<compile_context>
chip_gen: v7x
topology: tpu7x:2x2x1
jax: 0.10.0
libtpu: 0.0.40
codegen_flags: <defaults>
</compile_context>

<pallas_src>
import functools

import numpy as np
import jax
import jax.numpy as jnp
from jax.experimental import pallas as pl
from jax.experimental.pallas import tpu as pltpu

_LANE = 128
_SUBLANE = 8
_HIGH = jax.lax.Precision.HIGHEST


def _ceil_to(x, m):
    return (x + m - 1) // m * m


def _pad_last(x, target):
    pad = target - x.shape[-1]
    if pad == 0:
        return x
    widths = [(0, 0)] * (x.ndim - 1) + [(0, pad)]
    return jnp.pad(x, widths)


def _pad_dim(x, axis, target):
    pad = target - x.shape[axis]
    if pad == 0:
        return x
    widths = [(0, 0)] * x.ndim
    widths[axis] = (0, pad)
    return jnp.pad(x, widths)


def _gelu(x):
    # PyTorch nn.GELU default is the exact (erf-based) form.
    return 0.5 * x * (1.0 + jax.lax.erf(x * (1.0 / np.sqrt(2.0))))


def _peft_nf_kernel(n_layers, h_true, inv_h, itd_lane, *refs):
    """One batch tile.  Feature axes are zero-padded to multiples of 128 lanes."""
    it = iter(refs)
    feat_ref = next(it)                                             # [TB, 8]
    bmat_ref = next(it)                                             # [4, HP]  (duplicated cols)
    layers = [(next(it), next(it), next(it), next(it))              # lorau, lorav: [Lp, HP]
              for _ in range(n_layers)]                             # W: [HP,HP]  b: [1,HP]
    lu_o_ref, lv_o_ref = next(it), next(it)                         # [Lp, OP], [Lp, HP]
    w_f_ref, b_f_ref = next(it), next(it)                           # [HP, OP+H2P], [1, OP+H2P]
    w_i2_ref, b_i2_ref = next(it), next(it)                         # [1, H2P], [1, 1]
    out_ref = next(it)                                              # [TB, OP]

    feat = feat_ref[...]
    tb = feat.shape[0]
    hp = bmat_ref.shape[1]
    op = out_ref.shape[1]
    l_pad = lv_o_ref.shape[0]
    h_half = h_true // 2

    s_az, c_az = feat[:, 0:1], feat[:, 1:2]
    s_el, c_el = feat[:, 2:3], feat[:, 3:4]
    sidx = feat[:, 4:5].astype(jnp.int32)

    # Positional encoding: phase = [sin az, cos az, sin el, cos el] @ bmat.T, with the
    # bmat columns duplicated across the sin/cos halves; a lane-iota select builds x
    # lane-dense without any concatenate/relayout.  Lanes >= H stay exactly zero.
    bmat = bmat_ref[...]
    phase = (s_az * bmat[0:1, :] + c_az * bmat[1:2, :]
             + s_el * bmat[2:3, :] + c_el * bmat[3:4, :])            # [TB, HP]
    lane_h = jax.lax.broadcasted_iota(jnp.int32, (tb, hp), 1)
    x = jnp.where(lane_h < h_half, jnp.sin(phase),
                  jnp.where(lane_h < h_true, jnp.cos(phase), 0.0))

    # One-hot listener gather from the VMEM-resident LoRA tables (rides the MXU).
    lane_l = jax.lax.broadcasted_iota(jnp.int32, (tb, l_pad), 1)
    onehot = (lane_l == sidx).astype(jnp.float32)                    # [TB, Lp]

    def gather(tbl_ref):
        return jnp.dot(onehot, tbl_ref[...],
                       preferred_element_type=jnp.float32, precision=_HIGH)

    # Hidden LoRA MLP layers (dropout = identity at inference).  Padded lanes of
    # u/v/b/W are zero, so sum * (1/H_true) == true mean and padded lanes of x stay 0.
    for lu_ref, lv_ref, w_ref, b_ref in layers:
        u, v = gather(lu_ref), gather(lv_ref)
        z = u * (jnp.sum(v * x, axis=-1, keepdims=True) * inv_h)
        x = _gelu(jnp.dot(x, w_ref[...],
                          preferred_element_type=jnp.float32, precision=_HIGH)
                  + b_ref[...] + z)

    # Output LoRA linear fused with the first ITD layer: a single wide matmul, then
    # lane-aligned slices (OP, H2P are multiples of 128 -> cheap).
    u_o, v_o = gather(lu_o_ref), gather(lv_o_ref)
    z_o = u_o * (jnp.sum(v_o * x, axis=-1, keepdims=True) * inv_h)
    y = jnp.dot(x, w_f_ref[...],
                preferred_element_type=jnp.float32, precision=_HIGH) + b_f_ref[...]
    est = y[:, :op] + z_o                                            # [TB, OP]
    hid = _gelu(y[:, op:])                                           # [TB, H2P]

    # ITD head second layer: N=1 projection as VPU multiply + lane reduction, folded
    # into the spare zero lane `itd_lane` of the est slab -> one lane-dense output.
    itd = jnp.sum(hid * w_i2_ref[...], axis=-1, keepdims=True) + b_i2_ref[...]
    lane_o = jax.lax.broadcasted_iota(jnp.int32, (tb, op), 1)
    out_ref[...] = jnp.where(lane_o == itd_lane, itd, est)


def peft_neural_field_forward(params, tgt_loc, tgt_sidx, *, n_listeners, hidden_layers,
                              tile_b=1024):
    """Wrapper: pads weights to lane-dense shapes, tiles the batch, calls the kernel."""
    batch = tgt_loc.shape[0]
    h_true = 2 * params["bmat_t"].shape[1]
    o_true = params["w_o"].shape[1]
    hp = _ceil_to(h_true, _LANE)
    h2p = _ceil_to(params["w_i1"].shape[1], _LANE)
    op = _ceil_to(o_true + 1, _LANE)          # +1 guarantees a spare zero lane for itd
    l_pad = max(_ceil_to(n_listeners, _SUBLANE), _SUBLANE)

    # Batch tiling: large tiles (amortize per-step overhead, fill MXU M) while keeping
    # >= 2 grid steps so the "parallel" axis can shard across both v7x TensorCores.
    b_sl = _ceil_to(batch, _SUBLANE)
    tile = min(_ceil_to(tile_b, _SUBLANE),
               max(_SUBLANE, _ceil_to(pl.cdiv(b_sl, 2), _SUBLANE)))
    b_pad = _ceil_to(batch, tile)
    grid = (b_pad // tile,)

    # Per-example streamed data: one small lane-dense [B, 8] slab (trig + listener idx).
    # Padded batch rows (zeros, sidx 0) compute junk that is sliced off below.
    az = tgt_loc[:, 0].astype(jnp.float32)
    el = tgt_loc[:, 1].astype(jnp.float32)
    feat = jnp.stack([jnp.sin(az), jnp.cos(az), jnp.sin(el), jnp.cos(el),
                      tgt_sidx.astype(jnp.float32)], axis=-1)
    feat = jnp.pad(feat, ((0, b_pad - batch), (0, 8 - feat.shape[1])))
    feat_spec = pl.BlockSpec((tile, 8), lambda i: (i, 0))

    # VMEM-resident weights (constant index maps).  bmat columns are duplicated for the
    # sin/cos halves; LoRA tables zero-padded in both dims; w_o & w_i1 fused.
    def table(w, lanes):
        return _pad_dim(_pad_last(w.astype(jnp.float32), lanes), 0, l_pad)

    bmat_dup = _pad_last(jnp.concatenate([params["bmat_t"]] * 2, axis=1), hp)  # [4, HP]
    weight_inputs = [bmat_dup]
    for n in range(hidden_layers):
        weight_inputs += [table(params["wu_h"][n], hp), table(params["wv_h"][n], hp),
                          _pad_dim(_pad_last(params["w_h"][n], hp), 0, hp),
                          _pad_last(params["b_h"][n], hp)]
    w_fused = jnp.concatenate(
        [_pad_dim(_pad_last(params["w_o"], op), 0, hp),
         _pad_dim(_pad_last(params["w_i1"], h2p), 0, hp)], axis=1)             # [HP, OP+H2P]
    b_fused = jnp.concatenate(
        [_pad_last(params["b_o"], op), _pad_last(params["b_i1"], h2p)], axis=1)
    weight_inputs += [table(params["wu_o"], op), table(params["wv_o"], hp),
                      w_fused, b_fused,
                      _pad_last(params["w_i2"].T, h2p),                        # [1, H2P]
                      params["b_i2"]]                                          # [1, 1]

    out_shape = jax.ShapeDtypeStruct((b_pad, op), jnp.float32)
    out_spec = pl.BlockSpec((tile, op), lambda i: (i, 0))

    # VMEM budget: resident weights (x2 in case they stay double-buffered), the
    # double-buffered feat/out streams, a rough intermediate estimate, plus slack.
    # Capped at 48 MiB to leave headroom under v7x's 64 MiB physical VMEM.
    weight_bytes = sum(int(np.prod(w.shape)) * 4 for w in weight_inputs)
    stream_bytes = 2 * tile * (8 + op) * 4
    inter_bytes = tile * 4 * ((2 * hidden_layers + 6) * hp + 2 * (op + h2p) + l_pad)
    vmem_need = 2 * weight_bytes + stream_bytes + inter_bytes + (4 << 20)
    vmem_limit = int(min(max(vmem_need, 16 << 20), 48 << 20))

    kernel = functools.partial(_peft_nf_kernel, hidden_layers, h_true, 1.0 / h_true, o_true)

    def run(single_buffer_weights):
        if single_buffer_weights:
            # Constant blocks never change -> no need to double-buffer them in VMEM.
            wspecs = [pl.BlockSpec(w.shape, lambda i: (0, 0), pipeline_mode=pl.Buffered(1))
                      for w in weight_inputs]
        else:
            wspecs = [pl.BlockSpec(w.shape, lambda i: (0, 0)) for w in weight_inputs]
        return pl.pallas_call(
            kernel,
            grid=grid,
            in_specs=[feat_spec] + wspecs,
            out_specs=out_spec,
            out_shape=out_shape,
            compiler_params=pltpu.CompilerParams(
                dimension_semantics=("parallel",),
                vmem_limit_bytes=vmem_limit),
        )(feat, *weight_inputs)

    try:
        out_pad = run(True)
    except Exception:   # pipeline_mode=pl.Buffered(1) unsupported on this build: fall back
        out_pad = run(False)

    est = out_pad[:batch, :o_true].reshape(batch, 2, -1)
    itd = out_pad[:batch, o_true:o_true + 1]
    return est, itd


def init_params(key, hidden_features, hidden_layers, out_features, n_listeners, scale=1.0):
    """Deterministic synthetic parameters (shapes follow the module's __init__).

    NOTE: the PyTorch module zero-initializes the lorau weights; here we use small
    random values instead so the LoRA path is actually exercised by the check.
    """
    H, O, L = hidden_features, out_features, n_listeners
    keys = jax.random.split(key, 8 + 4 * hidden_layers)
    ki = iter(keys)

    def rnd(shape, s=0.1):
        return (s * jax.random.normal(next(ki), shape)).astype(jnp.float32)

    # bmat from numpy rng(0) like the module, stored transposed: [4, H/2].
    rng = np.random.default_rng(0)
    bmat = scale * rng.normal(0.0, 1.0, (H // 2, 4)).astype(np.float32)

    p = {
        "bmat_t": jnp.asarray(bmat.T, dtype=jnp.float32),
        "w_h": [], "b_h": [], "wu_h": [], "wv_h": [],
    }
    for _ in range(hidden_layers):
        p["w_h"].append(rnd((H, H)))          # fc weight, stored [in, out]
        p["b_h"].append(rnd((1, H)))          # fc bias
        p["wu_h"].append(rnd((L, H)))         # lorau table: row per listener
        p["wv_h"].append(rnd((L, H)))         # lorav table
    p["w_o"] = rnd((H, O))
    p["b_o"] = rnd((1, O))
    p["wu_o"] = rnd((L, O))                   # lorau[-1]
    p["wv_o"] = rnd((L, H))                   # lorav[-1]
    p["w_i1"] = rnd((H, H // 2))
    p["b_i1"] = rnd((1, H // 2))
    p["w_i2"] = rnd((H // 2, 1))
    p["b_i2"] = rnd((1, 1))
    return p


def reference_forward(params, tgt_loc, tgt_sidx, *, hidden_layers):
    """Pure-JAX reference mirroring the PyTorch forward (eval mode)."""
    hdot = functools.partial(jnp.dot, precision=_HIGH)
    az, el = tgt_loc[:, 0], tgt_loc[:, 1]
    f = jnp.stack([jnp.sin(az), jnp.cos(az), jnp.sin(el), jnp.cos(el)], axis=-1)
    emb = hdot(f, params["bmat_t"])
    x = jnp.concatenate([jnp.sin(emb), jnp.cos(emb)], axis=-1)

    def lora(x, w, b, wu, wv):
        u = jnp.take(wu, tgt_sidx, axis=0)
        v = jnp.take(wv, tgt_sidx, axis=0)
        z = u * jnp.mean(v * x, axis=-1, keepdims=True)
        return hdot(x, w) + b + z

    for n in range(hidden_layers):
        x = jax.nn.gelu(lora(x, params["w_h"][n], params["b_h"][n],
                             params["wu_h"][n], params["wv_h"][n]), approximate=False)
    est = lora(x, params["w_o"], params["b_o"], params["wu_o"], params["wv_o"])
    est = est.reshape(tgt_loc.shape[0], 2, -1)
    h = jax.nn.gelu(hdot(x, params["w_i1"]) + params["b_i1"], approximate=False)
    itd = hdot(h, params["w_i2"]) + params["b_i2"]
    return est, itd


if __name__ == "__main__":
    # Small shapes consistent with the module: batch=4, hidden=32, out=16, 8 listeners.
    batch = 4
    hidden_features = 32
    hidden_layers = 1
    out_features = 16          # must be even (reshape to [batch, 2, nfreqs])
    n_listeners = 8

    key = jax.random.PRNGKey(0)
    kp, kl, ks = jax.random.split(key, 3)
    params = init_params(kp, hidden_features, hidden_layers, out_features, n_listeners)

    tgt_loc = jax.random.uniform(kl, (batch, 3), minval=-np.pi, maxval=np.pi).astype(jnp.float32)
    tgt_sidx = jax.random.randint(ks, (batch,), 0, n_listeners)

    est, itd = peft_neural_field_forward(
        params, tgt_loc, tgt_sidx,
        n_listeners=n_listeners, hidden_layers=hidden_layers)
    est = jax.block_until_ready(est)
    itd = jax.block_until_ready(itd)

    est_ref, itd_ref = reference_forward(
        params, tgt_loc, tgt_sidx, hidden_layers=hidden_layers)

    np.testing.assert_allclose(np.asarray(est), np.asarray(est_ref), rtol=1e-5, atol=1e-5)
    np.testing.assert_allclose(np.asarray(itd), np.asarray(itd_ref), rtol=1e-5, atol=1e-5)
    assert est.shape == (batch, 2, out_features // 2)
    assert itd.shape == (batch, 1)
    print("KERNEL_OK")
</pallas_src>

<mosaic_0001>
module attributes {stable_mosaic.version = 11 : i64} {
  func.func @_peft_nf_kernel(%arg0: i32, %arg1: memref<8x8xf32, #tpu.memory_space<vmem>>, %arg2: memref<4x128xf32, #tpu.memory_space<vmem>>, %arg3: memref<8x128xf32, #tpu.memory_space<vmem>>, %arg4: memref<8x128xf32, #tpu.memory_space<vmem>>, %arg5: memref<128x128xf32, #tpu.memory_space<vmem>>, %arg6: memref<1x128xf32, #tpu.memory_space<vmem>>, %arg7: memref<8x128xf32, #tpu.memory_space<vmem>>, %arg8: memref<8x128xf32, #tpu.memory_space<vmem>>, %arg9: memref<128x256xf32, #tpu.memory_space<vmem>>, %arg10: memref<1x256xf32, #tpu.memory_space<vmem>>, %arg11: memref<1x128xf32, #tpu.memory_space<vmem>>, %arg12: memref<1x1xf32, #tpu.memory_space<vmem>>, %arg13: memref<8x128xf32, #tpu.memory_space<vmem>>) attributes {dimension_semantics = [#tpu.dimension_semantics<parallel>], iteration_bounds = array<i64: 1>, scalar_prefetch = 0 : i64, scratch_operands = 0 : i64, tpu.core_type = #tpu.core_type<tc>, window_params = [{transform_indices = @transform_0, window_bounds = array<i64: 8, 8>}, {pipeline_mode = #tpu.pipeline_mode<synchronous>, transform_indices = @transform_1, window_bounds = array<i64: 4, 128>}, {pipeline_mode = #tpu.pipeline_mode<synchronous>, transform_indices = @transform_2, window_bounds = array<i64: 8, 128>}, {pipeline_mode = #tpu.pipeline_mode<synchronous>, transform_indices = @transform_3, window_bounds = array<i64: 8, 128>}, {pipeline_mode = #tpu.pipeline_mode<synchronous>, transform_indices = @transform_4, window_bounds = array<i64: 128, 128>}, {pipeline_mode = #tpu.pipeline_mode<synchronous>, transform_indices = @transform_5, window_bounds = array<i64: 1, 128>}, {pipeline_mode = #tpu.pipeline_mode<synchronous>, transform_indices = @transform_6, window_bounds = array<i64: 8, 128>}, {pipeline_mode = #tpu.pipeline_mode<synchronous>, transform_indices = @transform_7, window_bounds = array<i64: 8, 128>}, {pipeline_mode = #tpu.pipeline_mode<synchronous>, transform_indices = @transform_8, window_bounds = array<i64: 128, 256>}, {pipeline_mode = #tpu.pipeline_mode<synchronous>, transform_indices = @transform_9, window_bounds = array<i64: 1, 256>}, {pipeline_mode = #tpu.pipeline_mode<synchronous>, transform_indices = @transform_10, window_bounds = array<i64: 1, 128>}, {pipeline_mode = #tpu.pipeline_mode<synchronous>, transform_indices = @transform_11, window_bounds = array<i64: 1, 1>}, {transform_indices = @transform_12, window_bounds = array<i64: 8, 128>}]} {
    %c0 = arith.constant 0 : index
    %c0_0 = arith.constant 0 : index
    %0 = vector.load %arg1[%c0, %c0_0] : memref<8x8xf32, #tpu.memory_space<vmem>>, vector<8x8xf32>
    %1 = vector.extract_strided_slice %0 {offsets = [0, 0], sizes = [8, 1], strides = [1, 1]} : vector<8x8xf32> to vector<8x1xf32>
    %2 = vector.extract_strided_slice %0 {offsets = [0, 1], sizes = [8, 1], strides = [1, 1]} : vector<8x8xf32> to vector<8x1xf32>
    %3 = vector.extract_strided_slice %0 {offsets = [0, 2], sizes = [8, 1], strides = [1, 1]} : vector<8x8xf32> to vector<8x1xf32>
    %4 = vector.extract_strided_slice %0 {offsets = [0, 3], sizes = [8, 1], strides = [1, 1]} : vector<8x8xf32> to vector<8x1xf32>
    %5 = vector.extract_strided_slice %0 {offsets = [0, 4], sizes = [8, 1], strides = [1, 1]} : vector<8x8xf32> to vector<8x1xf32>
    %6 = arith.fptosi %5 : vector<8x1xf32> to vector<8x1xi32>
    %c0_1 = arith.constant 0 : index
    %c0_2 = arith.constant 0 : index
    %7 = vector.load %arg2[%c0_1, %c0_2] : memref<4x128xf32, #tpu.memory_space<vmem>>, vector<4x128xf32>
    %8 = vector.extract_strided_slice %7 {offsets = [0, 0], sizes = [1, 128], strides = [1, 1]} : vector<4x128xf32> to vector<1x128xf32>
    %9 = vector.broadcast %1 : vector<8x1xf32> to vector<8x128xf32>
    %10 = vector.broadcast %8 : vector<1x128xf32> to vector<8x128xf32>
    %11 = arith.mulf %9, %10 : vector<8x128xf32>
    %12 = vector.extract_strided_slice %7 {offsets = [1, 0], sizes = [1, 128], strides = [1, 1]} : vector<4x128xf32> to vector<1x128xf32>
    %13 = vector.broadcast %2 : vector<8x1xf32> to vector<8x128xf32>
    %14 = vector.broadcast %12 : vector<1x128xf32> to vector<8x128xf32>
    %15 = arith.mulf %13, %14 : vector<8x128xf32>
    %16 = arith.addf %11, %15 : vector<8x128xf32>
    %17 = vector.extract_strided_slice %7 {offsets = [2, 0], sizes = [1, 128], strides = [1, 1]} : vector<4x128xf32> to vector<1x128xf32>
    %18 = vector.broadcast %3 : vector<8x1xf32> to vector<8x128xf32>
    %19 = vector.broadcast %17 : vector<1x128xf32> to vector<8x128xf32>
    %20 = arith.mulf %18, %19 : vector<8x128xf32>
    %21 = arith.addf %16, %20 : vector<8x128xf32>
    %22 = vector.extract_strided_slice %7 {offsets = [3, 0], sizes = [1, 128], strides = [1, 1]} : vector<4x128xf32> to vector<1x128xf32>
    %23 = vector.broadcast %4 : vector<8x1xf32> to vector<8x128xf32>
    %24 = vector.broadcast %22 : vector<1x128xf32> to vector<8x128xf32>
    %25 = arith.mulf %23, %24 : vector<8x128xf32>
    %26 = arith.addf %21, %25 : vector<8x128xf32>
    %27 = tpu.iota {dimensions = array<i32: 1>} : vector<8x128xi32>
    %c16_i32 = arith.constant 16 : i32
    %28 = vector.broadcast %c16_i32 : i32 to vector<8x128xi32>
    %29 = arith.cmpi slt, %27, %28 : vector<8x128xi32>
    %30 = math.sin %26 : vector<8x128xf32>
    %c32_i32 = arith.constant 32 : i32
    %31 = vector.broadcast %c32_i32 : i32 to vector<8x128xi32>
    %32 = arith.cmpi slt, %27, %31 : vector<8x128xi32>
    %33 = math.cos %26 : vector<8x128xf32>
    %cst = arith.constant 0.000000e+00 : f32
    %34 = vector.broadcast %cst : f32 to vector<8x128xf32>
    %35 = arith.select %32, %33, %34 : vector<8x128xi1>, vector<8x128xf32>
    %36 = arith.select %29, %30, %35 : vector<8x128xi1>, vector<8x128xf32>
    %37 = tpu.iota {dimensions = array<i32: 1>} : vector<8x8xi32>
    %38 = vector.broadcast %6 : vector<8x1xi32> to vector<8x8xi32>
    %39 = arith.cmpi eq, %37, %38 : vector<8x8xi32>
    %40 = arith.extui %39 : vector<8x8xi1> to vector<8x8xi32>
    %41 = arith.sitofp %40 : vector<8x8xi32> to vector<8x8xf32>
    %c0_3 = arith.constant 0 : index
    %c0_4 = arith.constant 0 : index
    %42 = vector.load %arg3[%c0_3, %c0_4] : memref<8x128xf32, #tpu.memory_space<vmem>>, vector<8x128xf32>
    %cst_5 = arith.constant dense<0.000000e+00> : vector<8x128xf32>
    %43 = tpu.matmul %41, %42, %cst_5 {dimension_numbers = #tpu.dot_dimension_numbers<[1], [0], [0], [1], [0, 0, 1, 1], [], []>, precision = #tpu.contract_precision<fp32>} : vector<8x8xf32>, vector<8x128xf32>, vector<8x128xf32> -> vector<8x128xf32>
    %c0_6 = arith.constant 0 : index
    %c0_7 = arith.constant 0 : index
    %44 = vector.load %arg4[%c0_6, %c0_7] : memref<8x128xf32, #tpu.memory_space<vmem>>, vector<8x128xf32>
    %cst_8 = arith.constant dense<0.000000e+00> : vector<8x128xf32>
    %45 = tpu.matmul %41, %44, %cst_8 {dimension_numbers = #tpu.dot_dimension_numbers<[1], [0], [0], [1], [0, 0, 1, 1], [], []>, precision = #tpu.contract_precision<fp32>} : vector<8x8xf32>, vector<8x128xf32>, vector<8x128xf32> -> vector<8x128xf32>
    %46 = arith.mulf %45, %36 : vector<8x128xf32>
    %cst_9 = arith.constant dense<0.000000e+00> : vector<8xf32>
    %47 = vector.multi_reduction <add>, %46, %cst_9 [1] : vector<8x128xf32> to vector<8xf32>
    %48 = vector.shape_cast %47 : vector<8xf32> to vector<8x1xf32>
    %cst_10 = arith.constant 3.125000e-02 : f32
    %49 = vector.broadcast %cst_10 : f32 to vector<8x1xf32>
    %50 = arith.mulf %48, %49 : vector<8x1xf32>
    %51 = vector.broadcast %50 : vector<8x1xf32> to vector<8x128xf32>
    %52 = arith.mulf %43, %51 : vector<8x128xf32>
    %c0_11 = arith.constant 0 : index
    %c0_12 = arith.constant 0 : index
    %53 = vector.load %arg5[%c0_11, %c0_12] : memref<128x128xf32, #tpu.memory_space<vmem>>, vector<128x128xf32>
    %cst_13 = arith.constant dense<0.000000e+00> : vector<8x128xf32>
    %54 = tpu.matmul %36, %53, %cst_13 {dimension_numbers = #tpu.dot_dimension_numbers<[1], [0], [0], [1], [0, 0, 1, 1], [], []>, precision = #tpu.contract_precision<fp32>} : vector<8x128xf32>, vector<128x128xf32>, vector<8x128xf32> -> vector<8x128xf32>
    %c0_14 = arith.constant 0 : index
    %c0_15 = arith.constant 0 : index
    %55 = vector.load %arg6[%c0_14, %c0_15] : memref<1x128xf32, #tpu.memory_space<vmem>>, vector<1x128xf32>
    %56 = vector.broadcast %55 : vector<1x128xf32> to vector<8x128xf32>
    %57 = arith.addf %54, %56 : vector<8x128xf32>
    %58 = arith.addf %57, %52 : vector<8x128xf32>
    %cst_16 = arith.constant 5.000000e-01 : f32
    %59 = vector.broadcast %cst_16 : f32 to vector<8x128xf32>
    %60 = arith.mulf %59, %58 : vector<8x128xf32>
    %cst_17 = arith.constant 0.707106769 : f32
    %61 = vector.broadcast %cst_17 : f32 to vector<8x128xf32>
    %62 = arith.mulf %58, %61 : vector<8x128xf32>
    %63 = math.erf %62 : vector<8x128xf32>
    %cst_18 = arith.constant 1.000000e+00 : f32
    %64 = vector.broadcast %cst_18 : f32 to vector<8x128xf32>
    %65 = arith.addf %64, %63 : vector<8x128xf32>
    %66 = arith.mulf %60, %65 : vector<8x128xf32>
    %c0_19 = arith.constant 0 : index
    %c0_20 = arith.constant 0 : index
    %67 = vector.load %arg7[%c0_19, %c0_20] : memref<8x128xf32, #tpu.memory_space<vmem>>, vector<8x128xf32>
    %cst_21 = arith.constant dense<0.000000e+00> : vector<8x128xf32>
    %68 = tpu.matmul %41, %67, %cst_21 {dimension_numbers = #tpu.dot_dimension_numbers<[1], [0], [0], [1], [0, 0, 1, 1], [], []>, precision = #tpu.contract_precision<fp32>} : vector<8x8xf32>, vector<8x128xf32>, vector<8x128xf32> -> vector<8x128xf32>
    %c0_22 = arith.constant 0 : index
    %c0_23 = arith.constant 0 : index
    %69 = vector.load %arg8[%c0_22, %c0_23] : memref<8x128xf32, #tpu.memory_space<vmem>>, vector<8x128xf32>
    %cst_24 = arith.constant dense<0.000000e+00> : vector<8x128xf32>
    %70 = tpu.matmul %41, %69, %cst_24 {dimension_numbers = #tpu.dot_dimension_numbers<[1], [0], [0], [1], [0, 0, 1, 1], [], []>, precision = #tpu.contract_precision<fp32>} : vector<8x8xf32>, vector<8x128xf32>, vector<8x128xf32> -> vector<8x128xf32>
    %71 = arith.mulf %70, %66 : vector<8x128xf32>
    %cst_25 = arith.constant dense<0.000000e+00> : vector<8xf32>
    %72 = vector.multi_reduction <add>, %71, %cst_25 [1] : vector<8x128xf32> to vector<8xf32>
    %73 = vector.shape_cast %72 : vector<8xf32> to vector<8x1xf32>
    %cst_26 = arith.constant 3.125000e-02 : f32
    %74 = vector.broadcast %cst_26 : f32 to vector<8x1xf32>
    %75 = arith.mulf %73, %74 : vector<8x1xf32>
    %76 = vector.broadcast %75 : vector<8x1xf32> to vector<8x128xf32>
    %77 = arith.mulf %68, %76 : vector<8x128xf32>
    %c0_27 = arith.constant 0 : index
    %c0_28 = arith.constant 0 : index
    %78 = vector.load %arg9[%c0_27, %c0_28] : memref<128x256xf32, #tpu.memory_space<vmem>>, vector<128x256xf32>
    %cst_29 = arith.constant dense<0.000000e+00> : vector<8x256xf32>
    %79 = tpu.matmul %66, %78, %cst_29 {dimension_numbers = #tpu.dot_dimension_numbers<[1], [0], [0], [1], [0, 0, 1, 1], [], []>, precision = #tpu.contract_precision<fp32>} : vector<8x128xf32>, vector<128x256xf32>, vector<8x256xf32> -> vector<8x256xf32>
    %c0_30 = arith.constant 0 : index
    %c0_31 = arith.constant 0 : index
    %80 = vector.load %arg10[%c0_30, %c0_31] : memref<1x256xf32, #tpu.memory_space<vmem>>, vector<1x256xf32>
    %81 = vector.broadcast %80 : vector<1x256xf32> to vector<8x256xf32>
    %82 = arith.addf %79, %81 : vector<8x256xf32>
    %83 = vector.extract_strided_slice %82 {offsets = [0, 0], sizes = [8, 128], strides = [1, 1]} : vector<8x256xf32> to vector<8x128xf32>
    %84 = arith.addf %83, %77 : vector<8x128xf32>
    %85 = vector.extract_strided_slice %82 {offsets = [0, 128], sizes = [8, 128], strides = [1, 1]} : vector<8x256xf32> to vector<8x128xf32>
    %cst_32 = arith.constant 5.000000e-01 : f32
    %86 = vector.broadcast %cst_32 : f32 to vector<8x128xf32>
    %87 = arith.mulf %86, %85 : vector<8x128xf32>
    %cst_33 = arith.constant 0.707106769 : f32
    %88 = vector.broadcast %cst_33 : f32 to vector<8x128xf32>
    %89 = arith.mulf %85, %88 : vector<8x128xf32>
    %90 = math.erf %89 : vector<8x128xf32>
    %cst_34 = arith.constant 1.000000e+00 : f32
    %91 = vector.broadcast %cst_34 : f32 to vector<8x128xf32>
    %92 = arith.addf %91, %90 : vector<8x128xf32>
    %93 = arith.mulf %87, %92 : vector<8x128xf32>
    %c0_35 = arith.constant 0 : index
    %c0_36 = arith.constant 0 : index
    %94 = vector.load %arg11[%c0_35, %c0_36] : memref<1x128xf32, #tpu.memory_space<vmem>>, vector<1x128xf32>
    %95 = vector.broadcast %94 : vector<1x128xf32> to vector<8x128xf32>
    %96 = arith.mulf %93, %95 : vector<8x128xf32>
    %cst_37 = arith.constant dense<0.000000e+00> : vector<8xf32>
    %97 = vector.multi_reduction <add>, %96, %cst_37 [1] : vector<8x128xf32> to vector<8xf32>
    %98 = vector.shape_cast %97 : vector<8xf32> to vector<8x1xf32>
    %c0_38 = arith.constant 0 : index
    %c0_39 = arith.constant 0 : index
    %99 = vector.load %arg12[%c0_38, %c0_39] : memref<1x1xf32, #tpu.memory_space<vmem>>, vector<1x1xf32>
    %100 = vector.broadcast %99 : vector<1x1xf32> to vector<8x1xf32>
    %101 = arith.addf %98, %100 : vector<8x1xf32>
    %102 = tpu.iota {dimensions = array<i32: 1>} : vector<8x128xi32>
    %c16_i32_40 = arith.constant 16 : i32
    %103 = vector.broadcast %c16_i32_40 : i32 to vector<8x128xi32>
    %104 = arith.cmpi eq, %102, %103 : vector<8x128xi32>
    %105 = vector.shape_cast %101 : vector<8x1xf32> to vector<8x1xf32>
    %106 = vector.broadcast %105 : vector<8x1xf32> to vector<8x128xf32>
    %107 = arith.select %104, %106, %84 : vector<8x128xi1>, vector<8x128xf32>
    %c0_41 = arith.constant 0 : index
    %c0_42 = arith.constant 0 : index
    %108 = vector.load %arg13[%c0_41, %c0_42] : memref<8x128xf32, #tpu.memory_space<vmem>>, vector<8x128xf32>
    tpu.vector_store %arg13[%c0_41, %c0_42], %107 {strides = array<i32>} : memref<8x128xf32, #tpu.memory_space<vmem>>, vector<8x128xf32>,
    return
  }
  func.func @transform_0(%arg0: i32) -> (i32, i32) {
    %c0_i32 = arith.constant 0 : i32
    %c0_i32_0 = arith.constant 0 : i32
    return %arg0, %c0_i32 : i32, i32
  }
  func.func @transform_1(%arg0: i32) -> (i32, i32) {
    %c0_i32 = arith.constant 0 : i32
    %c0_i32_0 = arith.constant 0 : i32
    %c0_i32_1 = arith.constant 0 : i32
    return %c0_i32, %c0_i32_0 : i32, i32
  }
  func.func @transform_2(%arg0: i32) -> (i32, i32) {
    %c0_i32 = arith.constant 0 : i32
    %c0_i32_0 = arith.constant 0 : i32
    %c0_i32_1 = arith.constant 0 : i32
    return %c0_i32, %c0_i32_0 : i32, i32
  }
  func.func @transform_3(%arg0: i32) -> (i32, i32) {
    %c0_i32 = arith.constant 0 : i32
    %c0_i32_0 = arith.constant 0 : i32
    %c0_i32_1 = arith.constant 0 : i32
    return %c0_i32, %c0_i32_0 : i32, i32
  }
  func.func @transform_4(%arg0: i32) -> (i32, i32) {
    %c0_i32 = arith.constant 0 : i32
    %c0_i32_0 = arith.constant 0 : i32
    %c0_i32_1 = arith.constant 0 : i32
    return %c0_i32, %c0_i32_0 : i32, i32
  }
  func.func @transform_5(%arg0: i32) -> (i32, i32) {
    %c0_i32 = arith.constant 0 : i32
    %c0_i32_0 = arith.constant 0 : i32
    %c0_i32_1 = arith.constant 0 : i32
    return %c0_i32, %c0_i32_0 : i32, i32
  }
  func.func @transform_6(%arg0: i32) -> (i32, i32) {
    %c0_i32 = arith.constant 0 : i32
    %c0_i32_0 = arith.constant 0 : i32
    %c0_i32_1 = arith.constant 0 : i32
    return %c0_i32, %c0_i32_0 : i32, i32
  }
  func.func @transform_7(%arg0: i32) -> (i32, i32) {
    %c0_i32 = arith.constant 0 : i32
    %c0_i32_0 = arith.constant 0 : i32
    %c0_i32_1 = arith.constant 0 : i32
    return %c0_i32, %c0_i32_0 : i32, i32
  }
  func.func @transform_8(%arg0: i32) -> (i32, i32) {
    %c0_i32 = arith.constant 0 : i32
    %c0_i32_0 = arith.constant 0 : i32
    %c0_i32_1 = arith.constant 0 : i32
    return %c0_i32, %c0_i32_0 : i32, i32
  }
  func.func @transform_9(%arg0: i32) -> (i32, i32) {
    %c0_i32 = arith.constant 0 : i32
    %c0_i32_0 = arith.constant 0 : i32
    %c0_i32_1 = arith.constant 0 : i32
    return %c0_i32, %c0_i32_0 : i32, i32
  }
  func.func @transform_10(%arg0: i32) -> (i32, i32) {
    %c0_i32 = arith.constant 0 : i32
    %c0_i32_0 = arith.constant 0 : i32
    %c0_i32_1 = arith.constant 0 : i32
    return %c0_i32, %c0_i32_0 : i32, i32
  }
  func.func @transform_11(%arg0: i32) -> (i32, i32) {
    %c0_i32 = arith.constant 0 : i32
    %c0_i32_0 = arith.constant 0 : i32
    %c0_i32_1 = arith.constant 0 : i32
    return %c0_i32, %c0_i32_0 : i32, i32
  }
  func.func @transform_12(%arg0: i32) -> (i32, i32) {
    %c0_i32 = arith.constant 0 : i32
    %c0_i32_0 = arith.constant 0 : i32
    return %arg0, %c0_i32 : i32, i32
  }
}

module attributes {stable_mosaic.version = 11 : i64} {
  func.func @_peft_nf_kernel(%arg0: i32, %arg1: memref<8x8xf32, #tpu.memory_space<vmem>>, %arg2: memref<4x128xf32, #tpu.memory_space<vmem>>, %arg3: memref<8x128xf32, #tpu.memory_space<vmem>>, %arg4: memref<8x128xf32, #tpu.memory_space<vmem>>, %arg5: memref<128x128xf32, #tpu.memory_space<vmem>>, %arg6: memref<1x128xf32, #tpu.memory_space<vmem>>, %arg7: memref<8x128xf32, #tpu.memory_space<vmem>>, %arg8: memref<8x128xf32, #tpu.memory_space<vmem>>, %arg9: memref<128x256xf32, #tpu.memory_space<vmem>>, %arg10: memref<1x256xf32, #tpu.memory_space<vmem>>, %arg11: memref<1x128xf32, #tpu.memory_space<vmem>>, %arg12: memref<1x1xf32, #tpu.memory_space<vmem>>, %arg13: memref<8x128xf32, #tpu.memory_space<vmem>>) attributes {dimension_semantics = [#tpu.dimension_semantics<parallel>], iteration_bounds = array<i64: 1>, scalar_prefetch = 0 : i64, scratch_operands = 0 : i64, tpu.core_type = #tpu.core_type<tc>, window_params = [{transform_indices = @transform_0, window_bounds = array<i64: 8, 8>}, {pipeline_mode = #tpu.pipeline_mode<synchronous>, transform_indices = @transform_1, window_bounds = array<i64: 4, 128>}, {pipeline_mode = #tpu.pipeline_mode<synchronous>, transform_indices = @transform_2, window_bounds = array<i64: 8, 128>}, {pipeline_mode = #tpu.pipeline_mode<synchronous>, transform_indices = @transform_3, window_bounds = array<i64: 8, 128>}, {pipeline_mode = #tpu.pipeline_mode<synchronous>, transform_indices = @transform_4, window_bounds = array<i64: 128, 128>}, {pipeline_mode = #tpu.pipeline_mode<synchronous>, transform_indices = @transform_5, window_bounds = array<i64: 1, 128>}, {pipeline_mode = #tpu.pipeline_mode<synchronous>, transform_indices = @transform_6, window_bounds = array<i64: 8, 128>}, {pipeline_mode = #tpu.pipeline_mode<synchronous>, transform_indices = @transform_7, window_bounds = array<i64: 8, 128>}, {pipeline_mode = #tpu.pipeline_mode<synchronous>, transform_indices = @transform_8, window_bounds = array<i64: 128, 256>}, {pipeline_mode = #tpu.pipeline_mode<synchronous>, transform_indices = @transform_9, window_bounds = array<i64: 1, 256>}, {pipeline_mode = #tpu.pipeline_mode<synchronous>, transform_indices = @transform_10, window_bounds = array<i64: 1, 128>}, {pipeline_mode = #tpu.pipeline_mode<synchronous>, transform_indices = @transform_11, window_bounds = array<i64: 1, 1>}, {transform_indices = @transform_12, window_bounds = array<i64: 8, 128>}]} {
    %c0 = arith.constant 0 : index
    %c0_0 = arith.constant 0 : index
    %0 = vector.load %arg1[%c0, %c0_0] : memref<8x8xf32, #tpu.memory_space<vmem>>, vector<8x8xf32>
    %1 = vector.extract_strided_slice %0 {offsets = [0, 0], sizes = [8, 1], strides = [1, 1]} : vector<8x8xf32> to vector<8x1xf32>
    %2 = vector.extract_strided_slice %0 {offsets = [0, 1], sizes = [8, 1], strides = [1, 1]} : vector<8x8xf32> to vector<8x1xf32>
    %3 = vector.extract_strided_slice %0 {offsets = [0, 2], sizes = [8, 1], strides = [1, 1]} : vector<8x8xf32> to vector<8x1xf32>
    %4 = vector.extract_strided_slice %0 {offsets = [0, 3], sizes = [8, 1], strides = [1, 1]} : vector<8x8xf32> to vector<8x1xf32>
    %5 = vector.extract_strided_slice %0 {offsets = [0, 4], sizes = [8, 1], strides = [1, 1]} : vector<8x8xf32> to vector<8x1xf32>
    %6 = arith.fptosi %5 : vector<8x1xf32> to vector<8x1xi32>
    %c0_1 = arith.constant 0 : index
    %c0_2 = arith.constant 0 : index
    %7 = vector.load %arg2[%c0_1, %c0_2] : memref<4x128xf32, #tpu.memory_space<vmem>>, vector<4x128xf32>
    %8 = vector.extract_strided_slice %7 {offsets = [0, 0], sizes = [1, 128], strides = [1, 1]} : vector<4x128xf32> to vector<1x128xf32>
    %9 = vector.broadcast %1 : vector<8x1xf32> to vector<8x128xf32>
    %10 = vector.broadcast %8 : vector<1x128xf32> to vector<8x128xf32>
    %11 = arith.mulf %9, %10 : vector<8x128xf32>
    %12 = vector.extract_strided_slice %7 {offsets = [1, 0], sizes = [1, 128], strides = [1, 1]} : vector<4x128xf32> to vector<1x128xf32>
    %13 = vector.broadcast %2 : vector<8x1xf32> to vector<8x128xf32>
    %14 = vector.broadcast %12 : vector<1x128xf32> to vector<8x128xf32>
    %15 = arith.mulf %13, %14 : vector<8x128xf32>
    %16 = arith.addf %11, %15 : vector<8x128xf32>
    %17 = vector.extract_strided_slice %7 {offsets = [2, 0], sizes = [1, 128], strides = [1, 1]} : vector<4x128xf32> to vector<1x128xf32>
    %18 = vector.broadcast %3 : vector<8x1xf32> to vector<8x128xf32>
    %19 = vector.broadcast %17 : vector<1x128xf32> to vector<8x128xf32>
    %20 = arith.mulf %18, %19 : vector<8x128xf32>
    %21 = arith.addf %16, %20 : vector<8x128xf32>
    %22 = vector.extract_strided_slice %7 {offsets = [3, 0], sizes = [1, 128], strides = [1, 1]} : vector<4x128xf32> to vector<1x128xf32>
    %23 = vector.broadcast %4 : vector<8x1xf32> to vector<8x128xf32>
    %24 = vector.broadcast %22 : vector<1x128xf32> to vector<8x128xf32>
    %25 = arith.mulf %23, %24 : vector<8x128xf32>
    %26 = arith.addf %21, %25 : vector<8x128xf32>
    %27 = tpu.iota {dimensions = array<i32: 1>} : vector<8x128xi32>
    %c16_i32 = arith.constant 16 : i32
    %28 = vector.broadcast %c16_i32 : i32 to vector<8x128xi32>
    %29 = arith.cmpi slt, %27, %28 : vector<8x128xi32>
    %30 = math.sin %26 : vector<8x128xf32>
    %c32_i32 = arith.constant 32 : i32
    %31 = vector.broadcast %c32_i32 : i32 to vector<8x128xi32>
    %32 = arith.cmpi slt, %27, %31 : vector<8x128xi32>
    %33 = math.cos %26 : vector<8x128xf32>
    %cst = arith.constant 0.000000e+00 : f32
    %34 = vector.broadcast %cst : f32 to vector<8x128xf32>
    %35 = arith.select %32, %33, %34 : vector<8x128xi1>, vector<8x128xf32>
    %36 = arith.select %29, %30, %35 : vector<8x128xi1>, vector<8x128xf32>
    %37 = tpu.iota {dimensions = array<i32: 1>} : vector<8x8xi32>
    %38 = vector.broadcast %6 : vector<8x1xi32> to vector<8x8xi32>
    %39 = arith.cmpi eq, %37, %38 : vector<8x8xi32>
    %40 = arith.extui %39 : vector<8x8xi1> to vector<8x8xi32>
    %41 = arith.sitofp %40 : vector<8x8xi32> to vector<8x8xf32>
    %c0_3 = arith.constant 0 : index
    %c0_4 = arith.constant 0 : index
    %42 = vector.load %arg3[%c0_3, %c0_4] : memref<8x128xf32, #tpu.memory_space<vmem>>, vector<8x128xf32>
    %cst_5 = arith.constant dense<0.000000e+00> : vector<8x128xf32>
    %43 = tpu.matmul %41, %42, %cst_5 {dimension_numbers = #tpu.dot_dimension_numbers<[1], [0], [0], [1], [0, 0, 1, 1], [], []>, precision = #tpu.contract_precision<fp32>} : vector<8x8xf32>, vector<8x128xf32>, vector<8x128xf32> -> vector<8x128xf32>
    %c0_6 = arith.constant 0 : index
    %c0_7 = arith.constant 0 : index
    %44 = vector.load %arg4[%c0_6, %c0_7] : memref<8x128xf32, #tpu.memory_space<vmem>>, vector<8x128xf32>
    %cst_8 = arith.constant dense<0.000000e+00> : vector<8x128xf32>
    %45 = tpu.matmul %41, %44, %cst_8 {dimension_numbers = #tpu.dot_dimension_numbers<[1], [0], [0], [1], [0, 0, 1, 1], [], []>, precision = #tpu.contract_precision<fp32>} : vector<8x8xf32>, vector<8x128xf32>, vector<8x128xf32> -> vector<8x128xf32>
    %46 = arith.mulf %45, %36 : vector<8x128xf32>
    %cst_9 = arith.constant dense<0.000000e+00> : vector<8xf32>
    %47 = vector.multi_reduction <add>, %46, %cst_9 [1] : vector<8x128xf32> to vector<8xf32>
    %48 = vector.shape_cast %47 : vector<8xf32> to vector<8x1xf32>
    %cst_10 = arith.constant 3.125000e-02 : f32
    %49 = vector.broadcast %cst_10 : f32 to vector<8x1xf32>
    %50 = arith.mulf %48, %49 : vector<8x1xf32>
    %51 = vector.broadcast %50 : vector<8x1xf32> to vector<8x128xf32>
    %52 = arith.mulf %43, %51 : vector<8x128xf32>
    %c0_11 = arith.constant 0 : index
    %c0_12 = arith.constant 0 : index
    %53 = vector.load %arg5[%c0_11, %c0_12] : memref<128x128xf32, #tpu.memory_space<vmem>>, vector<128x128xf32>
    %cst_13 = arith.constant dense<0.000000e+00> : vector<8x128xf32>
    %54 = tpu.matmul %36, %53, %cst_13 {dimension_numbers = #tpu.dot_dimension_numbers<[1], [0], [0], [1], [0, 0, 1, 1], [], []>, precision = #tpu.contract_precision<fp32>} : vector<8x128xf32>, vector<128x128xf32>, vector<8x128xf32> -> vector<8x128xf32>
    %c0_14 = arith.constant 0 : index
    %c0_15 = arith.constant 0 : index
    %55 = vector.load %arg6[%c0_14, %c0_15] : memref<1x128xf32, #tpu.memory_space<vmem>>, vector<1x128xf32>
    %56 = vector.broadcast %55 : vector<1x128xf32> to vector<8x128xf32>
    %57 = arith.addf %54, %56 : vector<8x128xf32>
    %58 = arith.addf %57, %52 : vector<8x128xf32>
    %cst_16 = arith.constant 5.000000e-01 : f32
    %59 = vector.broadcast %cst_16 : f32 to vector<8x128xf32>
    %60 = arith.mulf %59, %58 : vector<8x128xf32>
    %cst_17 = arith.constant 0.707106769 : f32
    %61 = vector.broadcast %cst_17 : f32 to vector<8x128xf32>
    %62 = arith.mulf %58, %61 : vector<8x128xf32>
    %63 = math.erf %62 : vector<8x128xf32>
    %cst_18 = arith.constant 1.000000e+00 : f32
    %64 = vector.broadcast %cst_18 : f32 to vector<8x128xf32>
    %65 = arith.addf %64, %63 : vector<8x128xf32>
    %66 = arith.mulf %60, %65 : vector<8x128xf32>
    %c0_19 = arith.constant 0 : index
    %c0_20 = arith.constant 0 : index
    %67 = vector.load %arg7[%c0_19, %c0_20] : memref<8x128xf32, #tpu.memory_space<vmem>>, vector<8x128xf32>
    %cst_21 = arith.constant dense<0.000000e+00> : vector<8x128xf32>
    %68 = tpu.matmul %41, %67, %cst_21 {dimension_numbers = #tpu.dot_dimension_numbers<[1], [0], [0], [1], [0, 0, 1, 1], [], []>, precision = #tpu.contract_precision<fp32>} : vector<8x8xf32>, vector<8x128xf32>, vector<8x128xf32> -> vector<8x128xf32>
    %c0_22 = arith.constant 0 : index
    %c0_23 = arith.constant 0 : index
    %69 = vector.load %arg8[%c0_22, %c0_23] : memref<8x128xf32, #tpu.memory_space<vmem>>, vector<8x128xf32>
    %cst_24 = arith.constant dense<0.000000e+00> : vector<8x128xf32>
    %70 = tpu.matmul %41, %69, %cst_24 {dimension_numbers = #tpu.dot_dimension_numbers<[1], [0], [0], [1], [0, 0, 1, 1], [], []>, precision = #tpu.contract_precision<fp32>} : vector<8x8xf32>, vector<8x128xf32>, vector<8x128xf32> -> vector<8x128xf32>
    %71 = arith.mulf %70, %66 : vector<8x128xf32>
    %cst_25 = arith.constant dense<0.000000e+00> : vector<8xf32>
    %72 = vector.multi_reduction <add>, %71, %cst_25 [1] : vector<8x128xf32> to vector<8xf32>
    %73 = vector.shape_cast %72 : vector<8xf32> to vector<8x1xf32>
    %cst_26 = arith.constant 3.125000e-02 : f32
    %74 = vector.broadcast %cst_26 : f32 to vector<8x1xf32>
    %75 = arith.mulf %73, %74 : vector<8x1xf32>
    %76 = vector.broadcast %75 : vector<8x1xf32> to vector<8x128xf32>
    %77 = arith.mulf %68, %76 : vector<8x128xf32>
    %c0_27 = arith.constant 0 : index
    %c0_28 = arith.constant 0 : index
    %78 = vector.load %arg9[%c0_27, %c0_28] : memref<128x256xf32, #tpu.memory_space<vmem>>, vector<128x256xf32>
    %cst_29 = arith.constant dense<0.000000e+00> : vector<8x256xf32>
    %79 = tpu.matmul %66, %78, %cst_29 {dimension_numbers = #tpu.dot_dimension_numbers<[1], [0], [0], [1], [0, 0, 1, 1], [], []>, precision = #tpu.contract_precision<fp32>} : vector<8x128xf32>, vector<128x256xf32>, vector<8x256xf32> -> vector<8x256xf32>
    %c0_30 = arith.constant 0 : index
    %c0_31 = arith.constant 0 : index
    %80 = vector.load %arg10[%c0_30, %c0_31] : memref<1x256xf32, #tpu.memory_space<vmem>>, vector<1x256xf32>
    %81 = vector.broadcast %80 : vector<1x256xf32> to vector<8x256xf32>
    %82 = arith.addf %79, %81 : vector<8x256xf32>
    %83 = vector.extract_strided_slice %82 {offsets = [0, 0], sizes = [8, 128], strides = [1, 1]} : vector<8x256xf32> to vector<8x128xf32>
    %84 = arith.addf %83, %77 : vector<8x128xf32>
    %85 = vector.extract_strided_slice %82 {offsets = [0, 128], sizes = [8, 128], strides = [1, 1]} : vector<8x256xf32> to vector<8x128xf32>
    %cst_32 = arith.constant 5.000000e-01 : f32
    %86 = vector.broadcast %cst_32 : f32 to vector<8x128xf32>
    %87 = arith.mulf %86, %85 : vector<8x128xf32>
    %cst_33 = arith.constant 0.707106769 : f32
    %88 = vector.broadcast %cst_33 : f32 to vector<8x128xf32>
    %89 = arith.mulf %85, %88 : vector<8x128xf32>
    %90 = math.erf %89 : vector<8x128xf32>
    %cst_34 = arith.constant 1.000000e+00 : f32
    %91 = vector.broadcast %cst_34 : f32 to vector<8x128xf32>
    %92 = arith.addf %91, %90 : vector<8x128xf32>
    %93 = arith.mulf %87, %92 : vector<8x128xf32>
    %c0_35 = arith.constant 0 : index
    %c0_36 = arith.constant 0 : index
    %94 = vector.load %arg11[%c0_35, %c0_36] : memref<1x128xf32, #tpu.memory_space<vmem>>, vector<1x128xf32>
    %95 = vector.broadcast %94 : vector<1x128xf32> to vector<8x128xf32>
    %96 = arith.mulf %93, %95 : vector<8x128xf32>
    %cst_37 = arith.constant dense<0.000000e+00> : vector<8xf32>
    %97 = vector.multi_reduction <add>, %96, %cst_37 [1] : vector<8x128xf32> to vector<8xf32>
    %98 = vector.shape_cast %97 : vector<8xf32> to vector<8x1xf32>
    %c0_38 = arith.constant 0 : index
    %c0_39 = arith.constant 0 : index
    %99 = vector.load %arg12[%c0_38, %c0_39] : memref<1x1xf32, #tpu.memory_space<vmem>>, vector<1x1xf32>
    %100 = vector.broadcast %99 : vector<1x1xf32> to vector<8x1xf32>
    %101 = arith.addf %98, %100 : vector<8x1xf32>
    %102 = tpu.iota {dimensions = array<i32: 1>} : vector<8x128xi32>
    %c16_i32_40 = arith.constant 16 : i32
    %103 = vector.broadcast %c16_i32_40 : i32 to vector<8x128xi32>
    %104 = arith.cmpi eq, %102, %103 : vector<8x128xi32>
    %105 = vector.shape_cast %101 : vector<8x1xf32> to vector<8x1xf32>
    %106 = vector.broadcast %105 : vector<8x1xf32> to vector<8x128xf32>
    %107 = arith.select %104, %106, %84 : vector<8x128xi1>, vector<8x128xf32>
    %c0_41 = arith.constant 0 : index
    %c0_42 = arith.constant 0 : index
    %108 = vector.load %arg13[%c0_41, %c0_42] : memref<8x128xf32, #tpu.memory_space<vmem>>, vector<8x128xf32>
    tpu.vector_store %arg13[%c0_41, %c0_42], %107 {strides = array<i32>} : memref<8x128xf32, #tpu.memory_space<vmem>>, vector<8x128xf32>,
    return
  }
  func.func @transform_0(%arg0: i32) -> (i32, i32) {
    %c0_i32 = arith.constant 0 : i32
    %c0_i32_0 = arith.constant 0 : i32
    return %arg0, %c0_i32 : i32, i32
  }
  func.func @transform_1(%arg0: i32) -> (i32, i32) {
    %c0_i32 = arith.constant 0 : i32
    %c0_i32_0 = arith.constant 0 : i32
    %c0_i32_1 = arith.constant 0 : i32
    return %c0_i32, %c0_i32_0 : i32, i32
  }
  func.func @transform_2(%arg0: i32) -> (i32, i32) {
    %c0_i32 = arith.constant 0 : i32
    %c0_i32_0 = arith.constant 0 : i32
    %c0_i32_1 = arith.constant 0 : i32
    return %c0_i32, %c0_i32_0 : i32, i32
  }
  func.func @transform_3(%arg0: i32) -> (i32, i32) {
    %c0_i32 = arith.constant 0 : i32
    %c0_i32_0 = arith.constant 0 : i32
    %c0_i32_1 = arith.constant 0 : i32
    return %c0_i32, %c0_i32_0 : i32, i32
  }
  func.func @transform_4(%arg0: i32) -> (i32, i32) {
    %c0_i32 = arith.constant 0 : i32
    %c0_i32_0 = arith.constant 0 : i32
    %c0_i32_1 = arith.constant 0 : i32
    return %c0_i32, %c0_i32_0 : i32, i32
  }
  func.func @transform_5(%arg0: i32) -> (i32, i32) {
    %c0_i32 = arith.constant 0 : i32
    %c0_i32_0 = arith.constant 0 : i32
    %c0_i32_1 = arith.constant 0 : i32
    return %c0_i32, %c0_i32_0 : i32, i32
  }
  func.func @transform_6(%arg0: i32) -> (i32, i32) {
    %c0_i32 = arith.constant 0 : i32
    %c0_i32_0 = arith.constant 0 : i32
    %c0_i32_1 = arith.constant 0 : i32
    return %c0_i32, %c0_i32_0 : i32, i32
  }
  func.func @transform_7(%arg0: i32) -> (i32, i32) {
    %c0_i32 = arith.constant 0 : i32
    %c0_i32_0 = arith.constant 0 : i32
    %c0_i32_1 = arith.constant 0 : i32
    return %c0_i32, %c0_i32_0 : i32, i32
  }
  func.func @transform_8(%arg0: i32) -> (i32, i32) {
    %c0_i32 = arith.constant 0 : i32
    %c0_i32_0 = arith.constant 0 : i32
    %c0_i32_1 = arith.constant 0 : i32
    return %c0_i32, %c0_i32_0 : i32, i32
  }
  func.func @transform_9(%arg0: i32) -> (i32, i32) {
    %c0_i32 = arith.constant 0 : i32
    %c0_i32_0 = arith.constant 0 : i32
    %c0_i32_1 = arith.constant 0 : i32
    return %c0_i32, %c0_i32_0 : i32, i32
  }
  func.func @transform_10(%arg0: i32) -> (i32, i32) {
    %c0_i32 = arith.constant 0 : i32
    %c0_i32_0 = arith.constant 0 : i32
    %c0_i32_1 = arith.constant 0 : i32
    return %c0_i32, %c0_i32_0 : i32, i32
  }
  func.func @transform_11(%arg0: i32) -> (i32, i32) {
    %c0_i32 = arith.constant 0 : i32
    %c0_i32_0 = arith.constant 0 : i32
    %c0_i32_1 = arith.constant 0 : i32
    return %c0_i32, %c0_i32_0 : i32, i32
  }
  func.func @transform_12(%arg0: i32) -> (i32, i32) {
    %c0_i32 = arith.constant 0 : i32
    %c0_i32_0 = arith.constant 0 : i32
    return %arg0, %c0_i32 : i32, i32
  }
}

</mosaic_0001>

<llo_original>
// kernel: tpu_custom_call.1
$region0: #{tpu_custom_call.1}
  #allocation0 [shape = 'u32[]', space=smem, size = 0x4, offset = 0x4, fixed_abs, tag = 'smem constant byte address 0x4 - core index']
  #allocation1 [shape = 'u32[144,128]{1,0:T(1,128)}', space=vmem, size = 0x12000, scoped, tag = 'internal scratch']
  #allocation2 [shape = 'f32[1,1]{1,0:T(1,128)S(1)}', space=vmem, size = 0x200, scoped, tag = 'scoped memory for tpu_custom_call.1']
  %s0 = inlined_call_operand.hbm [shape: f32[8,8], index: 0, kind: input, shape index: {}]
  %s1 = inlined_call_operand.hbm [shape: f32[4,128], index: 1, kind: input, shape index: {}]
  %s2 = inlined_call_operand.vmem [shape: f32[8,128], index: 2, kind: input, shape index: {}]
  %s3 = inlined_call_operand.hbm [shape: f32[8,128], index: 3, kind: input, shape index: {}]
  %s4 = inlined_call_operand.hbm [shape: f32[128,128], index: 4, kind: input, shape index: {}]
  %s5 = inlined_call_operand.hbm [shape: f32[1,128], index: 5, kind: input, shape index: {}]
  %s6 = inlined_call_operand.vmem [shape: f32[8,128], index: 6, kind: input, shape index: {}]
  %s7 = inlined_call_operand.vmem [shape: f32[8,128], index: 7, kind: input, shape index: {}]
  %s8 = inlined_call_operand.hbm [shape: f32[128,256], index: 8, kind: input, shape index: {}]
  %s9 = inlined_call_operand.vmem [shape: f32[1,256], index: 9, kind: input, shape index: {}]
  %s10 = inlined_call_operand.vmem [shape: f32[1,128], index: 10, kind: input, shape index: {}]
  %s11 = inlined_call_operand.<no memory space> [shape: f32[1,1], index: 11, kind: input, shape index: {}]
  %s12 = inlined_call_operand.hbm [shape: f32[8,128], index: 12, kind: output, shape index: {}]
  %s13 = sld [smem:[#allocation0]]
  $region82: #{tpu_custom_call.1} parent=0
    _
  %s15 = ssub.s32 1, %s13
  %s16 = scalar_select 0, %s15, %s13
  %v17 = vstv %s11
  %18 = vst [vmem:[#allocation2] sm:$0x1] %v17
  $region1: #{tpu_custom_call.1} parent=0
    #allocation3 [shape = 'u8[4096]{0}', space=vmem, size = 0x1000, scoped, tag = 'input window, operand 0, single buffered']
    #allocation4 [shape = 's32[1]{0}', space=sflag, size = 0x4, scoped, tag = 'scoped memory for tpu_custom_call.1']
    #allocation5 [shape = 's32[1]{0}', space=sflag, size = 0x4, scoped, tag = 'scoped memory for tpu_custom_call.1']
    #allocation6 [shape = 'u8[2048]{0}', space=vmem, size = 0x800, scoped, tag = 'input window, operand 1, single buffered']
    #allocation7 [shape = 's32[1]{0}', space=sflag, size = 0x4, scoped, tag = 'scoped memory for tpu_custom_call.1']
    #allocation8 [shape = 'u8[4096]{0}', space=vmem, size = 0x1000, scoped, tag = 'input window, operand 3, single buffered']
    #allocation9 [shape = 'u8[65536]{0}', space=vmem, size = 0x10000, scoped, tag = 'input window, operand 4, single buffered']
    #allocation10 [shape = 's32[1]{0}', space=sflag, size = 0x4, scoped, tag = 'scoped memory for tpu_custom_call.1']
    #allocation11 [shape = 'u8[512]{0}', space=vmem, size = 0x400, scoped, tag = 'input window, operand 5, single buffered']
    #allocation12 [shape = 'u8[131072]{0}', space=vmem, size = 0x20000, scoped, tag = 'input window, operand 8, single buffered']
    #allocation13 [shape = 's32[1]{0}', space=sflag, size = 0x4, scoped, tag = 'scoped memory for tpu_custom_call.1']
    #allocation14 [shape = 'u8[4096]{0}', space=vmem, size = 0x1000, scoped, tag = 'output window, operand 0, single buffered']
    %19 = vsyncpa [#allocation4], 0
    %20 = vsyncpa [#allocation7], 0
    %21 = vsyncpa [#allocation10], 0
    %22 = vsyncpa [#allocation13], 0
    %23 = vsyncpa [#allocation5], 0
    // Predicated region
    $region2: #{tpu_custom_call.1} parent=1 // pred_check
      _
    $region3: #{tpu_custom_call.1} parent=1 // pred_check_branch
      %25 = sbr.rel (0) target = $region5
    $region4: #{tpu_custom_call.1} parent=1 // pred_region
      %s27 = ssub.s32 128, 128
      %28 = vsyncadd [#allocation4], %s27
      %s30 = sshll.u32 [#allocation3], 4
      %s31 = int_to_ptr.vmem [resolvable:$true] %s30
      %33 = dma.hbm_to_vmem [thread:$0]  %s0, 128, %s31, [#allocation4]
    $region5: #{tpu_custom_call.1} parent=1 // pred_fallthru
      _
    // Predicated region
    $region6: #{tpu_custom_call.1} parent=1 // pred_check
      _
    $region7: #{tpu_custom_call.1} parent=1 // pred_check_branch
      %35 = sbr.rel (0) target = $region9
    $region8: #{tpu_custom_call.1} parent=1 // pred_region
      %s37 = ssub.s32 64, 64
      %38 = vsyncadd [#allocation7], %s37
      %s40 = sshll.u32 [#allocation6], 4
      %s41 = int_to_ptr.vmem [resolvable:$true] %s40
      %43 = dma.hbm_to_vmem [thread:$0]  %s1, 64, %s41, [#allocation7]
    $region9: #{tpu_custom_call.1} parent=1 // pred_fallthru
      _
    // Predicated region
    $region10: #{tpu_custom_call.1} parent=1 // pred_check
      _
    $region11: #{tpu_custom_call.1} parent=1 // pred_check_branch
      %45 = sbr.rel (0) target = $region13
    $region12: #{tpu_custom_call.1} parent=1 // pred_region
      _
    $region13: #{tpu_custom_call.1} parent=1 // pred_fallthru
      _
    // Predicated region
    $region14: #{tpu_custom_call.1} parent=1 // pred_check
      _
    $region15: #{tpu_custom_call.1} parent=1 // pred_check_branch
      %47 = sbr.rel (0) target = $region17
    $region16: #{tpu_custom_call.1} parent=1 // pred_region
      %s49 = ssub.s32 128, 128
      %50 = vsyncadd [#allocation7], %s49
      %s52 = sshll.u32 [#allocation8], 4
      %s53 = int_to_ptr.vmem [resolvable:$true] %s52
      %55 = dma.hbm_to_vmem [thread:$0]  %s3, 128, %s53, [#allocation7]
    $region17: #{tpu_custom_call.1} parent=1 // pred_fallthru
      _
    // Predicated region
    $region18: #{tpu_custom_call.1} parent=1 // pred_check
      _
    $region19: #{tpu_custom_call.1} parent=1 // pred_check_branch
      %57 = sbr.rel (0) target = $region21
    $region20: #{tpu_custom_call.1} parent=1 // pred_region
      %s59 = ssub.s32 2048, 2048
      %60 = vsyncadd [#allocation10], %s59
      %s61 = sshll.u32 [#allocation9], 4
      %s62 = int_to_ptr.vmem [resolvable:$true] %s61
      %67 = dma.hbm_to_vmem [thread:$0]  %s4, 2048, %s62, [#allocation10], 128, 128, 8
    $region21: #{tpu_custom_call.1} parent=1 // pred_fallthru
      _
    // Predicated region
    $region22: #{tpu_custom_call.1} parent=1 // pred_check
      _
    $region23: #{tpu_custom_call.1} parent=1 // pred_check_branch
      %69 = sbr.rel (0) target = $region25
    $region24: #{tpu_custom_call.1} parent=1 // pred_region
      %s71 = ssub.s32 16, 16
      %72 = vsyncadd [#allocation10], %s71
      %s74 = sshll.u32 [#allocation11], 4
      %s75 = int_to_ptr.vmem [resolvable:$true] %s74
      %77 = dma.hbm_to_vmem [thread:$0]  %s5, 16, %s75, [#allocation10]
    $region25: #{tpu_custom_call.1} parent=1 // pred_fallthru
      _
    // Predicated region
    $region26: #{tpu_custom_call.1} parent=1 // pred_check
      _
    $region27: #{tpu_custom_call.1} parent=1 // pred_check_branch
      %79 = sbr.rel (0) target = $region29
    $region28: #{tpu_custom_call.1} parent=1 // pred_region
      _
    $region29: #{tpu_custom_call.1} parent=1 // pred_fallthru
      _
    // Predicated region
    $region30: #{tpu_custom_call.1} parent=1 // pred_check
      _
    $region31: #{tpu_custom_call.1} parent=1 // pred_check_branch
      %81 = sbr.rel (0) target = $region33
    $region32: #{tpu_custom_call.1} parent=1 // pred_region
      _
    $region33: #{tpu_custom_call.1} parent=1 // pred_fallthru
      _
    // Predicated region
    $region34: #{tpu_custom_call.1} parent=1 // pred_check
      _
    $region35: #{tpu_custom_call.1} parent=1 // pred_check_branch
      %83 = sbr.rel (0) target = $region37
    $region36: #{tpu_custom_call.1} parent=1 // pred_region
      %s85 = ssub.s32 4096, 4096
      %86 = vsyncadd [#allocation13], %s85
      %s87 = sshll.u32 [#allocation12], 4
      %s88 = int_to_ptr.vmem [resolvable:$true] %s87
      %93 = dma.hbm_to_vmem [thread:$0]  %s8, 4096, %s88, [#allocation13], 256, 256, 16
    $region37: #{tpu_custom_call.1} parent=1 // pred_fallthru
      _
    // Predicated region
    $region38: #{tpu_custom_call.1} parent=1 // pred_check
      _
    $region39: #{tpu_custom_call.1} parent=1 // pred_check_branch
      %95 = sbr.rel (0) target = $region41
    $region40: #{tpu_custom_call.1} parent=1 // pred_region
      _
    $region41: #{tpu_custom_call.1} parent=1 // pred_fallthru
      _
    // Predicated region
    $region42: #{tpu_custom_call.1} parent=1 // pred_check
      _
    $region43: #{tpu_custom_call.1} parent=1 // pred_check_branch
      %97 = sbr.rel (0) target = $region45
    $region44: #{tpu_custom_call.1} parent=1 // pred_region
      _
    $region45: #{tpu_custom_call.1} parent=1 // pred_fallthru
      _
    // Predicated region
    $region46: #{tpu_custom_call.1} parent=1 // pred_check
      _
    $region47: #{tpu_custom_call.1} parent=1 // pred_check_branch
      %99 = sbr.rel (0) target = $region49
    $region48: #{tpu_custom_call.1} parent=1 // pred_region
      _
    $region49: #{tpu_custom_call.1} parent=1 // pred_fallthru
      _
    // Predicated region
    $region50: #{tpu_custom_call.1} parent=1 // pred_check
      _
    $region51: #{tpu_custom_call.1} parent=1 // pred_check_branch
      %101 = sbr.rel (0) target = $region53
    $region52: #{tpu_custom_call.1} parent=1 // pred_region
      %102 = dma.done [#allocation4], 128
    $region53: #{tpu_custom_call.1} parent=1 // pred_fallthru
      _
    // Predicated region
    $region54: #{tpu_custom_call.1} parent=1 // pred_check
      _
    $region55: #{tpu_custom_call.1} parent=1 // pred_check_branch
      %104 = sbr.rel (0) target = $region57
    $region56: #{tpu_custom_call.1} parent=1 // pred_region
      %105 = dma.done [#allocation7], 64
    $region57: #{tpu_custom_call.1} parent=1 // pred_fallthru
      _
    // Predicated region
    $region58: #{tpu_custom_call.1} parent=1 // pred_check
      _
    $region59: #{tpu_custom_call.1} parent=1 // pred_check_branch
      %107 = sbr.rel (0) target = $region61
    $region60: #{tpu_custom_call.1} parent=1 // pred_region
      %108 = dma.done [#allocation7], 128
    $region61: #{tpu_custom_call.1} parent=1 // pred_fallthru
      _
    // Predicated region
    $region62: #{tpu_custom_call.1} parent=1 // pred_check
      _
    $region63: #{tpu_custom_call.1} parent=1 // pred_check_branch
      %110 = sbr.rel (0) target = $region65
    $region64: #{tpu_custom_call.1} parent=1 // pred_region
      %111 = dma.done [#allocation10], 2048
    $region65: #{tpu_custom_call.1} parent=1 // pred_fallthru
      _
    // Predicated region
    $region66: #{tpu_custom_call.1} parent=1 // pred_check
      _
    $region67: #{tpu_custom_call.1} parent=1 // pred_check_branch
      %113 = sbr.rel (0) target = $region69
    $region68: #{tpu_custom_call.1} parent=1 // pred_region
      %114 = dma.done [#allocation10], 16
    $region69: #{tpu_custom_call.1} parent=1 // pred_fallthru
      _
    // Predicated region
    $region70: #{tpu_custom_call.1} parent=1 // pred_check
      _
    $region71: #{tpu_custom_call.1} parent=1 // pred_check_branch
      %116 = sbr.rel (0) target = $region73
    $region72: #{tpu_custom_call.1} parent=1 // pred_region
      %117 = dma.done [#allocation13], 4096
    $region73: #{tpu_custom_call.1} parent=1 // pred_fallthru
      _
    %v118 = vld [vmem:[#allocation3] sm:$0xff]
    %v119 = vcvt.f32.s32.to.zero.pseudo %v118
    %v120 = vld [vmem:[#allocation6] sm:$0xf]
    %122 = vset.pattern.permute.xlu0 0
    %123 = vperm.xlu0 %122, %v118
    %v124 = vpop.permute.xlu0 %123
    %v126 = vlaneseq
    %v127 = vshrl.u32 %v126, 7
    %v128 = vsub.s32 0, %v127
    %v129 = vrot.slane %v120, %v128
    %v130 = vmul.f32 %v124, %v129
    %131 = vset.pattern.permute.xlu0 1
    %132 = vperm.xlu0 %131, %v118
    %v133 = vpop.permute.xlu0 %132
    %v135 = vlaneseq
    %v136 = vshrl.u32 %v135, 7
    %v137 = vsub.s32 1, %v136
    %v138 = vrot.slane %v120, %v137
    %v139 = vmul.f32 %v133, %v138
    %v140 = vadd.f32 %v130, %v139
    %141 = vset.pattern.permute.xlu0 2
    %142 = vperm.xlu0 %141, %v118
    %v143 = vpop.permute.xlu0 %142
    %v145 = vlaneseq
    %v146 = vshrl.u32 %v145, 7
    %v147 = vsub.s32 2, %v146
    %v148 = vrot.slane %v120, %v147
    %v149 = vmul.f32 %v143, %v148
    %v150 = vadd.f32 %v140, %v149
    %151 = vset.pattern.permute.xlu0 3
    %152 = vperm.xlu0 %151, %v118
    %v153 = vpop.permute.xlu0 %152
    %v155 = vlaneseq
    %v156 = vshrl.u32 %v155, 7
    %v157 = vsub.s32 3, %v156
    %v158 = vrot.slane %v120, %v157
    %v159 = vmul.f32 %v153, %v158
    %v160 = vadd.f32 %v150, %v159
    %v161 = vlaneseq
    %v162 = vand.u32 %v161, 127
    %vm163 = vcmp.lt.s32.totalorder %v162, 16
    %v164 = vand.u32 2147483647, %v160
    %vm165 = vcmp.le.f32.partialorder %v164, 0.7853982
    %vm166 = vcmp.lt.s32.totalorder %v160, 0
    %v167 = vand.u32 %v160, 2139095040
    %v168 = vshrl.u32 %v167, 23
    %v169 = vsub.s32 %v168, 127
    %v170 = vand.u32 2147483647, %v160
    %v171 = vand.u32 %v170, 8388607
    %v172 = vor.u32 %v171, 8388608
    %v173 = vsub.s32 0, %v172
    %v174 = vadd.s32 %v169, 1
    %vm175 = vcmp.gt.s32.totalorder %v174, 0
    %v176 = vsel %vm175, %v174, 0
    %v177 = vshrl.u32 %v176, 5
    %v178 = vand.u32 %v176, 31
    %v179 = vsub.s32 32, %v178
    %v180 = vshrl.u32 683565275, %v179
    %v181 = vshll.u32 683565275, %v178
    %v182 = vshrl.u32 2475754826, %v179
    %v183 = vor.u32 %v181, %v182
    %v184 = vshll.u32 2475754826, %v178
    %v185 = vshrl.u32 2131351028, %v179
    %v186 = vor.u32 %v184, %v185
    %v187 = vshll.u32 2131351028, %v178
    %v188 = vshrl.u32 2102212464, %v179
    %v189 = vor.u32 %v187, %v188
    %v190 = vshll.u32 2102212464, %v178
    %v191 = vshrl.u32 920167782, %v179
    %v192 = vor.u32 %v190, %v191
    %v193 = vshll.u32 920167782, %v178
    %v194 = vshrl.u32 1326507024, %v179
    %v195 = vor.u32 %v193, %v194
    %vm196 = vcmp.lt.s32.totalorder %v177, 1
    %vm197 = vcmp.lt.s32.totalorder %v177, 2
    %vm198 = vcmp.lt.s32.totalorder %v177, 3
    %vm199 = vcmp.lt.s32.totalorder %v177, 4
    %v200 = vsel %vm196, %v180, %v183
    %v201 = vsel %vm199, %v189, 2102212464
    %v202 = vsel %vm198, %v186, %v201
    %v203 = vsel %vm197, %v200, %v202
    %v204 = vsel %vm196, %v183, %v186
    %v205 = vsel %vm199, %v192, 920167782
    %v206 = vsel %vm198, %v189, %v205
    %v207 = vsel %vm197, %v204, %v206
    %v208 = vsel %vm196, %v186, %v189
    %v209 = vsel %vm199, %v195, 1326507024
    %v210 = vsel %vm198, %v192, %v209
    %v211 = vsel %vm197, %v208, %v210
    %v212 = vshll.u32 %v172, 8
    %v213 = vmul.u32.u64.compose %v212, %v211
    %v214 = vextract.low.u32 %v213
    %v215 = vextract.high.u32 %v213
    %v216 = vmul.u32.u64.compose %v212, %v207
    %v217 = vextract.low.u32 %v216
    %v218 = vextract.high.u32 %v216
    %v219 = vmul.u32 %v212, %v203
    %v220 = vadd.s32 %v215, %v217
    %vm221 = vc.u32 %v215, %v217
    %v222 = vadd.s32 %v218, 1
    %v223 = vsel %vm221, %v222, %v218
    %v224 = vadd.s32 %v219, %v223
    %v225 = vadd.s32 %v224, 536870912
    %v226 = vshrl.u32 %v225, 30
    %v227 = vshll.u32 %v226, 30
    %v228 = vsub.s32 %v224, %v227
    %vm229 = vcmp.lt.s32.totalorder %v228, 0
    %v230 = vsub.s32 0, %v228
    %v231 = vsel %vm229, %v230, %v228
    %v232 = vclz %v231
    %v233 = vsub.s32 %v232, 2
    %vm234 = vcmp.gt.s32.totalorder 0, %v233
    %v235 = vsel %vm234, 0, %v233
    %v236 = vsub.s32 32, %v235
    %v237 = vshll.u32 %v228, %v235
    %v238 = vshrl.u32 %v220, %v236
    %v239 = vor.u32 %v237, %v238
    %v240 = vsub.s32 4294967266, %v235
    %v241 = vadd.s32 %v240, 127
    %v242 = vshll.u32 %v241, 23
    %v243 = vor.u32 4788187, %v242
    %v244 = vand.u32 2147483647, %v243
    %v246 = vcvt.s32.f32 %v239
    %v247 = vmul.f32 %v246, %v244
    %v248 = vxor.u32 %v247, 2147483648
    %v249 = vsel %vm166, %v248, %v247
    %v250 = vsub.s32 4, %v226
    %v251 = vsel %vm166, %v250, %v226
    %v252 = vsel %vm165, %v160, %v249
    %v253 = vsel %vm165, 0, %v251
    %v254 = vcosq.f32.pop %v252
    %v255 = vsinq.f32.pop %v252
    %vm256 = vweird.f32 %v160
    %v257 = vadd.s32 %v253, 3
    %v258 = vand.u32 %v257, 3
    %vm259 = vcmp.lt.s32.totalorder %v258, 2
    %vm260 = vcmp.eq.s32.totalorder %v258, 0
    %v261 = vxor.u32 %v255, 2147483648
    %v262 = vsel %vm260, %v254, %v261
    %vm263 = vcmp.eq.s32.totalorder %v258, 2
    %v264 = vxor.u32 %v254, 2147483648
    %v265 = vsel %vm263, %v264, %v255
    %v266 = vsel %vm259, %v262, %v265
    %v267 = vsel %vm256, nan, %v266
    %vm268 = vcmp.lt.s32.totalorder %v162, 32
    %v269 = vand.u32 2147483647, %v160
    %vm270 = vcmp.le.f32.partialorder %v269, 0.7853982
    %vm271 = vcmp.lt.s32.totalorder %v160, 0
    %v272 = vand.u32 %v160, 2139095040
    %v273 = vshrl.u32 %v272, 23
    %v274 = vsub.s32 %v273, 127
    %v275 = vand.u32 2147483647, %v160
    %v276 = vand.u32 %v275, 8388607
    %v277 = vor.u32 %v276, 8388608
    %v278 = vsub.s32 0, %v277
    %v279 = vadd.s32 %v274, 1
    %vm280 = vcmp.gt.s32.totalorder %v279, 0
    %v281 = vsel %vm280, %v279, 0
    %v282 = vshrl.u32 %v281, 5
    %v283 = vand.u32 %v281, 31
    %v284 = vsub.s32 32, %v283
    %v285 = vshrl.u32 683565275, %v284
    %v286 = vshll.u32 683565275, %v283
    %v287 = vshrl.u32 2475754826, %v284
    %v288 = vor.u32 %v286, %v287
    %v289 = vshll.u32 2475754826, %v283
    %v290 = vshrl.u32 2131351028, %v284
    %v291 = vor.u32 %v289, %v290
    %v292 = vshll.u32 2131351028, %v283
    %v293 = vshrl.u32 2102212464, %v284
    %v294 = vor.u32 %v292, %v293
    %v295 = vshll.u32 2102212464, %v283
    %v296 = vshrl.u32 920167782, %v284
    %v297 = vor.u32 %v295, %v296
    %v298 = vshll.u32 920167782, %v283
    %v299 = vshrl.u32 1326507024, %v284
    %v300 = vor.u32 %v298, %v299
    %vm301 = vcmp.lt.s32.totalorder %v282, 1
    %vm302 = vcmp.lt.s32.totalorder %v282, 2
    %vm303 = vcmp.lt.s32.totalorder %v282, 3
    %vm304 = vcmp.lt.s32.totalorder %v282, 4
    %v305 = vsel %vm301, %v285, %v288
    %v306 = vsel %vm304, %v294, 2102212464
    %v307 = vsel %vm303, %v291, %v306
    %v308 = vsel %vm302, %v305, %v307
    %v309 = vsel %vm301, %v288, %v291
    %v310 = vsel %vm304, %v297, 920167782
    %v311 = vsel %vm303, %v294, %v310
    %v312 = vsel %vm302, %v309, %v311
    %v313 = vsel %vm301, %v291, %v294
    %v314 = vsel %vm304, %v300, 1326507024
    %v315 = vsel %vm303, %v297, %v314
    %v316 = vsel %vm302, %v313, %v315
    %v317 = vshll.u32 %v277, 8
    %v318 = vmul.u32.u64.compose %v317, %v316
    %v319 = vextract.low.u32 %v318
    %v320 = vextract.high.u32 %v318
    %v321 = vmul.u32.u64.compose %v317, %v312
    %v322 = vextract.low.u32 %v321
    %v323 = vextract.high.u32 %v321
    %v324 = vmul.u32 %v317, %v308
    %v325 = vadd.s32 %v320, %v322
    %vm326 = vc.u32 %v320, %v322
    %v327 = vadd.s32 %v323, 1
    %v328 = vsel %vm326, %v327, %v323
    %v329 = vadd.s32 %v324, %v328
    %v330 = vadd.s32 %v329, 536870912
    %v331 = vshrl.u32 %v330, 30
    %v332 = vshll.u32 %v331, 30
    %v333 = vsub.s32 %v329, %v332
    %vm334 = vcmp.lt.s32.totalorder %v333, 0
    %v335 = vsub.s32 0, %v333
    %v336 = vsel %vm334, %v335, %v333
    %v337 = vclz %v336
    %v338 = vsub.s32 %v337, 2
    %vm339 = vcmp.gt.s32.totalorder 0, %v338
    %v340 = vsel %vm339, 0, %v338
    %v341 = vsub.s32 32, %v340
    %v342 = vshll.u32 %v333, %v340
    %v343 = vshrl.u32 %v325, %v341
    %v344 = vor.u32 %v342, %v343
    %v345 = vsub.s32 4294967266, %v340
    %v346 = vadd.s32 %v345, 127
    %v347 = vshll.u32 %v346, 23
    %v348 = vor.u32 4788187, %v347
    %v349 = vand.u32 2147483647, %v348
    %v351 = vcvt.s32.f32 %v344
    %v352 = vmul.f32 %v351, %v349
    %v353 = vxor.u32 %v352, 2147483648
    %v354 = vsel %vm271, %v353, %v352
    %v355 = vsub.s32 4, %v331
    %v356 = vsel %vm271, %v355, %v331
    %v357 = vsel %vm270, %v160, %v354
    %v358 = vsel %vm270, 0, %v356
    %v359 = vcosq.f32.pop %v357
    %v360 = vsinq.f32.pop %v357
    %vm361 = vweird.f32 %v160
    %v362 = vand.u32 %v358, 3
    %vm363 = vcmp.lt.s32.totalorder %v362, 2
    %vm364 = vcmp.eq.s32.totalorder %v362, 0
    %v365 = vxor.u32 %v360, 2147483648
    %v366 = vsel %vm364, %v359, %v365
    %vm367 = vcmp.eq.s32.totalorder %v362, 2
    %v368 = vxor.u32 %v359, 2147483648
    %v369 = vsel %vm367, %v368, %v360
    %v370 = vsel %vm363, %v366, %v369
    %v371 = vsel %vm361, nan, %v370
    %v372 = vsel %vm268, %v371, 0.0
    %v373 = vsel %vm163, %v267, %v372
    %374 = vset.pattern.permute.xlu0 4
    %375 = vperm.xlu0 %374, %v119
    %v376 = vpop.permute.xlu0 %375
    %vm377 = vcmp.eq.s32.totalorder %v162, %v376
    %v378 = vsel %vm377, 1, 0
    %v379 = vcvt.s32.f32 %v378
    %v380 = vld [vmem:[%s2] sm:$0xff]
    %vm381 = vcmask 64512
    %v383 = vsel %vm381, %v379, 0
    %385 = vmatprep.subr.mxu0 0.0
    %v386 = vand.u32 %v380, 4294901760
    %387 = vmatpush1.msra.mxu0 %v386
    %388 = vmatprep.subr.mxu0 0.0
    %389 = vmatpush1.msra.mxu0 0.0
    %390 = vmatprep.subr.mxu0 0.0
    %391 = vmatpush1.msra.mxu0 0.0
    %392 = vmatprep.subr.mxu0 0.0
    %393 = vmatpush1.msra.mxu0 0.0
    %394 = vmatprep.subr.mxu0 0.0
    %395 = vmatpush1.msra.mxu0 0.0
    %396 = vmatprep.subr.mxu0 0.0
    %397 = vmatpush1.msra.mxu0 0.0
    %398 = vmatprep.subr.mxu0 0.0
    %399 = vmatpush1.msra.mxu0 0.0
    %400 = vmatprep.subr.mxu0 0.0
    %401 = vmatpush1.msra.mxu0 0.0
    %402 = vmatprep.subr.mxu0 0.0
    %403 = vmatpush1.msra.mxu0 0.0
    %404 = vmatprep.subr.mxu0 0.0
    %405 = vmatpush1.msra.mxu0 0.0
    %406 = vmatprep.subr.mxu0 0.0
    %407 = vmatpush1.msra.mxu0 0.0
    %408 = vmatprep.subr.mxu0 0.0
    %409 = vmatpush1.msra.mxu0 0.0
    %410 = vmatprep.subr.mxu0 0.0
    %411 = vmatpush1.msra.mxu0 0.0
    %412 = vmatprep.subr.mxu0 0.0
    %413 = vmatpush1.msra.mxu0 0.0
    %414 = vmatprep.subr.mxu0 0.0
    %415 = vmatpush1.msra.mxu0 0.0
    %416 = vmatprep.subr.mxu0 0.0
    %417 = vmatpush1.msra.mxu0 0.0
    %418 = vmatprep.subr.mxu0 0.0
    %419 = vmatpush1.msra.mxu0 0.0
    %420 = vmatprep.subr.mxu0 0.0
    %421 = vmatpush1.msra.mxu0 0.0
    %422 = vmatprep.subr.mxu0 0.0
    %423 = vmatpush1.msra.mxu0 0.0
    %424 = vmatprep.subr.mxu0 0.0
    %425 = vmatpush1.msra.mxu0 0.0
    %426 = vmatprep.subr.mxu0 0.0
    %427 = vmatpush1.msra.mxu0 0.0
    %428 = vmatprep.subr.mxu0 0.0
    %429 = vmatpush1.msra.mxu0 0.0
    %430 = vmatprep.subr.mxu0 0.0
    %431 = vmatpush1.msra.mxu0 0.0
    %432 = vmatprep.subr.mxu0 0.0
    %433 = vmatpush1.msra.mxu0 0.0
    %434 = vmatprep.subr.mxu0 0.0
    %435 = vmatpush1.msra.mxu0 0.0
    %436 = vmatprep.subr.mxu0 0.0
    %437 = vmatpush1.msra.mxu0 0.0
    %438 = vmatprep.subr.mxu0 0.0
    %439 = vmatpush1.msra.mxu0 0.0
    %440 = vmatprep.subr.mxu0 0.0
    %441 = vmatpush1.msra.mxu0 0.0
    %442 = vmatprep.subr.mxu0 0.0
    %443 = vmatpush1.msra.mxu0 0.0
    %444 = vmatprep.subr.mxu0 0.0
    %445 = vmatpush1.msra.mxu0 0.0
    %446 = vmatprep.subr.mxu0 0.0
    %447 = vmatpush1.msra.mxu0 0.0
    %448 = vmatprep.subr.mxu0 0.0
    %449 = vmatpush1.msra.mxu0 0.0
    %450 = vmatprep.mubr.f32.mxu0 0.0
    %v451 = vand.u32 %v383, 4294901760
    %v452 = vsub.f32 %v383, %v451
    %v453 = vand.u32 %v452, 4294901760
    %v454 = vsub.f32 %v452, %v453
    %v455 = vand.u32 %v454, 4294901760
    %456 = vmatmul.mubr.f32.gmra.mrb[0].mxu0 %v455
    %v457 = vpop.f32.mrb[0].mxu0
    %v458 = vadd.f32 0.0, %v457
    %v459 = vpop.f32.mrb[0].mxu0
    %460 = vdwg.mxu0
    %461 = vmatprep.subr.mxu0 0.0
    %v462 = vand.u32 %v380, 4294901760
    %v463 = vsub.f32 %v380, %v462
    %v464 = vand.u32 %v463, 4294901760
    %v465 = vsub.f32 %v463, %v464
    %v466 = vand.u32 %v465, 4294901760
    %467 = vmatpush1.msra.mxu0 %v466
    %468 = vmatprep.subr.mxu0 0.0
    %469 = vmatpush1.msra.mxu0 0.0
    %470 = vmatprep.subr.mxu0 0.0
    %471 = vmatpush1.msra.mxu0 0.0
    %472 = vmatprep.subr.mxu0 0.0
    %473 = vmatpush1.msra.mxu0 0.0
    %474 = vmatprep.subr.mxu0 0.0
    %475 = vmatpush1.msra.mxu0 0.0
    %476 = vmatprep.subr.mxu0 0.0
    %477 = vmatpush1.msra.mxu0 0.0
    %478 = vmatprep.subr.mxu0 0.0
    %479 = vmatpush1.msra.mxu0 0.0
    %480 = vmatprep.subr.mxu0 0.0
    %481 = vmatpush1.msra.mxu0 0.0
    %482 = vmatprep.subr.mxu0 0.0
    %483 = vmatpush1.msra.mxu0 0.0
    %484 = vmatprep.subr.mxu0 0.0
    %485 = vmatpush1.msra.mxu0 0.0
    %486 = vmatprep.subr.mxu0 0.0
    %487 = vmatpush1.msra.mxu0 0.0
    %488 = vmatprep.subr.mxu0 0.0
    %489 = vmatpush1.msra.mxu0 0.0
    %490 = vmatprep.subr.mxu0 0.0
    %491 = vmatpush1.msra.mxu0 0.0
    %492 = vmatprep.subr.mxu0 0.0
    %493 = vmatpush1.msra.mxu0 0.0
    %494 = vmatprep.subr.mxu0 0.0
    %495 = vmatpush1.msra.mxu0 0.0
    %496 = vmatprep.subr.mxu0 0.0
    %497 = vmatpush1.msra.mxu0 0.0
    %498 = vmatprep.subr.mxu0 0.0
    %499 = vmatpush1.msra.mxu0 0.0
    %500 = vmatprep.subr.mxu0 0.0
    %501 = vmatpush1.msra.mxu0 0.0
    %502 = vmatprep.subr.mxu0 0.0
    %503 = vmatpush1.msra.mxu0 0.0
    %504 = vmatprep.subr.mxu0 0.0
    %505 = vmatpush1.msra.mxu0 0.0
    %506 = vmatprep.subr.mxu0 0.0
    %507 = vmatpush1.msra.mxu0 0.0
    %508 = vmatprep.subr.mxu0 0.0
    %509 = vmatpush1.msra.mxu0 0.0
    %510 = vmatprep.subr.mxu0 0.0
    %511 = vmatpush1.msra.mxu0 0.0
    %512 = vmatprep.subr.mxu0 0.0
    %513 = vmatpush1.msra.mxu0 0.0
    %514 = vmatprep.subr.mxu0 0.0
    %515 = vmatpush1.msra.mxu0 0.0
    %516 = vmatprep.subr.mxu0 0.0
    %517 = vmatpush1.msra.mxu0 0.0
    %518 = vmatprep.subr.mxu0 0.0
    %519 = vmatpush1.msra.mxu0 0.0
    %520 = vmatprep.subr.mxu0 0.0
    %521 = vmatpush1.msra.mxu0 0.0
    %522 = vmatprep.subr.mxu0 0.0
    %523 = vmatpush1.msra.mxu0 0.0
    %524 = vmatprep.subr.mxu0 0.0
    %525 = vmatpush1.msra.mxu0 0.0
    %526 = vmatprep.subr.mxu0 0.0
    %527 = vmatpush1.msra.mxu0 0.0
    %528 = vmatprep.subr.mxu0 0.0
    %529 = vmatpush1.msra.mxu0 0.0
    %530 = vmatprep.mubr.f32.mxu0 0.0
    %v531 = vand.u32 %v383, 4294901760
    %532 = vmatmul.mubr.f32.gmra.mrb[0].mxu0 %v531
    %v533 = vpop.f32.mrb[0].mxu0
    %v534 = vadd.f32 %v458, %v533
    %v535 = vpop.f32.mrb[0].mxu0
    %536 = vdwg.mxu0
    %537 = vmatprep.subr.mxu0 0.0
    %v538 = vand.u32 %v380, 4294901760
    %v539 = vsub.f32 %v380, %v538
    %540 = vmatpush1.msra.mxu0 %v539
    %541 = vmatprep.subr.mxu0 0.0
    %542 = vmatpush1.msra.mxu0 0.0
    %543 = vmatprep.subr.mxu0 0.0
    %544 = vmatpush1.msra.mxu0 0.0
    %545 = vmatprep.subr.mxu0 0.0
    %546 = vmatpush1.msra.mxu0 0.0
    %547 = vmatprep.subr.mxu0 0.0
    %548 = vmatpush1.msra.mxu0 0.0
    %549 = vmatprep.subr.mxu0 0.0
    %550 = vmatpush1.msra.mxu0 0.0
    %551 = vmatprep.subr.mxu0 0.0
    %552 = vmatpush1.msra.mxu0 0.0
    %553 = vmatprep.subr.mxu0 0.0
    %554 = vmatpush1.msra.mxu0 0.0
    %555 = vmatprep.subr.mxu0 0.0
    %556 = vmatpush1.msra.mxu0 0.0
    %557 = vmatprep.subr.mxu0 0.0
    %558 = vmatpush1.msra.mxu0 0.0
    %559 = vmatprep.subr.mxu0 0.0
    %560 = vmatpush1.msra.mxu0 0.0
    %561 = vmatprep.subr.mxu0 0.0
    %562 = vmatpush1.msra.mxu0 0.0
    %563 = vmatprep.subr.mxu0 0.0
    %564 = vmatpush1.msra.mxu0 0.0
    %565 = vmatprep.subr.mxu0 0.0
    %566 = vmatpush1.msra.mxu0 0.0
    %567 = vmatprep.subr.mxu0 0.0
    %568 = vmatpush1.msra.mxu0 0.0
    %569 = vmatprep.subr.mxu0 0.0
    %570 = vmatpush1.msra.mxu0 0.0
    %571 = vmatprep.subr.mxu0 0.0
    %572 = vmatpush1.msra.mxu0 0.0
    %573 = vmatprep.subr.mxu0 0.0
    %574 = vmatpush1.msra.mxu0 0.0
    %575 = vmatprep.subr.mxu0 0.0
    %576 = vmatpush1.msra.mxu0 0.0
    %577 = vmatprep.subr.mxu0 0.0
    %578 = vmatpush1.msra.mxu0 0.0
    %579 = vmatprep.subr.mxu0 0.0
    %580 = vmatpush1.msra.mxu0 0.0
    %581 = vmatprep.subr.mxu0 0.0
    %582 = vmatpush1.msra.mxu0 0.0
    %583 = vmatprep.subr.mxu0 0.0
    %584 = vmatpush1.msra.mxu0 0.0
    %585 = vmatprep.subr.mxu0 0.0
    %586 = vmatpush1.msra.mxu0 0.0
    %587 = vmatprep.subr.mxu0 0.0
    %588 = vmatpush1.msra.mxu0 0.0
    %589 = vmatprep.subr.mxu0 0.0
    %590 = vmatpush1.msra.mxu0 0.0
    %591 = vmatprep.subr.mxu0 0.0
    %592 = vmatpush1.msra.mxu0 0.0
    %593 = vmatprep.subr.mxu0 0.0
    %594 = vmatpush1.msra.mxu0 0.0
    %595 = vmatprep.subr.mxu0 0.0
    %596 = vmatpush1.msra.mxu0 0.0
    %597 = vmatprep.subr.mxu0 0.0
    %598 = vmatpush1.msra.mxu0 0.0
    %599 = vmatprep.subr.mxu0 0.0
    %600 = vmatpush1.msra.mxu0 0.0
    %601 = vmatprep.subr.mxu0 0.0
    %602 = vmatpush1.msra.mxu0 0.0
    %603 = vmatprep.mubr.f32.mxu0 0.0
    %v604 = vand.u32 %v383, 4294901760
    %v605 = vsub.f32 %v383, %v604
    %606 = vmatmul.mubr.f32.gmra.mrb[0].mxu0 %v605
    %v607 = vpop.f32.mrb[0].mxu0
    %v608 = vadd.f32 %v534, %v607
    %v609 = vpop.f32.mrb[0].mxu0
    %610 = vdwg.mxu0
    %611 = vmatprep.subr.mxu0 0.0
    %v612 = vand.u32 %v380, 4294901760
    %613 = vmatpush1.msra.mxu0 %v612
    %614 = vmatprep.subr.mxu0 0.0
    %615 = vmatpush1.msra.mxu0 0.0
    %616 = vmatprep.subr.mxu0 0.0
    %617 = vmatpush1.msra.mxu0 0.0
    %618 = vmatprep.subr.mxu0 0.0
    %619 = vmatpush1.msra.mxu0 0.0
    %620 = vmatprep.subr.mxu0 0.0
    %621 = vmatpush1.msra.mxu0 0.0
    %622 = vmatprep.subr.mxu0 0.0
    %623 = vmatpush1.msra.mxu0 0.0
    %624 = vmatprep.subr.mxu0 0.0
    %625 = vmatpush1.msra.mxu0 0.0
    %626 = vmatprep.subr.mxu0 0.0
    %627 = vmatpush1.msra.mxu0 0.0
    %628 = vmatprep.subr.mxu0 0.0
    %629 = vmatpush1.msra.mxu0 0.0
    %630 = vmatprep.subr.mxu0 0.0
    %631 = vmatpush1.msra.mxu0 0.0
    %632 = vmatprep.subr.mxu0 0.0
    %633 = vmatpush1.msra.mxu0 0.0
    %634 = vmatprep.subr.mxu0 0.0
    %635 = vmatpush1.msra.mxu0 0.0
    %636 = vmatprep.subr.mxu0 0.0
    %637 = vmatpush1.msra.mxu0 0.0
    %638 = vmatprep.subr.mxu0 0.0
    %639 = vmatpush1.msra.mxu0 0.0
    %640 = vmatprep.subr.mxu0 0.0
    %641 = vmatpush1.msra.mxu0 0.0
    %642 = vmatprep.subr.mxu0 0.0
    %643 = vmatpush1.msra.mxu0 0.0
    %644 = vmatprep.subr.mxu0 0.0
    %645 = vmatpush1.msra.mxu0 0.0
    %646 = vmatprep.subr.mxu0 0.0
    %647 = vmatpush1.msra.mxu0 0.0
    %648 = vmatprep.subr.mxu0 0.0
    %649 = vmatpush1.msra.mxu0 0.0
    %650 = vmatprep.subr.mxu0 0.0
    %651 = vmatpush1.msra.mxu0 0.0
    %652 = vmatprep.subr.mxu0 0.0
    %653 = vmatpush1.msra.mxu0 0.0
    %654 = vmatprep.subr.mxu0 0.0
    %655 = vmatpush1.msra.mxu0 0.0
    %656 = vmatprep.subr.mxu0 0.0
    %657 = vmatpush1.msra.mxu0 0.0
    %658 = vmatprep.subr.mxu0 0.0
    %659 = vmatpush1.msra.mxu0 0.0
    %660 = vmatprep.subr.mxu0 0.0
    %661 = vmatpush1.msra.mxu0 0.0
    %662 = vmatprep.subr.mxu0 0.0
    %663 = vmatpush1.msra.mxu0 0.0
    %664 = vmatprep.subr.mxu0 0.0
    %665 = vmatpush1.msra.mxu0 0.0
    %666 = vmatprep.subr.mxu0 0.0
    %667 = vmatpush1.msra.mxu0 0.0
    %668 = vmatprep.subr.mxu0 0.0
    %669 = vmatpush1.msra.mxu0 0.0
    %670 = vmatprep.subr.mxu0 0.0
    %671 = vmatpush1.msra.mxu0 0.0
    %672 = vmatprep.subr.mxu0 0.0
    %673 = vmatpush1.msra.mxu0 0.0
    %674 = vmatprep.subr.mxu0 0.0
    %675 = vmatpush1.msra.mxu0 0.0
    %676 = vmatprep.mubr.f32.mxu0 0.0
    %v677 = vand.u32 %v383, 4294901760
    %v678 = vsub.f32 %v383, %v677
    %v679 = vand.u32 %v678, 4294901760
    %680 = vmatmul.mubr.f32.gmra.mrb[0].mxu0 %v679
    %v681 = vpop.f32.mrb[0].mxu0
    %v682 = vadd.f32 %v608, %v681
    %v683 = vpop.f32.mrb[0].mxu0
    %684 = vdwg.mxu0
    %685 = vmatprep.subr.mxu0 0.0
    %v686 = vand.u32 %v380, 4294901760
    %v687 = vsub.f32 %v380, %v686
    %v688 = vand.u32 %v687, 4294901760
    %689 = vmatpush1.msra.mxu0 %v688
    %690 = vmatprep.subr.mxu0 0.0
    %691 = vmatpush1.msra.mxu0 0.0
    %692 = vmatprep.subr.mxu0 0.0
    %693 = vmatpush1.msra.mxu0 0.0
    %694 = vmatprep.subr.mxu0 0.0
    %695 = vmatpush1.msra.mxu0 0.0
    %696 = vmatprep.subr.mxu0 0.0
    %697 = vmatpush1.msra.mxu0 0.0
    %698 = vmatprep.subr.mxu0 0.0
    %699 = vmatpush1.msra.mxu0 0.0
    %700 = vmatprep.subr.mxu0 0.0
    %701 = vmatpush1.msra.mxu0 0.0
    %702 = vmatprep.subr.mxu0 0.0
    %703 = vmatpush1.msra.mxu0 0.0
    %704 = vmatprep.subr.mxu0 0.0
    %705 = vmatpush1.msra.mxu0 0.0
    %706 = vmatprep.subr.mxu0 0.0
    %707 = vmatpush1.msra.mxu0 0.0
    %708 = vmatprep.subr.mxu0 0.0
    %709 = vmatpush1.msra.mxu0 0.0
    %710 = vmatprep.subr.mxu0 0.0
    %711 = vmatpush1.msra.mxu0 0.0
    %712 = vmatprep.subr.mxu0 0.0
    %713 = vmatpush1.msra.mxu0 0.0
    %714 = vmatprep.subr.mxu0 0.0
    %715 = vmatpush1.msra.mxu0 0.0
    %716 = vmatprep.subr.mxu0 0.0
    %717 = vmatpush1.msra.mxu0 0.0
    %718 = vmatprep.subr.mxu0 0.0
    %719 = vmatpush1.msra.mxu0 0.0
    %720 = vmatprep.subr.mxu0 0.0
    %721 = vmatpush1.msra.mxu0 0.0
    %722 = vmatprep.subr.mxu0 0.0
    %723 = vmatpush1.msra.mxu0 0.0
    %724 = vmatprep.subr.mxu0 0.0
    %725 = vmatpush1.msra.mxu0 0.0
    %726 = vmatprep.subr.mxu0 0.0
    %727 = vmatpush1.msra.mxu0 0.0
    %728 = vmatprep.subr.mxu0 0.0
    %729 = vmatpush1.msra.mxu0 0.0
    %730 = vmatprep.subr.mxu0 0.0
    %731 = vmatpush1.msra.mxu0 0.0
    %732 = vmatprep.subr.mxu0 0.0
    %733 = vmatpush1.msra.mxu0 0.0
    %734 = vmatprep.subr.mxu0 0.0
    %735 = vmatpush1.msra.mxu0 0.0
    %736 = vmatprep.subr.mxu0 0.0
    %737 = vmatpush1.msra.mxu0 0.0
    %738 = vmatprep.subr.mxu0 0.0
    %739 = vmatpush1.msra.mxu0 0.0
    %740 = vmatprep.subr.mxu0 0.0
    %741 = vmatpush1.msra.mxu0 0.0
    %742 = vmatprep.subr.mxu0 0.0
    %743 = vmatpush1.msra.mxu0 0.0
    %744 = vmatprep.subr.mxu0 0.0
    %745 = vmatpush1.msra.mxu0 0.0
    %746 = vmatprep.subr.mxu0 0.0
    %747 = vmatpush1.msra.mxu0 0.0
    %748 = vmatprep.subr.mxu0 0.0
    %749 = vmatpush1.msra.mxu0 0.0
    %750 = vmatprep.subr.mxu0 0.0
    %751 = vmatpush1.msra.mxu0 0.0
    %752 = vmatprep.mubr.f32.mxu0 0.0
    %v753 = vand.u32 %v383, 4294901760
    %754 = vmatmul.mubr.f32.gmra.mrb[0].mxu0 %v753
    %v755 = vpop.f32.mrb[0].mxu0
    %v756 = vadd.f32 %v682, %v755
    %v757 = vpop.f32.mrb[0].mxu0
    %758 = vdwg.mxu0
    %759 = vmatprep.subr.mxu0 0.0
    %v760 = vand.u32 %v380, 4294901760
    %761 = vmatpush1.msra.mxu0 %v760
    %762 = vmatprep.subr.mxu0 0.0
    %763 = vmatpush1.msra.mxu0 0.0
    %764 = vmatprep.subr.mxu0 0.0
    %765 = vmatpush1.msra.mxu0 0.0
    %766 = vmatprep.subr.mxu0 0.0
    %767 = vmatpush1.msra.mxu0 0.0
    %768 = vmatprep.subr.mxu0 0.0
    %769 = vmatpush1.msra.mxu0 0.0
    %770 = vmatprep.subr.mxu0 0.0
    %771 = vmatpush1.msra.mxu0 0.0
    %772 = vmatprep.subr.mxu0 0.0
    %773 = vmatpush1.msra.mxu0 0.0
    %774 = vmatprep.subr.mxu0 0.0
    %775 = vmatpush1.msra.mxu0 0.0
    %776 = vmatprep.subr.mxu0 0.0
    %777 = vmatpush1.msra.mxu0 0.0
    %778 = vmatprep.subr.mxu0 0.0
    %779 = vmatpush1.msra.mxu0 0.0
    %780 = vmatprep.subr.mxu0 0.0
    %781 = vmatpush1.msra.mxu0 0.0
    %782 = vmatprep.subr.mxu0 0.0
    %783 = vmatpush1.msra.mxu0 0.0
    %784 = vmatprep.subr.mxu0 0.0
    %785 = vmatpush1.msra.mxu0 0.0
    %786 = vmatprep.subr.mxu0 0.0
    %787 = vmatpush1.msra.mxu0 0.0
    %788 = vmatprep.subr.mxu0 0.0
    %789 = vmatpush1.msra.mxu0 0.0
    %790 = vmatprep.subr.mxu0 0.0
    %791 = vmatpush1.msra.mxu0 0.0
    %792 = vmatprep.subr.mxu0 0.0
    %793 = vmatpush1.msra.mxu0 0.0
    %794 = vmatprep.subr.mxu0 0.0
    %795 = vmatpush1.msra.mxu0 0.0
    %796 = vmatprep.subr.mxu0 0.0
    %797 = vmatpush1.msra.mxu0 0.0
    %798 = vmatprep.subr.mxu0 0.0
    %799 = vmatpush1.msra.mxu0 0.0
    %800 = vmatprep.subr.mxu0 0.0
    %801 = vmatpush1.msra.mxu0 0.0
    %802 = vmatprep.subr.mxu0 0.0
    %803 = vmatpush1.msra.mxu0 0.0
    %804 = vmatprep.subr.mxu0 0.0
    %805 = vmatpush1.msra.mxu0 0.0
    %806 = vmatprep.subr.mxu0 0.0
    %807 = vmatpush1.msra.mxu0 0.0
    %808 = vmatprep.subr.mxu0 0.0
    %809 = vmatpush1.msra.mxu0 0.0
    %810 = vmatprep.subr.mxu0 0.0
    %811 = vmatpush1.msra.mxu0 0.0
    %812 = vmatprep.subr.mxu0 0.0
    %813 = vmatpush1.msra.mxu0 0.0
    %814 = vmatprep.subr.mxu0 0.0
    %815 = vmatpush1.msra.mxu0 0.0
    %816 = vmatprep.subr.mxu0 0.0
    %817 = vmatpush1.msra.mxu0 0.0
    %818 = vmatprep.subr.mxu0 0.0
    %819 = vmatpush1.msra.mxu0 0.0
    %820 = vmatprep.subr.mxu0 0.0
    %821 = vmatpush1.msra.mxu0 0.0
    %822 = vmatprep.subr.mxu0 0.0
    %823 = vmatpush1.msra.mxu0 0.0
    %824 = vmatprep.mubr.f32.mxu0 0.0
    %v825 = vand.u32 %v383, 4294901760
    %826 = vmatmul.mubr.f32.gmra.mrb[0].mxu0 %v825
    %v827 = vpop.f32.mrb[0].mxu0
    %v828 = vadd.f32 %v756, %v827
    %v829 = vpop.f32.mrb[0].mxu0
    %830 = vdwg.mxu0
    %v831 = vld [vmem:[#allocation8] sm:$0xff]
    %832 = vmatprep.subr.mxu0 0.0
    %v833 = vand.u32 %v831, 4294901760
    %834 = vmatpush1.msra.mxu0 %v833
    %835 = vmatprep.subr.mxu0 0.0
    %836 = vmatpush1.msra.mxu0 0.0
    %837 = vmatprep.subr.mxu0 0.0
    %838 = vmatpush1.msra.mxu0 0.0
    %839 = vmatprep.subr.mxu0 0.0
    %840 = vmatpush1.msra.mxu0 0.0
    %841 = vmatprep.subr.mxu0 0.0
    %842 = vmatpush1.msra.mxu0 0.0
    %843 = vmatprep.subr.mxu0 0.0
    %844 = vmatpush1.msra.mxu0 0.0
    %845 = vmatprep.subr.mxu0 0.0
    %846 = vmatpush1.msra.mxu0 0.0
    %847 = vmatprep.subr.mxu0 0.0
    %848 = vmatpush1.msra.mxu0 0.0
    %849 = vmatprep.subr.mxu0 0.0
    %850 = vmatpush1.msra.mxu0 0.0
    %851 = vmatprep.subr.mxu0 0.0
    %852 = vmatpush1.msra.mxu0 0.0
    %853 = vmatprep.subr.mxu0 0.0
    %854 = vmatpush1.msra.mxu0 0.0
    %855 = vmatprep.subr.mxu0 0.0
    %856 = vmatpush1.msra.mxu0 0.0
    %857 = vmatprep.subr.mxu0 0.0
    %858 = vmatpush1.msra.mxu0 0.0
    %859 = vmatprep.subr.mxu0 0.0
    %860 = vmatpush1.msra.mxu0 0.0
    %861 = vmatprep.subr.mxu0 0.0
    %862 = vmatpush1.msra.mxu0 0.0
    %863 = vmatprep.subr.mxu0 0.0
    %864 = vmatpush1.msra.mxu0 0.0
    %865 = vmatprep.subr.mxu0 0.0
    %866 = vmatpush1.msra.mxu0 0.0
    %867 = vmatprep.subr.mxu0 0.0
    %868 = vmatpush1.msra.mxu0 0.0
    %869 = vmatprep.subr.mxu0 0.0
    %870 = vmatpush1.msra.mxu0 0.0
    %871 = vmatprep.subr.mxu0 0.0
    %872 = vmatpush1.msra.mxu0 0.0
    %873 = vmatprep.subr.mxu0 0.0
    %874 = vmatpush1.msra.mxu0 0.0
    %875 = vmatprep.subr.mxu0 0.0
    %876 = vmatpush1.msra.mxu0 0.0
    %877 = vmatprep.subr.mxu0 0.0
    %878 = vmatpush1.msra.mxu0 0.0
    %879 = vmatprep.subr.mxu0 0.0
    %880 = vmatpush1.msra.mxu0 0.0
    %881 = vmatprep.subr.mxu0 0.0
    %882 = vmatpush1.msra.mxu0 0.0
    %883 = vmatprep.subr.mxu0 0.0
    %884 = vmatpush1.msra.mxu0 0.0
    %885 = vmatprep.subr.mxu0 0.0
    %886 = vmatpush1.msra.mxu0 0.0
    %887 = vmatprep.subr.mxu0 0.0
    %888 = vmatpush1.msra.mxu0 0.0
    %889 = vmatprep.subr.mxu0 0.0
    %890 = vmatpush1.msra.mxu0 0.0
    %891 = vmatprep.subr.mxu0 0.0
    %892 = vmatpush1.msra.mxu0 0.0
    %893 = vmatprep.subr.mxu0 0.0
    %894 = vmatpush1.msra.mxu0 0.0
    %895 = vmatprep.subr.mxu0 0.0
    %896 = vmatpush1.msra.mxu0 0.0
    %897 = vmatprep.mubr.f32.mxu0 0.0
    %v898 = vand.u32 %v383, 4294901760
    %v899 = vsub.f32 %v383, %v898
    %v900 = vand.u32 %v899, 4294901760
    %v901 = vsub.f32 %v899, %v900
    %v902 = vand.u32 %v901, 4294901760
    %903 = vmatmul.mubr.f32.gmra.mrb[0].mxu0 %v902
    %v904 = vpop.f32.mrb[0].mxu0
    %v905 = vadd.f32 0.0, %v904
    %v906 = vpop.f32.mrb[0].mxu0
    %907 = vdwg.mxu0
    %908 = vmatprep.subr.mxu0 0.0
    %v909 = vand.u32 %v831, 4294901760
    %v910 = vsub.f32 %v831, %v909
    %v911 = vand.u32 %v910, 4294901760
    %v912 = vsub.f32 %v910, %v911
    %v913 = vand.u32 %v912, 4294901760
    %914 = vmatpush1.msra.mxu0 %v913
    %915 = vmatprep.subr.mxu0 0.0
    %916 = vmatpush1.msra.mxu0 0.0
    %917 = vmatprep.subr.mxu0 0.0
    %918 = vmatpush1.msra.mxu0 0.0
    %919 = vmatprep.subr.mxu0 0.0
    %920 = vmatpush1.msra.mxu0 0.0
    %921 = vmatprep.subr.mxu0 0.0
    %922 = vmatpush1.msra.mxu0 0.0
    %923 = vmatprep.subr.mxu0 0.0
    %924 = vmatpush1.msra.mxu0 0.0
    %925 = vmatprep.subr.mxu0 0.0
    %926 = vmatpush1.msra.mxu0 0.0
    %927 = vmatprep.subr.mxu0 0.0
    %928 = vmatpush1.msra.mxu0 0.0
    %929 = vmatprep.subr.mxu0 0.0
    %930 = vmatpush1.msra.mxu0 0.0
    %931 = vmatprep.subr.mxu0 0.0
    %932 = vmatpush1.msra.mxu0 0.0
    %933 = vmatprep.subr.mxu0 0.0
    %934 = vmatpush1.msra.mxu0 0.0
    %935 = vmatprep.subr.mxu0 0.0
    %936 = vmatpush1.msra.mxu0 0.0
    %937 = vmatprep.subr.mxu0 0.0
    %938 = vmatpush1.msra.mxu0 0.0
    %939 = vmatprep.subr.mxu0 0.0
    %940 = vmatpush1.msra.mxu0 0.0
    %941 = vmatprep.subr.mxu0 0.0
    %942 = vmatpush1.msra.mxu0 0.0
    %943 = vmatprep.subr.mxu0 0.0
    %944 = vmatpush1.msra.mxu0 0.0
    %945 = vmatprep.subr.mxu0 0.0
    %946 = vmatpush1.msra.mxu0 0.0
    %947 = vmatprep.subr.mxu0 0.0
    %948 = vmatpush1.msra.mxu0 0.0
    %949 = vmatprep.subr.mxu0 0.0
    %950 = vmatpush1.msra.mxu0 0.0
    %951 = vmatprep.subr.mxu0 0.0
    %952 = vmatpush1.msra.mxu0 0.0
    %953 = vmatprep.subr.mxu0 0.0
    %954 = vmatpush1.msra.mxu0 0.0
    %955 = vmatprep.subr.mxu0 0.0
    %956 = vmatpush1.msra.mxu0 0.0
    %957 = vmatprep.subr.mxu0 0.0
    %958 = vmatpush1.msra.mxu0 0.0
    %959 = vmatprep.subr.mxu0 0.0
    %960 = vmatpush1.msra.mxu0 0.0
    %961 = vmatprep.subr.mxu0 0.0
    %962 = vmatpush1.msra.mxu0 0.0
    %963 = vmatprep.subr.mxu0 0.0
    %964 = vmatpush1.msra.mxu0 0.0
    %965 = vmatprep.subr.mxu0 0.0
    %966 = vmatpush1.msra.mxu0 0.0
    %967 = vmatprep.subr.mxu0 0.0
    %968 = vmatpush1.msra.mxu0 0.0
    %969 = vmatprep.subr.mxu0 0.0
    %970 = vmatpush1.msra.mxu0 0.0
    %971 = vmatprep.subr.mxu0 0.0
    %972 = vmatpush1.msra.mxu0 0.0
    %973 = vmatprep.subr.mxu0 0.0
    %974 = vmatpush1.msra.mxu0 0.0
    %975 = vmatprep.subr.mxu0 0.0
    %976 = vmatpush1.msra.mxu0 0.0
    %977 = vmatprep.mubr.f32.mxu0 0.0
    %v978 = vand.u32 %v383, 4294901760
    %979 = vmatmul.mubr.f32.gmra.mrb[0].mxu0 %v978
    %v980 = vpop.f32.mrb[0].mxu0
    %v981 = vadd.f32 %v905, %v980
    %v982 = vpop.f32.mrb[0].mxu0
    %983 = vdwg.mxu0
    %984 = vmatprep.subr.mxu0 0.0
    %v985 = vand.u32 %v831, 4294901760
    %v986 = vsub.f32 %v831, %v985
    %987 = vmatpush1.msra.mxu0 %v986
    %988 = vmatprep.subr.mxu0 0.0
    %989 = vmatpush1.msra.mxu0 0.0
    %990 = vmatprep.subr.mxu0 0.0
    %991 = vmatpush1.msra.mxu0 0.0
    %992 = vmatprep.subr.mxu0 0.0
    %993 = vmatpush1.msra.mxu0 0.0
    %994 = vmatprep.subr.mxu0 0.0
    %995 = vmatpush1.msra.mxu0 0.0
    %996 = vmatprep.subr.mxu0 0.0
    %997 = vmatpush1.msra.mxu0 0.0
    %998 = vmatprep.subr.mxu0 0.0
    %999 = vmatpush1.msra.mxu0 0.0
    %1000 = vmatprep.subr.mxu0 0.0
    %1001 = vmatpush1.msra.mxu0 0.0
    %1002 = vmatprep.subr.mxu0 0.0
    %1003 = vmatpush1.msra.mxu0 0.0
    %1004 = vmatprep.subr.mxu0 0.0
    %1005 = vmatpush1.msra.mxu0 0.0
    %1006 = vmatprep.subr.mxu0 0.0
    %1007 = vmatpush1.msra.mxu0 0.0
    %1008 = vmatprep.subr.mxu0 0.0
    %1009 = vmatpush1.msra.mxu0 0.0
    %1010 = vmatprep.subr.mxu0 0.0
    %1011 = vmatpush1.msra.mxu0 0.0
    %1012 = vmatprep.subr.mxu0 0.0
    %1013 = vmatpush1.msra.mxu0 0.0
    %1014 = vmatprep.subr.mxu0 0.0
    %1015 = vmatpush1.msra.mxu0 0.0
    %1016 = vmatprep.subr.mxu0 0.0
    %1017 = vmatpush1.msra.mxu0 0.0
    %1018 = vmatprep.subr.mxu0 0.0
    %1019 = vmatpush1.msra.mxu0 0.0
    %1020 = vmatprep.subr.mxu0 0.0
    %1021 = vmatpush1.msra.mxu0 0.0
    %1022 = vmatprep.subr.mxu0 0.0
    %1023 = vmatpush1.msra.mxu0 0.0
    %1024 = vmatprep.subr.mxu0 0.0
    %1025 = vmatpush1.msra.mxu0 0.0
    %1026 = vmatprep.subr.mxu0 0.0
    %1027 = vmatpush1.msra.mxu0 0.0
    %1028 = vmatprep.subr.mxu0 0.0
    %1029 = vmatpush1.msra.mxu0 0.0
    %1030 = vmatprep.subr.mxu0 0.0
    %1031 = vmatpush1.msra.mxu0 0.0
    %1032 = vmatprep.subr.mxu0 0.0
    %1033 = vmatpush1.msra.mxu0 0.0
    %1034 = vmatprep.subr.mxu0 0.0
    %1035 = vmatpush1.msra.mxu0 0.0
    %1036 = vmatprep.subr.mxu0 0.0
    %1037 = vmatpush1.msra.mxu0 0.0
    %1038 = vmatprep.subr.mxu0 0.0
    %1039 = vmatpush1.msra.mxu0 0.0
    %1040 = vmatprep.subr.mxu0 0.0
    %1041 = vmatpush1.msra.mxu0 0.0
    %1042 = vmatprep.subr.mxu0 0.0
    %1043 = vmatpush1.msra.mxu0 0.0
    %1044 = vmatprep.subr.mxu0 0.0
    %1045 = vmatpush1.msra.mxu0 0.0
    %1046 = vmatprep.subr.mxu0 0.0
    %1047 = vmatpush1.msra.mxu0 0.0
    %1048 = vmatprep.subr.mxu0 0.0
    %1049 = vmatpush1.msra.mxu0 0.0
    %1050 = vmatprep.mubr.f32.mxu0 0.0
    %v1051 = vand.u32 %v383, 4294901760
    %v1052 = vsub.f32 %v383, %v1051
    %1053 = vmatmul.mubr.f32.gmra.mrb[0].mxu0 %v1052
    %v1054 = vpop.f32.mrb[0].mxu0
    %v1055 = vadd.f32 %v981, %v1054
    %v1056 = vpop.f32.mrb[0].mxu0
    %1057 = vdwg.mxu0
    %1058 = vmatprep.subr.mxu0 0.0
    %v1059 = vand.u32 %v831, 4294901760
    %1060 = vmatpush1.msra.mxu0 %v1059
    %1061 = vmatprep.subr.mxu0 0.0
    %1062 = vmatpush1.msra.mxu0 0.0
    %1063 = vmatprep.subr.mxu0 0.0
    %1064 = vmatpush1.msra.mxu0 0.0
    %1065 = vmatprep.subr.mxu0 0.0
    %1066 = vmatpush1.msra.mxu0 0.0
    %1067 = vmatprep.subr.mxu0 0.0
    %1068 = vmatpush1.msra.mxu0 0.0
    %1069 = vmatprep.subr.mxu0 0.0
    %1070 = vmatpush1.msra.mxu0 0.0
    %1071 = vmatprep.subr.mxu0 0.0
    %1072 = vmatpush1.msra.mxu0 0.0
    %1073 = vmatprep.subr.mxu0 0.0
    %1074 = vmatpush1.msra.mxu0 0.0
    %1075 = vmatprep.subr.mxu0 0.0
    %1076 = vmatpush1.msra.mxu0 0.0
    %1077 = vmatprep.subr.mxu0 0.0
    %1078 = vmatpush1.msra.mxu0 0.0
    %1079 = vmatprep.subr.mxu0 0.0
    %1080 = vmatpush1.msra.mxu0 0.0
    %1081 = vmatprep.subr.mxu0 0.0
    %1082 = vmatpush1.msra.mxu0 0.0
    %1083 = vmatprep.subr.mxu0 0.0
    %1084 = vmatpush1.msra.mxu0 0.0
    %1085 = vmatprep.subr.mxu0 0.0
    %1086 = vmatpush1.msra.mxu0 0.0
    %1087 = vmatprep.subr.mxu0 0.0
    %1088 = vmatpush1.msra.mxu0 0.0
    %1089 = vmatprep.subr.mxu0 0.0
    %1090 = vmatpush1.msra.mxu0 0.0
    %1091 = vmatprep.subr.mxu0 0.0
    %1092 = vmatpush1.msra.mxu0 0.0
    %1093 = vmatprep.subr.mxu0 0.0
    %1094 = vmatpush1.msra.mxu0 0.0
    %1095 = vmatprep.subr.mxu0 0.0
    %1096 = vmatpush1.msra.mxu0 0.0
    %1097 = vmatprep.subr.mxu0 0.0
    %1098 = vmatpush1.msra.mxu0 0.0
    %1099 = vmatprep.subr.mxu0 0.0
    %1100 = vmatpush1.msra.mxu0 0.0
    %1101 = vmatprep.subr.mxu0 0.0
    %1102 = vmatpush1.msra.mxu0 0.0
    %1103 = vmatprep.subr.mxu0 0.0
    %1104 = vmatpush1.msra.mxu0 0.0
    %1105 = vmatprep.subr.mxu0 0.0
    %1106 = vmatpush1.msra.mxu0 0.0
    %1107 = vmatprep.subr.mxu0 0.0
    %1108 = vmatpush1.msra.mxu0 0.0
    %1109 = vmatprep.subr.mxu0 0.0
    %1110 = vmatpush1.msra.mxu0 0.0
    %1111 = vmatprep.subr.mxu0 0.0
    %1112 = vmatpush1.msra.mxu0 0.0
    %1113 = vmatprep.subr.mxu0 0.0
    %1114 = vmatpush1.msra.mxu0 0.0
    %1115 = vmatprep.subr.mxu0 0.0
    %1116 = vmatpush1.msra.mxu0 0.0
    %1117 = vmatprep.subr.mxu0 0.0
    %1118 = vmatpush1.msra.mxu0 0.0
    %1119 = vmatprep.subr.mxu0 0.0
    %1120 = vmatpush1.msra.mxu0 0.0
    %1121 = vmatprep.subr.mxu0 0.0
    %1122 = vmatpush1.msra.mxu0 0.0
    %1123 = vmatprep.mubr.f32.mxu0 0.0
    %v1124 = vand.u32 %v383, 4294901760
    %v1125 = vsub.f32 %v383, %v1124
    %v1126 = vand.u32 %v1125, 4294901760
    %1127 = vmatmul.mubr.f32.gmra.mrb[0].mxu0 %v1126
    %v1128 = vpop.f32.mrb[0].mxu0
    %v1129 = vadd.f32 %v1055, %v1128
    %v1130 = vpop.f32.mrb[0].mxu0
    %1131 = vdwg.mxu0
    %1132 = vmatprep.subr.mxu0 0.0
    %v1133 = vand.u32 %v831, 4294901760
    %v1134 = vsub.f32 %v831, %v1133
    %v1135 = vand.u32 %v1134, 4294901760
    %1136 = vmatpush1.msra.mxu0 %v1135
    %1137 = vmatprep.subr.mxu0 0.0
    %1138 = vmatpush1.msra.mxu0 0.0
    %1139 = vmatprep.subr.mxu0 0.0
    %1140 = vmatpush1.msra.mxu0 0.0
    %1141 = vmatprep.subr.mxu0 0.0
    %1142 = vmatpush1.msra.mxu0 0.0
    %1143 = vmatprep.subr.mxu0 0.0
    %1144 = vmatpush1.msra.mxu0 0.0
    %1145 = vmatprep.subr.mxu0 0.0
    %1146 = vmatpush1.msra.mxu0 0.0
    %1147 = vmatprep.subr.mxu0 0.0
    %1148 = vmatpush1.msra.mxu0 0.0
    %1149 = vmatprep.subr.mxu0 0.0
    %1150 = vmatpush1.msra.mxu0 0.0
    %1151 = vmatprep.subr.mxu0 0.0
    %1152 = vmatpush1.msra.mxu0 0.0
    %1153 = vmatprep.subr.mxu0 0.0
    %1154 = vmatpush1.msra.mxu0 0.0
    %1155 = vmatprep.subr.mxu0 0.0
    %1156 = vmatpush1.msra.mxu0 0.0
    %1157 = vmatprep.subr.mxu0 0.0
    %1158 = vmatpush1.msra.mxu0 0.0
    %1159 = vmatprep.subr.mxu0 0.0
    %1160 = vmatpush1.msra.mxu0 0.0
    %1161 = vmatprep.subr.mxu0 0.0
    %1162 = vmatpush1.msra.mxu0 0.0
    %1163 = vmatprep.subr.mxu0 0.0
    %1164 = vmatpush1.msra.mxu0 0.0
    %1165 = vmatprep.subr.mxu0 0.0
    %1166 = vmatpush1.msra.mxu0 0.0
    %1167 = vmatprep.subr.mxu0 0.0
    %1168 = vmatpush1.msra.mxu0 0.0
    %1169 = vmatprep.subr.mxu0 0.0
    %1170 = vmatpush1.msra.mxu0 0.0
    %1171 = vmatprep.subr.mxu0 0.0
    %1172 = vmatpush1.msra.mxu0 0.0
    %1173 = vmatprep.subr.mxu0 0.0
    %1174 = vmatpush1.msra.mxu0 0.0
    %1175 = vmatprep.subr.mxu0 0.0
    %1176 = vmatpush1.msra.mxu0 0.0
    %1177 = vmatprep.subr.mxu0 0.0
    %1178 = vmatpush1.msra.mxu0 0.0
    %1179 = vmatprep.subr.mxu0 0.0
    %1180 = vmatpush1.msra.mxu0 0.0
    %1181 = vmatprep.subr.mxu0 0.0
    %1182 = vmatpush1.msra.mxu0 0.0
    %1183 = vmatprep.subr.mxu0 0.0
    %1184 = vmatpush1.msra.mxu0 0.0
    %1185 = vmatprep.subr.mxu0 0.0
    %1186 = vmatpush1.msra.mxu0 0.0
    %1187 = vmatprep.subr.mxu0 0.0
    %1188 = vmatpush1.msra.mxu0 0.0
    %1189 = vmatprep.subr.mxu0 0.0
    %1190 = vmatpush1.msra.mxu0 0.0
    %1191 = vmatprep.subr.mxu0 0.0
    %1192 = vmatpush1.msra.mxu0 0.0
    %1193 = vmatprep.subr.mxu0 0.0
    %1194 = vmatpush1.msra.mxu0 0.0
    %1195 = vmatprep.subr.mxu0 0.0
    %1196 = vmatpush1.msra.mxu0 0.0
    %1197 = vmatprep.subr.mxu0 0.0
    %1198 = vmatpush1.msra.mxu0 0.0
    %1199 = vmatprep.mubr.f32.mxu0 0.0
    %v1200 = vand.u32 %v383, 4294901760
    %1201 = vmatmul.mubr.f32.gmra.mrb[0].mxu0 %v1200
    %v1202 = vpop.f32.mrb[0].mxu0
    %v1203 = vadd.f32 %v1129, %v1202
    %v1204 = vpop.f32.mrb[0].mxu0
    %1205 = vdwg.mxu0
    %1206 = vmatprep.subr.mxu0 0.0
    %v1207 = vand.u32 %v831, 4294901760
    %1208 = vmatpush1.msra.mxu0 %v1207
    %1209 = vmatprep.subr.mxu0 0.0
    %1210 = vmatpush1.msra.mxu0 0.0
    %1211 = vmatprep.subr.mxu0 0.0
    %1212 = vmatpush1.msra.mxu0 0.0
    %1213 = vmatprep.subr.mxu0 0.0
    %1214 = vmatpush1.msra.mxu0 0.0
    %1215 = vmatprep.subr.mxu0 0.0
    %1216 = vmatpush1.msra.mxu0 0.0
    %1217 = vmatprep.subr.mxu0 0.0
    %1218 = vmatpush1.msra.mxu0 0.0
    %1219 = vmatprep.subr.mxu0 0.0
    %1220 = vmatpush1.msra.mxu0 0.0
    %1221 = vmatprep.subr.mxu0 0.0
    %1222 = vmatpush1.msra.mxu0 0.0
    %1223 = vmatprep.subr.mxu0 0.0
    %1224 = vmatpush1.msra.mxu0 0.0
    %1225 = vmatprep.subr.mxu0 0.0
    %1226 = vmatpush1.msra.mxu0 0.0
    %1227 = vmatprep.subr.mxu0 0.0
    %1228 = vmatpush1.msra.mxu0 0.0
    %1229 = vmatprep.subr.mxu0 0.0
    %1230 = vmatpush1.msra.mxu0 0.0
    %1231 = vmatprep.subr.mxu0 0.0
    %1232 = vmatpush1.msra.mxu0 0.0
    %1233 = vmatprep.subr.mxu0 0.0
    %1234 = vmatpush1.msra.mxu0 0.0
    %1235 = vmatprep.subr.mxu0 0.0
    %1236 = vmatpush1.msra.mxu0 0.0
    %1237 = vmatprep.subr.mxu0 0.0
    %1238 = vmatpush1.msra.mxu0 0.0
    %1239 = vmatprep.subr.mxu0 0.0
    %1240 = vmatpush1.msra.mxu0 0.0
    %1241 = vmatprep.subr.mxu0 0.0
    %1242 = vmatpush1.msra.mxu0 0.0
    %1243 = vmatprep.subr.mxu0 0.0
    %1244 = vmatpush1.msra.mxu0 0.0
    %1245 = vmatprep.subr.mxu0 0.0
    %1246 = vmatpush1.msra.mxu0 0.0
    %1247 = vmatprep.subr.mxu0 0.0
    %1248 = vmatpush1.msra.mxu0 0.0
    %1249 = vmatprep.subr.mxu0 0.0
    %1250 = vmatpush1.msra.mxu0 0.0
    %1251 = vmatprep.subr.mxu0 0.0
    %1252 = vmatpush1.msra.mxu0 0.0
    %1253 = vmatprep.subr.mxu0 0.0
    %1254 = vmatpush1.msra.mxu0 0.0
    %1255 = vmatprep.subr.mxu0 0.0
    %1256 = vmatpush1.msra.mxu0 0.0
    %1257 = vmatprep.subr.mxu0 0.0
    %1258 = vmatpush1.msra.mxu0 0.0
    %1259 = vmatprep.subr.mxu0 0.0
    %1260 = vmatpush1.msra.mxu0 0.0
    %1261 = vmatprep.subr.mxu0 0.0
    %1262 = vmatpush1.msra.mxu0 0.0
    %1263 = vmatprep.subr.mxu0 0.0
    %1264 = vmatpush1.msra.mxu0 0.0
    %1265 = vmatprep.subr.mxu0 0.0
    %1266 = vmatpush1.msra.mxu0 0.0
    %1267 = vmatprep.subr.mxu0 0.0
    %1268 = vmatpush1.msra.mxu0 0.0
    %1269 = vmatprep.subr.mxu0 0.0
    %1270 = vmatpush1.msra.mxu0 0.0
    %1271 = vmatprep.mubr.f32.mxu0 0.0
    %v1272 = vand.u32 %v383, 4294901760
    %1273 = vmatmul.mubr.f32.gmra.mrb[0].mxu0 %v1272
    %v1274 = vpop.f32.mrb[0].mxu0
    %v1275 = vadd.f32 %v1203, %v1274
    %v1276 = vpop.f32.mrb[0].mxu0
    %1277 = vdwg.mxu0
    %v1278 = vmul.f32 %v1275, %v373
    %1279 = vadd.xlane.f32.xlu0 %v1278
    %v1280 = vpop.xlane.xlu0 %1279
    %v1281 = vmul.f32 %v1280, 0.03125
    %v1282 = vmul.f32 %v828, %v1281
    %v1283 = vld [vmem:[#allocation9] sm:$0xff]
    %v1284 = vld [vmem:[#allocation9 + $0x8] sm:$0xff]
    %v1285 = vld [vmem:[#allocation9 + $0x10] sm:$0xff]
    %v1286 = vld [vmem:[#allocation9 + $0x18] sm:$0xff]
    %v1287 = vld [vmem:[#allocation9 + $0x20] sm:$0xff]
    %v1288 = vld [vmem:[#allocation9 + $0x28] sm:$0xff]
    %v1289 = vld [vmem:[#allocation9 + $0x30] sm:$0xff]
    %v1290 = vld [vmem:[#allocation9 + $0x38] sm:$0xff]
    %v1291 = vld [vmem:[#allocation9 + $0x40] sm:$0xff]
    %v1292 = vld [vmem:[#allocation9 + $0x48] sm:$0xff]
    %v1293 = vld [vmem:[#allocation9 + $0x50] sm:$0xff]
    %v1294 = vld [vmem:[#allocation9 + $0x58] sm:$0xff]
    %v1295 = vld [vmem:[#allocation9 + $0x60] sm:$0xff]
    %v1296 = vld [vmem:[#allocation9 + $0x68] sm:$0xff]
    %v1297 = vld [vmem:[#allocation9 + $0x70] sm:$0xff]
    %v1298 = vld [vmem:[#allocation9 + $0x78] sm:$0xff]
    %v1299 = vld [vmem:[#allocation11] sm:$0x1]
    %v1301 = vlaneseq
    %v1302 = vshrl.u32 %v1301, 7
    %v1303 = vsub.s32 0, %v1302
    %v1304 = vrot.slane %v1299, %v1303
    %1306 = vmatprep.subr.mxu0 0.0
    %v1307 = vand.u32 %v1283, 4294901760
    %1308 = vmatpush1.msra.mxu0 %v1307
    %1309 = vmatprep.subr.mxu0 0.0
    %v1310 = vand.u32 %v1284, 4294901760
    %1311 = vmatpush1.msra.mxu0 %v1310
    %1312 = vmatprep.subr.mxu0 0.0
    %v1313 = vand.u32 %v1285, 4294901760
    %1314 = vmatpush1.msra.mxu0 %v1313
    %1315 = vmatprep.subr.mxu0 0.0
    %v1316 = vand.u32 %v1286, 4294901760
    %1317 = vmatpush1.msra.mxu0 %v1316
    %1318 = vmatprep.subr.mxu0 0.0
    %v1319 = vand.u32 %v1287, 4294901760
    %1320 = vmatpush1.msra.mxu0 %v1319
    %1321 = vmatprep.subr.mxu0 0.0
    %v1322 = vand.u32 %v1288, 4294901760
    %1323 = vmatpush1.msra.mxu0 %v1322
    %1324 = vmatprep.subr.mxu0 0.0
    %v1325 = vand.u32 %v1289, 4294901760
    %1326 = vmatpush1.msra.mxu0 %v1325
    %1327 = vmatprep.subr.mxu0 0.0
    %v1328 = vand.u32 %v1290, 4294901760
    %1329 = vmatpush1.msra.mxu0 %v1328
    %1330 = vmatprep.subr.mxu0 0.0
    %v1331 = vand.u32 %v1291, 4294901760
    %1332 = vmatpush1.msra.mxu0 %v1331
    %1333 = vmatprep.subr.mxu0 0.0
    %v1334 = vand.u32 %v1292, 4294901760
    %1335 = vmatpush1.msra.mxu0 %v1334
    %1336 = vmatprep.subr.mxu0 0.0
    %v1337 = vand.u32 %v1293, 4294901760
    %1338 = vmatpush1.msra.mxu0 %v1337
    %1339 = vmatprep.subr.mxu0 0.0
    %v1340 = vand.u32 %v1294, 4294901760
    %1341 = vmatpush1.msra.mxu0 %v1340
    %1342 = vmatprep.subr.mxu0 0.0
    %v1343 = vand.u32 %v1295, 4294901760
    %1344 = vmatpush1.msra.mxu0 %v1343
    %1345 = vmatprep.subr.mxu0 0.0
    %v1346 = vand.u32 %v1296, 4294901760
    %1347 = vmatpush1.msra.mxu0 %v1346
    %1348 = vmatprep.subr.mxu0 0.0
    %v1349 = vand.u32 %v1297, 4294901760
    %1350 = vmatpush1.msra.mxu0 %v1349
    %1351 = vmatprep.subr.mxu0 0.0
    %v1352 = vand.u32 %v1298, 4294901760
    %1353 = vmatpush1.msra.mxu0 %v1352
    %1354 = vmatprep.subr.mxu0 0.0
    %1355 = vmatpush1.msra.mxu0 0.0
    %1356 = vmatprep.subr.mxu0 0.0
    %1357 = vmatpush1.msra.mxu0 0.0
    %1358 = vmatprep.subr.mxu0 0.0
    %1359 = vmatpush1.msra.mxu0 0.0
    %1360 = vmatprep.subr.mxu0 0.0
    %1361 = vmatpush1.msra.mxu0 0.0
    %1362 = vmatprep.subr.mxu0 0.0
    %1363 = vmatpush1.msra.mxu0 0.0
    %1364 = vmatprep.subr.mxu0 0.0
    %1365 = vmatpush1.msra.mxu0 0.0
    %1366 = vmatprep.subr.mxu0 0.0
    %1367 = vmatpush1.msra.mxu0 0.0
    %1368 = vmatprep.subr.mxu0 0.0
    %1369 = vmatpush1.msra.mxu0 0.0
    %1370 = vmatprep.subr.mxu0 0.0
    %1371 = vmatpush1.msra.mxu0 0.0
    %1372 = vmatprep.subr.mxu0 0.0
    %1373 = vmatpush1.msra.mxu0 0.0
    %1374 = vmatprep.subr.mxu0 0.0
    %1375 = vmatpush1.msra.mxu0 0.0
    %1376 = vmatprep.subr.mxu0 0.0
    %1377 = vmatpush1.msra.mxu0 0.0
    %1378 = vmatprep.subr.mxu0 0.0
    %1379 = vmatpush1.msra.mxu0 0.0
    %1380 = vmatprep.subr.mxu0 0.0
    %1381 = vmatpush1.msra.mxu0 0.0
    %1382 = vmatprep.subr.mxu0 0.0
    %1383 = vmatpush1.msra.mxu0 0.0
    %1384 = vmatprep.subr.mxu0 0.0
    %1385 = vmatpush1.msra.mxu0 0.0
    %1386 = vmatprep.mubr.f32.mxu0 0.0
    %v1387 = vand.u32 %v373, 4294901760
    %v1388 = vsub.f32 %v373, %v1387
    %v1389 = vand.u32 %v1388, 4294901760
    %v1390 = vsub.f32 %v1388, %v1389
    %v1391 = vand.u32 %v1390, 4294901760
    %1392 = vmatmul.mubr.f32.gmra.mrb[0].mxu0 %v1391
    %v1393 = vpop.f32.mrb[0].mxu0
    %v1394 = vadd.f32 %v1304, %v1393
    %v1395 = vpop.f32.mrb[0].mxu0
    %1396 = vdwg.mxu0
    %1397 = vmatprep.subr.mxu0 0.0
    %v1398 = vand.u32 %v1283, 4294901760
    %v1399 = vsub.f32 %v1283, %v1398
    %v1400 = vand.u32 %v1399, 4294901760
    %v1401 = vsub.f32 %v1399, %v1400
    %v1402 = vand.u32 %v1401, 4294901760
    %1403 = vmatpush1.msra.mxu0 %v1402
    %1404 = vmatprep.subr.mxu0 0.0
    %v1405 = vand.u32 %v1284, 4294901760
    %v1406 = vsub.f32 %v1284, %v1405
    %v1407 = vand.u32 %v1406, 4294901760
    %v1408 = vsub.f32 %v1406, %v1407
    %v1409 = vand.u32 %v1408, 4294901760
    %1410 = vmatpush1.msra.mxu0 %v1409
    %1411 = vmatprep.subr.mxu0 0.0
    %v1412 = vand.u32 %v1285, 4294901760
    %v1413 = vsub.f32 %v1285, %v1412
    %v1414 = vand.u32 %v1413, 4294901760
    %v1415 = vsub.f32 %v1413, %v1414
    %v1416 = vand.u32 %v1415, 4294901760
    %1417 = vmatpush1.msra.mxu0 %v1416
    %1418 = vmatprep.subr.mxu0 0.0
    %v1419 = vand.u32 %v1286, 4294901760
    %v1420 = vsub.f32 %v1286, %v1419
    %v1421 = vand.u32 %v1420, 4294901760
    %v1422 = vsub.f32 %v1420, %v1421
    %v1423 = vand.u32 %v1422, 4294901760
    %1424 = vmatpush1.msra.mxu0 %v1423
    %1425 = vmatprep.subr.mxu0 0.0
    %v1426 = vand.u32 %v1287, 4294901760
    %v1427 = vsub.f32 %v1287, %v1426
    %v1428 = vand.u32 %v1427, 4294901760
    %v1429 = vsub.f32 %v1427, %v1428
    %v1430 = vand.u32 %v1429, 4294901760
    %1431 = vmatpush1.msra.mxu0 %v1430
    %1432 = vmatprep.subr.mxu0 0.0
    %v1433 = vand.u32 %v1288, 4294901760
    %v1434 = vsub.f32 %v1288, %v1433
    %v1435 = vand.u32 %v1434, 4294901760
    %v1436 = vsub.f32 %v1434, %v1435
    %v1437 = vand.u32 %v1436, 4294901760
    %1438 = vmatpush1.msra.mxu0 %v1437
    %1439 = vmatprep.subr.mxu0 0.0
    %v1440 = vand.u32 %v1289, 4294901760
    %v1441 = vsub.f32 %v1289, %v1440
    %v1442 = vand.u32 %v1441, 4294901760
    %v1443 = vsub.f32 %v1441, %v1442
    %v1444 = vand.u32 %v1443, 4294901760
    %1445 = vmatpush1.msra.mxu0 %v1444
    %1446 = vmatprep.subr.mxu0 0.0
    %v1447 = vand.u32 %v1290, 4294901760
    %v1448 = vsub.f32 %v1290, %v1447
    %v1449 = vand.u32 %v1448, 4294901760
    %v1450 = vsub.f32 %v1448, %v1449
    %v1451 = vand.u32 %v1450, 4294901760
    %1452 = vmatpush1.msra.mxu0 %v1451
    %1453 = vmatprep.subr.mxu0 0.0
    %v1454 = vand.u32 %v1291, 4294901760
    %v1455 = vsub.f32 %v1291, %v1454
    %v1456 = vand.u32 %v1455, 4294901760
    %v1457 = vsub.f32 %v1455, %v1456
    %v1458 = vand.u32 %v1457, 4294901760
    %1459 = vmatpush1.msra.mxu0 %v1458
    %1460 = vmatprep.subr.mxu0 0.0
    %v1461 = vand.u32 %v1292, 4294901760
    %v1462 = vsub.f32 %v1292, %v1461
    %v1463 = vand.u32 %v1462, 4294901760
    %v1464 = vsub.f32 %v1462, %v1463
    %v1465 = vand.u32 %v1464, 4294901760
    %1466 = vmatpush1.msra.mxu0 %v1465
    %1467 = vmatprep.subr.mxu0 0.0
    %v1468 = vand.u32 %v1293, 4294901760
    %v1469 = vsub.f32 %v1293, %v1468
    %v1470 = vand.u32 %v1469, 4294901760
    %v1471 = vsub.f32 %v1469, %v1470
    %v1472 = vand.u32 %v1471, 4294901760
    %1473 = vmatpush1.msra.mxu0 %v1472
    %1474 = vmatprep.subr.mxu0 0.0
    %v1475 = vand.u32 %v1294, 4294901760
    %v1476 = vsub.f32 %v1294, %v1475
    %v1477 = vand.u32 %v1476, 4294901760
    %v1478 = vsub.f32 %v1476, %v1477
    %v1479 = vand.u32 %v1478, 4294901760
    %1480 = vmatpush1.msra.mxu0 %v1479
    %1481 = vmatprep.subr.mxu0 0.0
    %v1482 = vand.u32 %v1295, 4294901760
    %v1483 = vsub.f32 %v1295, %v1482
    %v1484 = vand.u32 %v1483, 4294901760
    %v1485 = vsub.f32 %v1483, %v1484
    %v1486 = vand.u32 %v1485, 4294901760
    %1487 = vmatpush1.msra.mxu0 %v1486
    %1488 = vmatprep.subr.mxu0 0.0
    %v1489 = vand.u32 %v1296, 4294901760
    %v1490 = vsub.f32 %v1296, %v1489
    %v1491 = vand.u32 %v1490, 4294901760
    %v1492 = vsub.f32 %v1490, %v1491
    %v1493 = vand.u32 %v1492, 4294901760
    %1494 = vmatpush1.msra.mxu0 %v1493
    %1495 = vmatprep.subr.mxu0 0.0
    %v1496 = vand.u32 %v1297, 4294901760
    %v1497 = vsub.f32 %v1297, %v1496
    %v1498 = vand.u32 %v1497, 4294901760
    %v1499 = vsub.f32 %v1497, %v1498
    %v1500 = vand.u32 %v1499, 4294901760
    %1501 = vmatpush1.msra.mxu0 %v1500
    %1502 = vmatprep.subr.mxu0 0.0
    %v1503 = vand.u32 %v1298, 4294901760
    %v1504 = vsub.f32 %v1298, %v1503
    %v1505 = vand.u32 %v1504, 4294901760
    %v1506 = vsub.f32 %v1504, %v1505
    %v1507 = vand.u32 %v1506, 4294901760
    %1508 = vmatpush1.msra.mxu0 %v1507
    %1509 = vmatprep.subr.mxu0 0.0
    %1510 = vmatpush1.msra.mxu0 0.0
    %1511 = vmatprep.subr.mxu0 0.0
    %1512 = vmatpush1.msra.mxu0 0.0
    %1513 = vmatprep.subr.mxu0 0.0
    %1514 = vmatpush1.msra.mxu0 0.0
    %1515 = vmatprep.subr.mxu0 0.0
    %1516 = vmatpush1.msra.mxu0 0.0
    %1517 = vmatprep.subr.mxu0 0.0
    %1518 = vmatpush1.msra.mxu0 0.0
    %1519 = vmatprep.subr.mxu0 0.0
    %1520 = vmatpush1.msra.mxu0 0.0
    %1521 = vmatprep.subr.mxu0 0.0
    %1522 = vmatpush1.msra.mxu0 0.0
    %1523 = vmatprep.subr.mxu0 0.0
    %1524 = vmatpush1.msra.mxu0 0.0
    %1525 = vmatprep.subr.mxu0 0.0
    %1526 = vmatpush1.msra.mxu0 0.0
    %1527 = vmatprep.subr.mxu0 0.0
    %1528 = vmatpush1.msra.mxu0 0.0
    %1529 = vmatprep.subr.mxu0 0.0
    %1530 = vmatpush1.msra.mxu0 0.0
    %1531 = vmatprep.subr.mxu0 0.0
    %1532 = vmatpush1.msra.mxu0 0.0
    %1533 = vmatprep.subr.mxu0 0.0
    %1534 = vmatpush1.msra.mxu0 0.0
    %1535 = vmatprep.subr.mxu0 0.0
    %1536 = vmatpush1.msra.mxu0 0.0
    %1537 = vmatprep.subr.mxu0 0.0
    %1538 = vmatpush1.msra.mxu0 0.0
    %1539 = vmatprep.subr.mxu0 0.0
    %1540 = vmatpush1.msra.mxu0 0.0
    %1541 = vmatprep.mubr.f32.mxu0 0.0
    %v1542 = vand.u32 %v373, 4294901760
    %1543 = vmatmul.mubr.f32.gmra.mrb[0].mxu0 %v1542
    %v1544 = vpop.f32.mrb[0].mxu0
    %v1545 = vadd.f32 %v1394, %v1544
    %v1546 = vpop.f32.mrb[0].mxu0
    %1547 = vdwg.mxu0
    %1548 = vmatprep.subr.mxu0 0.0
    %v1549 = vand.u32 %v1283, 4294901760
    %v1550 = vsub.f32 %v1283, %v1549
    %1551 = vmatpush1.msra.mxu0 %v1550
    %1552 = vmatprep.subr.mxu0 0.0
    %v1553 = vand.u32 %v1284, 4294901760
    %v1554 = vsub.f32 %v1284, %v1553
    %1555 = vmatpush1.msra.mxu0 %v1554
    %1556 = vmatprep.subr.mxu0 0.0
    %v1557 = vand.u32 %v1285, 4294901760
    %v1558 = vsub.f32 %v1285, %v1557
    %1559 = vmatpush1.msra.mxu0 %v1558
    %1560 = vmatprep.subr.mxu0 0.0
    %v1561 = vand.u32 %v1286, 4294901760
    %v1562 = vsub.f32 %v1286, %v1561
    %1563 = vmatpush1.msra.mxu0 %v1562
    %1564 = vmatprep.subr.mxu0 0.0
    %v1565 = vand.u32 %v1287, 4294901760
    %v1566 = vsub.f32 %v1287, %v1565
    %1567 = vmatpush1.msra.mxu0 %v1566
    %1568 = vmatprep.subr.mxu0 0.0
    %v1569 = vand.u32 %v1288, 4294901760
    %v1570 = vsub.f32 %v1288, %v1569
    %1571 = vmatpush1.msra.mxu0 %v1570
    %1572 = vmatprep.subr.mxu0 0.0
    %v1573 = vand.u32 %v1289, 4294901760
    %v1574 = vsub.f32 %v1289, %v1573
    %1575 = vmatpush1.msra.mxu0 %v1574
    %1576 = vmatprep.subr.mxu0 0.0
    %v1577 = vand.u32 %v1290, 4294901760
    %v1578 = vsub.f32 %v1290, %v1577
    %1579 = vmatpush1.msra.mxu0 %v1578
    %1580 = vmatprep.subr.mxu0 0.0
    %v1581 = vand.u32 %v1291, 4294901760
    %v1582 = vsub.f32 %v1291, %v1581
    %1583 = vmatpush1.msra.mxu0 %v1582
    %1584 = vmatprep.subr.mxu0 0.0
    %v1585 = vand.u32 %v1292, 4294901760
    %v1586 = vsub.f32 %v1292, %v1585
    %1587 = vmatpush1.msra.mxu0 %v1586
    %1588 = vmatprep.subr.mxu0 0.0
    %v1589 = vand.u32 %v1293, 4294901760
    %v1590 = vsub.f32 %v1293, %v1589
    %1591 = vmatpush1.msra.mxu0 %v1590
    %1592 = vmatprep.subr.mxu0 0.0
    %v1593 = vand.u32 %v1294, 4294901760
    %v1594 = vsub.f32 %v1294, %v1593
    %1595 = vmatpush1.msra.mxu0 %v1594
    %1596 = vmatprep.subr.mxu0 0.0
    %v1597 = vand.u32 %v1295, 4294901760
    %v1598 = vsub.f32 %v1295, %v1597
    %1599 = vmatpush1.msra.mxu0 %v1598
    %1600 = vmatprep.subr.mxu0 0.0
    %v1601 = vand.u32 %v1296, 4294901760
    %v1602 = vsub.f32 %v1296, %v1601
    %1603 = vmatpush1.msra.mxu0 %v1602
    %1604 = vmatprep.subr.mxu0 0.0
    %v1605 = vand.u32 %v1297, 4294901760
    %v1606 = vsub.f32 %v1297, %v1605
    %1607 = vmatpush1.msra.mxu0 %v1606
    %1608 = vmatprep.subr.mxu0 0.0
    %v1609 = vand.u32 %v1298, 4294901760
    %v1610 = vsub.f32 %v1298, %v1609
    %1611 = vmatpush1.msra.mxu0 %v1610
    %1612 = vmatprep.subr.mxu0 0.0
    %1613 = vmatpush1.msra.mxu0 0.0
    %1614 = vmatprep.subr.mxu0 0.0
    %1615 = vmatpush1.msra.mxu0 0.0
    %1616 = vmatprep.subr.mxu0 0.0
    %1617 = vmatpush1.msra.mxu0 0.0
    %1618 = vmatprep.subr.mxu0 0.0
    %1619 = vmatpush1.msra.mxu0 0.0
    %1620 = vmatprep.subr.mxu0 0.0
    %1621 = vmatpush1.msra.mxu0 0.0
    %1622 = vmatprep.subr.mxu0 0.0
    %1623 = vmatpush1.msra.mxu0 0.0
    %1624 = vmatprep.subr.mxu0 0.0
    %1625 = vmatpush1.msra.mxu0 0.0
    %1626 = vmatprep.subr.mxu0 0.0
    %1627 = vmatpush1.msra.mxu0 0.0
    %1628 = vmatprep.subr.mxu0 0.0
    %1629 = vmatpush1.msra.mxu0 0.0
    %1630 = vmatprep.subr.mxu0 0.0
    %1631 = vmatpush1.msra.mxu0 0.0
    %1632 = vmatprep.subr.mxu0 0.0
    %1633 = vmatpush1.msra.mxu0 0.0
    %1634 = vmatprep.subr.mxu0 0.0
    %1635 = vmatpush1.msra.mxu0 0.0
    %1636 = vmatprep.subr.mxu0 0.0
    %1637 = vmatpush1.msra.mxu0 0.0
    %1638 = vmatprep.subr.mxu0 0.0
    %1639 = vmatpush1.msra.mxu0 0.0
    %1640 = vmatprep.subr.mxu0 0.0
    %1641 = vmatpush1.msra.mxu0 0.0
    %1642 = vmatprep.subr.mxu0 0.0
    %1643 = vmatpush1.msra.mxu0 0.0
    %1644 = vmatprep.mubr.f32.mxu0 0.0
    %v1645 = vand.u32 %v373, 4294901760
    %v1646 = vsub.f32 %v373, %v1645
    %1647 = vmatmul.mubr.f32.gmra.mrb[0].mxu0 %v1646
    %v1648 = vpop.f32.mrb[0].mxu0
    %v1649 = vadd.f32 %v1545, %v1648
    %v1650 = vpop.f32.mrb[0].mxu0
    %1651 = vdwg.mxu0
    %1652 = vmatprep.subr.mxu0 0.0
    %v1653 = vand.u32 %v1283, 4294901760
    %1654 = vmatpush1.msra.mxu0 %v1653
    %1655 = vmatprep.subr.mxu0 0.0
    %v1656 = vand.u32 %v1284, 4294901760
    %1657 = vmatpush1.msra.mxu0 %v1656
    %1658 = vmatprep.subr.mxu0 0.0
    %v1659 = vand.u32 %v1285, 4294901760
    %1660 = vmatpush1.msra.mxu0 %v1659
    %1661 = vmatprep.subr.mxu0 0.0
    %v1662 = vand.u32 %v1286, 4294901760
    %1663 = vmatpush1.msra.mxu0 %v1662
    %1664 = vmatprep.subr.mxu0 0.0
    %v1665 = vand.u32 %v1287, 4294901760
    %1666 = vmatpush1.msra.mxu0 %v1665
    %1667 = vmatprep.subr.mxu0 0.0
    %v1668 = vand.u32 %v1288, 4294901760
    %1669 = vmatpush1.msra.mxu0 %v1668
    %1670 = vmatprep.subr.mxu0 0.0
    %v1671 = vand.u32 %v1289, 4294901760
    %1672 = vmatpush1.msra.mxu0 %v1671
    %1673 = vmatprep.subr.mxu0 0.0
    %v1674 = vand.u32 %v1290, 4294901760
    %1675 = vmatpush1.msra.mxu0 %v1674
    %1676 = vmatprep.subr.mxu0 0.0
    %v1677 = vand.u32 %v1291, 4294901760
    %1678 = vmatpush1.msra.mxu0 %v1677
    %1679 = vmatprep.subr.mxu0 0.0
    %v1680 = vand.u32 %v1292, 4294901760
    %1681 = vmatpush1.msra.mxu0 %v1680
    %1682 = vmatprep.subr.mxu0 0.0
    %v1683 = vand.u32 %v1293, 4294901760
    %1684 = vmatpush1.msra.mxu0 %v1683
    %1685 = vmatprep.subr.mxu0 0.0
    %v1686 = vand.u32 %v1294, 4294901760
    %1687 = vmatpush1.msra.mxu0 %v1686
    %1688 = vmatprep.subr.mxu0 0.0
    %v1689 = vand.u32 %v1295, 4294901760
    %1690 = vmatpush1.msra.mxu0 %v1689
    %1691 = vmatprep.subr.mxu0 0.0
    %v1692 = vand.u32 %v1296, 4294901760
    %1693 = vmatpush1.msra.mxu0 %v1692
    %1694 = vmatprep.subr.mxu0 0.0
    %v1695 = vand.u32 %v1297, 4294901760
    %1696 = vmatpush1.msra.mxu0 %v1695
    %1697 = vmatprep.subr.mxu0 0.0
    %v1698 = vand.u32 %v1298, 4294901760
    %1699 = vmatpush1.msra.mxu0 %v1698
    %1700 = vmatprep.subr.mxu0 0.0
    %1701 = vmatpush1.msra.mxu0 0.0
    %1702 = vmatprep.subr.mxu0 0.0
    %1703 = vmatpush1.msra.mxu0 0.0
    %1704 = vmatprep.subr.mxu0 0.0
    %1705 = vmatpush1.msra.mxu0 0.0
    %1706 = vmatprep.subr.mxu0 0.0
    %1707 = vmatpush1.msra.mxu0 0.0
    %1708 = vmatprep.subr.mxu0 0.0
    %1709 = vmatpush1.msra.mxu0 0.0
    %1710 = vmatprep.subr.mxu0 0.0
    %1711 = vmatpush1.msra.mxu0 0.0
    %1712 = vmatprep.subr.mxu0 0.0
    %1713 = vmatpush1.msra.mxu0 0.0
    %1714 = vmatprep.subr.mxu0 0.0
    %1715 = vmatpush1.msra.mxu0 0.0
    %1716 = vmatprep.subr.mxu0 0.0
    %1717 = vmatpush1.msra.mxu0 0.0
    %1718 = vmatprep.subr.mxu0 0.0
    %1719 = vmatpush1.msra.mxu0 0.0
    %1720 = vmatprep.subr.mxu0 0.0
    %1721 = vmatpush1.msra.mxu0 0.0
    %1722 = vmatprep.subr.mxu0 0.0
    %1723 = vmatpush1.msra.mxu0 0.0
    %1724 = vmatprep.subr.mxu0 0.0
    %1725 = vmatpush1.msra.mxu0 0.0
    %1726 = vmatprep.subr.mxu0 0.0
    %1727 = vmatpush1.msra.mxu0 0.0
    %1728 = vmatprep.subr.mxu0 0.0
    %1729 = vmatpush1.msra.mxu0 0.0
    %1730 = vmatprep.subr.mxu0 0.0
    %1731 = vmatpush1.msra.mxu0 0.0
    %1732 = vmatprep.mubr.f32.mxu0 0.0
    %v1733 = vand.u32 %v373, 4294901760
    %v1734 = vsub.f32 %v373, %v1733
    %v1735 = vand.u32 %v1734, 4294901760
    %1736 = vmatmul.mubr.f32.gmra.mrb[0].mxu0 %v1735
    %v1737 = vpop.f32.mrb[0].mxu0
    %v1738 = vadd.f32 %v1649, %v1737
    %v1739 = vpop.f32.mrb[0].mxu0
    %1740 = vdwg.mxu0
    %1741 = vmatprep.subr.mxu0 0.0
    %v1742 = vand.u32 %v1283, 4294901760
    %v1743 = vsub.f32 %v1283, %v1742
    %v1744 = vand.u32 %v1743, 4294901760
    %1745 = vmatpush1.msra.mxu0 %v1744
    %1746 = vmatprep.subr.mxu0 0.0
    %v1747 = vand.u32 %v1284, 4294901760
    %v1748 = vsub.f32 %v1284, %v1747
    %v1749 = vand.u32 %v1748, 4294901760
    %1750 = vmatpush1.msra.mxu0 %v1749
    %1751 = vmatprep.subr.mxu0 0.0
    %v1752 = vand.u32 %v1285, 4294901760
    %v1753 = vsub.f32 %v1285, %v1752
    %v1754 = vand.u32 %v1753, 4294901760
    %1755 = vmatpush1.msra.mxu0 %v1754
    %1756 = vmatprep.subr.mxu0 0.0
    %v1757 = vand.u32 %v1286, 4294901760
    %v1758 = vsub.f32 %v1286, %v1757
    %v1759 = vand.u32 %v1758, 4294901760
    %1760 = vmatpush1.msra.mxu0 %v1759
    %1761 = vmatprep.subr.mxu0 0.0
    %v1762 = vand.u32 %v1287, 4294901760
    %v1763 = vsub.f32 %v1287, %v1762
    %v1764 = vand.u32 %v1763, 4294901760
    %1765 = vmatpush1.msra.mxu0 %v1764
    %1766 = vmatprep.subr.mxu0 0.0
    %v1767 = vand.u32 %v1288, 4294901760
    %v1768 = vsub.f32 %v1288, %v1767
    %v1769 = vand.u32 %v1768, 4294901760
    %1770 = vmatpush1.msra.mxu0 %v1769
    %1771 = vmatprep.subr.mxu0 0.0
    %v1772 = vand.u32 %v1289, 4294901760
    %v1773 = vsub.f32 %v1289, %v1772
    %v1774 = vand.u32 %v1773, 4294901760
    %1775 = vmatpush1.msra.mxu0 %v1774
    %1776 = vmatprep.subr.mxu0 0.0
    %v1777 = vand.u32 %v1290, 4294901760
    %v1778 = vsub.f32 %v1290, %v1777
    %v1779 = vand.u32 %v1778, 4294901760
    %1780 = vmatpush1.msra.mxu0 %v1779
    %1781 = vmatprep.subr.mxu0 0.0
    %v1782 = vand.u32 %v1291, 4294901760
    %v1783 = vsub.f32 %v1291, %v1782
    %v1784 = vand.u32 %v1783, 4294901760
    %1785 = vmatpush1.msra.mxu0 %v1784
    %1786 = vmatprep.subr.mxu0 0.0
    %v1787 = vand.u32 %v1292, 4294901760
    %v1788 = vsub.f32 %v1292, %v1787
    %v1789 = vand.u32 %v1788, 4294901760
    %1790 = vmatpush1.msra.mxu0 %v1789
    %1791 = vmatprep.subr.mxu0 0.0
    %v1792 = vand.u32 %v1293, 4294901760
    %v1793 = vsub.f32 %v1293, %v1792
    %v1794 = vand.u32 %v1793, 4294901760
    %1795 = vmatpush1.msra.mxu0 %v1794
    %1796 = vmatprep.subr.mxu0 0.0
    %v1797 = vand.u32 %v1294, 4294901760
    %v1798 = vsub.f32 %v1294, %v1797
    %v1799 = vand.u32 %v1798, 4294901760
    %1800 = vmatpush1.msra.mxu0 %v1799
    %1801 = vmatprep.subr.mxu0 0.0
    %v1802 = vand.u32 %v1295, 4294901760
    %v1803 = vsub.f32 %v1295, %v1802
    %v1804 = vand.u32 %v1803, 4294901760
    %1805 = vmatpush1.msra.mxu0 %v1804
    %1806 = vmatprep.subr.mxu0 0.0
    %v1807 = vand.u32 %v1296, 4294901760
    %v1808 = vsub.f32 %v1296, %v1807
    %v1809 = vand.u32 %v1808, 4294901760
    %1810 = vmatpush1.msra.mxu0 %v1809
    %1811 = vmatprep.subr.mxu0 0.0
    %v1812 = vand.u32 %v1297, 4294901760
    %v1813 = vsub.f32 %v1297, %v1812
    %v1814 = vand.u32 %v1813, 4294901760
    %1815 = vmatpush1.msra.mxu0 %v1814
    %1816 = vmatprep.subr.mxu0 0.0
    %v1817 = vand.u32 %v1298, 4294901760
    %v1818 = vsub.f32 %v1298, %v1817
    %v1819 = vand.u32 %v1818, 4294901760
    %1820 = vmatpush1.msra.mxu0 %v1819
    %1821 = vmatprep.subr.mxu0 0.0
    %1822 = vmatpush1.msra.mxu0 0.0
    %1823 = vmatprep.subr.mxu0 0.0
    %1824 = vmatpush1.msra.mxu0 0.0
    %1825 = vmatprep.subr.mxu0 0.0
    %1826 = vmatpush1.msra.mxu0 0.0
    %1827 = vmatprep.subr.mxu0 0.0
    %1828 = vmatpush1.msra.mxu0 0.0
    %1829 = vmatprep.subr.mxu0 0.0
    %1830 = vmatpush1.msra.mxu0 0.0
    %1831 = vmatprep.subr.mxu0 0.0
    %1832 = vmatpush1.msra.mxu0 0.0
    %1833 = vmatprep.subr.mxu0 0.0
    %1834 = vmatpush1.msra.mxu0 0.0
    %1835 = vmatprep.subr.mxu0 0.0
    %1836 = vmatpush1.msra.mxu0 0.0
    %1837 = vmatprep.subr.mxu0 0.0
    %1838 = vmatpush1.msra.mxu0 0.0
    %1839 = vmatprep.subr.mxu0 0.0
    %1840 = vmatpush1.msra.mxu0 0.0
    %1841 = vmatprep.subr.mxu0 0.0
    %1842 = vmatpush1.msra.mxu0 0.0
    %1843 = vmatprep.subr.mxu0 0.0
    %1844 = vmatpush1.msra.mxu0 0.0
    %1845 = vmatprep.subr.mxu0 0.0
    %1846 = vmatpush1.msra.mxu0 0.0
    %1847 = vmatprep.subr.mxu0 0.0
    %1848 = vmatpush1.msra.mxu0 0.0
    %1849 = vmatprep.subr.mxu0 0.0
    %1850 = vmatpush1.msra.mxu0 0.0
    %1851 = vmatprep.subr.mxu0 0.0
    %1852 = vmatpush1.msra.mxu0 0.0
    %1853 = vmatprep.mubr.f32.mxu0 0.0
    %v1854 = vand.u32 %v373, 4294901760
    %1855 = vmatmul.mubr.f32.gmra.mrb[0].mxu0 %v1854
    %v1856 = vpop.f32.mrb[0].mxu0
    %v1857 = vadd.f32 %v1738, %v1856
    %v1858 = vpop.f32.mrb[0].mxu0
    %1859 = vdwg.mxu0
    %1860 = vmatprep.subr.mxu0 0.0
    %v1861 = vand.u32 %v1283, 4294901760
    %1862 = vmatpush1.msra.mxu0 %v1861
    %1863 = vmatprep.subr.mxu0 0.0
    %v1864 = vand.u32 %v1284, 4294901760
    %1865 = vmatpush1.msra.mxu0 %v1864
    %1866 = vmatprep.subr.mxu0 0.0
    %v1867 = vand.u32 %v1285, 4294901760
    %1868 = vmatpush1.msra.mxu0 %v1867
    %1869 = vmatprep.subr.mxu0 0.0
    %v1870 = vand.u32 %v1286, 4294901760
    %1871 = vmatpush1.msra.mxu0 %v1870
    %1872 = vmatprep.subr.mxu0 0.0
    %v1873 = vand.u32 %v1287, 4294901760
    %1874 = vmatpush1.msra.mxu0 %v1873
    %1875 = vmatprep.subr.mxu0 0.0
    %v1876 = vand.u32 %v1288, 4294901760
    %1877 = vmatpush1.msra.mxu0 %v1876
    %1878 = vmatprep.subr.mxu0 0.0
    %v1879 = vand.u32 %v1289, 4294901760
    %1880 = vmatpush1.msra.mxu0 %v1879
    %1881 = vmatprep.subr.mxu0 0.0
    %v1882 = vand.u32 %v1290, 4294901760
    %1883 = vmatpush1.msra.mxu0 %v1882
    %1884 = vmatprep.subr.mxu0 0.0
    %v1885 = vand.u32 %v1291, 4294901760
    %1886 = vmatpush1.msra.mxu0 %v1885
    %1887 = vmatprep.subr.mxu0 0.0
    %v1888 = vand.u32 %v1292, 4294901760
    %1889 = vmatpush1.msra.mxu0 %v1888
    %1890 = vmatprep.subr.mxu0 0.0
    %v1891 = vand.u32 %v1293, 4294901760
    %1892 = vmatpush1.msra.mxu0 %v1891
    %1893 = vmatprep.subr.mxu0 0.0
    %v1894 = vand.u32 %v1294, 4294901760
    %1895 = vmatpush1.msra.mxu0 %v1894
    %1896 = vmatprep.subr.mxu0 0.0
    %v1897 = vand.u32 %v1295, 4294901760
    %1898 = vmatpush1.msra.mxu0 %v1897
    %1899 = vmatprep.subr.mxu0 0.0
    %v1900 = vand.u32 %v1296, 4294901760
    %1901 = vmatpush1.msra.mxu0 %v1900
    %1902 = vmatprep.subr.mxu0 0.0
    %v1903 = vand.u32 %v1297, 4294901760
    %1904 = vmatpush1.msra.mxu0 %v1903
    %1905 = vmatprep.subr.mxu0 0.0
    %v1906 = vand.u32 %v1298, 4294901760
    %1907 = vmatpush1.msra.mxu0 %v1906
    %1908 = vmatprep.subr.mxu0 0.0
    %1909 = vmatpush1.msra.mxu0 0.0
    %1910 = vmatprep.subr.mxu0 0.0
    %1911 = vmatpush1.msra.mxu0 0.0
    %1912 = vmatprep.subr.mxu0 0.0
    %1913 = vmatpush1.msra.mxu0 0.0
    %1914 = vmatprep.subr.mxu0 0.0
    %1915 = vmatpush1.msra.mxu0 0.0
    %1916 = vmatprep.subr.mxu0 0.0
    %1917 = vmatpush1.msra.mxu0 0.0
    %1918 = vmatprep.subr.mxu0 0.0
    %1919 = vmatpush1.msra.mxu0 0.0
    %1920 = vmatprep.subr.mxu0 0.0
    %1921 = vmatpush1.msra.mxu0 0.0
    %1922 = vmatprep.subr.mxu0 0.0
    %1923 = vmatpush1.msra.mxu0 0.0
    %1924 = vmatprep.subr.mxu0 0.0
    %1925 = vmatpush1.msra.mxu0 0.0
    %1926 = vmatprep.subr.mxu0 0.0
    %1927 = vmatpush1.msra.mxu0 0.0
    %1928 = vmatprep.subr.mxu0 0.0
    %1929 = vmatpush1.msra.mxu0 0.0
    %1930 = vmatprep.subr.mxu0 0.0
    %1931 = vmatpush1.msra.mxu0 0.0
    %1932 = vmatprep.subr.mxu0 0.0
    %1933 = vmatpush1.msra.mxu0 0.0
    %1934 = vmatprep.subr.mxu0 0.0
    %1935 = vmatpush1.msra.mxu0 0.0
    %1936 = vmatprep.subr.mxu0 0.0
    %1937 = vmatpush1.msra.mxu0 0.0
    %1938 = vmatprep.subr.mxu0 0.0
    %1939 = vmatpush1.msra.mxu0 0.0
    %1940 = vmatprep.mubr.f32.mxu0 0.0
    %v1941 = vand.u32 %v373, 4294901760
    %1942 = vmatmul.mubr.f32.gmra.mrb[0].mxu0 %v1941
    %v1943 = vpop.f32.mrb[0].mxu0
    %v1944 = vadd.f32 %v1857, %v1943
    %v1945 = vpop.f32.mrb[0].mxu0
    %1946 = vdwg.mxu0
    %v1947 = vadd.f32 %v1944, %v1282
    %v1948 = vmul.f32 %v1947, 0.5
    %v1949 = vmul.f32 %v1947, 0.70710677
    %v1950 = verf.f32.pop %v1949
    %v1951 = vadd.f32 %v1950, 1.0
    %v1952 = vmul.f32 %v1948, %v1951
    %v1953 = vld [vmem:[%s6] sm:$0xff]
    %1954 = vmatprep.subr.mxu0 0.0
    %v1955 = vand.u32 %v1953, 4294901760
    %1956 = vmatpush1.msra.mxu0 %v1955
    %1957 = vmatprep.subr.mxu0 0.0
    %1958 = vmatpush1.msra.mxu0 0.0
    %1959 = vmatprep.subr.mxu0 0.0
    %1960 = vmatpush1.msra.mxu0 0.0
    %1961 = vmatprep.subr.mxu0 0.0
    %1962 = vmatpush1.msra.mxu0 0.0
    %1963 = vmatprep.subr.mxu0 0.0
    %1964 = vmatpush1.msra.mxu0 0.0
    %1965 = vmatprep.subr.mxu0 0.0
    %1966 = vmatpush1.msra.mxu0 0.0
    %1967 = vmatprep.subr.mxu0 0.0
    %1968 = vmatpush1.msra.mxu0 0.0
    %1969 = vmatprep.subr.mxu0 0.0
    %1970 = vmatpush1.msra.mxu0 0.0
    %1971 = vmatprep.subr.mxu0 0.0
    %1972 = vmatpush1.msra.mxu0 0.0
    %1973 = vmatprep.subr.mxu0 0.0
    %1974 = vmatpush1.msra.mxu0 0.0
    %1975 = vmatprep.subr.mxu0 0.0
    %1976 = vmatpush1.msra.mxu0 0.0
    %1977 = vmatprep.subr.mxu0 0.0
    %1978 = vmatpush1.msra.mxu0 0.0
    %1979 = vmatprep.subr.mxu0 0.0
    %1980 = vmatpush1.msra.mxu0 0.0
    %1981 = vmatprep.subr.mxu0 0.0
    %1982 = vmatpush1.msra.mxu0 0.0
    %1983 = vmatprep.subr.mxu0 0.0
    %1984 = vmatpush1.msra.mxu0 0.0
    %1985 = vmatprep.subr.mxu0 0.0
    %1986 = vmatpush1.msra.mxu0 0.0
    %1987 = vmatprep.subr.mxu0 0.0
    %1988 = vmatpush1.msra.mxu0 0.0
    %1989 = vmatprep.subr.mxu0 0.0
    %1990 = vmatpush1.msra.mxu0 0.0
    %1991 = vmatprep.subr.mxu0 0.0
    %1992 = vmatpush1.msra.mxu0 0.0
    %1993 = vmatprep.subr.mxu0 0.0
    %1994 = vmatpush1.msra.mxu0 0.0
    %1995 = vmatprep.subr.mxu0 0.0
    %1996 = vmatpush1.msra.mxu0 0.0
    %1997 = vmatprep.subr.mxu0 0.0
    %1998 = vmatpush1.msra.mxu0 0.0
    %1999 = vmatprep.subr.mxu0 0.0
    %2000 = vmatpush1.msra.mxu0 0.0
    %2001 = vmatprep.subr.mxu0 0.0
    %2002 = vmatpush1.msra.mxu0 0.0
    %2003 = vmatprep.subr.mxu0 0.0
    %2004 = vmatpush1.msra.mxu0 0.0
    %2005 = vmatprep.subr.mxu0 0.0
    %2006 = vmatpush1.msra.mxu0 0.0
    %2007 = vmatprep.subr.mxu0 0.0
    %2008 = vmatpush1.msra.mxu0 0.0
    %2009 = vmatprep.subr.mxu0 0.0
    %2010 = vmatpush1.msra.mxu0 0.0
    %2011 = vmatprep.subr.mxu0 0.0
    %2012 = vmatpush1.msra.mxu0 0.0
    %2013 = vmatprep.subr.mxu0 0.0
    %2014 = vmatpush1.msra.mxu0 0.0
    %2015 = vmatprep.subr.mxu0 0.0
    %2016 = vmatpush1.msra.mxu0 0.0
    %2017 = vmatprep.subr.mxu0 0.0
    %2018 = vmatpush1.msra.mxu0 0.0
    %2019 = vmatprep.mubr.f32.mxu0 0.0
    %v2020 = vand.u32 %v383, 4294901760
    %v2021 = vsub.f32 %v383, %v2020
    %v2022 = vand.u32 %v2021, 4294901760
    %v2023 = vsub.f32 %v2021, %v2022
    %v2024 = vand.u32 %v2023, 4294901760
    %2025 = vmatmul.mubr.f32.gmra.mrb[0].mxu0 %v2024
    %v2026 = vpop.f32.mrb[0].mxu0
    %v2027 = vadd.f32 0.0, %v2026
    %v2028 = vpop.f32.mrb[0].mxu0
    %2029 = vdwg.mxu0
    %2030 = vmatprep.subr.mxu0 0.0
    %v2031 = vand.u32 %v1953, 4294901760
    %v2032 = vsub.f32 %v1953, %v2031
    %v2033 = vand.u32 %v2032, 4294901760
    %v2034 = vsub.f32 %v2032, %v2033
    %v2035 = vand.u32 %v2034, 4294901760
    %2036 = vmatpush1.msra.mxu0 %v2035
    %2037 = vmatprep.subr.mxu0 0.0
    %2038 = vmatpush1.msra.mxu0 0.0
    %2039 = vmatprep.subr.mxu0 0.0
    %2040 = vmatpush1.msra.mxu0 0.0
    %2041 = vmatprep.subr.mxu0 0.0
    %2042 = vmatpush1.msra.mxu0 0.0
    %2043 = vmatprep.subr.mxu0 0.0
    %2044 = vmatpush1.msra.mxu0 0.0
    %2045 = vmatprep.subr.mxu0 0.0
    %2046 = vmatpush1.msra.mxu0 0.0
    %2047 = vmatprep.subr.mxu0 0.0
    %2048 = vmatpush1.msra.mxu0 0.0
    %2049 = vmatprep.subr.mxu0 0.0
    %2050 = vmatpush1.msra.mxu0 0.0
    %2051 = vmatprep.subr.mxu0 0.0
    %2052 = vmatpush1.msra.mxu0 0.0
    %2053 = vmatprep.subr.mxu0 0.0
    %2054 = vmatpush1.msra.mxu0 0.0
    %2055 = vmatprep.subr.mxu0 0.0
    %2056 = vmatpush1.msra.mxu0 0.0
    %2057 = vmatprep.subr.mxu0 0.0
    %2058 = vmatpush1.msra.mxu0 0.0
    %2059 = vmatprep.subr.mxu0 0.0
    %2060 = vmatpush1.msra.mxu0 0.0
    %2061 = vmatprep.subr.mxu0 0.0
    %2062 = vmatpush1.msra.mxu0 0.0
    %2063 = vmatprep.subr.mxu0 0.0
    %2064 = vmatpush1.msra.mxu0 0.0
    %2065 = vmatprep.subr.mxu0 0.0
    %2066 = vmatpush1.msra.mxu0 0.0
    %2067 = vmatprep.subr.mxu0 0.0
    %2068 = vmatpush1.msra.mxu0 0.0
    %2069 = vmatprep.subr.mxu0 0.0
    %2070 = vmatpush1.msra.mxu0 0.0
    %2071 = vmatprep.subr.mxu0 0.0
    %2072 = vmatpush1.msra.mxu0 0.0
    %2073 = vmatprep.subr.mxu0 0.0
    %2074 = vmatpush1.msra.mxu0 0.0
    %2075 = vmatprep.subr.mxu0 0.0
    %2076 = vmatpush1.msra.mxu0 0.0
    %2077 = vmatprep.subr.mxu0 0.0
    %2078 = vmatpush1.msra.mxu0 0.0
    %2079 = vmatprep.subr.mxu0 0.0
    %2080 = vmatpush1.msra.mxu0 0.0
    %2081 = vmatprep.subr.mxu0 0.0
    %2082 = vmatpush1.msra.mxu0 0.0
    %2083 = vmatprep.subr.mxu0 0.0
    %2084 = vmatpush1.msra.mxu0 0.0
    %2085 = vmatprep.subr.mxu0 0.0
    %2086 = vmatpush1.msra.mxu0 0.0
    %2087 = vmatprep.subr.mxu0 0.0
    %2088 = vmatpush1.msra.mxu0 0.0
    %2089 = vmatprep.subr.mxu0 0.0
    %2090 = vmatpush1.msra.mxu0 0.0
    %2091 = vmatprep.subr.mxu0 0.0
    %2092 = vmatpush1.msra.mxu0 0.0
    %2093 = vmatprep.subr.mxu0 0.0
    %2094 = vmatpush1.msra.mxu0 0.0
    %2095 = vmatprep.subr.mxu0 0.0
    %2096 = vmatpush1.msra.mxu0 0.0
    %2097 = vmatprep.subr.mxu0 0.0
    %2098 = vmatpush1.msra.mxu0 0.0
    %2099 = vmatprep.mubr.f32.mxu0 0.0
    %v2100 = vand.u32 %v383, 4294901760
    %2101 = vmatmul.mubr.f32.gmra.mrb[0].mxu0 %v2100
    %v2102 = vpop.f32.mrb[0].mxu0
    %v2103 = vadd.f32 %v2027, %v2102
    %v2104 = vpop.f32.mrb[0].mxu0
    %2105 = vdwg.mxu0
    %2106 = vmatprep.subr.mxu0 0.0
    %v2107 = vand.u32 %v1953, 4294901760
    %v2108 = vsub.f32 %v1953, %v2107
    %2109 = vmatpush1.msra.mxu0 %v2108
    %2110 = vmatprep.subr.mxu0 0.0
    %2111 = vmatpush1.msra.mxu0 0.0
    %2112 = vmatprep.subr.mxu0 0.0
    %2113 = vmatpush1.msra.mxu0 0.0
    %2114 = vmatprep.subr.mxu0 0.0
    %2115 = vmatpush1.msra.mxu0 0.0
    %2116 = vmatprep.subr.mxu0 0.0
    %2117 = vmatpush1.msra.mxu0 0.0
    %2118 = vmatprep.subr.mxu0 0.0
    %2119 = vmatpush1.msra.mxu0 0.0
    %2120 = vmatprep.subr.mxu0 0.0
    %2121 = vmatpush1.msra.mxu0 0.0
    %2122 = vmatprep.subr.mxu0 0.0
    %2123 = vmatpush1.msra.mxu0 0.0
    %2124 = vmatprep.subr.mxu0 0.0
    %2125 = vmatpush1.msra.mxu0 0.0
    %2126 = vmatprep.subr.mxu0 0.0
    %2127 = vmatpush1.msra.mxu0 0.0
    %2128 = vmatprep.subr.mxu0 0.0
    %2129 = vmatpush1.msra.mxu0 0.0
    %2130 = vmatprep.subr.mxu0 0.0
    %2131 = vmatpush1.msra.mxu0 0.0
    %2132 = vmatprep.subr.mxu0 0.0
    %2133 = vmatpush1.msra.mxu0 0.0
    %2134 = vmatprep.subr.mxu0 0.0
    %2135 = vmatpush1.msra.mxu0 0.0
    %2136 = vmatprep.subr.mxu0 0.0
    %2137 = vmatpush1.msra.mxu0 0.0
    %2138 = vmatprep.subr.mxu0 0.0
    %2139 = vmatpush1.msra.mxu0 0.0
    %2140 = vmatprep.subr.mxu0 0.0
    %2141 = vmatpush1.msra.mxu0 0.0
    %2142 = vmatprep.subr.mxu0 0.0
    %2143 = vmatpush1.msra.mxu0 0.0
    %2144 = vmatprep.subr.mxu0 0.0
    %2145 = vmatpush1.msra.mxu0 0.0
    %2146 = vmatprep.subr.mxu0 0.0
    %2147 = vmatpush1.msra.mxu0 0.0
    %2148 = vmatprep.subr.mxu0 0.0
    %2149 = vmatpush1.msra.mxu0 0.0
    %2150 = vmatprep.subr.mxu0 0.0
    %2151 = vmatpush1.msra.mxu0 0.0
    %2152 = vmatprep.subr.mxu0 0.0
    %2153 = vmatpush1.msra.mxu0 0.0
    %2154 = vmatprep.subr.mxu0 0.0
    %2155 = vmatpush1.msra.mxu0 0.0
    %2156 = vmatprep.subr.mxu0 0.0
    %2157 = vmatpush1.msra.mxu0 0.0
    %2158 = vmatprep.subr.mxu0 0.0
    %2159 = vmatpush1.msra.mxu0 0.0
    %2160 = vmatprep.subr.mxu0 0.0
    %2161 = vmatpush1.msra.mxu0 0.0
    %2162 = vmatprep.subr.mxu0 0.0
    %2163 = vmatpush1.msra.mxu0 0.0
    %2164 = vmatprep.subr.mxu0 0.0
    %2165 = vmatpush1.msra.mxu0 0.0
    %2166 = vmatprep.subr.mxu0 0.0
    %2167 = vmatpush1.msra.mxu0 0.0
    %2168 = vmatprep.subr.mxu0 0.0
    %2169 = vmatpush1.msra.mxu0 0.0
    %2170 = vmatprep.subr.mxu0 0.0
    %2171 = vmatpush1.msra.mxu0 0.0
    %2172 = vmatprep.mubr.f32.mxu0 0.0
    %v2173 = vand.u32 %v383, 4294901760
    %v2174 = vsub.f32 %v383, %v2173
    %2175 = vmatmul.mubr.f32.gmra.mrb[0].mxu0 %v2174
    %v2176 = vpop.f32.mrb[0].mxu0
    %v2177 = vadd.f32 %v2103, %v2176
    %v2178 = vpop.f32.mrb[0].mxu0
    %2179 = vdwg.mxu0
    %2180 = vmatprep.subr.mxu0 0.0
    %v2181 = vand.u32 %v1953, 4294901760
    %2182 = vmatpush1.msra.mxu0 %v2181
    %2183 = vmatprep.subr.mxu0 0.0
    %2184 = vmatpush1.msra.mxu0 0.0
    %2185 = vmatprep.subr.mxu0 0.0
    %2186 = vmatpush1.msra.mxu0 0.0
    %2187 = vmatprep.subr.mxu0 0.0
    %2188 = vmatpush1.msra.mxu0 0.0
    %2189 = vmatprep.subr.mxu0 0.0
    %2190 = vmatpush1.msra.mxu0 0.0
    %2191 = vmatprep.subr.mxu0 0.0
    %2192 = vmatpush1.msra.mxu0 0.0
    %2193 = vmatprep.subr.mxu0 0.0
    %2194 = vmatpush1.msra.mxu0 0.0
    %2195 = vmatprep.subr.mxu0 0.0
    %2196 = vmatpush1.msra.mxu0 0.0
    %2197 = vmatprep.subr.mxu0 0.0
    %2198 = vmatpush1.msra.mxu0 0.0
    %2199 = vmatprep.subr.mxu0 0.0
    %2200 = vmatpush1.msra.mxu0 0.0
    %2201 = vmatprep.subr.mxu0 0.0
    %2202 = vmatpush1.msra.mxu0 0.0
    %2203 = vmatprep.subr.mxu0 0.0
    %2204 = vmatpush1.msra.mxu0 0.0
    %2205 = vmatprep.subr.mxu0 0.0
    %2206 = vmatpush1.msra.mxu0 0.0
    %2207 = vmatprep.subr.mxu0 0.0
    %2208 = vmatpush1.msra.mxu0 0.0
    %2209 = vmatprep.subr.mxu0 0.0
    %2210 = vmatpush1.msra.mxu0 0.0
    %2211 = vmatprep.subr.mxu0 0.0
    %2212 = vmatpush1.msra.mxu0 0.0
    %2213 = vmatprep.subr.mxu0 0.0
    %2214 = vmatpush1.msra.mxu0 0.0
    %2215 = vmatprep.subr.mxu0 0.0
    %2216 = vmatpush1.msra.mxu0 0.0
    %2217 = vmatprep.subr.mxu0 0.0
    %2218 = vmatpush1.msra.mxu0 0.0
    %2219 = vmatprep.subr.mxu0 0.0
    %2220 = vmatpush1.msra.mxu0 0.0
    %2221 = vmatprep.subr.mxu0 0.0
    %2222 = vmatpush1.msra.mxu0 0.0
    %2223 = vmatprep.subr.mxu0 0.0
    %2224 = vmatpush1.msra.mxu0 0.0
    %2225 = vmatprep.subr.mxu0 0.0
    %2226 = vmatpush1.msra.mxu0 0.0
    %2227 = vmatprep.subr.mxu0 0.0
    %2228 = vmatpush1.msra.mxu0 0.0
    %2229 = vmatprep.subr.mxu0 0.0
    %2230 = vmatpush1.msra.mxu0 0.0
    %2231 = vmatprep.subr.mxu0 0.0
    %2232 = vmatpush1.msra.mxu0 0.0
    %2233 = vmatprep.subr.mxu0 0.0
    %2234 = vmatpush1.msra.mxu0 0.0
    %2235 = vmatprep.subr.mxu0 0.0
    %2236 = vmatpush1.msra.mxu0 0.0
    %2237 = vmatprep.subr.mxu0 0.0
    %2238 = vmatpush1.msra.mxu0 0.0
    %2239 = vmatprep.subr.mxu0 0.0
    %2240 = vmatpush1.msra.mxu0 0.0
    %2241 = vmatprep.subr.mxu0 0.0
    %2242 = vmatpush1.msra.mxu0 0.0
    %2243 = vmatprep.subr.mxu0 0.0
    %2244 = vmatpush1.msra.mxu0 0.0
    %2245 = vmatprep.mubr.f32.mxu0 0.0
    %v2246 = vand.u32 %v383, 4294901760
    %v2247 = vsub.f32 %v383, %v2246
    %v2248 = vand.u32 %v2247, 4294901760
    %2249 = vmatmul.mubr.f32.gmra.mrb[0].mxu0 %v2248
    %v2250 = vpop.f32.mrb[0].mxu0
    %v2251 = vadd.f32 %v2177, %v2250
    %v2252 = vpop.f32.mrb[0].mxu0
    %2253 = vdwg.mxu0
    %2254 = vmatprep.subr.mxu0 0.0
    %v2255 = vand.u32 %v1953, 4294901760
    %v2256 = vsub.f32 %v1953, %v2255
    %v2257 = vand.u32 %v2256, 4294901760
    %2258 = vmatpush1.msra.mxu0 %v2257
    %2259 = vmatprep.subr.mxu0 0.0
    %2260 = vmatpush1.msra.mxu0 0.0
    %2261 = vmatprep.subr.mxu0 0.0
    %2262 = vmatpush1.msra.mxu0 0.0
    %2263 = vmatprep.subr.mxu0 0.0
    %2264 = vmatpush1.msra.mxu0 0.0
    %2265 = vmatprep.subr.mxu0 0.0
    %2266 = vmatpush1.msra.mxu0 0.0
    %2267 = vmatprep.subr.mxu0 0.0
    %2268 = vmatpush1.msra.mxu0 0.0
    %2269 = vmatprep.subr.mxu0 0.0
    %2270 = vmatpush1.msra.mxu0 0.0
    %2271 = vmatprep.subr.mxu0 0.0
    %2272 = vmatpush1.msra.mxu0 0.0
    %2273 = vmatprep.subr.mxu0 0.0
    %2274 = vmatpush1.msra.mxu0 0.0
    %2275 = vmatprep.subr.mxu0 0.0
    %2276 = vmatpush1.msra.mxu0 0.0
    %2277 = vmatprep.subr.mxu0 0.0
    %2278 = vmatpush1.msra.mxu0 0.0
    %2279 = vmatprep.subr.mxu0 0.0
    %2280 = vmatpush1.msra.mxu0 0.0
    %2281 = vmatprep.subr.mxu0 0.0
    %2282 = vmatpush1.msra.mxu0 0.0
    %2283 = vmatprep.subr.mxu0 0.0
    %2284 = vmatpush1.msra.mxu0 0.0
    %2285 = vmatprep.subr.mxu0 0.0
    %2286 = vmatpush1.msra.mxu0 0.0
    %2287 = vmatprep.subr.mxu0 0.0
    %2288 = vmatpush1.msra.mxu0 0.0
    %2289 = vmatprep.subr.mxu0 0.0
    %2290 = vmatpush1.msra.mxu0 0.0
    %2291 = vmatprep.subr.mxu0 0.0
    %2292 = vmatpush1.msra.mxu0 0.0
    %2293 = vmatprep.subr.mxu0 0.0
    %2294 = vmatpush1.msra.mxu0 0.0
    %2295 = vmatprep.subr.mxu0 0.0
    %2296 = vmatpush1.msra.mxu0 0.0
    %2297 = vmatprep.subr.mxu0 0.0
    %2298 = vmatpush1.msra.mxu0 0.0
    %2299 = vmatprep.subr.mxu0 0.0
    %2300 = vmatpush1.msra.mxu0 0.0
    %2301 = vmatprep.subr.mxu0 0.0
    %2302 = vmatpush1.msra.mxu0 0.0
    %2303 = vmatprep.subr.mxu0 0.0
    %2304 = vmatpush1.msra.mxu0 0.0
    %2305 = vmatprep.subr.mxu0 0.0
    %2306 = vmatpush1.msra.mxu0 0.0
    %2307 = vmatprep.subr.mxu0 0.0
    %2308 = vmatpush1.msra.mxu0 0.0
    %2309 = vmatprep.subr.mxu0 0.0
    %2310 = vmatpush1.msra.mxu0 0.0
    %2311 = vmatprep.subr.mxu0 0.0
    %2312 = vmatpush1.msra.mxu0 0.0
    %2313 = vmatprep.subr.mxu0 0.0
    %2314 = vmatpush1.msra.mxu0 0.0
    %2315 = vmatprep.subr.mxu0 0.0
    %2316 = vmatpush1.msra.mxu0 0.0
    %2317 = vmatprep.subr.mxu0 0.0
    %2318 = vmatpush1.msra.mxu0 0.0
    %2319 = vmatprep.subr.mxu0 0.0
    %2320 = vmatpush1.msra.mxu0 0.0
    %2321 = vmatprep.mubr.f32.mxu0 0.0
    %v2322 = vand.u32 %v383, 4294901760
    %2323 = vmatmul.mubr.f32.gmra.mrb[0].mxu0 %v2322
    %v2324 = vpop.f32.mrb[0].mxu0
    %v2325 = vadd.f32 %v2251, %v2324
    %v2326 = vpop.f32.mrb[0].mxu0
    %2327 = vdwg.mxu0
    %2328 = vmatprep.subr.mxu0 0.0
    %v2329 = vand.u32 %v1953, 4294901760
    %2330 = vmatpush1.msra.mxu0 %v2329
    %2331 = vmatprep.subr.mxu0 0.0
    %2332 = vmatpush1.msra.mxu0 0.0
    %2333 = vmatprep.subr.mxu0 0.0
    %2334 = vmatpush1.msra.mxu0 0.0
    %2335 = vmatprep.subr.mxu0 0.0
    %2336 = vmatpush1.msra.mxu0 0.0
    %2337 = vmatprep.subr.mxu0 0.0
    %2338 = vmatpush1.msra.mxu0 0.0
    %2339 = vmatprep.subr.mxu0 0.0
    %2340 = vmatpush1.msra.mxu0 0.0
    %2341 = vmatprep.subr.mxu0 0.0
    %2342 = vmatpush1.msra.mxu0 0.0
    %2343 = vmatprep.subr.mxu0 0.0
    %2344 = vmatpush1.msra.mxu0 0.0
    %2345 = vmatprep.subr.mxu0 0.0
    %2346 = vmatpush1.msra.mxu0 0.0
    %2347 = vmatprep.subr.mxu0 0.0
    %2348 = vmatpush1.msra.mxu0 0.0
    %2349 = vmatprep.subr.mxu0 0.0
    %2350 = vmatpush1.msra.mxu0 0.0
    %2351 = vmatprep.subr.mxu0 0.0
    %2352 = vmatpush1.msra.mxu0 0.0
    %2353 = vmatprep.subr.mxu0 0.0
    %2354 = vmatpush1.msra.mxu0 0.0
    %2355 = vmatprep.subr.mxu0 0.0
    %2356 = vmatpush1.msra.mxu0 0.0
    %2357 = vmatprep.subr.mxu0 0.0
    %2358 = vmatpush1.msra.mxu0 0.0
    %2359 = vmatprep.subr.mxu0 0.0
    %2360 = vmatpush1.msra.mxu0 0.0
    %2361 = vmatprep.subr.mxu0 0.0
    %2362 = vmatpush1.msra.mxu0 0.0
    %2363 = vmatprep.subr.mxu0 0.0
    %2364 = vmatpush1.msra.mxu0 0.0
    %2365 = vmatprep.subr.mxu0 0.0
    %2366 = vmatpush1.msra.mxu0 0.0
    %2367 = vmatprep.subr.mxu0 0.0
    %2368 = vmatpush1.msra.mxu0 0.0
    %2369 = vmatprep.subr.mxu0 0.0
    %2370 = vmatpush1.msra.mxu0 0.0
    %2371 = vmatprep.subr.mxu0 0.0
    %2372 = vmatpush1.msra.mxu0 0.0
    %2373 = vmatprep.subr.mxu0 0.0
    %2374 = vmatpush1.msra.mxu0 0.0
    %2375 = vmatprep.subr.mxu0 0.0
    %2376 = vmatpush1.msra.mxu0 0.0
    %2377 = vmatprep.subr.mxu0 0.0
    %2378 = vmatpush1.msra.mxu0 0.0
    %2379 = vmatprep.subr.mxu0 0.0
    %2380 = vmatpush1.msra.mxu0 0.0
    %2381 = vmatprep.subr.mxu0 0.0
    %2382 = vmatpush1.msra.mxu0 0.0
    %2383 = vmatprep.subr.mxu0 0.0
    %2384 = vmatpush1.msra.mxu0 0.0
    %2385 = vmatprep.subr.mxu0 0.0
    %2386 = vmatpush1.msra.mxu0 0.0
    %2387 = vmatprep.subr.mxu0 0.0
    %2388 = vmatpush1.msra.mxu0 0.0
    %2389 = vmatprep.subr.mxu0 0.0
    %2390 = vmatpush1.msra.mxu0 0.0
    %2391 = vmatprep.subr.mxu0 0.0
    %2392 = vmatpush1.msra.mxu0 0.0
    %2393 = vmatprep.mubr.f32.mxu0 0.0
    %v2394 = vand.u32 %v383, 4294901760
    %2395 = vmatmul.mubr.f32.gmra.mrb[0].mxu0 %v2394
    %v2396 = vpop.f32.mrb[0].mxu0
    %v2397 = vadd.f32 %v2325, %v2396
    %v2398 = vpop.f32.mrb[0].mxu0
    %2399 = vdwg.mxu0
    %v2400 = vld [vmem:[%s7] sm:$0xff]
    %2401 = vmatprep.subr.mxu0 0.0
    %v2402 = vand.u32 %v2400, 4294901760
    %2403 = vmatpush1.msra.mxu0 %v2402
    %2404 = vmatprep.subr.mxu0 0.0
    %2405 = vmatpush1.msra.mxu0 0.0
    %2406 = vmatprep.subr.mxu0 0.0
    %2407 = vmatpush1.msra.mxu0 0.0
    %2408 = vmatprep.subr.mxu0 0.0
    %2409 = vmatpush1.msra.mxu0 0.0
    %2410 = vmatprep.subr.mxu0 0.0
    %2411 = vmatpush1.msra.mxu0 0.0
    %2412 = vmatprep.subr.mxu0 0.0
    %2413 = vmatpush1.msra.mxu0 0.0
    %2414 = vmatprep.subr.mxu0 0.0
    %2415 = vmatpush1.msra.mxu0 0.0
    %2416 = vmatprep.subr.mxu0 0.0
    %2417 = vmatpush1.msra.mxu0 0.0
    %2418 = vmatprep.subr.mxu0 0.0
    %2419 = vmatpush1.msra.mxu0 0.0
    %2420 = vmatprep.subr.mxu0 0.0
    %2421 = vmatpush1.msra.mxu0 0.0
    %2422 = vmatprep.subr.mxu0 0.0
    %2423 = vmatpush1.msra.mxu0 0.0
    %2424 = vmatprep.subr.mxu0 0.0
    %2425 = vmatpush1.msra.mxu0 0.0
    %2426 = vmatprep.subr.mxu0 0.0
    %2427 = vmatpush1.msra.mxu0 0.0
    %2428 = vmatprep.subr.mxu0 0.0
    %2429 = vmatpush1.msra.mxu0 0.0
    %2430 = vmatprep.subr.mxu0 0.0
    %2431 = vmatpush1.msra.mxu0 0.0
    %2432 = vmatprep.subr.mxu0 0.0
    %2433 = vmatpush1.msra.mxu0 0.0
    %2434 = vmatprep.subr.mxu0 0.0
    %2435 = vmatpush1.msra.mxu0 0.0
    %2436 = vmatprep.subr.mxu0 0.0
    %2437 = vmatpush1.msra.mxu0 0.0
    %2438 = vmatprep.subr.mxu0 0.0
    %2439 = vmatpush1.msra.mxu0 0.0
    %2440 = vmatprep.subr.mxu0 0.0
    %2441 = vmatpush1.msra.mxu0 0.0
    %2442 = vmatprep.subr.mxu0 0.0
    %2443 = vmatpush1.msra.mxu0 0.0
    %2444 = vmatprep.subr.mxu0 0.0
    %2445 = vmatpush1.msra.mxu0 0.0
    %2446 = vmatprep.subr.mxu0 0.0
    %2447 = vmatpush1.msra.mxu0 0.0
    %2448 = vmatprep.subr.mxu0 0.0
    %2449 = vmatpush1.msra.mxu0 0.0
    %2450 = vmatprep.subr.mxu0 0.0
    %2451 = vmatpush1.msra.mxu0 0.0
    %2452 = vmatprep.subr.mxu0 0.0
    %2453 = vmatpush1.msra.mxu0 0.0
    %2454 = vmatprep.subr.mxu0 0.0
    %2455 = vmatpush1.msra.mxu0 0.0
    %2456 = vmatprep.subr.mxu0 0.0
    %2457 = vmatpush1.msra.mxu0 0.0
    %2458 = vmatprep.subr.mxu0 0.0
    %2459 = vmatpush1.msra.mxu0 0.0
    %2460 = vmatprep.subr.mxu0 0.0
    %2461 = vmatpush1.msra.mxu0 0.0
    %2462 = vmatprep.subr.mxu0 0.0
    %2463 = vmatpush1.msra.mxu0 0.0
    %2464 = vmatprep.subr.mxu0 0.0
    %2465 = vmatpush1.msra.mxu0 0.0
    %2466 = vmatprep.mubr.f32.mxu0 0.0
    %v2467 = vand.u32 %v383, 4294901760
    %v2468 = vsub.f32 %v383, %v2467
    %v2469 = vand.u32 %v2468, 4294901760
    %v2470 = vsub.f32 %v2468, %v2469
    %v2471 = vand.u32 %v2470, 4294901760
    %2472 = vmatmul.mubr.f32.gmra.mrb[0].mxu0 %v2471
    %v2473 = vpop.f32.mrb[0].mxu0
    %v2474 = vadd.f32 0.0, %v2473
    %v2475 = vpop.f32.mrb[0].mxu0
    %2476 = vdwg.mxu0
    %2477 = vmatprep.subr.mxu0 0.0
    %v2478 = vand.u32 %v2400, 4294901760
    %v2479 = vsub.f32 %v2400, %v2478
    %v2480 = vand.u32 %v2479, 4294901760
    %v2481 = vsub.f32 %v2479, %v2480
    %v2482 = vand.u32 %v2481, 4294901760
    %2483 = vmatpush1.msra.mxu0 %v2482
    %2484 = vmatprep.subr.mxu0 0.0
    %2485 = vmatpush1.msra.mxu0 0.0
    %2486 = vmatprep.subr.mxu0 0.0
    %2487 = vmatpush1.msra.mxu0 0.0
    %2488 = vmatprep.subr.mxu0 0.0
    %2489 = vmatpush1.msra.mxu0 0.0
    %2490 = vmatprep.subr.mxu0 0.0
    %2491 = vmatpush1.msra.mxu0 0.0
    %2492 = vmatprep.subr.mxu0 0.0
    %2493 = vmatpush1.msra.mxu0 0.0
    %2494 = vmatprep.subr.mxu0 0.0
    %2495 = vmatpush1.msra.mxu0 0.0
    %2496 = vmatprep.subr.mxu0 0.0
    %2497 = vmatpush1.msra.mxu0 0.0
    %2498 = vmatprep.subr.mxu0 0.0
    %2499 = vmatpush1.msra.mxu0 0.0
    %2500 = vmatprep.subr.mxu0 0.0
    %2501 = vmatpush1.msra.mxu0 0.0
    %2502 = vmatprep.subr.mxu0 0.0
    %2503 = vmatpush1.msra.mxu0 0.0
    %2504 = vmatprep.subr.mxu0 0.0
    %2505 = vmatpush1.msra.mxu0 0.0
    %2506 = vmatprep.subr.mxu0 0.0
    %2507 = vmatpush1.msra.mxu0 0.0
    %2508 = vmatprep.subr.mxu0 0.0
    %2509 = vmatpush1.msra.mxu0 0.0
    %2510 = vmatprep.subr.mxu0 0.0
    %2511 = vmatpush1.msra.mxu0 0.0
    %2512 = vmatprep.subr.mxu0 0.0
    %2513 = vmatpush1.msra.mxu0 0.0
    %2514 = vmatprep.subr.mxu0 0.0
    %2515 = vmatpush1.msra.mxu0 0.0
    %2516 = vmatprep.subr.mxu0 0.0
    %2517 = vmatpush1.msra.mxu0 0.0
    %2518 = vmatprep.subr.mxu0 0.0
    %2519 = vmatpush1.msra.mxu0 0.0
    %2520 = vmatprep.subr.mxu0 0.0
    %2521 = vmatpush1.msra.mxu0 0.0
    %2522 = vmatprep.subr.mxu0 0.0
    %2523 = vmatpush1.msra.mxu0 0.0
    %2524 = vmatprep.subr.mxu0 0.0
    %2525 = vmatpush1.msra.mxu0 0.0
    %2526 = vmatprep.subr.mxu0 0.0
    %2527 = vmatpush1.msra.mxu0 0.0
    %2528 = vmatprep.subr.mxu0 0.0
    %2529 = vmatpush1.msra.mxu0 0.0
    %2530 = vmatprep.subr.mxu0 0.0
    %2531 = vmatpush1.msra.mxu0 0.0
    %2532 = vmatprep.subr.mxu0 0.0
    %2533 = vmatpush1.msra.mxu0 0.0
    %2534 = vmatprep.subr.mxu0 0.0
    %2535 = vmatpush1.msra.mxu0 0.0
    %2536 = vmatprep.subr.mxu0 0.0
    %2537 = vmatpush1.msra.mxu0 0.0
    %2538 = vmatprep.subr.mxu0 0.0
    %2539 = vmatpush1.msra.mxu0 0.0
    %2540 = vmatprep.subr.mxu0 0.0
    %2541 = vmatpush1.msra.mxu0 0.0
    %2542 = vmatprep.subr.mxu0 0.0
    %2543 = vmatpush1.msra.mxu0 0.0
    %2544 = vmatprep.subr.mxu0 0.0
    %2545 = vmatpush1.msra.mxu0 0.0
    %2546 = vmatprep.mubr.f32.mxu0 0.0
    %v2547 = vand.u32 %v383, 4294901760
    %2548 = vmatmul.mubr.f32.gmra.mrb[0].mxu0 %v2547
    %v2549 = vpop.f32.mrb[0].mxu0
    %v2550 = vadd.f32 %v2474, %v2549
    %v2551 = vpop.f32.mrb[0].mxu0
    %2552 = vdwg.mxu0
    %2553 = vmatprep.subr.mxu0 0.0
    %v2554 = vand.u32 %v2400, 4294901760
    %v2555 = vsub.f32 %v2400, %v2554
    %2556 = vmatpush1.msra.mxu0 %v2555
    %2557 = vmatprep.subr.mxu0 0.0
    %2558 = vmatpush1.msra.mxu0 0.0
    %2559 = vmatprep.subr.mxu0 0.0
    %2560 = vmatpush1.msra.mxu0 0.0
    %2561 = vmatprep.subr.mxu0 0.0
    %2562 = vmatpush1.msra.mxu0 0.0
    %2563 = vmatprep.subr.mxu0 0.0
    %2564 = vmatpush1.msra.mxu0 0.0
    %2565 = vmatprep.subr.mxu0 0.0
    %2566 = vmatpush1.msra.mxu0 0.0
    %2567 = vmatprep.subr.mxu0 0.0
    %2568 = vmatpush1.msra.mxu0 0.0
    %2569 = vmatprep.subr.mxu0 0.0
    %2570 = vmatpush1.msra.mxu0 0.0
    %2571 = vmatprep.subr.mxu0 0.0
    %2572 = vmatpush1.msra.mxu0 0.0
    %2573 = vmatprep.subr.mxu0 0.0
    %2574 = vmatpush1.msra.mxu0 0.0
    %2575 = vmatprep.subr.mxu0 0.0
    %2576 = vmatpush1.msra.mxu0 0.0
    %2577 = vmatprep.subr.mxu0 0.0
    %2578 = vmatpush1.msra.mxu0 0.0
    %2579 = vmatprep.subr.mxu0 0.0
    %2580 = vmatpush1.msra.mxu0 0.0
    %2581 = vmatprep.subr.mxu0 0.0
    %2582 = vmatpush1.msra.mxu0 0.0
    %2583 = vmatprep.subr.mxu0 0.0
    %2584 = vmatpush1.msra.mxu0 0.0
    %2585 = vmatprep.subr.mxu0 0.0
    %2586 = vmatpush1.msra.mxu0 0.0
    %2587 = vmatprep.subr.mxu0 0.0
    %2588 = vmatpush1.msra.mxu0 0.0
    %2589 = vmatprep.subr.mxu0 0.0
    %2590 = vmatpush1.msra.mxu0 0.0
    %2591 = vmatprep.subr.mxu0 0.0
    %2592 = vmatpush1.msra.mxu0 0.0
    %2593 = vmatprep.subr.mxu0 0.0
    %2594 = vmatpush1.msra.mxu0 0.0
    %2595 = vmatprep.subr.mxu0 0.0
    %2596 = vmatpush1.msra.mxu0 0.0
    %2597 = vmatprep.subr.mxu0 0.0
    %2598 = vmatpush1.msra.mxu0 0.0
    %2599 = vmatprep.subr.mxu0 0.0
    %2600 = vmatpush1.msra.mxu0 0.0
    %2601 = vmatprep.subr.mxu0 0.0
    %2602 = vmatpush1.msra.mxu0 0.0
    %2603 = vmatprep.subr.mxu0 0.0
    %2604 = vmatpush1.msra.mxu0 0.0
    %2605 = vmatprep.subr.mxu0 0.0
    %2606 = vmatpush1.msra.mxu0 0.0
    %2607 = vmatprep.subr.mxu0 0.0
    %2608 = vmatpush1.msra.mxu0 0.0
    %2609 = vmatprep.subr.mxu0 0.0
    %2610 = vmatpush1.msra.mxu0 0.0
    %2611 = vmatprep.subr.mxu0 0.0
    %2612 = vmatpush1.msra.mxu0 0.0
    %2613 = vmatprep.subr.mxu0 0.0
    %2614 = vmatpush1.msra.mxu0 0.0
    %2615 = vmatprep.subr.mxu0 0.0
    %2616 = vmatpush1.msra.mxu0 0.0
    %2617 = vmatprep.subr.mxu0 0.0
    %2618 = vmatpush1.msra.mxu0 0.0
    %2619 = vmatprep.mubr.f32.mxu0 0.0
    %v2620 = vand.u32 %v383, 4294901760
    %v2621 = vsub.f32 %v383, %v2620
    %2622 = vmatmul.mubr.f32.gmra.mrb[0].mxu0 %v2621
    %v2623 = vpop.f32.mrb[0].mxu0
    %v2624 = vadd.f32 %v2550, %v2623
    %v2625 = vpop.f32.mrb[0].mxu0
    %2626 = vdwg.mxu0
    %2627 = vmatprep.subr.mxu0 0.0
    %v2628 = vand.u32 %v2400, 4294901760
    %2629 = vmatpush1.msra.mxu0 %v2628
    %2630 = vmatprep.subr.mxu0 0.0
    %2631 = vmatpush1.msra.mxu0 0.0
    %2632 = vmatprep.subr.mxu0 0.0
    %2633 = vmatpush1.msra.mxu0 0.0
    %2634 = vmatprep.subr.mxu0 0.0
    %2635 = vmatpush1.msra.mxu0 0.0
    %2636 = vmatprep.subr.mxu0 0.0
    %2637 = vmatpush1.msra.mxu0 0.0
    %2638 = vmatprep.subr.mxu0 0.0
    %2639 = vmatpush1.msra.mxu0 0.0
    %2640 = vmatprep.subr.mxu0 0.0
    %2641 = vmatpush1.msra.mxu0 0.0
    %2642 = vmatprep.subr.mxu0 0.0
    %2643 = vmatpush1.msra.mxu0 0.0
    %2644 = vmatprep.subr.mxu0 0.0
    %2645 = vmatpush1.msra.mxu0 0.0
    %2646 = vmatprep.subr.mxu0 0.0
    %2647 = vmatpush1.msra.mxu0 0.0
    %2648 = vmatprep.subr.mxu0 0.0
    %2649 = vmatpush1.msra.mxu0 0.0
    %2650 = vmatprep.subr.mxu0 0.0
    %2651 = vmatpush1.msra.mxu0 0.0
    %2652 = vmatprep.subr.mxu0 0.0
    %2653 = vmatpush1.msra.mxu0 0.0
    %2654 = vmatprep.subr.mxu0 0.0
    %2655 = vmatpush1.msra.mxu0 0.0
    %2656 = vmatprep.subr.mxu0 0.0
    %2657 = vmatpush1.msra.mxu0 0.0
    %2658 = vmatprep.subr.mxu0 0.0
    %2659 = vmatpush1.msra.mxu0 0.0
    %2660 = vmatprep.subr.mxu0 0.0
    %2661 = vmatpush1.msra.mxu0 0.0
    %2662 = vmatprep.subr.mxu0 0.0
    %2663 = vmatpush1.msra.mxu0 0.0
    %2664 = vmatprep.subr.mxu0 0.0
    %2665 = vmatpush1.msra.mxu0 0.0
    %2666 = vmatprep.subr.mxu0 0.0
    %2667 = vmatpush1.msra.mxu0 0.0
    %2668 = vmatprep.subr.mxu0 0.0
    %2669 = vmatpush1.msra.mxu0 0.0
    %2670 = vmatprep.subr.mxu0 0.0
    %2671 = vmatpush1.msra.mxu0 0.0
    %2672 = vmatprep.subr.mxu0 0.0
    %2673 = vmatpush1.msra.mxu0 0.0
    %2674 = vmatprep.subr.mxu0 0.0
    %2675 = vmatpush1.msra.mxu0 0.0
    %2676 = vmatprep.subr.mxu0 0.0
    %2677 = vmatpush1.msra.mxu0 0.0
    %2678 = vmatprep.subr.mxu0 0.0
    %2679 = vmatpush1.msra.mxu0 0.0
    %2680 = vmatprep.subr.mxu0 0.0
    %2681 = vmatpush1.msra.mxu0 0.0
    %2682 = vmatprep.subr.mxu0 0.0
    %2683 = vmatpush1.msra.mxu0 0.0
    %2684 = vmatprep.subr.mxu0 0.0
    %2685 = vmatpush1.msra.mxu0 0.0
    %2686 = vmatprep.subr.mxu0 0.0
    %2687 = vmatpush1.msra.mxu0 0.0
    %2688 = vmatprep.subr.mxu0 0.0
    %2689 = vmatpush1.msra.mxu0 0.0
    %2690 = vmatprep.subr.mxu0 0.0
    %2691 = vmatpush1.msra.mxu0 0.0
    %2692 = vmatprep.mubr.f32.mxu0 0.0
    %v2693 = vand.u32 %v383, 4294901760
    %v2694 = vsub.f32 %v383, %v2693
    %v2695 = vand.u32 %v2694, 4294901760
    %2696 = vmatmul.mubr.f32.gmra.mrb[0].mxu0 %v2695
    %v2697 = vpop.f32.mrb[0].mxu0
    %v2698 = vadd.f32 %v2624, %v2697
    %v2699 = vpop.f32.mrb[0].mxu0
    %2700 = vdwg.mxu0
    %2701 = vmatprep.subr.mxu0 0.0
    %v2702 = vand.u32 %v2400, 4294901760
    %v2703 = vsub.f32 %v2400, %v2702
    %v2704 = vand.u32 %v2703, 4294901760
    %2705 = vmatpush1.msra.mxu0 %v2704
    %2706 = vmatprep.subr.mxu0 0.0
    %2707 = vmatpush1.msra.mxu0 0.0
    %2708 = vmatprep.subr.mxu0 0.0
    %2709 = vmatpush1.msra.mxu0 0.0
    %2710 = vmatprep.subr.mxu0 0.0
    %2711 = vmatpush1.msra.mxu0 0.0
    %2712 = vmatprep.subr.mxu0 0.0
    %2713 = vmatpush1.msra.mxu0 0.0
    %2714 = vmatprep.subr.mxu0 0.0
    %2715 = vmatpush1.msra.mxu0 0.0
    %2716 = vmatprep.subr.mxu0 0.0
    %2717 = vmatpush1.msra.mxu0 0.0
    %2718 = vmatprep.subr.mxu0 0.0
    %2719 = vmatpush1.msra.mxu0 0.0
    %2720 = vmatprep.subr.mxu0 0.0
    %2721 = vmatpush1.msra.mxu0 0.0
    %2722 = vmatprep.subr.mxu0 0.0
    %2723 = vmatpush1.msra.mxu0 0.0
    %2724 = vmatprep.subr.mxu0 0.0
    %2725 = vmatpush1.msra.mxu0 0.0
    %2726 = vmatprep.subr.mxu0 0.0
    %2727 = vmatpush1.msra.mxu0 0.0
    %2728 = vmatprep.subr.mxu0 0.0
    %2729 = vmatpush1.msra.mxu0 0.0
    %2730 = vmatprep.subr.mxu0 0.0
    %2731 = vmatpush1.msra.mxu0 0.0
    %2732 = vmatprep.subr.mxu0 0.0
    %2733 = vmatpush1.msra.mxu0 0.0
    %2734 = vmatprep.subr.mxu0 0.0
    %2735 = vmatpush1.msra.mxu0 0.0
    %2736 = vmatprep.subr.mxu0 0.0
    %2737 = vmatpush1.msra.mxu0 0.0
    %2738 = vmatprep.subr.mxu0 0.0
    %2739 = vmatpush1.msra.mxu0 0.0
    %2740 = vmatprep.subr.mxu0 0.0
    %2741 = vmatpush1.msra.mxu0 0.0
    %2742 = vmatprep.subr.mxu0 0.0
    %2743 = vmatpush1.msra.mxu0 0.0
    %2744 = vmatprep.subr.mxu0 0.0
    %2745 = vmatpush1.msra.mxu0 0.0
    %2746 = vmatprep.subr.mxu0 0.0
    %2747 = vmatpush1.msra.mxu0 0.0
    %2748 = vmatprep.subr.mxu0 0.0
    %2749 = vmatpush1.msra.mxu0 0.0
    %2750 = vmatprep.subr.mxu0 0.0
    %2751 = vmatpush1.msra.mxu0 0.0
    %2752 = vmatprep.subr.mxu0 0.0
    %2753 = vmatpush1.msra.mxu0 0.0
    %2754 = vmatprep.subr.mxu0 0.0
    %2755 = vmatpush1.msra.mxu0 0.0
    %2756 = vmatprep.subr.mxu0 0.0
    %2757 = vmatpush1.msra.mxu0 0.0
    %2758 = vmatprep.subr.mxu0 0.0
    %2759 = vmatpush1.msra.mxu0 0.0
    %2760 = vmatprep.subr.mxu0 0.0
    %2761 = vmatpush1.msra.mxu0 0.0
    %2762 = vmatprep.subr.mxu0 0.0
    %2763 = vmatpush1.msra.mxu0 0.0
    %2764 = vmatprep.subr.mxu0 0.0
    %2765 = vmatpush1.msra.mxu0 0.0
    %2766 = vmatprep.subr.mxu0 0.0
    %2767 = vmatpush1.msra.mxu0 0.0
    %2768 = vmatprep.mubr.f32.mxu0 0.0
    %v2769 = vand.u32 %v383, 4294901760
    %2770 = vmatmul.mubr.f32.gmra.mrb[0].mxu0 %v2769
    %v2771 = vpop.f32.mrb[0].mxu0
    %v2772 = vadd.f32 %v2698, %v2771
    %v2773 = vpop.f32.mrb[0].mxu0
    %2774 = vdwg.mxu0
    %2775 = vmatprep.subr.mxu0 0.0
    %v2776 = vand.u32 %v2400, 4294901760
    %2777 = vmatpush1.msra.mxu0 %v2776
    %2778 = vmatprep.subr.mxu0 0.0
    %2779 = vmatpush1.msra.mxu0 0.0
    %2780 = vmatprep.subr.mxu0 0.0
    %2781 = vmatpush1.msra.mxu0 0.0
    %2782 = vmatprep.subr.mxu0 0.0
    %2783 = vmatpush1.msra.mxu0 0.0
    %2784 = vmatprep.subr.mxu0 0.0
    %2785 = vmatpush1.msra.mxu0 0.0
    %2786 = vmatprep.subr.mxu0 0.0
    %2787 = vmatpush1.msra.mxu0 0.0
    %2788 = vmatprep.subr.mxu0 0.0
    %2789 = vmatpush1.msra.mxu0 0.0
    %2790 = vmatprep.subr.mxu0 0.0
    %2791 = vmatpush1.msra.mxu0 0.0
    %2792 = vmatprep.subr.mxu0 0.0
    %2793 = vmatpush1.msra.mxu0 0.0
    %2794 = vmatprep.subr.mxu0 0.0
    %2795 = vmatpush1.msra.mxu0 0.0
    %2796 = vmatprep.subr.mxu0 0.0
    %2797 = vmatpush1.msra.mxu0 0.0
    %2798 = vmatprep.subr.mxu0 0.0
    %2799 = vmatpush1.msra.mxu0 0.0
    %2800 = vmatprep.subr.mxu0 0.0
    %2801 = vmatpush1.msra.mxu0 0.0
    %2802 = vmatprep.subr.mxu0 0.0
    %2803 = vmatpush1.msra.mxu0 0.0
    %2804 = vmatprep.subr.mxu0 0.0
    %2805 = vmatpush1.msra.mxu0 0.0
    %2806 = vmatprep.subr.mxu0 0.0
    %2807 = vmatpush1.msra.mxu0 0.0
    %2808 = vmatprep.subr.mxu0 0.0
    %2809 = vmatpush1.msra.mxu0 0.0
    %2810 = vmatprep.subr.mxu0 0.0
    %2811 = vmatpush1.msra.mxu0 0.0
    %2812 = vmatprep.subr.mxu0 0.0
    %2813 = vmatpush1.msra.mxu0 0.0
    %2814 = vmatprep.subr.mxu0 0.0
    %2815 = vmatpush1.msra.mxu0 0.0
    %2816 = vmatprep.subr.mxu0 0.0
    %2817 = vmatpush1.msra.mxu0 0.0
    %2818 = vmatprep.subr.mxu0 0.0
    %2819 = vmatpush1.msra.mxu0 0.0
    %2820 = vmatprep.subr.mxu0 0.0
    %2821 = vmatpush1.msra.mxu0 0.0
    %2822 = vmatprep.subr.mxu0 0.0
    %2823 = vmatpush1.msra.mxu0 0.0
    %2824 = vmatprep.subr.mxu0 0.0
    %2825 = vmatpush1.msra.mxu0 0.0
    %2826 = vmatprep.subr.mxu0 0.0
    %2827 = vmatpush1.msra.mxu0 0.0
    %2828 = vmatprep.subr.mxu0 0.0
    %2829 = vmatpush1.msra.mxu0 0.0
    %2830 = vmatprep.subr.mxu0 0.0
    %2831 = vmatpush1.msra.mxu0 0.0
    %2832 = vmatprep.subr.mxu0 0.0
    %2833 = vmatpush1.msra.mxu0 0.0
    %2834 = vmatprep.subr.mxu0 0.0
    %2835 = vmatpush1.msra.mxu0 0.0
    %2836 = vmatprep.subr.mxu0 0.0
    %2837 = vmatpush1.msra.mxu0 0.0
    %2838 = vmatprep.subr.mxu0 0.0
    %2839 = vmatpush1.msra.mxu0 0.0
    %2840 = vmatprep.mubr.f32.mxu0 0.0
    %v2841 = vand.u32 %v383, 4294901760
    %2842 = vmatmul.mubr.f32.gmra.mrb[0].mxu0 %v2841
    %v2843 = vpop.f32.mrb[0].mxu0
    %v2844 = vadd.f32 %v2772, %v2843
    %v2845 = vpop.f32.mrb[0].mxu0
    %2846 = vdwg.mxu0
    %v2847 = vmul.f32 %v2844, %v1952
    %2848 = vadd.xlane.f32.xlu0 %v2847
    %v2849 = vpop.xlane.xlu0 %2848
    %v2850 = vmul.f32 %v2849, 0.03125
    %v2851 = vmul.f32 %v2397, %v2850
    %v2852 = vld [vmem:[#allocation12] sm:$0xff]
    %v2853 = vld [vmem:[#allocation12 + $0x8] sm:$0xff]
    %v2854 = vld [vmem:[#allocation12 + $0x10] sm:$0xff]
    %v2855 = vld [vmem:[#allocation12 + $0x18] sm:$0xff]
    %v2856 = vld [vmem:[#allocation12 + $0x20] sm:$0xff]
    %v2857 = vld [vmem:[#allocation12 + $0x28] sm:$0xff]
    %v2858 = vld [vmem:[#allocation12 + $0x30] sm:$0xff]
    %v2859 = vld [vmem:[#allocation12 + $0x38] sm:$0xff]
    %v2860 = vld [vmem:[#allocation12 + $0x40] sm:$0xff]
    %v2861 = vld [vmem:[#allocation12 + $0x48] sm:$0xff]
    %v2862 = vld [vmem:[#allocation12 + $0x50] sm:$0xff]
    %v2863 = vld [vmem:[#allocation12 + $0x58] sm:$0xff]
    %v2864 = vld [vmem:[#allocation12 + $0x60] sm:$0xff]
    %v2865 = vld [vmem:[#allocation12 + $0x68] sm:$0xff]
    %v2866 = vld [vmem:[#allocation12 + $0x70] sm:$0xff]
    %v2867 = vld [vmem:[#allocation12 + $0x78] sm:$0xff]
    %v2868 = vld [vmem:[#allocation12 + $0x80] sm:$0xff]
    %v2869 = vld [vmem:[#allocation12 + $0x88] sm:$0xff]
    %v2870 = vld [vmem:[#allocation12 + $0x90] sm:$0xff]
    %v2871 = vld [vmem:[#allocation12 + $0x98] sm:$0xff]
    %v2872 = vld [vmem:[#allocation12 + $0xa0] sm:$0xff]
    %v2873 = vld [vmem:[#allocation12 + $0xa8] sm:$0xff]
    %v2874 = vld [vmem:[#allocation12 + $0xb0] sm:$0xff]
    %v2875 = vld [vmem:[#allocation12 + $0xb8] sm:$0xff]
    %v2876 = vld [vmem:[#allocation12 + $0xc0] sm:$0xff]
    %v2877 = vld [vmem:[#allocation12 + $0xc8] sm:$0xff]
    %v2878 = vld [vmem:[#allocation12 + $0xd0] sm:$0xff]
    %v2879 = vld [vmem:[#allocation12 + $0xd8] sm:$0xff]
    %v2880 = vld [vmem:[#allocation12 + $0xe0] sm:$0xff]
    %v2881 = vld [vmem:[#allocation12 + $0xe8] sm:$0xff]
    %v2882 = vld [vmem:[#allocation12 + $0xf0] sm:$0xff]
    %v2883 = vld [vmem:[#allocation12 + $0xf8] sm:$0xff]
    %v2884 = vld [vmem:[%s9] sm:$0x3]
    %v2886 = vlaneseq
    %v2887 = vshrl.u32 %v2886, 7
    %v2888 = vsub.s32 0, %v2887
    %v2889 = vrot.slane %v2884, %v2888
    %v2890 = vlaneseq
    %v2891 = vshrl.u32 %v2890, 7
    %v2892 = vsub.s32 1, %v2891
    %v2893 = vrot.slane %v2884, %v2892
    %v2896 = vand.u32 %v2853, 4294901760
    %2897 = vmatprep.subr.mxu0 %v2896
    %v2898 = vand.u32 %v2852, 4294901760
    %2899 = vmatpush1.msra.mxu0 %v2898
    %v2900 = vand.u32 %v2855, 4294901760
    %2901 = vmatprep.subr.mxu0 %v2900
    %v2902 = vand.u32 %v2854, 4294901760
    %2903 = vmatpush1.msra.mxu0 %v2902
    %v2904 = vand.u32 %v2857, 4294901760
    %2905 = vmatprep.subr.mxu0 %v2904
    %v2906 = vand.u32 %v2856, 4294901760
    %2907 = vmatpush1.msra.mxu0 %v2906
    %v2908 = vand.u32 %v2859, 4294901760
    %2909 = vmatprep.subr.mxu0 %v2908
    %v2910 = vand.u32 %v2858, 4294901760
    %2911 = vmatpush1.msra.mxu0 %v2910
    %v2912 = vand.u32 %v2861, 4294901760
    %2913 = vmatprep.subr.mxu0 %v2912
    %v2914 = vand.u32 %v2860, 4294901760
    %2915 = vmatpush1.msra.mxu0 %v2914
    %v2916 = vand.u32 %v2863, 4294901760
    %2917 = vmatprep.subr.mxu0 %v2916
    %v2918 = vand.u32 %v2862, 4294901760
    %2919 = vmatpush1.msra.mxu0 %v2918
    %v2920 = vand.u32 %v2865, 4294901760
    %2921 = vmatprep.subr.mxu0 %v2920
    %v2922 = vand.u32 %v2864, 4294901760
    %2923 = vmatpush1.msra.mxu0 %v2922
    %v2924 = vand.u32 %v2867, 4294901760
    %2925 = vmatprep.subr.mxu0 %v2924
    %v2926 = vand.u32 %v2866, 4294901760
    %2927 = vmatpush1.msra.mxu0 %v2926
    %v2928 = vand.u32 %v2869, 4294901760
    %2929 = vmatprep.subr.mxu0 %v2928
    %v2930 = vand.u32 %v2868, 4294901760
    %2931 = vmatpush1.msra.mxu0 %v2930
    %v2932 = vand.u32 %v2871, 4294901760
    %2933 = vmatprep.subr.mxu0 %v2932
    %v2934 = vand.u32 %v2870, 4294901760
    %2935 = vmatpush1.msra.mxu0 %v2934
    %v2936 = vand.u32 %v2873, 4294901760
    %2937 = vmatprep.subr.mxu0 %v2936
    %v2938 = vand.u32 %v2872, 4294901760
    %2939 = vmatpush1.msra.mxu0 %v2938
    %v2940 = vand.u32 %v2875, 4294901760
    %2941 = vmatprep.subr.mxu0 %v2940
    %v2942 = vand.u32 %v2874, 4294901760
    %2943 = vmatpush1.msra.mxu0 %v2942
    %v2944 = vand.u32 %v2877, 4294901760
    %2945 = vmatprep.subr.mxu0 %v2944
    %v2946 = vand.u32 %v2876, 4294901760
    %2947 = vmatpush1.msra.mxu0 %v2946
    %v2948 = vand.u32 %v2879, 4294901760
    %2949 = vmatprep.subr.mxu0 %v2948
    %v2950 = vand.u32 %v2878, 4294901760
    %2951 = vmatpush1.msra.mxu0 %v2950
    %v2952 = vand.u32 %v2881, 4294901760
    %2953 = vmatprep.subr.mxu0 %v2952
    %v2954 = vand.u32 %v2880, 4294901760
    %2955 = vmatpush1.msra.mxu0 %v2954
    %v2956 = vand.u32 %v2883, 4294901760
    %2957 = vmatprep.subr.mxu0 %v2956
    %v2958 = vand.u32 %v2882, 4294901760
    %2959 = vmatpush1.msra.mxu0 %v2958
    %2960 = vmatprep.subr.mxu0 0.0
    %2961 = vmatpush1.msra.mxu0 0.0
    %2962 = vmatprep.subr.mxu0 0.0
    %2963 = vmatpush1.msra.mxu0 0.0
    %2964 = vmatprep.subr.mxu0 0.0
    %2965 = vmatpush1.msra.mxu0 0.0
    %2966 = vmatprep.subr.mxu0 0.0
    %2967 = vmatpush1.msra.mxu0 0.0
    %2968 = vmatprep.subr.mxu0 0.0
    %2969 = vmatpush1.msra.mxu0 0.0
    %2970 = vmatprep.subr.mxu0 0.0
    %2971 = vmatpush1.msra.mxu0 0.0
    %2972 = vmatprep.subr.mxu0 0.0
    %2973 = vmatpush1.msra.mxu0 0.0
    %2974 = vmatprep.subr.mxu0 0.0
    %2975 = vmatpush1.msra.mxu0 0.0
    %2976 = vmatprep.subr.mxu0 0.0
    %2977 = vmatpush1.msra.mxu0 0.0
    %2978 = vmatprep.subr.mxu0 0.0
    %2979 = vmatpush1.msra.mxu0 0.0
    %2980 = vmatprep.subr.mxu0 0.0
    %2981 = vmatpush1.msra.mxu0 0.0
    %2982 = vmatprep.subr.mxu0 0.0
    %2983 = vmatpush1.msra.mxu0 0.0
    %2984 = vmatprep.subr.mxu0 0.0
    %2985 = vmatpush1.msra.mxu0 0.0
    %2986 = vmatprep.subr.mxu0 0.0
    %2987 = vmatpush1.msra.mxu0 0.0
    %2988 = vmatprep.subr.mxu0 0.0
    %2989 = vmatpush1.msra.mxu0 0.0
    %2990 = vmatprep.subr.mxu0 0.0
    %2991 = vmatpush1.msra.mxu0 0.0
    %2992 = vmatprep.mubr.f32.mxu0 0.0
    %v2993 = vand.u32 %v1952, 4294901760
    %v2994 = vsub.f32 %v1952, %v2993
    %v2995 = vand.u32 %v2994, 4294901760
    %v2996 = vsub.f32 %v2994, %v2995
    %v2997 = vand.u32 %v2996, 4294901760
    %2998 = vmatmul.mubr.f32.gmra.mrb[0].mxu0 %v2997
    %v2999 = vpop.f32.mrb[0].mxu0
    %v3000 = vadd.f32 %v2889, %v2999
    %v3001 = vpop.f32.mrb[0].mxu0
    %v3002 = vadd.f32 %v2893, %v3001
    %3003 = vdwg.mxu0
    %v3004 = vand.u32 %v2853, 4294901760
    %v3005 = vsub.f32 %v2853, %v3004
    %v3006 = vand.u32 %v3005, 4294901760
    %v3007 = vsub.f32 %v3005, %v3006
    %v3008 = vand.u32 %v3007, 4294901760
    %3009 = vmatprep.subr.mxu0 %v3008
    %v3010 = vand.u32 %v2852, 4294901760
    %v3011 = vsub.f32 %v2852, %v3010
    %v3012 = vand.u32 %v3011, 4294901760
    %v3013 = vsub.f32 %v3011, %v3012
    %v3014 = vand.u32 %v3013, 4294901760
    %3015 = vmatpush1.msra.mxu0 %v3014
    %v3016 = vand.u32 %v2855, 4294901760
    %v3017 = vsub.f32 %v2855, %v3016
    %v3018 = vand.u32 %v3017, 4294901760
    %v3019 = vsub.f32 %v3017, %v3018
    %v3020 = vand.u32 %v3019, 4294901760
    %3021 = vmatprep.subr.mxu0 %v3020
    %v3022 = vand.u32 %v2854, 4294901760
    %v3023 = vsub.f32 %v2854, %v3022
    %v3024 = vand.u32 %v3023, 4294901760
    %v3025 = vsub.f32 %v3023, %v3024
    %v3026 = vand.u32 %v3025, 4294901760
    %3027 = vmatpush1.msra.mxu0 %v3026
    %v3028 = vand.u32 %v2857, 4294901760
    %v3029 = vsub.f32 %v2857, %v3028
    %v3030 = vand.u32 %v3029, 4294901760
    %v3031 = vsub.f32 %v3029, %v3030
    %v3032 = vand.u32 %v3031, 4294901760
    %3033 = vmatprep.subr.mxu0 %v3032
    %v3034 = vand.u32 %v2856, 4294901760
    %v3035 = vsub.f32 %v2856, %v3034
    %v3036 = vand.u32 %v3035, 4294901760
    %v3037 = vsub.f32 %v3035, %v3036
    %v3038 = vand.u32 %v3037, 4294901760
    %3039 = vmatpush1.msra.mxu0 %v3038
    %v3040 = vand.u32 %v2859, 4294901760
    %v3041 = vsub.f32 %v2859, %v3040
    %v3042 = vand.u32 %v3041, 4294901760
    %v3043 = vsub.f32 %v3041, %v3042
    %v3044 = vand.u32 %v3043, 4294901760
    %3045 = vmatprep.subr.mxu0 %v3044
    %v3046 = vand.u32 %v2858, 4294901760
    %v3047 = vsub.f32 %v2858, %v3046
    %v3048 = vand.u32 %v3047, 4294901760
    %v3049 = vsub.f32 %v3047, %v3048
    %v3050 = vand.u32 %v3049, 4294901760
    %3051 = vmatpush1.msra.mxu0 %v3050
    %v3052 = vand.u32 %v2861, 4294901760
    %v3053 = vsub.f32 %v2861, %v3052
    %v3054 = vand.u32 %v3053, 4294901760
    %v3055 = vsub.f32 %v3053, %v3054
    %v3056 = vand.u32 %v3055, 4294901760
    %3057 = vmatprep.subr.mxu0 %v3056
    %v3058 = vand.u32 %v2860, 4294901760
    %v3059 = vsub.f32 %v2860, %v3058
    %v3060 = vand.u32 %v3059, 4294901760
    %v3061 = vsub.f32 %v3059, %v3060
    %v3062 = vand.u32 %v3061, 4294901760
    %3063 = vmatpush1.msra.mxu0 %v3062
    %v3064 = vand.u32 %v2863, 4294901760
    %v3065 = vsub.f32 %v2863, %v3064
    %v3066 = vand.u32 %v3065, 4294901760
    %v3067 = vsub.f32 %v3065, %v3066
    %v3068 = vand.u32 %v3067, 4294901760
    %3069 = vmatprep.subr.mxu0 %v3068
    %v3070 = vand.u32 %v2862, 4294901760
    %v3071 = vsub.f32 %v2862, %v3070
    %v3072 = vand.u32 %v3071, 4294901760
    %v3073 = vsub.f32 %v3071, %v3072
    %v3074 = vand.u32 %v3073, 4294901760
    %3075 = vmatpush1.msra.mxu0 %v3074
    %v3076 = vand.u32 %v2865, 4294901760
    %v3077 = vsub.f32 %v2865, %v3076
    %v3078 = vand.u32 %v3077, 4294901760
    %v3079 = vsub.f32 %v3077, %v3078
    %v3080 = vand.u32 %v3079, 4294901760
    %3081 = vmatprep.subr.mxu0 %v3080
    %v3082 = vand.u32 %v2864, 4294901760
    %v3083 = vsub.f32 %v2864, %v3082
    %v3084 = vand.u32 %v3083, 4294901760
    %v3085 = vsub.f32 %v3083, %v3084
    %v3086 = vand.u32 %v3085, 4294901760
    %3087 = vmatpush1.msra.mxu0 %v3086
    %v3088 = vand.u32 %v2867, 4294901760
    %v3089 = vsub.f32 %v2867, %v3088
    %v3090 = vand.u32 %v3089, 4294901760
    %v3091 = vsub.f32 %v3089, %v3090
    %v3092 = vand.u32 %v3091, 4294901760
    %3093 = vmatprep.subr.mxu0 %v3092
    %v3094 = vand.u32 %v2866, 4294901760
    %v3095 = vsub.f32 %v2866, %v3094
    %v3096 = vand.u32 %v3095, 4294901760
    %v3097 = vsub.f32 %v3095, %v3096
    %v3098 = vand.u32 %v3097, 4294901760
    %3099 = vmatpush1.msra.mxu0 %v3098
    %v3100 = vand.u32 %v2869, 4294901760
    %v3101 = vsub.f32 %v2869, %v3100
    %v3102 = vand.u32 %v3101, 4294901760
    %v3103 = vsub.f32 %v3101, %v3102
    %v3104 = vand.u32 %v3103, 4294901760
    %3105 = vmatprep.subr.mxu0 %v3104
    %v3106 = vand.u32 %v2868, 4294901760
    %v3107 = vsub.f32 %v2868, %v3106
    %v3108 = vand.u32 %v3107, 4294901760
    %v3109 = vsub.f32 %v3107, %v3108
    %v3110 = vand.u32 %v3109, 4294901760
    %3111 = vmatpush1.msra.mxu0 %v3110
    %v3112 = vand.u32 %v2871, 4294901760
    %v3113 = vsub.f32 %v2871, %v3112
    %v3114 = vand.u32 %v3113, 4294901760
    %v3115 = vsub.f32 %v3113, %v3114
    %v3116 = vand.u32 %v3115, 4294901760
    %3117 = vmatprep.subr.mxu0 %v3116
    %v3118 = vand.u32 %v2870, 4294901760
    %v3119 = vsub.f32 %v2870, %v3118
    %v3120 = vand.u32 %v3119, 4294901760
    %v3121 = vsub.f32 %v3119, %v3120
    %v3122 = vand.u32 %v3121, 4294901760
    %3123 = vmatpush1.msra.mxu0 %v3122
    %v3124 = vand.u32 %v2873, 4294901760
    %v3125 = vsub.f32 %v2873, %v3124
    %v3126 = vand.u32 %v3125, 4294901760
    %v3127 = vsub.f32 %v3125, %v3126
    %v3128 = vand.u32 %v3127, 4294901760
    %3129 = vmatprep.subr.mxu0 %v3128
    %v3130 = vand.u32 %v2872, 4294901760
    %v3131 = vsub.f32 %v2872, %v3130
    %v3132 = vand.u32 %v3131, 4294901760
    %v3133 = vsub.f32 %v3131, %v3132
    %v3134 = vand.u32 %v3133, 4294901760
    %3135 = vmatpush1.msra.mxu0 %v3134
    %v3136 = vand.u32 %v2875, 4294901760
    %v3137 = vsub.f32 %v2875, %v3136
    %v3138 = vand.u32 %v3137, 4294901760
    %v3139 = vsub.f32 %v3137, %v3138
    %v3140 = vand.u32 %v3139, 4294901760
    %3141 = vmatprep.subr.mxu0 %v3140
    %v3142 = vand.u32 %v2874, 4294901760
    %v3143 = vsub.f32 %v2874, %v3142
    %v3144 = vand.u32 %v3143, 4294901760
    %v3145 = vsub.f32 %v3143, %v3144
    %v3146 = vand.u32 %v3145, 4294901760
    %3147 = vmatpush1.msra.mxu0 %v3146
    %v3148 = vand.u32 %v2877, 4294901760
    %v3149 = vsub.f32 %v2877, %v3148
    %v3150 = vand.u32 %v3149, 4294901760
    %v3151 = vsub.f32 %v3149, %v3150
    %v3152 = vand.u32 %v3151, 4294901760
    %3153 = vmatprep.subr.mxu0 %v3152
    %v3154 = vand.u32 %v2876, 4294901760
    %v3155 = vsub.f32 %v2876, %v3154
    %v3156 = vand.u32 %v3155, 4294901760
    %v3157 = vsub.f32 %v3155, %v3156
    %v3158 = vand.u32 %v3157, 4294901760
    %3159 = vmatpush1.msra.mxu0 %v3158
    %v3160 = vand.u32 %v2879, 4294901760
    %v3161 = vsub.f32 %v2879, %v3160
    %v3162 = vand.u32 %v3161, 4294901760
    %v3163 = vsub.f32 %v3161, %v3162
    %v3164 = vand.u32 %v3163, 4294901760
    %3165 = vmatprep.subr.mxu0 %v3164
    %v3166 = vand.u32 %v2878, 4294901760
    %v3167 = vsub.f32 %v2878, %v3166
    %v3168 = vand.u32 %v3167, 4294901760
    %v3169 = vsub.f32 %v3167, %v3168
    %v3170 = vand.u32 %v3169, 4294901760
    %3171 = vmatpush1.msra.mxu0 %v3170
    %v3172 = vand.u32 %v2881, 4294901760
    %v3173 = vsub.f32 %v2881, %v3172
    %v3174 = vand.u32 %v3173, 4294901760
    %v3175 = vsub.f32 %v3173, %v3174
    %v3176 = vand.u32 %v3175, 4294901760
    %3177 = vmatprep.subr.mxu0 %v3176
    %v3178 = vand.u32 %v2880, 4294901760
    %v3179 = vsub.f32 %v2880, %v3178
    %v3180 = vand.u32 %v3179, 4294901760
    %v3181 = vsub.f32 %v3179, %v3180
    %v3182 = vand.u32 %v3181, 4294901760
    %3183 = vmatpush1.msra.mxu0 %v3182
    %v3184 = vand.u32 %v2883, 4294901760
    %v3185 = vsub.f32 %v2883, %v3184
    %v3186 = vand.u32 %v3185, 4294901760
    %v3187 = vsub.f32 %v3185, %v3186
    %v3188 = vand.u32 %v3187, 4294901760
    %3189 = vmatprep.subr.mxu0 %v3188
    %v3190 = vand.u32 %v2882, 4294901760
    %v3191 = vsub.f32 %v2882, %v3190
    %v3192 = vand.u32 %v3191, 4294901760
    %v3193 = vsub.f32 %v3191, %v3192
    %v3194 = vand.u32 %v3193, 4294901760
    %3195 = vmatpush1.msra.mxu0 %v3194
    %3196 = vmatprep.subr.mxu0 0.0
    %3197 = vmatpush1.msra.mxu0 0.0
    %3198 = vmatprep.subr.mxu0 0.0
    %3199 = vmatpush1.msra.mxu0 0.0
    %3200 = vmatprep.subr.mxu0 0.0
    %3201 = vmatpush1.msra.mxu0 0.0
    %3202 = vmatprep.subr.mxu0 0.0
    %3203 = vmatpush1.msra.mxu0 0.0
    %3204 = vmatprep.subr.mxu0 0.0
    %3205 = vmatpush1.msra.mxu0 0.0
    %3206 = vmatprep.subr.mxu0 0.0
    %3207 = vmatpush1.msra.mxu0 0.0
    %3208 = vmatprep.subr.mxu0 0.0
    %3209 = vmatpush1.msra.mxu0 0.0
    %3210 = vmatprep.subr.mxu0 0.0
    %3211 = vmatpush1.msra.mxu0 0.0
    %3212 = vmatprep.subr.mxu0 0.0
    %3213 = vmatpush1.msra.mxu0 0.0
    %3214 = vmatprep.subr.mxu0 0.0
    %3215 = vmatpush1.msra.mxu0 0.0
    %3216 = vmatprep.subr.mxu0 0.0
    %3217 = vmatpush1.msra.mxu0 0.0
    %3218 = vmatprep.subr.mxu0 0.0
    %3219 = vmatpush1.msra.mxu0 0.0
    %3220 = vmatprep.subr.mxu0 0.0
    %3221 = vmatpush1.msra.mxu0 0.0
    %3222 = vmatprep.subr.mxu0 0.0
    %3223 = vmatpush1.msra.mxu0 0.0
    %3224 = vmatprep.subr.mxu0 0.0
    %3225 = vmatpush1.msra.mxu0 0.0
    %3226 = vmatprep.subr.mxu0 0.0
    %3227 = vmatpush1.msra.mxu0 0.0
    %3228 = vmatprep.mubr.f32.mxu0 0.0
    %v3229 = vand.u32 %v1952, 4294901760
    %3230 = vmatmul.mubr.f32.gmra.mrb[0].mxu0 %v3229
    %v3231 = vpop.f32.mrb[0].mxu0
    %v3232 = vadd.f32 %v3000, %v3231
    %v3233 = vpop.f32.mrb[0].mxu0
    %v3234 = vadd.f32 %v3002, %v3233
    %3235 = vdwg.mxu0
    %v3236 = vand.u32 %v2853, 4294901760
    %v3237 = vsub.f32 %v2853, %v3236
    %3238 = vmatprep.subr.mxu0 %v3237
    %v3239 = vand.u32 %v2852, 4294901760
    %v3240 = vsub.f32 %v2852, %v3239
    %3241 = vmatpush1.msra.mxu0 %v3240
    %v3242 = vand.u32 %v2855, 4294901760
    %v3243 = vsub.f32 %v2855, %v3242
    %3244 = vmatprep.subr.mxu0 %v3243
    %v3245 = vand.u32 %v2854, 4294901760
    %v3246 = vsub.f32 %v2854, %v3245
    %3247 = vmatpush1.msra.mxu0 %v3246
    %v3248 = vand.u32 %v2857, 4294901760
    %v3249 = vsub.f32 %v2857, %v3248
    %3250 = vmatprep.subr.mxu0 %v3249
    %v3251 = vand.u32 %v2856, 4294901760
    %v3252 = vsub.f32 %v2856, %v3251
    %3253 = vmatpush1.msra.mxu0 %v3252
    %v3254 = vand.u32 %v2859, 4294901760
    %v3255 = vsub.f32 %v2859, %v3254
    %3256 = vmatprep.subr.mxu0 %v3255
    %v3257 = vand.u32 %v2858, 4294901760
    %v3258 = vsub.f32 %v2858, %v3257
    %3259 = vmatpush1.msra.mxu0 %v3258
    %v3260 = vand.u32 %v2861, 4294901760
    %v3261 = vsub.f32 %v2861, %v3260
    %3262 = vmatprep.subr.mxu0 %v3261
    %v3263 = vand.u32 %v2860, 4294901760
    %v3264 = vsub.f32 %v2860, %v3263
    %3265 = vmatpush1.msra.mxu0 %v3264
    %v3266 = vand.u32 %v2863, 4294901760
    %v3267 = vsub.f32 %v2863, %v3266
    %3268 = vmatprep.subr.mxu0 %v3267
    %v3269 = vand.u32 %v2862, 4294901760
    %v3270 = vsub.f32 %v2862, %v3269
    %3271 = vmatpush1.msra.mxu0 %v3270
    %v3272 = vand.u32 %v2865, 4294901760
    %v3273 = vsub.f32 %v2865, %v3272
    %3274 = vmatprep.subr.mxu0 %v3273
    %v3275 = vand.u32 %v2864, 4294901760
    %v3276 = vsub.f32 %v2864, %v3275
    %3277 = vmatpush1.msra.mxu0 %v3276
    %v3278 = vand.u32 %v2867, 4294901760
    %v3279 = vsub.f32 %v2867, %v3278
    %3280 = vmatprep.subr.mxu0 %v3279
    %v3281 = vand.u32 %v2866, 4294901760
    %v3282 = vsub.f32 %v2866, %v3281
    %3283 = vmatpush1.msra.mxu0 %v3282
    %v3284 = vand.u32 %v2869, 4294901760
    %v3285 = vsub.f32 %v2869, %v3284
    %3286 = vmatprep.subr.mxu0 %v3285
    %v3287 = vand.u32 %v2868, 4294901760
    %v3288 = vsub.f32 %v2868, %v3287
    %3289 = vmatpush1.msra.mxu0 %v3288
    %v3290 = vand.u32 %v2871, 4294901760
    %v3291 = vsub.f32 %v2871, %v3290
    %3292 = vmatprep.subr.mxu0 %v3291
    %v3293 = vand.u32 %v2870, 4294901760
    %v3294 = vsub.f32 %v2870, %v3293
    %3295 = vmatpush1.msra.mxu0 %v3294
    %v3296 = vand.u32 %v2873, 4294901760
    %v3297 = vsub.f32 %v2873, %v3296
    %3298 = vmatprep.subr.mxu0 %v3297
    %v3299 = vand.u32 %v2872, 4294901760
    %v3300 = vsub.f32 %v2872, %v3299
    %3301 = vmatpush1.msra.mxu0 %v3300
    %v3302 = vand.u32 %v2875, 4294901760
    %v3303 = vsub.f32 %v2875, %v3302
    %3304 = vmatprep.subr.mxu0 %v3303
    %v3305 = vand.u32 %v2874, 4294901760
    %v3306 = vsub.f32 %v2874, %v3305
    %3307 = vmatpush1.msra.mxu0 %v3306
    %v3308 = vand.u32 %v2877, 4294901760
    %v3309 = vsub.f32 %v2877, %v3308
    %3310 = vmatprep.subr.mxu0 %v3309
    %v3311 = vand.u32 %v2876, 4294901760
    %v3312 = vsub.f32 %v2876, %v3311
    %3313 = vmatpush1.msra.mxu0 %v3312
    %v3314 = vand.u32 %v2879, 4294901760
    %v3315 = vsub.f32 %v2879, %v3314
    %3316 = vmatprep.subr.mxu0 %v3315
    %v3317 = vand.u32 %v2878, 4294901760
    %v3318 = vsub.f32 %v2878, %v3317
    %3319 = vmatpush1.msra.mxu0 %v3318
    %v3320 = vand.u32 %v2881, 4294901760
    %v3321 = vsub.f32 %v2881, %v3320
    %3322 = vmatprep.subr.mxu0 %v3321
    %v3323 = vand.u32 %v2880, 4294901760
    %v3324 = vsub.f32 %v2880, %v3323
    %3325 = vmatpush1.msra.mxu0 %v3324
    %v3326 = vand.u32 %v2883, 4294901760
    %v3327 = vsub.f32 %v2883, %v3326
    %3328 = vmatprep.subr.mxu0 %v3327
    %v3329 = vand.u32 %v2882, 4294901760
    %v3330 = vsub.f32 %v2882, %v3329
    %3331 = vmatpush1.msra.mxu0 %v3330
    %3332 = vmatprep.subr.mxu0 0.0
    %3333 = vmatpush1.msra.mxu0 0.0
    %3334 = vmatprep.subr.mxu0 0.0
    %3335 = vmatpush1.msra.mxu0 0.0
    %3336 = vmatprep.subr.mxu0 0.0
    %3337 = vmatpush1.msra.mxu0 0.0
    %3338 = vmatprep.subr.mxu0 0.0
    %3339 = vmatpush1.msra.mxu0 0.0
    %3340 = vmatprep.subr.mxu0 0.0
    %3341 = vmatpush1.msra.mxu0 0.0
    %3342 = vmatprep.subr.mxu0 0.0
    %3343 = vmatpush1.msra.mxu0 0.0
    %3344 = vmatprep.subr.mxu0 0.0
    %3345 = vmatpush1.msra.mxu0 0.0
    %3346 = vmatprep.subr.mxu0 0.0
    %3347 = vmatpush1.msra.mxu0 0.0
    %3348 = vmatprep.subr.mxu0 0.0
    %3349 = vmatpush1.msra.mxu0 0.0
    %3350 = vmatprep.subr.mxu0 0.0
    %3351 = vmatpush1.msra.mxu0 0.0
    %3352 = vmatprep.subr.mxu0 0.0
    %3353 = vmatpush1.msra.mxu0 0.0
    %3354 = vmatprep.subr.mxu0 0.0
    %3355 = vmatpush1.msra.mxu0 0.0
    %3356 = vmatprep.subr.mxu0 0.0
    %3357 = vmatpush1.msra.mxu0 0.0
    %3358 = vmatprep.subr.mxu0 0.0
    %3359 = vmatpush1.msra.mxu0 0.0
    %3360 = vmatprep.subr.mxu0 0.0
    %3361 = vmatpush1.msra.mxu0 0.0
    %3362 = vmatprep.subr.mxu0 0.0
    %3363 = vmatpush1.msra.mxu0 0.0
    %3364 = vmatprep.mubr.f32.mxu0 0.0
    %v3365 = vand.u32 %v1952, 4294901760
    %v3366 = vsub.f32 %v1952, %v3365
    %3367 = vmatmul.mubr.f32.gmra.mrb[0].mxu0 %v3366
    %v3368 = vpop.f32.mrb[0].mxu0
    %v3369 = vadd.f32 %v3232, %v3368
    %v3370 = vpop.f32.mrb[0].mxu0
    %v3371 = vadd.f32 %v3234, %v3370
    %3372 = vdwg.mxu0
    %v3373 = vand.u32 %v2853, 4294901760
    %3374 = vmatprep.subr.mxu0 %v3373
    %v3375 = vand.u32 %v2852, 4294901760
    %3376 = vmatpush1.msra.mxu0 %v3375
    %v3377 = vand.u32 %v2855, 4294901760
    %3378 = vmatprep.subr.mxu0 %v3377
    %v3379 = vand.u32 %v2854, 4294901760
    %3380 = vmatpush1.msra.mxu0 %v3379
    %v3381 = vand.u32 %v2857, 4294901760
    %3382 = vmatprep.subr.mxu0 %v3381
    %v3383 = vand.u32 %v2856, 4294901760
    %3384 = vmatpush1.msra.mxu0 %v3383
    %v3385 = vand.u32 %v2859, 4294901760
    %3386 = vmatprep.subr.mxu0 %v3385
    %v3387 = vand.u32 %v2858, 4294901760
    %3388 = vmatpush1.msra.mxu0 %v3387
    %v3389 = vand.u32 %v2861, 4294901760
    %3390 = vmatprep.subr.mxu0 %v3389
    %v3391 = vand.u32 %v2860, 4294901760
    %3392 = vmatpush1.msra.mxu0 %v3391
    %v3393 = vand.u32 %v2863, 4294901760
    %3394 = vmatprep.subr.mxu0 %v3393
    %v3395 = vand.u32 %v2862, 4294901760
    %3396 = vmatpush1.msra.mxu0 %v3395
    %v3397 = vand.u32 %v2865, 4294901760
    %3398 = vmatprep.subr.mxu0 %v3397
    %v3399 = vand.u32 %v2864, 4294901760
    %3400 = vmatpush1.msra.mxu0 %v3399
    %v3401 = vand.u32 %v2867, 4294901760
    %3402 = vmatprep.subr.mxu0 %v3401
    %v3403 = vand.u32 %v2866, 4294901760
    %3404 = vmatpush1.msra.mxu0 %v3403
    %v3405 = vand.u32 %v2869, 4294901760
    %3406 = vmatprep.subr.mxu0 %v3405
    %v3407 = vand.u32 %v2868, 4294901760
    %3408 = vmatpush1.msra.mxu0 %v3407
    %v3409 = vand.u32 %v2871, 4294901760
    %3410 = vmatprep.subr.mxu0 %v3409
    %v3411 = vand.u32 %v2870, 4294901760
    %3412 = vmatpush1.msra.mxu0 %v3411
    %v3413 = vand.u32 %v2873, 4294901760
    %3414 = vmatprep.subr.mxu0 %v3413
    %v3415 = vand.u32 %v2872, 4294901760
    %3416 = vmatpush1.msra.mxu0 %v3415
    %v3417 = vand.u32 %v2875, 4294901760
    %3418 = vmatprep.subr.mxu0 %v3417
    %v3419 = vand.u32 %v2874, 4294901760
    %3420 = vmatpush1.msra.mxu0 %v3419
    %v3421 = vand.u32 %v2877, 4294901760
    %3422 = vmatprep.subr.mxu0 %v3421
    %v3423 = vand.u32 %v2876, 4294901760
    %3424 = vmatpush1.msra.mxu0 %v3423
    %v3425 = vand.u32 %v2879, 4294901760
    %3426 = vmatprep.subr.mxu0 %v3425
    %v3427 = vand.u32 %v2878, 4294901760
    %3428 = vmatpush1.msra.mxu0 %v3427
    %v3429 = vand.u32 %v2881, 4294901760
    %3430 = vmatprep.subr.mxu0 %v3429
    %v3431 = vand.u32 %v2880, 4294901760
    %3432 = vmatpush1.msra.mxu0 %v3431
    %v3433 = vand.u32 %v2883, 4294901760
    %3434 = vmatprep.subr.mxu0 %v3433
    %v3435 = vand.u32 %v2882, 4294901760
    %3436 = vmatpush1.msra.mxu0 %v3435
    %3437 = vmatprep.subr.mxu0 0.0
    %3438 = vmatpush1.msra.mxu0 0.0
    %3439 = vmatprep.subr.mxu0 0.0
    %3440 = vmatpush1.msra.mxu0 0.0
    %3441 = vmatprep.subr.mxu0 0.0
    %3442 = vmatpush1.msra.mxu0 0.0
    %3443 = vmatprep.subr.mxu0 0.0
    %3444 = vmatpush1.msra.mxu0 0.0
    %3445 = vmatprep.subr.mxu0 0.0
    %3446 = vmatpush1.msra.mxu0 0.0
    %3447 = vmatprep.subr.mxu0 0.0
    %3448 = vmatpush1.msra.mxu0 0.0
    %3449 = vmatprep.subr.mxu0 0.0
    %3450 = vmatpush1.msra.mxu0 0.0
    %3451 = vmatprep.subr.mxu0 0.0
    %3452 = vmatpush1.msra.mxu0 0.0
    %3453 = vmatprep.subr.mxu0 0.0
    %3454 = vmatpush1.msra.mxu0 0.0
    %3455 = vmatprep.subr.mxu0 0.0
    %3456 = vmatpush1.msra.mxu0 0.0
    %3457 = vmatprep.subr.mxu0 0.0
    %3458 = vmatpush1.msra.mxu0 0.0
    %3459 = vmatprep.subr.mxu0 0.0
    %3460 = vmatpush1.msra.mxu0 0.0
    %3461 = vmatprep.subr.mxu0 0.0
    %3462 = vmatpush1.msra.mxu0 0.0
    %3463 = vmatprep.subr.mxu0 0.0
    %3464 = vmatpush1.msra.mxu0 0.0
    %3465 = vmatprep.subr.mxu0 0.0
    %3466 = vmatpush1.msra.mxu0 0.0
    %3467 = vmatprep.subr.mxu0 0.0
    %3468 = vmatpush1.msra.mxu0 0.0
    %3469 = vmatprep.mubr.f32.mxu0 0.0
    %v3470 = vand.u32 %v1952, 4294901760
    %v3471 = vsub.f32 %v1952, %v3470
    %v3472 = vand.u32 %v3471, 4294901760
    %3473 = vmatmul.mubr.f32.gmra.mrb[0].mxu0 %v3472
    %v3474 = vpop.f32.mrb[0].mxu0
    %v3475 = vadd.f32 %v3369, %v3474
    %v3476 = vpop.f32.mrb[0].mxu0
    %v3477 = vadd.f32 %v3371, %v3476
    %3478 = vdwg.mxu0
    %v3479 = vand.u32 %v2853, 4294901760
    %v3480 = vsub.f32 %v2853, %v3479
    %v3481 = vand.u32 %v3480, 4294901760
    %3482 = vmatprep.subr.mxu0 %v3481
    %v3483 = vand.u32 %v2852, 4294901760
    %v3484 = vsub.f32 %v2852, %v3483
    %v3485 = vand.u32 %v3484, 4294901760
    %3486 = vmatpush1.msra.mxu0 %v3485
    %v3487 = vand.u32 %v2855, 4294901760
    %v3488 = vsub.f32 %v2855, %v3487
    %v3489 = vand.u32 %v3488, 4294901760
    %3490 = vmatprep.subr.mxu0 %v3489
    %v3491 = vand.u32 %v2854, 4294901760
    %v3492 = vsub.f32 %v2854, %v3491
    %v3493 = vand.u32 %v3492, 4294901760
    %3494 = vmatpush1.msra.mxu0 %v3493
    %v3495 = vand.u32 %v2857, 4294901760
    %v3496 = vsub.f32 %v2857, %v3495
    %v3497 = vand.u32 %v3496, 4294901760
    %3498 = vmatprep.subr.mxu0 %v3497
    %v3499 = vand.u32 %v2856, 4294901760
    %v3500 = vsub.f32 %v2856, %v3499
    %v3501 = vand.u32 %v3500, 4294901760
    %3502 = vmatpush1.msra.mxu0 %v3501
    %v3503 = vand.u32 %v2859, 4294901760
    %v3504 = vsub.f32 %v2859, %v3503
    %v3505 = vand.u32 %v3504, 4294901760
    %3506 = vmatprep.subr.mxu0 %v3505
    %v3507 = vand.u32 %v2858, 4294901760
    %v3508 = vsub.f32 %v2858, %v3507
    %v3509 = vand.u32 %v3508, 4294901760
    %3510 = vmatpush1.msra.mxu0 %v3509
    %v3511 = vand.u32 %v2861, 4294901760
    %v3512 = vsub.f32 %v2861, %v3511
    %v3513 = vand.u32 %v3512, 4294901760
    %3514 = vmatprep.subr.mxu0 %v3513
    %v3515 = vand.u32 %v2860, 4294901760
    %v3516 = vsub.f32 %v2860, %v3515
    %v3517 = vand.u32 %v3516, 4294901760
    %3518 = vmatpush1.msra.mxu0 %v3517
    %v3519 = vand.u32 %v2863, 4294901760
    %v3520 = vsub.f32 %v2863, %v3519
    %v3521 = vand.u32 %v3520, 4294901760
    %3522 = vmatprep.subr.mxu0 %v3521
    %v3523 = vand.u32 %v2862, 4294901760
    %v3524 = vsub.f32 %v2862, %v3523
    %v3525 = vand.u32 %v3524, 4294901760
    %3526 = vmatpush1.msra.mxu0 %v3525
    %v3527 = vand.u32 %v2865, 4294901760
    %v3528 = vsub.f32 %v2865, %v3527
    %v3529 = vand.u32 %v3528, 4294901760
    %3530 = vmatprep.subr.mxu0 %v3529
    %v3531 = vand.u32 %v2864, 4294901760
    %v3532 = vsub.f32 %v2864, %v3531
    %v3533 = vand.u32 %v3532, 4294901760
    %3534 = vmatpush1.msra.mxu0 %v3533
    %v3535 = vand.u32 %v2867, 4294901760
    %v3536 = vsub.f32 %v2867, %v3535
    %v3537 = vand.u32 %v3536, 4294901760
    %3538 = vmatprep.subr.mxu0 %v3537
    %v3539 = vand.u32 %v2866, 4294901760
    %v3540 = vsub.f32 %v2866, %v3539
    %v3541 = vand.u32 %v3540, 4294901760
    %3542 = vmatpush1.msra.mxu0 %v3541
    %v3543 = vand.u32 %v2869, 4294901760
    %v3544 = vsub.f32 %v2869, %v3543
    %v3545 = vand.u32 %v3544, 4294901760
    %3546 = vmatprep.subr.mxu0 %v3545
    %v3547 = vand.u32 %v2868, 4294901760
    %v3548 = vsub.f32 %v2868, %v3547
    %v3549 = vand.u32 %v3548, 4294901760
    %3550 = vmatpush1.msra.mxu0 %v3549
    %v3551 = vand.u32 %v2871, 4294901760
    %v3552 = vsub.f32 %v2871, %v3551
    %v3553 = vand.u32 %v3552, 4294901760
    %3554 = vmatprep.subr.mxu0 %v3553
    %v3555 = vand.u32 %v2870, 4294901760
    %v3556 = vsub.f32 %v2870, %v3555
    %v3557 = vand.u32 %v3556, 4294901760
    %3558 = vmatpush1.msra.mxu0 %v3557
    %v3559 = vand.u32 %v2873, 4294901760
    %v3560 = vsub.f32 %v2873, %v3559
    %v3561 = vand.u32 %v3560, 4294901760
    %3562 = vmatprep.subr.mxu0 %v3561
    %v3563 = vand.u32 %v2872, 4294901760
    %v3564 = vsub.f32 %v2872, %v3563
    %v3565 = vand.u32 %v3564, 4294901760
    %3566 = vmatpush1.msra.mxu0 %v3565
    %v3567 = vand.u32 %v2875, 4294901760
    %v3568 = vsub.f32 %v2875, %v3567
    %v3569 = vand.u32 %v3568, 4294901760
    %3570 = vmatprep.subr.mxu0 %v3569
    %v3571 = vand.u32 %v2874, 4294901760
    %v3572 = vsub.f32 %v2874, %v3571
    %v3573 = vand.u32 %v3572, 4294901760
    %3574 = vmatpush1.msra.mxu0 %v3573
    %v3575 = vand.u32 %v2877, 4294901760
    %v3576 = vsub.f32 %v2877, %v3575
    %v3577 = vand.u32 %v3576, 4294901760
    %3578 = vmatprep.subr.mxu0 %v3577
    %v3579 = vand.u32 %v2876, 4294901760
    %v3580 = vsub.f32 %v2876, %v3579
    %v3581 = vand.u32 %v3580, 4294901760
    %3582 = vmatpush1.msra.mxu0 %v3581
    %v3583 = vand.u32 %v2879, 4294901760
    %v3584 = vsub.f32 %v2879, %v3583
    %v3585 = vand.u32 %v3584, 4294901760
    %3586 = vmatprep.subr.mxu0 %v3585
    %v3587 = vand.u32 %v2878, 4294901760
    %v3588 = vsub.f32 %v2878, %v3587
    %v3589 = vand.u32 %v3588, 4294901760
    %3590 = vmatpush1.msra.mxu0 %v3589
    %v3591 = vand.u32 %v2881, 4294901760
    %v3592 = vsub.f32 %v2881, %v3591
    %v3593 = vand.u32 %v3592, 4294901760
    %3594 = vmatprep.subr.mxu0 %v3593
    %v3595 = vand.u32 %v2880, 4294901760
    %v3596 = vsub.f32 %v2880, %v3595
    %v3597 = vand.u32 %v3596, 4294901760
    %3598 = vmatpush1.msra.mxu0 %v3597
    %v3599 = vand.u32 %v2883, 4294901760
    %v3600 = vsub.f32 %v2883, %v3599
    %v3601 = vand.u32 %v3600, 4294901760
    %3602 = vmatprep.subr.mxu0 %v3601
    %v3603 = vand.u32 %v2882, 4294901760
    %v3604 = vsub.f32 %v2882, %v3603
    %v3605 = vand.u32 %v3604, 4294901760
    %3606 = vmatpush1.msra.mxu0 %v3605
    %3607 = vmatprep.subr.mxu0 0.0
    %3608 = vmatpush1.msra.mxu0 0.0
    %3609 = vmatprep.subr.mxu0 0.0
    %3610 = vmatpush1.msra.mxu0 0.0
    %3611 = vmatprep.subr.mxu0 0.0
    %3612 = vmatpush1.msra.mxu0 0.0
    %3613 = vmatprep.subr.mxu0 0.0
    %3614 = vmatpush1.msra.mxu0 0.0
    %3615 = vmatprep.subr.mxu0 0.0
    %3616 = vmatpush1.msra.mxu0 0.0
    %3617 = vmatprep.subr.mxu0 0.0
    %3618 = vmatpush1.msra.mxu0 0.0
    %3619 = vmatprep.subr.mxu0 0.0
    %3620 = vmatpush1.msra.mxu0 0.0
    %3621 = vmatprep.subr.mxu0 0.0
    %3622 = vmatpush1.msra.mxu0 0.0
    %3623 = vmatprep.subr.mxu0 0.0
    %3624 = vmatpush1.msra.mxu0 0.0
    %3625 = vmatprep.subr.mxu0 0.0
    %3626 = vmatpush1.msra.mxu0 0.0
    %3627 = vmatprep.subr.mxu0 0.0
    %3628 = vmatpush1.msra.mxu0 0.0
    %3629 = vmatprep.subr.mxu0 0.0
    %3630 = vmatpush1.msra.mxu0 0.0
    %3631 = vmatprep.subr.mxu0 0.0
    %3632 = vmatpush1.msra.mxu0 0.0
    %3633 = vmatprep.subr.mxu0 0.0
    %3634 = vmatpush1.msra.mxu0 0.0
    %3635 = vmatprep.subr.mxu0 0.0
    %3636 = vmatpush1.msra.mxu0 0.0
    %3637 = vmatprep.subr.mxu0 0.0
    %3638 = vmatpush1.msra.mxu0 0.0
    %3639 = vmatprep.mubr.f32.mxu0 0.0
    %v3640 = vand.u32 %v1952, 4294901760
    %3641 = vmatmul.mubr.f32.gmra.mrb[0].mxu0 %v3640
    %v3642 = vpop.f32.mrb[0].mxu0
    %v3643 = vadd.f32 %v3475, %v3642
    %v3644 = vpop.f32.mrb[0].mxu0
    %v3645 = vadd.f32 %v3477, %v3644
    %3646 = vdwg.mxu0
    %v3647 = vand.u32 %v2853, 4294901760
    %3648 = vmatprep.subr.mxu0 %v3647
    %v3649 = vand.u32 %v2852, 4294901760
    %3650 = vmatpush1.msra.mxu0 %v3649
    %v3651 = vand.u32 %v2855, 4294901760
    %3652 = vmatprep.subr.mxu0 %v3651
    %v3653 = vand.u32 %v2854, 4294901760
    %3654 = vmatpush1.msra.mxu0 %v3653
    %v3655 = vand.u32 %v2857, 4294901760
    %3656 = vmatprep.subr.mxu0 %v3655
    %v3657 = vand.u32 %v2856, 4294901760
    %3658 = vmatpush1.msra.mxu0 %v3657
    %v3659 = vand.u32 %v2859, 4294901760
    %3660 = vmatprep.subr.mxu0 %v3659
    %v3661 = vand.u32 %v2858, 4294901760
    %3662 = vmatpush1.msra.mxu0 %v3661
    %v3663 = vand.u32 %v2861, 4294901760
    %3664 = vmatprep.subr.mxu0 %v3663
    %v3665 = vand.u32 %v2860, 4294901760
    %3666 = vmatpush1.msra.mxu0 %v3665
    %v3667 = vand.u32 %v2863, 4294901760
    %3668 = vmatprep.subr.mxu0 %v3667
    %v3669 = vand.u32 %v2862, 4294901760
    %3670 = vmatpush1.msra.mxu0 %v3669
    %v3671 = vand.u32 %v2865, 4294901760
    %3672 = vmatprep.subr.mxu0 %v3671
    %v3673 = vand.u32 %v2864, 4294901760
    %3674 = vmatpush1.msra.mxu0 %v3673
    %v3675 = vand.u32 %v2867, 4294901760
    %3676 = vmatprep.subr.mxu0 %v3675
    %v3677 = vand.u32 %v2866, 4294901760
    %3678 = vmatpush1.msra.mxu0 %v3677
    %v3679 = vand.u32 %v2869, 4294901760
    %3680 = vmatprep.subr.mxu0 %v3679
    %v3681 = vand.u32 %v2868, 4294901760
    %3682 = vmatpush1.msra.mxu0 %v3681
    %v3683 = vand.u32 %v2871, 4294901760
    %3684 = vmatprep.subr.mxu0 %v3683
    %v3685 = vand.u32 %v2870, 4294901760
    %3686 = vmatpush1.msra.mxu0 %v3685
    %v3687 = vand.u32 %v2873, 4294901760
    %3688 = vmatprep.subr.mxu0 %v3687
    %v3689 = vand.u32 %v2872, 4294901760
    %3690 = vmatpush1.msra.mxu0 %v3689
    %v3691 = vand.u32 %v2875, 4294901760
    %3692 = vmatprep.subr.mxu0 %v3691
    %v3693 = vand.u32 %v2874, 4294901760
    %3694 = vmatpush1.msra.mxu0 %v3693
    %v3695 = vand.u32 %v2877, 4294901760
    %3696 = vmatprep.subr.mxu0 %v3695
    %v3697 = vand.u32 %v2876, 4294901760
    %3698 = vmatpush1.msra.mxu0 %v3697
    %v3699 = vand.u32 %v2879, 4294901760
    %3700 = vmatprep.subr.mxu0 %v3699
    %v3701 = vand.u32 %v2878, 4294901760
    %3702 = vmatpush1.msra.mxu0 %v3701
    %v3703 = vand.u32 %v2881, 4294901760
    %3704 = vmatprep.subr.mxu0 %v3703
    %v3705 = vand.u32 %v2880, 4294901760
    %3706 = vmatpush1.msra.mxu0 %v3705
    %v3707 = vand.u32 %v2883, 4294901760
    %3708 = vmatprep.subr.mxu0 %v3707
    %v3709 = vand.u32 %v2882, 4294901760
    %3710 = vmatpush1.msra.mxu0 %v3709
    %3711 = vmatprep.subr.mxu0 0.0
    %3712 = vmatpush1.msra.mxu0 0.0
    %3713 = vmatprep.subr.mxu0 0.0
    %3714 = vmatpush1.msra.mxu0 0.0
    %3715 = vmatprep.subr.mxu0 0.0
    %3716 = vmatpush1.msra.mxu0 0.0
    %3717 = vmatprep.subr.mxu0 0.0
    %3718 = vmatpush1.msra.mxu0 0.0
    %3719 = vmatprep.subr.mxu0 0.0
    %3720 = vmatpush1.msra.mxu0 0.0
    %3721 = vmatprep.subr.mxu0 0.0
    %3722 = vmatpush1.msra.mxu0 0.0
    %3723 = vmatprep.subr.mxu0 0.0
    %3724 = vmatpush1.msra.mxu0 0.0
    %3725 = vmatprep.subr.mxu0 0.0
    %3726 = vmatpush1.msra.mxu0 0.0
    %3727 = vmatprep.subr.mxu0 0.0
    %3728 = vmatpush1.msra.mxu0 0.0
    %3729 = vmatprep.subr.mxu0 0.0
    %3730 = vmatpush1.msra.mxu0 0.0
    %3731 = vmatprep.subr.mxu0 0.0
    %3732 = vmatpush1.msra.mxu0 0.0
    %3733 = vmatprep.subr.mxu0 0.0
    %3734 = vmatpush1.msra.mxu0 0.0
    %3735 = vmatprep.subr.mxu0 0.0
    %3736 = vmatpush1.msra.mxu0 0.0
    %3737 = vmatprep.subr.mxu0 0.0
    %3738 = vmatpush1.msra.mxu0 0.0
    %3739 = vmatprep.subr.mxu0 0.0
    %3740 = vmatpush1.msra.mxu0 0.0
    %3741 = vmatprep.subr.mxu0 0.0
    %3742 = vmatpush1.msra.mxu0 0.0
    %3743 = vmatprep.mubr.f32.mxu0 0.0
    %v3744 = vand.u32 %v1952, 4294901760
    %3745 = vmatmul.mubr.f32.gmra.mrb[0].mxu0 %v3744
    %v3746 = vpop.f32.mrb[0].mxu0
    %v3747 = vadd.f32 %v3643, %v3746
    %v3748 = vpop.f32.mrb[0].mxu0
    %v3749 = vadd.f32 %v3645, %v3748
    %3750 = vdwg.mxu0
    %v3751 = vadd.f32 %v3747, %v2851
    %v3752 = vmul.f32 %v3749, 0.5
    %v3753 = vmul.f32 %v3749, 0.70710677
    %v3754 = verf.f32.pop %v3753
    %v3755 = vadd.f32 %v3754, 1.0
    %v3756 = vmul.f32 %v3752, %v3755
    %v3757 = vld [vmem:[%s10] sm:$0x1]
    %v3759 = vlaneseq
    %v3760 = vshrl.u32 %v3759, 7
    %v3761 = vsub.s32 0, %v3760
    %v3762 = vrot.slane %v3757, %v3761
    %v3764 = vmul.f32 %v3756, %v3762
    %3765 = vadd.xlane.f32.xlu0 %v3764
    %v3766 = vpop.xlane.xlu0 %3765
    %v3767 = vld [vmem:[#allocation2] sm:$0x1]
    %v3769 = vlaneseq
    %v3770 = vshrl.u32 %v3769, 7
    %v3771 = vsub.s32 0, %v3770
    %v3772 = vrot.slane %v3767, %v3771
    %v3774 = vadd.f32 %v3766, %v3772
    %vm3775 = vcmp.eq.s32.totalorder %v162, 16
    %3777 = vset.pattern.permute.xlu0 0
    %3778 = vperm.xlu0 %3777, %v3774
    %v3779 = vpop.permute.xlu0 %3778
    %v3781 = vsel %vm3775, %v3779, %v3751
    %3782 = vst [vmem:[#allocation14] sm:$0xff] %v3781
    // Predicated region
    $region74: #{tpu_custom_call.1} parent=1 // pred_check
      _
    $region75: #{tpu_custom_call.1} parent=1 // pred_check_branch
      %3784 = sbr.rel (0) target = $region77
    $region76: #{tpu_custom_call.1} parent=1 // pred_region
      %s3786 = ssub.s32 128, 128
      %3787 = vsyncadd [#allocation5], %s3786
      %s3789 = sshll.u32 [#allocation14], 4
      %s3790 = int_to_ptr.vmem [resolvable:$true] %s3789
      %3792 = dma.vmem_to_hbm [thread:$0]  %s3790, 128, %s12, [#allocation5]
    $region77: #{tpu_custom_call.1} parent=1 // pred_fallthru
      _
    // Predicated region
    $region78: #{tpu_custom_call.1} parent=1 // pred_check
      _
    $region79: #{tpu_custom_call.1} parent=1 // pred_check_branch
      %3794 = sbr.rel (0) target = $region81
    $region80: #{tpu_custom_call.1} parent=1 // pred_region
      %3795 = dma.done [#allocation5], 128
    $region81: #{tpu_custom_call.1} parent=1 // pred_fallthru
      _
    %3796 = vsyncpa [#allocation4], 1
    %3797 = vsyncpa [#allocation7], 1
    %3798 = vsyncpa [#allocation10], 1
    %3799 = vsyncpa [#allocation13], 1
    %3800 = vsyncpa [#allocation5], 1

// kernel: tpu_custom_call.1
$region0: #{tpu_custom_call.1}
  #allocation0 [shape = 'u32[]', space=smem, size = 0x4, offset = 0x4, fixed_abs, tag = 'smem constant byte address 0x4 - core index']
  #allocation1 [shape = 'u32[144,128]{1,0:T(1,128)}', space=vmem, size = 0x12000, scoped, tag = 'internal scratch']
  #allocation2 [shape = 'f32[1,1]{1,0:T(1,128)S(1)}', space=vmem, size = 0x200, scoped, tag = 'scoped memory for tpu_custom_call.1']
  %s0 = inlined_call_operand.hbm [shape: f32[8,8], index: 0, kind: input, shape index: {}]
  %s1 = inlined_call_operand.hbm [shape: f32[4,128], index: 1, kind: input, shape index: {}]
  %s2 = inlined_call_operand.vmem [shape: f32[8,128], index: 2, kind: input, shape index: {}]
  %s3 = inlined_call_operand.hbm [shape: f32[8,128], index: 3, kind: input, shape index: {}]
  %s4 = inlined_call_operand.hbm [shape: f32[128,128], index: 4, kind: input, shape index: {}]
  %s5 = inlined_call_operand.hbm [shape: f32[1,128], index: 5, kind: input, shape index: {}]
  %s6 = inlined_call_operand.vmem [shape: f32[8,128], index: 6, kind: input, shape index: {}]
  %s7 = inlined_call_operand.vmem [shape: f32[8,128], index: 7, kind: input, shape index: {}]
  %s8 = inlined_call_operand.hbm [shape: f32[128,256], index: 8, kind: input, shape index: {}]
  %s9 = inlined_call_operand.vmem [shape: f32[1,256], index: 9, kind: input, shape index: {}]
  %s10 = inlined_call_operand.vmem [shape: f32[1,128], index: 10, kind: input, shape index: {}]
  %s11 = inlined_call_operand.<no memory space> [shape: f32[1,1], index: 11, kind: input, shape index: {}]
  %s12 = inlined_call_operand.hbm [shape: f32[8,128], index: 12, kind: output, shape index: {}]
  %s13 = sld [smem:[#allocation0]]
  $region82: #{tpu_custom_call.1} parent=0
    _
  %s15 = ssub.s32 1, %s13
  %s16 = scalar_select 0, %s15, %s13
  %v17 = vstv %s11
  %18 = vst [vmem:[#allocation2] sm:$0x1] %v17
  $region1: #{tpu_custom_call.1} parent=0
    #allocation3 [shape = 'u8[4096]{0}', space=vmem, size = 0x1000, scoped, tag = 'input window, operand 0, single buffered']
    #allocation4 [shape = 's32[1]{0}', space=sflag, size = 0x4, scoped, tag = 'scoped memory for tpu_custom_call.1']
    #allocation5 [shape = 's32[1]{0}', space=sflag, size = 0x4, scoped, tag = 'scoped memory for tpu_custom_call.1']
    #allocation6 [shape = 'u8[2048]{0}', space=vmem, size = 0x800, scoped, tag = 'input window, operand 1, single buffered']
    #allocation7 [shape = 's32[1]{0}', space=sflag, size = 0x4, scoped, tag = 'scoped memory for tpu_custom_call.1']
    #allocation8 [shape = 'u8[4096]{0}', space=vmem, size = 0x1000, scoped, tag = 'input window, operand 3, single buffered']
    #allocation9 [shape = 'u8[65536]{0}', space=vmem, size = 0x10000, scoped, tag = 'input window, operand 4, single buffered']
    #allocation10 [shape = 's32[1]{0}', space=sflag, size = 0x4, scoped, tag = 'scoped memory for tpu_custom_call.1']
    #allocation11 [shape = 'u8[512]{0}', space=vmem, size = 0x400, scoped, tag = 'input window, operand 5, single buffered']
    #allocation12 [shape = 'u8[131072]{0}', space=vmem, size = 0x20000, scoped, tag = 'input window, operand 8, single buffered']
    #allocation13 [shape = 's32[1]{0}', space=sflag, size = 0x4, scoped, tag = 'scoped memory for tpu_custom_call.1']
    #allocation14 [shape = 'u8[4096]{0}', space=vmem, size = 0x1000, scoped, tag = 'output window, operand 0, single buffered']
    %19 = vsyncpa [#allocation4], 0
    %20 = vsyncpa [#allocation7], 0
    %21 = vsyncpa [#allocation10], 0
    %22 = vsyncpa [#allocation13], 0
    %23 = vsyncpa [#allocation5], 0
    // Predicated region
    $region2: #{tpu_custom_call.1} parent=1 // pred_check
      _
    $region3: #{tpu_custom_call.1} parent=1 // pred_check_branch
      %25 = sbr.rel (0) target = $region5
    $region4: #{tpu_custom_call.1} parent=1 // pred_region
      %s27 = ssub.s32 128, 128
      %28 = vsyncadd [#allocation4], %s27
      %s30 = sshll.u32 [#allocation3], 4
      %s31 = int_to_ptr.vmem [resolvable:$true] %s30
      %33 = dma.hbm_to_vmem [thread:$0]  %s0, 128, %s31, [#allocation4]
    $region5: #{tpu_custom_call.1} parent=1 // pred_fallthru
      _
    // Predicated region
    $region6: #{tpu_custom_call.1} parent=1 // pred_check
      _
    $region7: #{tpu_custom_call.1} parent=1 // pred_check_branch
      %35 = sbr.rel (0) target = $region9
    $region8: #{tpu_custom_call.1} parent=1 // pred_region
      %s37 = ssub.s32 64, 64
      %38 = vsyncadd [#allocation7], %s37
      %s40 = sshll.u32 [#allocation6], 4
      %s41 = int_to_ptr.vmem [resolvable:$true] %s40
      %43 = dma.hbm_to_vmem [thread:$0]  %s1, 64, %s41, [#allocation7]
    $region9: #{tpu_custom_call.1} parent=1 // pred_fallthru
      _
    // Predicated region
    $region10: #{tpu_custom_call.1} parent=1 // pred_check
      _
    $region11: #{tpu_custom_call.1} parent=1 // pred_check_branch
      %45 = sbr.rel (0) target = $region13
    $region12: #{tpu_custom_call.1} parent=1 // pred_region
      _
    $region13: #{tpu_custom_call.1} parent=1 // pred_fallthru
      _
    // Predicated region
    $region14: #{tpu_custom_call.1} parent=1 // pred_check
      _
    $region15: #{tpu_custom_call.1} parent=1 // pred_check_branch
      %47 = sbr.rel (0) target = $region17
    $region16: #{tpu_custom_call.1} parent=1 // pred_region
      %s49 = ssub.s32 128, 128
      %50 = vsyncadd [#allocation7], %s49
      %s52 = sshll.u32 [#allocation8], 4
      %s53 = int_to_ptr.vmem [resolvable:$true] %s52
      %55 = dma.hbm_to_vmem [thread:$0]  %s3, 128, %s53, [#allocation7]
    $region17: #{tpu_custom_call.1} parent=1 // pred_fallthru
      _
    // Predicated region
    $region18: #{tpu_custom_call.1} parent=1 // pred_check
      _
    $region19: #{tpu_custom_call.1} parent=1 // pred_check_branch
      %57 = sbr.rel (0) target = $region21
    $region20: #{tpu_custom_call.1} parent=1 // pred_region
      %s59 = ssub.s32 2048, 2048
      %60 = vsyncadd [#allocation10], %s59
      %s61 = sshll.u32 [#allocation9], 4
      %s62 = int_to_ptr.vmem [resolvable:$true] %s61
      %67 = dma.hbm_to_vmem [thread:$0]  %s4, 2048, %s62, [#allocation10], 128, 128, 8
    $region21: #{tpu_custom_call.1} parent=1 // pred_fallthru
      _
    // Predicated region
    $region22: #{tpu_custom_call.1} parent=1 // pred_check
      _
    $region23: #{tpu_custom_call.1} parent=1 // pred_check_branch
      %69 = sbr.rel (0) target = $region25
    $region24: #{tpu_custom_call.1} parent=1 // pred_region
      %s71 = ssub.s32 16, 16
      %72 = vsyncadd [#allocation10], %s71
      %s74 = sshll.u32 [#allocation11], 4
      %s75 = int_to_ptr.vmem [resolvable:$true] %s74
      %77 = dma.hbm_to_vmem [thread:$0]  %s5, 16, %s75, [#allocation10]
    $region25: #{tpu_custom_call.1} parent=1 // pred_fallthru
      _
    // Predicated region
    $region26: #{tpu_custom_call.1} parent=1 // pred_check
      _
    $region27: #{tpu_custom_call.1} parent=1 // pred_check_branch
      %79 = sbr.rel (0) target = $region29
    $region28: #{tpu_custom_call.1} parent=1 // pred_region
      _
    $region29: #{tpu_custom_call.1} parent=1 // pred_fallthru
      _
    // Predicated region
    $region30: #{tpu_custom_call.1} parent=1 // pred_check
      _
    $region31: #{tpu_custom_call.1} parent=1 // pred_check_branch
      %81 = sbr.rel (0) target = $region33
    $region32: #{tpu_custom_call.1} parent=1 // pred_region
      _
    $region33: #{tpu_custom_call.1} parent=1 // pred_fallthru
      _
    // Predicated region
    $region34: #{tpu_custom_call.1} parent=1 // pred_check
      _
    $region35: #{tpu_custom_call.1} parent=1 // pred_check_branch
      %83 = sbr.rel (0) target = $region37
    $region36: #{tpu_custom_call.1} parent=1 // pred_region
      %s85 = ssub.s32 4096, 4096
      %86 = vsyncadd [#allocation13], %s85
      %s87 = sshll.u32 [#allocation12], 4
      %s88 = int_to_ptr.vmem [resolvable:$true] %s87
      %93 = dma.hbm_to_vmem [thread:$0]  %s8, 4096, %s88, [#allocation13], 256, 256, 16
    $region37: #{tpu_custom_call.1} parent=1 // pred_fallthru
      _
    // Predicated region
    $region38: #{tpu_custom_call.1} parent=1 // pred_check
      _
    $region39: #{tpu_custom_call.1} parent=1 // pred_check_branch
      %95 = sbr.rel (0) target = $region41
    $region40: #{tpu_custom_call.1} parent=1 // pred_region
      _
    $region41: #{tpu_custom_call.1} parent=1 // pred_fallthru
      _
    // Predicated region
    $region42: #{tpu_custom_call.1} parent=1 // pred_check
      _
    $region43: #{tpu_custom_call.1} parent=1 // pred_check_branch
      %97 = sbr.rel (0) target = $region45
    $region44: #{tpu_custom_call.1} parent=1 // pred_region
      _
    $region45: #{tpu_custom_call.1} parent=1 // pred_fallthru
      _
    // Predicated region
    $region46: #{tpu_custom_call.1} parent=1 // pred_check
      _
    $region47: #{tpu_custom_call.1} parent=1 // pred_check_branch
      %99 = sbr.rel (0) target = $region49
    $region48: #{tpu_custom_call.1} parent=1 // pred_region
      _
    $region49: #{tpu_custom_call.1} parent=1 // pred_fallthru
      _
    // Predicated region
    $region50: #{tpu_custom_call.1} parent=1 // pred_check
      _
    $region51: #{tpu_custom_call.1} parent=1 // pred_check_branch
      %101 = sbr.rel (0) target = $region53
    $region52: #{tpu_custom_call.1} parent=1 // pred_region
      %102 = dma.done [#allocation4], 128
    $region53: #{tpu_custom_call.1} parent=1 // pred_fallthru
      _
    // Predicated region
    $region54: #{tpu_custom_call.1} parent=1 // pred_check
      _
    $region55: #{tpu_custom_call.1} parent=1 // pred_check_branch
      %104 = sbr.rel (0) target = $region57
    $region56: #{tpu_custom_call.1} parent=1 // pred_region
      %105 = dma.done [#allocation7], 64
    $region57: #{tpu_custom_call.1} parent=1 // pred_fallthru
      _
    // Predicated region
    $region58: #{tpu_custom_call.1} parent=1 // pred_check
      _
    $region59: #{tpu_custom_call.1} parent=1 // pred_check_branch
      %107 = sbr.rel (0) target = $region61
    $region60: #{tpu_custom_call.1} parent=1 // pred_region
      %108 = dma.done [#allocation7], 128
    $region61: #{tpu_custom_call.1} parent=1 // pred_fallthru
      _
    // Predicated region
    $region62: #{tpu_custom_call.1} parent=1 // pred_check
      _
    $region63: #{tpu_custom_call.1} parent=1 // pred_check_branch
      %110 = sbr.rel (0) target = $region65
    $region64: #{tpu_custom_call.1} parent=1 // pred_region
      %111 = dma.done [#allocation10], 2048
    $region65: #{tpu_custom_call.1} parent=1 // pred_fallthru
      _
    // Predicated region
    $region66: #{tpu_custom_call.1} parent=1 // pred_check
      _
    $region67: #{tpu_custom_call.1} parent=1 // pred_check_branch
      %113 = sbr.rel (0) target = $region69
    $region68: #{tpu_custom_call.1} parent=1 // pred_region
      %114 = dma.done [#allocation10], 16
    $region69: #{tpu_custom_call.1} parent=1 // pred_fallthru
      _
    // Predicated region
    $region70: #{tpu_custom_call.1} parent=1 // pred_check
      _
    $region71: #{tpu_custom_call.1} parent=1 // pred_check_branch
      %116 = sbr.rel (0) target = $region73
    $region72: #{tpu_custom_call.1} parent=1 // pred_region
      %117 = dma.done [#allocation13], 4096
    $region73: #{tpu_custom_call.1} parent=1 // pred_fallthru
      _
    %v118 = vld [vmem:[#allocation3] sm:$0xff]
    %v119 = vcvt.f32.s32.to.zero.pseudo %v118
    %v120 = vld [vmem:[#allocation6] sm:$0xf]
    %122 = vset.pattern.permute.xlu0 0
    %123 = vperm.xlu0 %122, %v118
    %v124 = vpop.permute.xlu0 %123
    %v126 = vlaneseq
    %v127 = vshrl.u32 %v126, 7
    %v128 = vsub.s32 0, %v127
    %v129 = vrot.slane %v120, %v128
    %v130 = vmul.f32 %v124, %v129
    %131 = vset.pattern.permute.xlu0 1
    %132 = vperm.xlu0 %131, %v118
    %v133 = vpop.permute.xlu0 %132
    %v135 = vlaneseq
    %v136 = vshrl.u32 %v135, 7
    %v137 = vsub.s32 1, %v136
    %v138 = vrot.slane %v120, %v137
    %v139 = vmul.f32 %v133, %v138
    %v140 = vadd.f32 %v130, %v139
    %141 = vset.pattern.permute.xlu0 2
    %142 = vperm.xlu0 %141, %v118
    %v143 = vpop.permute.xlu0 %142
    %v145 = vlaneseq
    %v146 = vshrl.u32 %v145, 7
    %v147 = vsub.s32 2, %v146
    %v148 = vrot.slane %v120, %v147
    %v149 = vmul.f32 %v143, %v148
    %v150 = vadd.f32 %v140, %v149
    %151 = vset.pattern.permute.xlu0 3
    %152 = vperm.xlu0 %151, %v118
    %v153 = vpop.permute.xlu0 %152
    %v155 = vlaneseq
    %v156 = vshrl.u32 %v155, 7
    %v157 = vsub.s32 3, %v156
    %v158 = vrot.slane %v120, %v157
    %v159 = vmul.f32 %v153, %v158
    %v160 = vadd.f32 %v150, %v159
    %v161 = vlaneseq
    %v162 = vand.u32 %v161, 127
    %vm163 = vcmp.lt.s32.totalorder %v162, 16
    %v164 = vand.u32 2147483647, %v160
    %vm165 = vcmp.le.f32.partialorder %v164, 0.7853982
    %vm166 = vcmp.lt.s32.totalorder %v160, 0
    %v167 = vand.u32 %v160, 2139095040
    %v168 = vshrl.u32 %v167, 23
    %v169 = vsub.s32 %v168, 127
    %v170 = vand.u32 2147483647, %v160
    %v171 = vand.u32 %v170, 8388607
    %v172 = vor.u32 %v171, 8388608
    %v173 = vsub.s32 0, %v172
    %v174 = vadd.s32 %v169, 1
    %vm175 = vcmp.gt.s32.totalorder %v174, 0
    %v176 = vsel %vm175, %v174, 0
    %v177 = vshrl.u32 %v176, 5
    %v178 = vand.u32 %v176, 31
    %v179 = vsub.s32 32, %v178
    %v180 = vshrl.u32 683565275, %v179
    %v181 = vshll.u32 683565275, %v178
    %v182 = vshrl.u32 2475754826, %v179
    %v183 = vor.u32 %v181, %v182
    %v184 = vshll.u32 2475754826, %v178
    %v185 = vshrl.u32 2131351028, %v179
    %v186 = vor.u32 %v184, %v185
    %v187 = vshll.u32 2131351028, %v178
    %v188 = vshrl.u32 2102212464, %v179
    %v189 = vor.u32 %v187, %v188
    %v190 = vshll.u32 2102212464, %v178
    %v191 = vshrl.u32 920167782, %v179
    %v192 = vor.u32 %v190, %v191
    %v193 = vshll.u32 920167782, %v178
    %v194 = vshrl.u32 1326507024, %v179
    %v195 = vor.u32 %v193, %v194
    %vm196 = vcmp.lt.s32.totalorder %v177, 1
    %vm197 = vcmp.lt.s32.totalorder %v177, 2
    %vm198 = vcmp.lt.s32.totalorder %v177, 3
    %vm199 = vcmp.lt.s32.totalorder %v177, 4
    %v200 = vsel %vm196, %v180, %v183
    %v201 = vsel %vm199, %v189, 2102212464
    %v202 = vsel %vm198, %v186, %v201
    %v203 = vsel %vm197, %v200, %v202
    %v204 = vsel %vm196, %v183, %v186
    %v205 = vsel %vm199, %v192, 920167782
    %v206 = vsel %vm198, %v189, %v205
    %v207 = vsel %vm197, %v204, %v206
    %v208 = vsel %vm196, %v186, %v189
    %v209 = vsel %vm199, %v195, 1326507024
    %v210 = vsel %vm198, %v192, %v209
    %v211 = vsel %vm197, %v208, %v210
    %v212 = vshll.u32 %v172, 8
    %v213 = vmul.u32.u64.compose %v212, %v211
    %v214 = vextract.low.u32 %v213
    %v215 = vextract.high.u32 %v213
    %v216 = vmul.u32.u64.compose %v212, %v207
    %v217 = vextract.low.u32 %v216
    %v218 = vextract.high.u32 %v216
    %v219 = vmul.u32 %v212, %v203
    %v220 = vadd.s32 %v215, %v217
    %vm221 = vc.u32 %v215, %v217
    %v222 = vadd.s32 %v218, 1
    %v223 = vsel %vm221, %v222, %v218
    %v224 = vadd.s32 %v219, %v223
    %v225 = vadd.s32 %v224, 536870912
    %v226 = vshrl.u32 %v225, 30
    %v227 = vshll.u32 %v226, 30
    %v228 = vsub.s32 %v224, %v227
    %vm229 = vcmp.lt.s32.totalorder %v228, 0
    %v230 = vsub.s32 0, %v228
    %v231 = vsel %vm229, %v230, %v228
    %v232 = vclz %v231
    %v233 = vsub.s32 %v232, 2
    %vm234 = vcmp.gt.s32.totalorder 0, %v233
    %v235 = vsel %vm234, 0, %v233
    %v236 = vsub.s32 32, %v235
    %v237 = vshll.u32 %v228, %v235
    %v238 = vshrl.u32 %v220, %v236
    %v239 = vor.u32 %v237, %v238
    %v240 = vsub.s32 4294967266, %v235
    %v241 = vadd.s32 %v240, 127
    %v242 = vshll.u32 %v241, 23
    %v243 = vor.u32 4788187, %v242
    %v244 = vand.u32 2147483647, %v243
    %v246 = vcvt.s32.f32 %v239
    %v247 = vmul.f32 %v246, %v244
    %v248 = vxor.u32 %v247, 2147483648
    %v249 = vsel %vm166, %v248, %v247
    %v250 = vsub.s32 4, %v226
    %v251 = vsel %vm166, %v250, %v226
    %v252 = vsel %vm165, %v160, %v249
    %v253 = vsel %vm165, 0, %v251
    %v254 = vcosq.f32.pop %v252
    %v255 = vsinq.f32.pop %v252
    %vm256 = vweird.f32 %v160
    %v257 = vadd.s32 %v253, 3
    %v258 = vand.u32 %v257, 3
    %vm259 = vcmp.lt.s32.totalorder %v258, 2
    %vm260 = vcmp.eq.s32.totalorder %v258, 0
    %v261 = vxor.u32 %v255, 2147483648
    %v262 = vsel %vm260, %v254, %v261
    %vm263 = vcmp.eq.s32.totalorder %v258, 2
    %v264 = vxor.u32 %v254, 2147483648
    %v265 = vsel %vm263, %v264, %v255
    %v266 = vsel %vm259, %v262, %v265
    %v267 = vsel %vm256, nan, %v266
    %vm268 = vcmp.lt.s32.totalorder %v162, 32
    %v269 = vand.u32 2147483647, %v160
    %vm270 = vcmp.le.f32.partialorder %v269, 0.7853982
    %vm271 = vcmp.lt.s32.totalorder %v160, 0
    %v272 = vand.u32 %v160, 2139095040
    %v273 = vshrl.u32 %v272, 23
    %v274 = vsub.s32 %v273, 127
    %v275 = vand.u32 2147483647, %v160
    %v276 = vand.u32 %v275, 8388607
    %v277 = vor.u32 %v276, 8388608
    %v278 = vsub.s32 0, %v277
    %v279 = vadd.s32 %v274, 1
    %vm280 = vcmp.gt.s32.totalorder %v279, 0
    %v281 = vsel %vm280, %v279, 0
    %v282 = vshrl.u32 %v281, 5
    %v283 = vand.u32 %v281, 31
    %v284 = vsub.s32 32, %v283
    %v285 = vshrl.u32 683565275, %v284
    %v286 = vshll.u32 683565275, %v283
    %v287 = vshrl.u32 2475754826, %v284
    %v288 = vor.u32 %v286, %v287
    %v289 = vshll.u32 2475754826, %v283
    %v290 = vshrl.u32 2131351028, %v284
    %v291 = vor.u32 %v289, %v290
    %v292 = vshll.u32 2131351028, %v283
    %v293 = vshrl.u32 2102212464, %v284
    %v294 = vor.u32 %v292, %v293
    %v295 = vshll.u32 2102212464, %v283
    %v296 = vshrl.u32 920167782, %v284
    %v297 = vor.u32 %v295, %v296
    %v298 = vshll.u32 920167782, %v283
    %v299 = vshrl.u32 1326507024, %v284
    %v300 = vor.u32 %v298, %v299
    %vm301 = vcmp.lt.s32.totalorder %v282, 1
    %vm302 = vcmp.lt.s32.totalorder %v282, 2
    %vm303 = vcmp.lt.s32.totalorder %v282, 3
    %vm304 = vcmp.lt.s32.totalorder %v282, 4
    %v305 = vsel %vm301, %v285, %v288
    %v306 = vsel %vm304, %v294, 2102212464
    %v307 = vsel %vm303, %v291, %v306
    %v308 = vsel %vm302, %v305, %v307
    %v309 = vsel %vm301, %v288, %v291
    %v310 = vsel %vm304, %v297, 920167782
    %v311 = vsel %vm303, %v294, %v310
    %v312 = vsel %vm302, %v309, %v311
    %v313 = vsel %vm301, %v291, %v294
    %v314 = vsel %vm304, %v300, 1326507024
    %v315 = vsel %vm303, %v297, %v314
    %v316 = vsel %vm302, %v313, %v315
    %v317 = vshll.u32 %v277, 8
    %v318 = vmul.u32.u64.compose %v317, %v316
    %v319 = vextract.low.u32 %v318
    %v320 = vextract.high.u32 %v318
    %v321 = vmul.u32.u64.compose %v317, %v312
    %v322 = vextract.low.u32 %v321
    %v323 = vextract.high.u32 %v321
    %v324 = vmul.u32 %v317, %v308
    %v325 = vadd.s32 %v320, %v322
    %vm326 = vc.u32 %v320, %v322
    %v327 = vadd.s32 %v323, 1
    %v328 = vsel %vm326, %v327, %v323
    %v329 = vadd.s32 %v324, %v328
    %v330 = vadd.s32 %v329, 536870912
    %v331 = vshrl.u32 %v330, 30
    %v332 = vshll.u32 %v331, 30
    %v333 = vsub.s32 %v329, %v332
    %vm334 = vcmp.lt.s32.totalorder %v333, 0
    %v335 = vsub.s32 0, %v333
    %v336 = vsel %vm334, %v335, %v333
    %v337 = vclz %v336
    %v338 = vsub.s32 %v337, 2
    %vm339 = vcmp.gt.s32.totalorder 0, %v338
    %v340 = vsel %vm339, 0, %v338
    %v341 = vsub.s32 32, %v340
    %v342 = vshll.u32 %v333, %v340
    %v343 = vshrl.u32 %v325, %v341
    %v344 = vor.u32 %v342, %v343
    %v345 = vsub.s32 4294967266, %v340
    %v346 = vadd.s32 %v345, 127
    %v347 = vshll.u32 %v346, 23
    %v348 = vor.u32 4788187, %v347
    %v349 = vand.u32 2147483647, %v348
    %v351 = vcvt.s32.f32 %v344
    %v352 = vmul.f32 %v351, %v349
    %v353 = vxor.u32 %v352, 2147483648
    %v354 = vsel %vm271, %v353, %v352
    %v355 = vsub.s32 4, %v331
    %v356 = vsel %vm271, %v355, %v331
    %v357 = vsel %vm270, %v160, %v354
    %v358 = vsel %vm270, 0, %v356
    %v359 = vcosq.f32.pop %v357
    %v360 = vsinq.f32.pop %v357
    %vm361 = vweird.f32 %v160
    %v362 = vand.u32 %v358, 3
    %vm363 = vcmp.lt.s32.totalorder %v362, 2
    %vm364 = vcmp.eq.s32.totalorder %v362, 0
    %v365 = vxor.u32 %v360, 2147483648
    %v366 = vsel %vm364, %v359, %v365
    %vm367 = vcmp.eq.s32.totalorder %v362, 2
    %v368 = vxor.u32 %v359, 2147483648
    %v369 = vsel %vm367, %v368, %v360
    %v370 = vsel %vm363, %v366, %v369
    %v371 = vsel %vm361, nan, %v370
    %v372 = vsel %vm268, %v371, 0.0
    %v373 = vsel %vm163, %v267, %v372
    %374 = vset.pattern.permute.xlu0 4
    %375 = vperm.xlu0 %374, %v119
    %v376 = vpop.permute.xlu0 %375
    %vm377 = vcmp.eq.s32.totalorder %v162, %v376
    %v378 = vsel %vm377, 1, 0
    %v379 = vcvt.s32.f32 %v378
    %v380 = vld [vmem:[%s2] sm:$0xff]
    %vm381 = vcmask 64512
    %v383 = vsel %vm381, %v379, 0
    %385 = vmatprep.subr.mxu0 0.0
    %v386 = vand.u32 %v380, 4294901760
    %387 = vmatpush1.msra.mxu0 %v386
    %388 = vmatprep.subr.mxu0 0.0
    %389 = vmatpush1.msra.mxu0 0.0
    %390 = vmatprep.subr.mxu0 0.0
    %391 = vmatpush1.msra.mxu0 0.0
    %392 = vmatprep.subr.mxu0 0.0
    %393 = vmatpush1.msra.mxu0 0.0
    %394 = vmatprep.subr.mxu0 0.0
    %395 = vmatpush1.msra.mxu0 0.0
    %396 = vmatprep.subr.mxu0 0.0
    %397 = vmatpush1.msra.mxu0 0.0
    %398 = vmatprep.subr.mxu0 0.0
    %399 = vmatpush1.msra.mxu0 0.0
    %400 = vmatprep.subr.mxu0 0.0
    %401 = vmatpush1.msra.mxu0 0.0
    %402 = vmatprep.subr.mxu0 0.0
    %403 = vmatpush1.msra.mxu0 0.0
    %404 = vmatprep.subr.mxu0 0.0
    %405 = vmatpush1.msra.mxu0 0.0
    %406 = vmatprep.subr.mxu0 0.0
    %407 = vmatpush1.msra.mxu0 0.0
    %408 = vmatprep.subr.mxu0 0.0
    %409 = vmatpush1.msra.mxu0 0.0
    %410 = vmatprep.subr.mxu0 0.0
    %411 = vmatpush1.msra.mxu0 0.0
    %412 = vmatprep.subr.mxu0 0.0
    %413 = vmatpush1.msra.mxu0 0.0
    %414 = vmatprep.subr.mxu0 0.0
    %415 = vmatpush1.msra.mxu0 0.0
    %416 = vmatprep.subr.mxu0 0.0
    %417 = vmatpush1.msra.mxu0 0.0
    %418 = vmatprep.subr.mxu0 0.0
    %419 = vmatpush1.msra.mxu0 0.0
    %420 = vmatprep.subr.mxu0 0.0
    %421 = vmatpush1.msra.mxu0 0.0
    %422 = vmatprep.subr.mxu0 0.0
    %423 = vmatpush1.msra.mxu0 0.0
    %424 = vmatprep.subr.mxu0 0.0
    %425 = vmatpush1.msra.mxu0 0.0
    %426 = vmatprep.subr.mxu0 0.0
    %427 = vmatpush1.msra.mxu0 0.0
    %428 = vmatprep.subr.mxu0 0.0
    %429 = vmatpush1.msra.mxu0 0.0
    %430 = vmatprep.subr.mxu0 0.0
    %431 = vmatpush1.msra.mxu0 0.0
    %432 = vmatprep.subr.mxu0 0.0
    %433 = vmatpush1.msra.mxu0 0.0
    %434 = vmatprep.subr.mxu0 0.0
    %435 = vmatpush1.msra.mxu0 0.0
    %436 = vmatprep.subr.mxu0 0.0
    %437 = vmatpush1.msra.mxu0 0.0
    %438 = vmatprep.subr.mxu0 0.0
    %439 = vmatpush1.msra.mxu0 0.0
    %440 = vmatprep.subr.mxu0 0.0
    %441 = vmatpush1.msra.mxu0 0.0
    %442 = vmatprep.subr.mxu0 0.0
    %443 = vmatpush1.msra.mxu0 0.0
    %444 = vmatprep.subr.mxu0 0.0
    %445 = vmatpush1.msra.mxu0 0.0
    %446 = vmatprep.subr.mxu0 0.0
    %447 = vmatpush1.msra.mxu0 0.0
    %448 = vmatprep.subr.mxu0 0.0
    %449 = vmatpush1.msra.mxu0 0.0
    %450 = vmatprep.mubr.f32.mxu0 0.0
    %v451 = vand.u32 %v383, 4294901760
    %v452 = vsub.f32 %v383, %v451
    %v453 = vand.u32 %v452, 4294901760
    %v454 = vsub.f32 %v452, %v453
    %v455 = vand.u32 %v454, 4294901760
    %456 = vmatmul.mubr.f32.gmra.mrb[0].mxu0 %v455
    %v457 = vpop.f32.mrb[0].mxu0
    %v458 = vadd.f32 0.0, %v457
    %v459 = vpop.f32.mrb[0].mxu0
    %460 = vdwg.mxu0
    %461 = vmatprep.subr.mxu0 0.0
    %v462 = vand.u32 %v380, 4294901760
    %v463 = vsub.f32 %v380, %v462
    %v464 = vand.u32 %v463, 4294901760
    %v465 = vsub.f32 %v463, %v464
    %v466 = vand.u32 %v465, 4294901760
    %467 = vmatpush1.msra.mxu0 %v466
    %468 = vmatprep.subr.mxu0 0.0
    %469 = vmatpush1.msra.mxu0 0.0
    %470 = vmatprep.subr.mxu0 0.0
    %471 = vmatpush1.msra.mxu0 0.0
    %472 = vmatprep.subr.mxu0 0.0
    %473 = vmatpush1.msra.mxu0 0.0
    %474 = vmatprep.subr.mxu0 0.0
    %475 = vmatpush1.msra.mxu0 0.0
    %476 = vmatprep.subr.mxu0 0.0
    %477 = vmatpush1.msra.mxu0 0.0
    %478 = vmatprep.subr.mxu0 0.0
    %479 = vmatpush1.msra.mxu0 0.0
    %480 = vmatprep.subr.mxu0 0.0
    %481 = vmatpush1.msra.mxu0 0.0
    %482 = vmatprep.subr.mxu0 0.0
    %483 = vmatpush1.msra.mxu0 0.0
    %484 = vmatprep.subr.mxu0 0.0
    %485 = vmatpush1.msra.mxu0 0.0
    %486 = vmatprep.subr.mxu0 0.0
    %487 = vmatpush1.msra.mxu0 0.0
    %488 = vmatprep.subr.mxu0 0.0
    %489 = vmatpush1.msra.mxu0 0.0
    %490 = vmatprep.subr.mxu0 0.0
    %491 = vmatpush1.msra.mxu0 0.0
    %492 = vmatprep.subr.mxu0 0.0
    %493 = vmatpush1.msra.mxu0 0.0
    %494 = vmatprep.subr.mxu0 0.0
    %495 = vmatpush1.msra.mxu0 0.0
    %496 = vmatprep.subr.mxu0 0.0
    %497 = vmatpush1.msra.mxu0 0.0
    %498 = vmatprep.subr.mxu0 0.0
    %499 = vmatpush1.msra.mxu0 0.0
    %500 = vmatprep.subr.mxu0 0.0
    %501 = vmatpush1.msra.mxu0 0.0
    %502 = vmatprep.subr.mxu0 0.0
    %503 = vmatpush1.msra.mxu0 0.0
    %504 = vmatprep.subr.mxu0 0.0
    %505 = vmatpush1.msra.mxu0 0.0
    %506 = vmatprep.subr.mxu0 0.0
    %507 = vmatpush1.msra.mxu0 0.0
    %508 = vmatprep.subr.mxu0 0.0
    %509 = vmatpush1.msra.mxu0 0.0
    %510 = vmatprep.subr.mxu0 0.0
    %511 = vmatpush1.msra.mxu0 0.0
    %512 = vmatprep.subr.mxu0 0.0
    %513 = vmatpush1.msra.mxu0 0.0
    %514 = vmatprep.subr.mxu0 0.0
    %515 = vmatpush1.msra.mxu0 0.0
    %516 = vmatprep.subr.mxu0 0.0
    %517 = vmatpush1.msra.mxu0 0.0
    %518 = vmatprep.subr.mxu0 0.0
    %519 = vmatpush1.msra.mxu0 0.0
    %520 = vmatprep.subr.mxu0 0.0
    %521 = vmatpush1.msra.mxu0 0.0
    %522 = vmatprep.subr.mxu0 0.0
    %523 = vmatpush1.msra.mxu0 0.0
    %524 = vmatprep.subr.mxu0 0.0
    %525 = vmatpush1.msra.mxu0 0.0
    %526 = vmatprep.subr.mxu0 0.0
    %527 = vmatpush1.msra.mxu0 0.0
    %528 = vmatprep.subr.mxu0 0.0
    %529 = vmatpush1.msra.mxu0 0.0
    %530 = vmatprep.mubr.f32.mxu0 0.0
    %v531 = vand.u32 %v383, 4294901760
    %532 = vmatmul.mubr.f32.gmra.mrb[0].mxu0 %v531
    %v533 = vpop.f32.mrb[0].mxu0
    %v534 = vadd.f32 %v458, %v533
    %v535 = vpop.f32.mrb[0].mxu0
    %536 = vdwg.mxu0
    %537 = vmatprep.subr.mxu0 0.0
    %v538 = vand.u32 %v380, 4294901760
    %v539 = vsub.f32 %v380, %v538
    %540 = vmatpush1.msra.mxu0 %v539
    %541 = vmatprep.subr.mxu0 0.0
    %542 = vmatpush1.msra.mxu0 0.0
    %543 = vmatprep.subr.mxu0 0.0
    %544 = vmatpush1.msra.mxu0 0.0
    %545 = vmatprep.subr.mxu0 0.0
    %546 = vmatpush1.msra.mxu0 0.0
    %547 = vmatprep.subr.mxu0 0.0
    %548 = vmatpush1.msra.mxu0 0.0
    %549 = vmatprep.subr.mxu0 0.0
    %550 = vmatpush1.msra.mxu0 0.0
    %551 = vmatprep.subr.mxu0 0.0
    %552 = vmatpush1.msra.mxu0 0.0
    %553 = vmatprep.subr.mxu0 0.0
    %554 = vmatpush1.msra.mxu0 0.0
    %555 = vmatprep.subr.mxu0 0.0
    %556 = vmatpush1.msra.mxu0 0.0
    %557 = vmatprep.subr.mxu0 0.0
    %558 = vmatpush1.msra.mxu0 0.0
    %559 = vmatprep.subr.mxu0 0.0
    %560 = vmatpush1.msra.mxu0 0.0
    %561 = vmatprep.subr.mxu0 0.0
    %562 = vmatpush1.msra.mxu0 0.0
    %563 = vmatprep.subr.mxu0 0.0
    %564 = vmatpush1.msra.mxu0 0.0
    %565 = vmatprep.subr.mxu0 0.0
    %566 = vmatpush1.msra.mxu0 0.0
    %567 = vmatprep.subr.mxu0 0.0
    %568 = vmatpush1.msra.mxu0 0.0
    %569 = vmatprep.subr.mxu0 0.0
    %570 = vmatpush1.msra.mxu0 0.0
    %571 = vmatprep.subr.mxu0 0.0
    %572 = vmatpush1.msra.mxu0 0.0
    %573 = vmatprep.subr.mxu0 0.0
    %574 = vmatpush1.msra.mxu0 0.0
    %575 = vmatprep.subr.mxu0 0.0
    %576 = vmatpush1.msra.mxu0 0.0
    %577 = vmatprep.subr.mxu0 0.0
    %578 = vmatpush1.msra.mxu0 0.0
    %579 = vmatprep.subr.mxu0 0.0
    %580 = vmatpush1.msra.mxu0 0.0
    %581 = vmatprep.subr.mxu0 0.0
    %582 = vmatpush1.msra.mxu0 0.0
    %583 = vmatprep.subr.mxu0 0.0
    %584 = vmatpush1.msra.mxu0 0.0
    %585 = vmatprep.subr.mxu0 0.0
    %586 = vmatpush1.msra.mxu0 0.0
    %587 = vmatprep.subr.mxu0 0.0
    %588 = vmatpush1.msra.mxu0 0.0
    %589 = vmatprep.subr.mxu0 0.0
    %590 = vmatpush1.msra.mxu0 0.0
    %591 = vmatprep.subr.mxu0 0.0
    %592 = vmatpush1.msra.mxu0 0.0
    %593 = vmatprep.subr.mxu0 0.0
    %594 = vmatpush1.msra.mxu0 0.0
    %595 = vmatprep.subr.mxu0 0.0
    %596 = vmatpush1.msra.mxu0 0.0
    %597 = vmatprep.subr.mxu0 0.0
    %598 = vmatpush1.msra.mxu0 0.0
    %599 = vmatprep.subr.mxu0 0.0
    %600 = vmatpush1.msra.mxu0 0.0
    %601 = vmatprep.subr.mxu0 0.0
    %602 = vmatpush1.msra.mxu0 0.0
    %603 = vmatprep.mubr.f32.mxu0 0.0
    %v604 = vand.u32 %v383, 4294901760
    %v605 = vsub.f32 %v383, %v604
    %606 = vmatmul.mubr.f32.gmra.mrb[0].mxu0 %v605
    %v607 = vpop.f32.mrb[0].mxu0
    %v608 = vadd.f32 %v534, %v607
    %v609 = vpop.f32.mrb[0].mxu0
    %610 = vdwg.mxu0
    %611 = vmatprep.subr.mxu0 0.0
    %v612 = vand.u32 %v380, 4294901760
    %613 = vmatpush1.msra.mxu0 %v612
    %614 = vmatprep.subr.mxu0 0.0
    %615 = vmatpush1.msra.mxu0 0.0
    %616 = vmatprep.subr.mxu0 0.0
    %617 = vmatpush1.msra.mxu0 0.0
    %618 = vmatprep.subr.mxu0 0.0
    %619 = vmatpush1.msra.mxu0 0.0
    %620 = vmatprep.subr.mxu0 0.0
    %621 = vmatpush1.msra.mxu0 0.0
    %622 = vmatprep.subr.mxu0 0.0
    %623 = vmatpush1.msra.mxu0 0.0
    %624 = vmatprep.subr.mxu0 0.0
    %625 = vmatpush1.msra.mxu0 0.0
    %626 = vmatprep.subr.mxu0 0.0
    %627 = vmatpush1.msra.mxu0 0.0
    %628 = vmatprep.subr.mxu0 0.0
    %629 = vmatpush1.msra.mxu0 0.0
    %630 = vmatprep.subr.mxu0 0.0
    %631 = vmatpush1.msra.mxu0 0.0
    %632 = vmatprep.subr.mxu0 0.0
    %633 = vmatpush1.msra.mxu0 0.0
    %634 = vmatprep.subr.mxu0 0.0
    %635 = vmatpush1.msra.mxu0 0.0
    %636 = vmatprep.subr.mxu0 0.0
    %637 = vmatpush1.msra.mxu0 0.0
    %638 = vmatprep.subr.mxu0 0.0
    %639 = vmatpush1.msra.mxu0 0.0
    %640 = vmatprep.subr.mxu0 0.0
    %641 = vmatpush1.msra.mxu0 0.0
    %642 = vmatprep.subr.mxu0 0.0
    %643 = vmatpush1.msra.mxu0 0.0
    %644 = vmatprep.subr.mxu0 0.0
    %645 = vmatpush1.msra.mxu0 0.0
    %646 = vmatprep.subr.mxu0 0.0
    %647 = vmatpush1.msra.mxu0 0.0
    %648 = vmatprep.subr.mxu0 0.0
    %649 = vmatpush1.msra.mxu0 0.0
    %650 = vmatprep.subr.mxu0 0.0
    %651 = vmatpush1.msra.mxu0 0.0
    %652 = vmatprep.subr.mxu0 0.0
    %653 = vmatpush1.msra.mxu0 0.0
    %654 = vmatprep.subr.mxu0 0.0
    %655 = vmatpush1.msra.mxu0 0.0
    %656 = vmatprep.subr.mxu0 0.0
    %657 = vmatpush1.msra.mxu0 0.0
    %658 = vmatprep.subr.mxu0 0.0
    %659 = vmatpush1.msra.mxu0 0.0
    %660 = vmatprep.subr.mxu0 0.0
    %661 = vmatpush1.msra.mxu0 0.0
    %662 = vmatprep.subr.mxu0 0.0
    %663 = vmatpush1.msra.mxu0 0.0
    %664 = vmatprep.subr.mxu0 0.0
    %665 = vmatpush1.msra.mxu0 0.0
    %666 = vmatprep.subr.mxu0 0.0
    %667 = vmatpush1.msra.mxu0 0.0
    %668 = vmatprep.subr.mxu0 0.0
    %669 = vmatpush1.msra.mxu0 0.0
    %670 = vmatprep.subr.mxu0 0.0
    %671 = vmatpush1.msra.mxu0 0.0
    %672 = vmatprep.subr.mxu0 0.0
    %673 = vmatpush1.msra.mxu0 0.0
    %674 = vmatprep.subr.mxu0 0.0
    %675 = vmatpush1.msra.mxu0 0.0
    %676 = vmatprep.mubr.f32.mxu0 0.0
    %v677 = vand.u32 %v383, 4294901760
    %v678 = vsub.f32 %v383, %v677
    %v679 = vand.u32 %v678, 4294901760
    %680 = vmatmul.mubr.f32.gmra.mrb[0].mxu0 %v679
    %v681 = vpop.f32.mrb[0].mxu0
    %v682 = vadd.f32 %v608, %v681
    %v683 = vpop.f32.mrb[0].mxu0
    %684 = vdwg.mxu0
    %685 = vmatprep.subr.mxu0 0.0
    %v686 = vand.u32 %v380, 4294901760
    %v687 = vsub.f32 %v380, %v686
    %v688 = vand.u32 %v687, 4294901760
    %689 = vmatpush1.msra.mxu0 %v688
    %690 = vmatprep.subr.mxu0 0.0
    %691 = vmatpush1.msra.mxu0 0.0
    %692 = vmatprep.subr.mxu0 0.0
    %693 = vmatpush1.msra.mxu0 0.0
    %694 = vmatprep.subr.mxu0 0.0
    %695 = vmatpush1.msra.mxu0 0.0
    %696 = vmatprep.subr.mxu0 0.0
    %697 = vmatpush1.msra.mxu0 0.0
    %698 = vmatprep.subr.mxu0 0.0
    %699 = vmatpush1.msra.mxu0 0.0
    %700 = vmatprep.subr.mxu0 0.0
    %701 = vmatpush1.msra.mxu0 0.0
    %702 = vmatprep.subr.mxu0 0.0
    %703 = vmatpush1.msra.mxu0 0.0
    %704 = vmatprep.subr.mxu0 0.0
    %705 = vmatpush1.msra.mxu0 0.0
    %706 = vmatprep.subr.mxu0 0.0
    %707 = vmatpush1.msra.mxu0 0.0
    %708 = vmatprep.subr.mxu0 0.0
    %709 = vmatpush1.msra.mxu0 0.0
    %710 = vmatprep.subr.mxu0 0.0
    %711 = vmatpush1.msra.mxu0 0.0
    %712 = vmatprep.subr.mxu0 0.0
    %713 = vmatpush1.msra.mxu0 0.0
    %714 = vmatprep.subr.mxu0 0.0
    %715 = vmatpush1.msra.mxu0 0.0
    %716 = vmatprep.subr.mxu0 0.0
    %717 = vmatpush1.msra.mxu0 0.0
    %718 = vmatprep.subr.mxu0 0.0
    %719 = vmatpush1.msra.mxu0 0.0
    %720 = vmatprep.subr.mxu0 0.0
    %721 = vmatpush1.msra.mxu0 0.0
    %722 = vmatprep.subr.mxu0 0.0
    %723 = vmatpush1.msra.mxu0 0.0
    %724 = vmatprep.subr.mxu0 0.0
    %725 = vmatpush1.msra.mxu0 0.0
    %726 = vmatprep.subr.mxu0 0.0
    %727 = vmatpush1.msra.mxu0 0.0
    %728 = vmatprep.subr.mxu0 0.0
    %729 = vmatpush1.msra.mxu0 0.0
    %730 = vmatprep.subr.mxu0 0.0
    %731 = vmatpush1.msra.mxu0 0.0
    %732 = vmatprep.subr.mxu0 0.0
    %733 = vmatpush1.msra.mxu0 0.0
    %734 = vmatprep.subr.mxu0 0.0
    %735 = vmatpush1.msra.mxu0 0.0
    %736 = vmatprep.subr.mxu0 0.0
    %737 = vmatpush1.msra.mxu0 0.0
    %738 = vmatprep.subr.mxu0 0.0
    %739 = vmatpush1.msra.mxu0 0.0
    %740 = vmatprep.subr.mxu0 0.0
    %741 = vmatpush1.msra.mxu0 0.0
    %742 = vmatprep.subr.mxu0 0.0
    %743 = vmatpush1.msra.mxu0 0.0
    %744 = vmatprep.subr.mxu0 0.0
    %745 = vmatpush1.msra.mxu0 0.0
    %746 = vmatprep.subr.mxu0 0.0
    %747 = vmatpush1.msra.mxu0 0.0
    %748 = vmatprep.subr.mxu0 0.0
    %749 = vmatpush1.msra.mxu0 0.0
    %750 = vmatprep.subr.mxu0 0.0
    %751 = vmatpush1.msra.mxu0 0.0
    %752 = vmatprep.mubr.f32.mxu0 0.0
    %v753 = vand.u32 %v383, 4294901760
    %754 = vmatmul.mubr.f32.gmra.mrb[0].mxu0 %v753
    %v755 = vpop.f32.mrb[0].mxu0
    %v756 = vadd.f32 %v682, %v755
    %v757 = vpop.f32.mrb[0].mxu0
    %758 = vdwg.mxu0
    %759 = vmatprep.subr.mxu0 0.0
    %v760 = vand.u32 %v380, 4294901760
    %761 = vmatpush1.msra.mxu0 %v760
    %762 = vmatprep.subr.mxu0 0.0
    %763 = vmatpush1.msra.mxu0 0.0
    %764 = vmatprep.subr.mxu0 0.0
    %765 = vmatpush1.msra.mxu0 0.0
    %766 = vmatprep.subr.mxu0 0.0
    %767 = vmatpush1.msra.mxu0 0.0
    %768 = vmatprep.subr.mxu0 0.0
    %769 = vmatpush1.msra.mxu0 0.0
    %770 = vmatprep.subr.mxu0 0.0
    %771 = vmatpush1.msra.mxu0 0.0
    %772 = vmatprep.subr.mxu0 0.0
    %773 = vmatpush1.msra.mxu0 0.0
    %774 = vmatprep.subr.mxu0 0.0
    %775 = vmatpush1.msra.mxu0 0.0
    %776 = vmatprep.subr.mxu0 0.0
    %777 = vmatpush1.msra.mxu0 0.0
    %778 = vmatprep.subr.mxu0 0.0
    %779 = vmatpush1.msra.mxu0 0.0
    %780 = vmatprep.subr.mxu0 0.0
    %781 = vmatpush1.msra.mxu0 0.0
    %782 = vmatprep.subr.mxu0 0.0
    %783 = vmatpush1.msra.mxu0 0.0
    %784 = vmatprep.subr.mxu0 0.0
    %785 = vmatpush1.msra.mxu0 0.0
    %786 = vmatprep.subr.mxu0 0.0
    %787 = vmatpush1.msra.mxu0 0.0
    %788 = vmatprep.subr.mxu0 0.0
    %789 = vmatpush1.msra.mxu0 0.0
    %790 = vmatprep.subr.mxu0 0.0
    %791 = vmatpush1.msra.mxu0 0.0
    %792 = vmatprep.subr.mxu0 0.0
    %793 = vmatpush1.msra.mxu0 0.0
    %794 = vmatprep.subr.mxu0 0.0
    %795 = vmatpush1.msra.mxu0 0.0
    %796 = vmatprep.subr.mxu0 0.0
    %797 = vmatpush1.msra.mxu0 0.0
    %798 = vmatprep.subr.mxu0 0.0
    %799 = vmatpush1.msra.mxu0 0.0
    %800 = vmatprep.subr.mxu0 0.0
    %801 = vmatpush1.msra.mxu0 0.0
    %802 = vmatprep.subr.mxu0 0.0
    %803 = vmatpush1.msra.mxu0 0.0
    %804 = vmatprep.subr.mxu0 0.0
    %805 = vmatpush1.msra.mxu0 0.0
    %806 = vmatprep.subr.mxu0 0.0
    %807 = vmatpush1.msra.mxu0 0.0
    %808 = vmatprep.subr.mxu0 0.0
    %809 = vmatpush1.msra.mxu0 0.0
    %810 = vmatprep.subr.mxu0 0.0
    %811 = vmatpush1.msra.mxu0 0.0
    %812 = vmatprep.subr.mxu0 0.0
    %813 = vmatpush1.msra.mxu0 0.0
    %814 = vmatprep.subr.mxu0 0.0
    %815 = vmatpush1.msra.mxu0 0.0
    %816 = vmatprep.subr.mxu0 0.0
    %817 = vmatpush1.msra.mxu0 0.0
    %818 = vmatprep.subr.mxu0 0.0
    %819 = vmatpush1.msra.mxu0 0.0
    %820 = vmatprep.subr.mxu0 0.0
    %821 = vmatpush1.msra.mxu0 0.0
    %822 = vmatprep.subr.mxu0 0.0
    %823 = vmatpush1.msra.mxu0 0.0
    %824 = vmatprep.mubr.f32.mxu0 0.0
    %v825 = vand.u32 %v383, 4294901760
    %826 = vmatmul.mubr.f32.gmra.mrb[0].mxu0 %v825
    %v827 = vpop.f32.mrb[0].mxu0
    %v828 = vadd.f32 %v756, %v827
    %v829 = vpop.f32.mrb[0].mxu0
    %830 = vdwg.mxu0
    %v831 = vld [vmem:[#allocation8] sm:$0xff]
    %832 = vmatprep.subr.mxu0 0.0
    %v833 = vand.u32 %v831, 4294901760
    %834 = vmatpush1.msra.mxu0 %v833
    %835 = vmatprep.subr.mxu0 0.0
    %836 = vmatpush1.msra.mxu0 0.0
    %837 = vmatprep.subr.mxu0 0.0
    %838 = vmatpush1.msra.mxu0 0.0
    %839 = vmatprep.subr.mxu0 0.0
    %840 = vmatpush1.msra.mxu0 0.0
    %841 = vmatprep.subr.mxu0 0.0
    %842 = vmatpush1.msra.mxu0 0.0
    %843 = vmatprep.subr.mxu0 0.0
    %844 = vmatpush1.msra.mxu0 0.0
    %845 = vmatprep.subr.mxu0 0.0
    %846 = vmatpush1.msra.mxu0 0.0
    %847 = vmatprep.subr.mxu0 0.0
    %848 = vmatpush1.msra.mxu0 0.0
    %849 = vmatprep.subr.mxu0 0.0
    %850 = vmatpush1.msra.mxu0 0.0
    %851 = vmatprep.subr.mxu0 0.0
    %852 = vmatpush1.msra.mxu0 0.0
    %853 = vmatprep.subr.mxu0 0.0
    %854 = vmatpush1.msra.mxu0 0.0
    %855 = vmatprep.subr.mxu0 0.0
    %856 = vmatpush1.msra.mxu0 0.0
    %857 = vmatprep.subr.mxu0 0.0
    %858 = vmatpush1.msra.mxu0 0.0
    %859 = vmatprep.subr.mxu0 0.0
    %860 = vmatpush1.msra.mxu0 0.0
    %861 = vmatprep.subr.mxu0 0.0
    %862 = vmatpush1.msra.mxu0 0.0
    %863 = vmatprep.subr.mxu0 0.0
    %864 = vmatpush1.msra.mxu0 0.0
    %865 = vmatprep.subr.mxu0 0.0
    %866 = vmatpush1.msra.mxu0 0.0
    %867 = vmatprep.subr.mxu0 0.0
    %868 = vmatpush1.msra.mxu0 0.0
    %869 = vmatprep.subr.mxu0 0.0
    %870 = vmatpush1.msra.mxu0 0.0
    %871 = vmatprep.subr.mxu0 0.0
    %872 = vmatpush1.msra.mxu0 0.0
    %873 = vmatprep.subr.mxu0 0.0
    %874 = vmatpush1.msra.mxu0 0.0
    %875 = vmatprep.subr.mxu0 0.0
    %876 = vmatpush1.msra.mxu0 0.0
    %877 = vmatprep.subr.mxu0 0.0
    %878 = vmatpush1.msra.mxu0 0.0
    %879 = vmatprep.subr.mxu0 0.0
    %880 = vmatpush1.msra.mxu0 0.0
    %881 = vmatprep.subr.mxu0 0.0
    %882 = vmatpush1.msra.mxu0 0.0
    %883 = vmatprep.subr.mxu0 0.0
    %884 = vmatpush1.msra.mxu0 0.0
    %885 = vmatprep.subr.mxu0 0.0
    %886 = vmatpush1.msra.mxu0 0.0
    %887 = vmatprep.subr.mxu0 0.0
    %888 = vmatpush1.msra.mxu0 0.0
    %889 = vmatprep.subr.mxu0 0.0
    %890 = vmatpush1.msra.mxu0 0.0
    %891 = vmatprep.subr.mxu0 0.0
    %892 = vmatpush1.msra.mxu0 0.0
    %893 = vmatprep.subr.mxu0 0.0
    %894 = vmatpush1.msra.mxu0 0.0
    %895 = vmatprep.subr.mxu0 0.0
    %896 = vmatpush1.msra.mxu0 0.0
    %897 = vmatprep.mubr.f32.mxu0 0.0
    %v898 = vand.u32 %v383, 4294901760
    %v899 = vsub.f32 %v383, %v898
    %v900 = vand.u32 %v899, 4294901760
    %v901 = vsub.f32 %v899, %v900
    %v902 = vand.u32 %v901, 4294901760
    %903 = vmatmul.mubr.f32.gmra.mrb[0].mxu0 %v902
    %v904 = vpop.f32.mrb[0].mxu0
    %v905 = vadd.f32 0.0, %v904
    %v906 = vpop.f32.mrb[0].mxu0
    %907 = vdwg.mxu0
    %908 = vmatprep.subr.mxu0 0.0
    %v909 = vand.u32 %v831, 4294901760
    %v910 = vsub.f32 %v831, %v909
    %v911 = vand.u32 %v910, 4294901760
    %v912 = vsub.f32 %v910, %v911
    %v913 = vand.u32 %v912, 4294901760
    %914 = vmatpush1.msra.mxu0 %v913
    %915 = vmatprep.subr.mxu0 0.0
    %916 = vmatpush1.msra.mxu0 0.0
    %917 = vmatprep.subr.mxu0 0.0
    %918 = vmatpush1.msra.mxu0 0.0
    %919 = vmatprep.subr.mxu0 0.0
    %920 = vmatpush1.msra.mxu0 0.0
    %921 = vmatprep.subr.mxu0 0.0
    %922 = vmatpush1.msra.mxu0 0.0
    %923 = vmatprep.subr.mxu0 0.0
    %924 = vmatpush1.msra.mxu0 0.0
    %925 = vmatprep.subr.mxu0 0.0
    %926 = vmatpush1.msra.mxu0 0.0
    %927 = vmatprep.subr.mxu0 0.0
    %928 = vmatpush1.msra.mxu0 0.0
    %929 = vmatprep.subr.mxu0 0.0
    %930 = vmatpush1.msra.mxu0 0.0
    %931 = vmatprep.subr.mxu0 0.0
    %932 = vmatpush1.msra.mxu0 0.0
    %933 = vmatprep.subr.mxu0 0.0
    %934 = vmatpush1.msra.mxu0 0.0
    %935 = vmatprep.subr.mxu0 0.0
    %936 = vmatpush1.msra.mxu0 0.0
    %937 = vmatprep.subr.mxu0 0.0
    %938 = vmatpush1.msra.mxu0 0.0
    %939 = vmatprep.subr.mxu0 0.0
    %940 = vmatpush1.msra.mxu0 0.0
    %941 = vmatprep.subr.mxu0 0.0
    %942 = vmatpush1.msra.mxu0 0.0
    %943 = vmatprep.subr.mxu0 0.0
    %944 = vmatpush1.msra.mxu0 0.0
    %945 = vmatprep.subr.mxu0 0.0
    %946 = vmatpush1.msra.mxu0 0.0
    %947 = vmatprep.subr.mxu0 0.0
    %948 = vmatpush1.msra.mxu0 0.0
    %949 = vmatprep.subr.mxu0 0.0
    %950 = vmatpush1.msra.mxu0 0.0
    %951 = vmatprep.subr.mxu0 0.0
    %952 = vmatpush1.msra.mxu0 0.0
    %953 = vmatprep.subr.mxu0 0.0
    %954 = vmatpush1.msra.mxu0 0.0
    %955 = vmatprep.subr.mxu0 0.0
    %956 = vmatpush1.msra.mxu0 0.0
    %957 = vmatprep.subr.mxu0 0.0
    %958 = vmatpush1.msra.mxu0 0.0
    %959 = vmatprep.subr.mxu0 0.0
    %960 = vmatpush1.msra.mxu0 0.0
    %961 = vmatprep.subr.mxu0 0.0
    %962 = vmatpush1.msra.mxu0 0.0
    %963 = vmatprep.subr.mxu0 0.0
    %964 = vmatpush1.msra.mxu0 0.0
    %965 = vmatprep.subr.mxu0 0.0
    %966 = vmatpush1.msra.mxu0 0.0
    %967 = vmatprep.subr.mxu0 0.0
    %968 = vmatpush1.msra.mxu0 0.0
    %969 = vmatprep.subr.mxu0 0.0
    %970 = vmatpush1.msra.mxu0 0.0
    %971 = vmatprep.subr.mxu0 0.0
    %972 = vmatpush1.msra.mxu0 0.0
    %973 = vmatprep.subr.mxu0 0.0
    %974 = vmatpush1.msra.mxu0 0.0
    %975 = vmatprep.subr.mxu0 0.0
    %976 = vmatpush1.msra.mxu0 0.0
    %977 = vmatprep.mubr.f32.mxu0 0.0
    %v978 = vand.u32 %v383, 4294901760
    %979 = vmatmul.mubr.f32.gmra.mrb[0].mxu0 %v978
    %v980 = vpop.f32.mrb[0].mxu0
    %v981 = vadd.f32 %v905, %v980
    %v982 = vpop.f32.mrb[0].mxu0
    %983 = vdwg.mxu0
    %984 = vmatprep.subr.mxu0 0.0
    %v985 = vand.u32 %v831, 4294901760
    %v986 = vsub.f32 %v831, %v985
    %987 = vmatpush1.msra.mxu0 %v986
    %988 = vmatprep.subr.mxu0 0.0
    %989 = vmatpush1.msra.mxu0 0.0
    %990 = vmatprep.subr.mxu0 0.0
    %991 = vmatpush1.msra.mxu0 0.0
    %992 = vmatprep.subr.mxu0 0.0
    %993 = vmatpush1.msra.mxu0 0.0
    %994 = vmatprep.subr.mxu0 0.0
    %995 = vmatpush1.msra.mxu0 0.0
    %996 = vmatprep.subr.mxu0 0.0
    %997 = vmatpush1.msra.mxu0 0.0
    %998 = vmatprep.subr.mxu0 0.0
    %999 = vmatpush1.msra.mxu0 0.0
    %1000 = vmatprep.subr.mxu0 0.0
    %1001 = vmatpush1.msra.mxu0 0.0
    %1002 = vmatprep.subr.mxu0 0.0
    %1003 = vmatpush1.msra.mxu0 0.0
    %1004 = vmatprep.subr.mxu0 0.0
    %1005 = vmatpush1.msra.mxu0 0.0
    %1006 = vmatprep.subr.mxu0 0.0
    %1007 = vmatpush1.msra.mxu0 0.0
    %1008 = vmatprep.subr.mxu0 0.0
    %1009 = vmatpush1.msra.mxu0 0.0
    %1010 = vmatprep.subr.mxu0 0.0
    %1011 = vmatpush1.msra.mxu0 0.0
    %1012 = vmatprep.subr.mxu0 0.0
    %1013 = vmatpush1.msra.mxu0 0.0
    %1014 = vmatprep.subr.mxu0 0.0
    %1015 = vmatpush1.msra.mxu0 0.0
    %1016 = vmatprep.subr.mxu0 0.0
    %1017 = vmatpush1.msra.mxu0 0.0
    %1018 = vmatprep.subr.mxu0 0.0
    %1019 = vmatpush1.msra.mxu0 0.0
    %1020 = vmatprep.subr.mxu0 0.0
    %1021 = vmatpush1.msra.mxu0 0.0
    %1022 = vmatprep.subr.mxu0 0.0
    %1023 = vmatpush1.msra.mxu0 0.0
    %1024 = vmatprep.subr.mxu0 0.0
    %1025 = vmatpush1.msra.mxu0 0.0
    %1026 = vmatprep.subr.mxu0 0.0
    %1027 = vmatpush1.msra.mxu0 0.0
    %1028 = vmatprep.subr.mxu0 0.0
    %1029 = vmatpush1.msra.mxu0 0.0
    %1030 = vmatprep.subr.mxu0 0.0
    %1031 = vmatpush1.msra.mxu0 0.0
    %1032 = vmatprep.subr.mxu0 0.0
    %1033 = vmatpush1.msra.mxu0 0.0
    %1034 = vmatprep.subr.mxu0 0.0
    %1035 = vmatpush1.msra.mxu0 0.0
    %1036 = vmatprep.subr.mxu0 0.0
    %1037 = vmatpush1.msra.mxu0 0.0
    %1038 = vmatprep.subr.mxu0 0.0
    %1039 = vmatpush1.msra.mxu0 0.0
    %1040 = vmatprep.subr.mxu0 0.0
    %1041 = vmatpush1.msra.mxu0 0.0
    %1042 = vmatprep.subr.mxu0 0.0
    %1043 = vmatpush1.msra.mxu0 0.0
    %1044 = vmatprep.subr.mxu0 0.0
    %1045 = vmatpush1.msra.mxu0 0.0
    %1046 = vmatprep.subr.mxu0 0.0
    %1047 = vmatpush1.msra.mxu0 0.0
    %1048 = vmatprep.subr.mxu0 0.0
    %1049 = vmatpush1.msra.mxu0 0.0
    %1050 = vmatprep.mubr.f32.mxu0 0.0
    %v1051 = vand.u32 %v383, 4294901760
    %v1052 = vsub.f32 %v383, %v1051
    %1053 = vmatmul.mubr.f32.gmra.mrb[0].mxu0 %v1052
    %v1054 = vpop.f32.mrb[0].mxu0
    %v1055 = vadd.f32 %v981, %v1054
    %v1056 = vpop.f32.mrb[0].mxu0
    %1057 = vdwg.mxu0
    %1058 = vmatprep.subr.mxu0 0.0
    %v1059 = vand.u32 %v831, 4294901760
    %1060 = vmatpush1.msra.mxu0 %v1059
    %1061 = vmatprep.subr.mxu0 0.0
    %1062 = vmatpush1.msra.mxu0 0.0
    %1063 = vmatprep.subr.mxu0 0.0
    %1064 = vmatpush1.msra.mxu0 0.0
    %1065 = vmatprep.subr.mxu0 0.0
    %1066 = vmatpush1.msra.mxu0 0.0
    %1067 = vmatprep.subr.mxu0 0.0
    %1068 = vmatpush1.msra.mxu0 0.0
    %1069 = vmatprep.subr.mxu0 0.0
    %1070 = vmatpush1.msra.mxu0 0.0
    %1071 = vmatprep.subr.mxu0 0.0
    %1072 = vmatpush1.msra.mxu0 0.0
    %1073 = vmatprep.subr.mxu0 0.0
    %1074 = vmatpush1.msra.mxu0 0.0
    %1075 = vmatprep.subr.mxu0 0.0
    %1076 = vmatpush1.msra.mxu0 0.0
    %1077 = vmatprep.subr.mxu0 0.0
    %1078 = vmatpush1.msra.mxu0 0.0
    %1079 = vmatprep.subr.mxu0 0.0
    %1080 = vmatpush1.msra.mxu0 0.0
    %1081 = vmatprep.subr.mxu0 0.0
    %1082 = vmatpush1.msra.mxu0 0.0
    %1083 = vmatprep.subr.mxu0 0.0
    %1084 = vmatpush1.msra.mxu0 0.0
    %1085 = vmatprep.subr.mxu0 0.0
    %1086 = vmatpush1.msra.mxu0 0.0
    %1087 = vmatprep.subr.mxu0 0.0
    %1088 = vmatpush1.msra.mxu0 0.0
    %1089 = vmatprep.subr.mxu0 0.0
    %1090 = vmatpush1.msra.mxu0 0.0
    %1091 = vmatprep.subr.mxu0 0.0
    %1092 = vmatpush1.msra.mxu0 0.0
    %1093 = vmatprep.subr.mxu0 0.0
    %1094 = vmatpush1.msra.mxu0 0.0
    %1095 = vmatprep.subr.mxu0 0.0
    %1096 = vmatpush1.msra.mxu0 0.0
    %1097 = vmatprep.subr.mxu0 0.0
    %1098 = vmatpush1.msra.mxu0 0.0
    %1099 = vmatprep.subr.mxu0 0.0
    %1100 = vmatpush1.msra.mxu0 0.0
    %1101 = vmatprep.subr.mxu0 0.0
    %1102 = vmatpush1.msra.mxu0 0.0
    %1103 = vmatprep.subr.mxu0 0.0
    %1104 = vmatpush1.msra.mxu0 0.0
    %1105 = vmatprep.subr.mxu0 0.0
    %1106 = vmatpush1.msra.mxu0 0.0
    %1107 = vmatprep.subr.mxu0 0.0
    %1108 = vmatpush1.msra.mxu0 0.0
    %1109 = vmatprep.subr.mxu0 0.0
    %1110 = vmatpush1.msra.mxu0 0.0
    %1111 = vmatprep.subr.mxu0 0.0
    %1112 = vmatpush1.msra.mxu0 0.0
    %1113 = vmatprep.subr.mxu0 0.0
    %1114 = vmatpush1.msra.mxu0 0.0
    %1115 = vmatprep.subr.mxu0 0.0
    %1116 = vmatpush1.msra.mxu0 0.0
    %1117 = vmatprep.subr.mxu0 0.0
    %1118 = vmatpush1.msra.mxu0 0.0
    %1119 = vmatprep.subr.mxu0 0.0
    %1120 = vmatpush1.msra.mxu0 0.0
    %1121 = vmatprep.subr.mxu0 0.0
    %1122 = vmatpush1.msra.mxu0 0.0
    %1123 = vmatprep.mubr.f32.mxu0 0.0
    %v1124 = vand.u32 %v383, 4294901760
    %v1125 = vsub.f32 %v383, %v1124
    %v1126 = vand.u32 %v1125, 4294901760
    %1127 = vmatmul.mubr.f32.gmra.mrb[0].mxu0 %v1126
    %v1128 = vpop.f32.mrb[0].mxu0
    %v1129 = vadd.f32 %v1055, %v1128
    %v1130 = vpop.f32.mrb[0].mxu0
    %1131 = vdwg.mxu0
    %1132 = vmatprep.subr.mxu0 0.0
    %v1133 = vand.u32 %v831, 4294901760
    %v1134 = vsub.f32 %v831, %v1133
    %v1135 = vand.u32 %v1134, 4294901760
    %1136 = vmatpush1.msra.mxu0 %v1135
    %1137 = vmatprep.subr.mxu0 0.0
    %1138 = vmatpush1.msra.mxu0 0.0
    %1139 = vmatprep.subr.mxu0 0.0
    %1140 = vmatpush1.msra.mxu0 0.0
    %1141 = vmatprep.subr.mxu0 0.0
    %1142 = vmatpush1.msra.mxu0 0.0
    %1143 = vmatprep.subr.mxu0 0.0
    %1144 = vmatpush1.msra.mxu0 0.0
    %1145 = vmatprep.subr.mxu0 0.0
    %1146 = vmatpush1.msra.mxu0 0.0
    %1147 = vmatprep.subr.mxu0 0.0
    %1148 = vmatpush1.msra.mxu0 0.0
    %1149 = vmatprep.subr.mxu0 0.0
    %1150 = vmatpush1.msra.mxu0 0.0
    %1151 = vmatprep.subr.mxu0 0.0
    %1152 = vmatpush1.msra.mxu0 0.0
    %1153 = vmatprep.subr.mxu0 0.0
    %1154 = vmatpush1.msra.mxu0 0.0
    %1155 = vmatprep.subr.mxu0 0.0
    %1156 = vmatpush1.msra.mxu0 0.0
    %1157 = vmatprep.subr.mxu0 0.0
    %1158 = vmatpush1.msra.mxu0 0.0
    %1159 = vmatprep.subr.mxu0 0.0
    %1160 = vmatpush1.msra.mxu0 0.0
    %1161 = vmatprep.subr.mxu0 0.0
    %1162 = vmatpush1.msra.mxu0 0.0
    %1163 = vmatprep.subr.mxu0 0.0
    %1164 = vmatpush1.msra.mxu0 0.0
    %1165 = vmatprep.subr.mxu0 0.0
    %1166 = vmatpush1.msra.mxu0 0.0
    %1167 = vmatprep.subr.mxu0 0.0
    %1168 = vmatpush1.msra.mxu0 0.0
    %1169 = vmatprep.subr.mxu0 0.0
    %1170 = vmatpush1.msra.mxu0 0.0
    %1171 = vmatprep.subr.mxu0 0.0
    %1172 = vmatpush1.msra.mxu0 0.0
    %1173 = vmatprep.subr.mxu0 0.0
    %1174 = vmatpush1.msra.mxu0 0.0
    %1175 = vmatprep.subr.mxu0 0.0
    %1176 = vmatpush1.msra.mxu0 0.0
    %1177 = vmatprep.subr.mxu0 0.0
    %1178 = vmatpush1.msra.mxu0 0.0
    %1179 = vmatprep.subr.mxu0 0.0
    %1180 = vmatpush1.msra.mxu0 0.0
    %1181 = vmatprep.subr.mxu0 0.0
    %1182 = vmatpush1.msra.mxu0 0.0
    %1183 = vmatprep.subr.mxu0 0.0
    %1184 = vmatpush1.msra.mxu0 0.0
    %1185 = vmatprep.subr.mxu0 0.0
    %1186 = vmatpush1.msra.mxu0 0.0
    %1187 = vmatprep.subr.mxu0 0.0
    %1188 = vmatpush1.msra.mxu0 0.0
    %1189 = vmatprep.subr.mxu0 0.0
    %1190 = vmatpush1.msra.mxu0 0.0
    %1191 = vmatprep.subr.mxu0 0.0
    %1192 = vmatpush1.msra.mxu0 0.0
    %1193 = vmatprep.subr.mxu0 0.0
    %1194 = vmatpush1.msra.mxu0 0.0
    %1195 = vmatprep.subr.mxu0 0.0
    %1196 = vmatpush1.msra.mxu0 0.0
    %1197 = vmatprep.subr.mxu0 0.0
    %1198 = vmatpush1.msra.mxu0 0.0
    %1199 = vmatprep.mubr.f32.mxu0 0.0
    %v1200 = vand.u32 %v383, 4294901760
    %1201 = vmatmul.mubr.f32.gmra.mrb[0].mxu0 %v1200
    %v1202 = vpop.f32.mrb[0].mxu0
    %v1203 = vadd.f32 %v1129, %v1202
    %v1204 = vpop.f32.mrb[0].mxu0
    %1205 = vdwg.mxu0
    %1206 = vmatprep.subr.mxu0 0.0
    %v1207 = vand.u32 %v831, 4294901760
    %1208 = vmatpush1.msra.mxu0 %v1207
    %1209 = vmatprep.subr.mxu0 0.0
    %1210 = vmatpush1.msra.mxu0 0.0
    %1211 = vmatprep.subr.mxu0 0.0
    %1212 = vmatpush1.msra.mxu0 0.0
    %1213 = vmatprep.subr.mxu0 0.0
    %1214 = vmatpush1.msra.mxu0 0.0
    %1215 = vmatprep.subr.mxu0 0.0
    %1216 = vmatpush1.msra.mxu0 0.0
    %1217 = vmatprep.subr.mxu0 0.0
    %1218 = vmatpush1.msra.mxu0 0.0
    %1219 = vmatprep.subr.mxu0 0.0
    %1220 = vmatpush1.msra.mxu0 0.0
    %1221 = vmatprep.subr.mxu0 0.0
    %1222 = vmatpush1.msra.mxu0 0.0
    %1223 = vmatprep.subr.mxu0 0.0
    %1224 = vmatpush1.msra.mxu0 0.0
    %1225 = vmatprep.subr.mxu0 0.0
    %1226 = vmatpush1.msra.mxu0 0.0
    %1227 = vmatprep.subr.mxu0 0.0
    %1228 = vmatpush1.msra.mxu0 0.0
    %1229 = vmatprep.subr.mxu0 0.0
    %1230 = vmatpush1.msra.mxu0 0.0
    %1231 = vmatprep.subr.mxu0 0.0
    %1232 = vmatpush1.msra.mxu0 0.0
    %1233 = vmatprep.subr.mxu0 0.0
    %1234 = vmatpush1.msra.mxu0 0.0
    %1235 = vmatprep.subr.mxu0 0.0
    %1236 = vmatpush1.msra.mxu0 0.0
    %1237 = vmatprep.subr.mxu0 0.0
    %1238 = vmatpush1.msra.mxu0 0.0
    %1239 = vmatprep.subr.mxu0 0.0
    %1240 = vmatpush1.msra.mxu0 0.0
    %1241 = vmatprep.subr.mxu0 0.0
    %1242 = vmatpush1.msra.mxu0 0.0
    %1243 = vmatprep.subr.mxu0 0.0
    %1244 = vmatpush1.msra.mxu0 0.0
    %1245 = vmatprep.subr.mxu0 0.0
    %1246 = vmatpush1.msra.mxu0 0.0
    %1247 = vmatprep.subr.mxu0 0.0
    %1248 = vmatpush1.msra.mxu0 0.0
    %1249 = vmatprep.subr.mxu0 0.0
    %1250 = vmatpush1.msra.mxu0 0.0
    %1251 = vmatprep.subr.mxu0 0.0
    %1252 = vmatpush1.msra.mxu0 0.0
    %1253 = vmatprep.subr.mxu0 0.0
    %1254 = vmatpush1.msra.mxu0 0.0
    %1255 = vmatprep.subr.mxu0 0.0
    %1256 = vmatpush1.msra.mxu0 0.0
    %1257 = vmatprep.subr.mxu0 0.0
    %1258 = vmatpush1.msra.mxu0 0.0
    %1259 = vmatprep.subr.mxu0 0.0
    %1260 = vmatpush1.msra.mxu0 0.0
    %1261 = vmatprep.subr.mxu0 0.0
    %1262 = vmatpush1.msra.mxu0 0.0
    %1263 = vmatprep.subr.mxu0 0.0
    %1264 = vmatpush1.msra.mxu0 0.0
    %1265 = vmatprep.subr.mxu0 0.0
    %1266 = vmatpush1.msra.mxu0 0.0
    %1267 = vmatprep.subr.mxu0 0.0
    %1268 = vmatpush1.msra.mxu0 0.0
    %1269 = vmatprep.subr.mxu0 0.0
    %1270 = vmatpush1.msra.mxu0 0.0
    %1271 = vmatprep.mubr.f32.mxu0 0.0
    %v1272 = vand.u32 %v383, 4294901760
    %1273 = vmatmul.mubr.f32.gmra.mrb[0].mxu0 %v1272
    %v1274 = vpop.f32.mrb[0].mxu0
    %v1275 = vadd.f32 %v1203, %v1274
    %v1276 = vpop.f32.mrb[0].mxu0
    %1277 = vdwg.mxu0
    %v1278 = vmul.f32 %v1275, %v373
    %1279 = vadd.xlane.f32.xlu0 %v1278
    %v1280 = vpop.xlane.xlu0 %1279
    %v1281 = vmul.f32 %v1280, 0.03125
    %v1282 = vmul.f32 %v828, %v1281
    %v1283 = vld [vmem:[#allocation9] sm:$0xff]
    %v1284 = vld [vmem:[#allocation9 + $0x8] sm:$0xff]
    %v1285 = vld [vmem:[#allocation9 + $0x10] sm:$0xff]
    %v1286 = vld [vmem:[#allocation9 + $0x18] sm:$0xff]
    %v1287 = vld [vmem:[#allocation9 + $0x20] sm:$0xff]
    %v1288 = vld [vmem:[#allocation9 + $0x28] sm:$0xff]
    %v1289 = vld [vmem:[#allocation9 + $0x30] sm:$0xff]
    %v1290 = vld [vmem:[#allocation9 + $0x38] sm:$0xff]
    %v1291 = vld [vmem:[#allocation9 + $0x40] sm:$0xff]
    %v1292 = vld [vmem:[#allocation9 + $0x48] sm:$0xff]
    %v1293 = vld [vmem:[#allocation9 + $0x50] sm:$0xff]
    %v1294 = vld [vmem:[#allocation9 + $0x58] sm:$0xff]
    %v1295 = vld [vmem:[#allocation9 + $0x60] sm:$0xff]
    %v1296 = vld [vmem:[#allocation9 + $0x68] sm:$0xff]
    %v1297 = vld [vmem:[#allocation9 + $0x70] sm:$0xff]
    %v1298 = vld [vmem:[#allocation9 + $0x78] sm:$0xff]
    %v1299 = vld [vmem:[#allocation11] sm:$0x1]
    %v1301 = vlaneseq
    %v1302 = vshrl.u32 %v1301, 7
    %v1303 = vsub.s32 0, %v1302
    %v1304 = vrot.slane %v1299, %v1303
    %1306 = vmatprep.subr.mxu0 0.0
    %v1307 = vand.u32 %v1283, 4294901760
    %1308 = vmatpush1.msra.mxu0 %v1307
    %1309 = vmatprep.subr.mxu0 0.0
    %v1310 = vand.u32 %v1284, 4294901760
    %1311 = vmatpush1.msra.mxu0 %v1310
    %1312 = vmatprep.subr.mxu0 0.0
    %v1313 = vand.u32 %v1285, 4294901760
    %1314 = vmatpush1.msra.mxu0 %v1313
    %1315 = vmatprep.subr.mxu0 0.0
    %v1316 = vand.u32 %v1286, 4294901760
    %1317 = vmatpush1.msra.mxu0 %v1316
    %1318 = vmatprep.subr.mxu0 0.0
    %v1319 = vand.u32 %v1287, 4294901760
    %1320 = vmatpush1.msra.mxu0 %v1319
    %1321 = vmatprep.subr.mxu0 0.0
    %v1322 = vand.u32 %v1288, 4294901760
    %1323 = vmatpush1.msra.mxu0 %v1322
    %1324 = vmatprep.subr.mxu0 0.0
    %v1325 = vand.u32 %v1289, 4294901760
    %1326 = vmatpush1.msra.mxu0 %v1325
    %1327 = vmatprep.subr.mxu0 0.0
    %v1328 = vand.u32 %v1290, 4294901760
    %1329 = vmatpush1.msra.mxu0 %v1328
    %1330 = vmatprep.subr.mxu0 0.0
    %v1331 = vand.u32 %v1291, 4294901760
    %1332 = vmatpush1.msra.mxu0 %v1331
    %1333 = vmatprep.subr.mxu0 0.0
    %v1334 = vand.u32 %v1292, 4294901760
    %1335 = vmatpush1.msra.mxu0 %v1334
    %1336 = vmatprep.subr.mxu0 0.0
    %v1337 = vand.u32 %v1293, 4294901760
    %1338 = vmatpush1.msra.mxu0 %v1337
    %1339 = vmatprep.subr.mxu0 0.0
    %v1340 = vand.u32 %v1294, 4294901760
    %1341 = vmatpush1.msra.mxu0 %v1340
    %1342 = vmatprep.subr.mxu0 0.0
    %v1343 = vand.u32 %v1295, 4294901760
    %1344 = vmatpush1.msra.mxu0 %v1343
    %1345 = vmatprep.subr.mxu0 0.0
    %v1346 = vand.u32 %v1296, 4294901760
    %1347 = vmatpush1.msra.mxu0 %v1346
    %1348 = vmatprep.subr.mxu0 0.0
    %v1349 = vand.u32 %v1297, 4294901760
    %1350 = vmatpush1.msra.mxu0 %v1349
    %1351 = vmatprep.subr.mxu0 0.0
    %v1352 = vand.u32 %v1298, 4294901760
    %1353 = vmatpush1.msra.mxu0 %v1352
    %1354 = vmatprep.subr.mxu0 0.0
    %1355 = vmatpush1.msra.mxu0 0.0
    %1356 = vmatprep.subr.mxu0 0.0
    %1357 = vmatpush1.msra.mxu0 0.0
    %1358 = vmatprep.subr.mxu0 0.0
    %1359 = vmatpush1.msra.mxu0 0.0
    %1360 = vmatprep.subr.mxu0 0.0
    %1361 = vmatpush1.msra.mxu0 0.0
    %1362 = vmatprep.subr.mxu0 0.0
    %1363 = vmatpush1.msra.mxu0 0.0
    %1364 = vmatprep.subr.mxu0 0.0
    %1365 = vmatpush1.msra.mxu0 0.0
    %1366 = vmatprep.subr.mxu0 0.0
    %1367 = vmatpush1.msra.mxu0 0.0
    %1368 = vmatprep.subr.mxu0 0.0
    %1369 = vmatpush1.msra.mxu0 0.0
    %1370 = vmatprep.subr.mxu0 0.0
    %1371 = vmatpush1.msra.mxu0 0.0
    %1372 = vmatprep.subr.mxu0 0.0
    %1373 = vmatpush1.msra.mxu0 0.0
    %1374 = vmatprep.subr.mxu0 0.0
    %1375 = vmatpush1.msra.mxu0 0.0
    %1376 = vmatprep.subr.mxu0 0.0
    %1377 = vmatpush1.msra.mxu0 0.0
    %1378 = vmatprep.subr.mxu0 0.0
    %1379 = vmatpush1.msra.mxu0 0.0
    %1380 = vmatprep.subr.mxu0 0.0
    %1381 = vmatpush1.msra.mxu0 0.0
    %1382 = vmatprep.subr.mxu0 0.0
    %1383 = vmatpush1.msra.mxu0 0.0
    %1384 = vmatprep.subr.mxu0 0.0
    %1385 = vmatpush1.msra.mxu0 0.0
    %1386 = vmatprep.mubr.f32.mxu0 0.0
    %v1387 = vand.u32 %v373, 4294901760
    %v1388 = vsub.f32 %v373, %v1387
    %v1389 = vand.u32 %v1388, 4294901760
    %v1390 = vsub.f32 %v1388, %v1389
    %v1391 = vand.u32 %v1390, 4294901760
    %1392 = vmatmul.mubr.f32.gmra.mrb[0].mxu0 %v1391
    %v1393 = vpop.f32.mrb[0].mxu0
    %v1394 = vadd.f32 %v1304, %v1393
    %v1395 = vpop.f32.mrb[0].mxu0
    %1396 = vdwg.mxu0
    %1397 = vmatprep.subr.mxu0 0.0
    %v1398 = vand.u32 %v1283, 4294901760
    %v1399 = vsub.f32 %v1283, %v1398
    %v1400 = vand.u32 %v1399, 4294901760
    %v1401 = vsub.f32 %v1399, %v1400
    %v1402 = vand.u32 %v1401, 4294901760
    %1403 = vmatpush1.msra.mxu0 %v1402
    %1404 = vmatprep.subr.mxu0 0.0
    %v1405 = vand.u32 %v1284, 4294901760
    %v1406 = vsub.f32 %v1284, %v1405
    %v1407 = vand.u32 %v1406, 4294901760
    %v1408 = vsub.f32 %v1406, %v1407
    %v1409 = vand.u32 %v1408, 4294901760
    %1410 = vmatpush1.msra.mxu0 %v1409
    %1411 = vmatprep.subr.mxu0 0.0
    %v1412 = vand.u32 %v1285, 4294901760
    %v1413 = vsub.f32 %v1285, %v1412
    %v1414 = vand.u32 %v1413, 4294901760
    %v1415 = vsub.f32 %v1413, %v1414
    %v1416 = vand.u32 %v1415, 4294901760
    %1417 = vmatpush1.msra.mxu0 %v1416
    %1418 = vmatprep.subr.mxu0 0.0
    %v1419 = vand.u32 %v1286, 4294901760
    %v1420 = vsub.f32 %v1286, %v1419
    %v1421 = vand.u32 %v1420, 4294901760
    %v1422 = vsub.f32 %v1420, %v1421
    %v1423 = vand.u32 %v1422, 4294901760
    %1424 = vmatpush1.msra.mxu0 %v1423
    %1425 = vmatprep.subr.mxu0 0.0
    %v1426 = vand.u32 %v1287, 4294901760
    %v1427 = vsub.f32 %v1287, %v1426
    %v1428 = vand.u32 %v1427, 4294901760
    %v1429 = vsub.f32 %v1427, %v1428
    %v1430 = vand.u32 %v1429, 4294901760
    %1431 = vmatpush1.msra.mxu0 %v1430
    %1432 = vmatprep.subr.mxu0 0.0
    %v1433 = vand.u32 %v1288, 4294901760
    %v1434 = vsub.f32 %v1288, %v1433
    %v1435 = vand.u32 %v1434, 4294901760
    %v1436 = vsub.f32 %v1434, %v1435
    %v1437 = vand.u32 %v1436, 4294901760
    %1438 = vmatpush1.msra.mxu0 %v1437
    %1439 = vmatprep.subr.mxu0 0.0
    %v1440 = vand.u32 %v1289, 4294901760
    %v1441 = vsub.f32 %v1289, %v1440
    %v1442 = vand.u32 %v1441, 4294901760
    %v1443 = vsub.f32 %v1441, %v1442
    %v1444 = vand.u32 %v1443, 4294901760
    %1445 = vmatpush1.msra.mxu0 %v1444
    %1446 = vmatprep.subr.mxu0 0.0
    %v1447 = vand.u32 %v1290, 4294901760
    %v1448 = vsub.f32 %v1290, %v1447
    %v1449 = vand.u32 %v1448, 4294901760
    %v1450 = vsub.f32 %v1448, %v1449
    %v1451 = vand.u32 %v1450, 4294901760
    %1452 = vmatpush1.msra.mxu0 %v1451
    %1453 = vmatprep.subr.mxu0 0.0
    %v1454 = vand.u32 %v1291, 4294901760
    %v1455 = vsub.f32 %v1291, %v1454
    %v1456 = vand.u32 %v1455, 4294901760
    %v1457 = vsub.f32 %v1455, %v1456
    %v1458 = vand.u32 %v1457, 4294901760
    %1459 = vmatpush1.msra.mxu0 %v1458
    %1460 = vmatprep.subr.mxu0 0.0
    %v1461 = vand.u32 %v1292, 4294901760
    %v1462 = vsub.f32 %v1292, %v1461
    %v1463 = vand.u32 %v1462, 4294901760
    %v1464 = vsub.f32 %v1462, %v1463
    %v1465 = vand.u32 %v1464, 4294901760
    %1466 = vmatpush1.msra.mxu0 %v1465
    %1467 = vmatprep.subr.mxu0 0.0
    %v1468 = vand.u32 %v1293, 4294901760
    %v1469 = vsub.f32 %v1293, %v1468
    %v1470 = vand.u32 %v1469, 4294901760
    %v1471 = vsub.f32 %v1469, %v1470
    %v1472 = vand.u32 %v1471, 4294901760
    %1473 = vmatpush1.msra.mxu0 %v1472
    %1474 = vmatprep.subr.mxu0 0.0
    %v1475 = vand.u32 %v1294, 4294901760
    %v1476 = vsub.f32 %v1294, %v1475
    %v1477 = vand.u32 %v1476, 4294901760
    %v1478 = vsub.f32 %v1476, %v1477
    %v1479 = vand.u32 %v1478, 4294901760
    %1480 = vmatpush1.msra.mxu0 %v1479
    %1481 = vmatprep.subr.mxu0 0.0
    %v1482 = vand.u32 %v1295, 4294901760
    %v1483 = vsub.f32 %v1295, %v1482
    %v1484 = vand.u32 %v1483, 4294901760
    %v1485 = vsub.f32 %v1483, %v1484
    %v1486 = vand.u32 %v1485, 4294901760
    %1487 = vmatpush1.msra.mxu0 %v1486
    %1488 = vmatprep.subr.mxu0 0.0
    %v1489 = vand.u32 %v1296, 4294901760
    %v1490 = vsub.f32 %v1296, %v1489
    %v1491 = vand.u32 %v1490, 4294901760
    %v1492 = vsub.f32 %v1490, %v1491
    %v1493 = vand.u32 %v1492, 4294901760
    %1494 = vmatpush1.msra.mxu0 %v1493
    %1495 = vmatprep.subr.mxu0 0.0
    %v1496 = vand.u32 %v1297, 4294901760
    %v1497 = vsub.f32 %v1297, %v1496
    %v1498 = vand.u32 %v1497, 4294901760
    %v1499 = vsub.f32 %v1497, %v1498
    %v1500 = vand.u32 %v1499, 4294901760
    %1501 = vmatpush1.msra.mxu0 %v1500
    %1502 = vmatprep.subr.mxu0 0.0
    %v1503 = vand.u32 %v1298, 4294901760
    %v1504 = vsub.f32 %v1298, %v1503
    %v1505 = vand.u32 %v1504, 4294901760
    %v1506 = vsub.f32 %v1504, %v1505
    %v1507 = vand.u32 %v1506, 4294901760
    %1508 = vmatpush1.msra.mxu0 %v1507
    %1509 = vmatprep.subr.mxu0 0.0
    %1510 = vmatpush1.msra.mxu0 0.0
    %1511 = vmatprep.subr.mxu0 0.0
    %1512 = vmatpush1.msra.mxu0 0.0
    %1513 = vmatprep.subr.mxu0 0.0
    %1514 = vmatpush1.msra.mxu0 0.0
    %1515 = vmatprep.subr.mxu0 0.0
    %1516 = vmatpush1.msra.mxu0 0.0
    %1517 = vmatprep.subr.mxu0 0.0
    %1518 = vmatpush1.msra.mxu0 0.0
    %1519 = vmatprep.subr.mxu0 0.0
    %1520 = vmatpush1.msra.mxu0 0.0
    %1521 = vmatprep.subr.mxu0 0.0
    %1522 = vmatpush1.msra.mxu0 0.0
    %1523 = vmatprep.subr.mxu0 0.0
    %1524 = vmatpush1.msra.mxu0 0.0
    %1525 = vmatprep.subr.mxu0 0.0
    %1526 = vmatpush1.msra.mxu0 0.0
    %1527 = vmatprep.subr.mxu0 0.0
    %1528 = vmatpush1.msra.mxu0 0.0
    %1529 = vmatprep.subr.mxu0 0.0
    %1530 = vmatpush1.msra.mxu0 0.0
    %1531 = vmatprep.subr.mxu0 0.0
    %1532 = vmatpush1.msra.mxu0 0.0
    %1533 = vmatprep.subr.mxu0 0.0
    %1534 = vmatpush1.msra.mxu0 0.0
    %1535 = vmatprep.subr.mxu0 0.0
    %1536 = vmatpush1.msra.mxu0 0.0
    %1537 = vmatprep.subr.mxu0 0.0
    %1538 = vmatpush1.msra.mxu0 0.0
    %1539 = vmatprep.subr.mxu0 0.0
    %1540 = vmatpush1.msra.mxu0 0.0
    %1541 = vmatprep.mubr.f32.mxu0 0.0
    %v1542 = vand.u32 %v373, 4294901760
    %1543 = vmatmul.mubr.f32.gmra.mrb[0].mxu0 %v1542
    %v1544 = vpop.f32.mrb[0].mxu0
    %v1545 = vadd.f32 %v1394, %v1544
    %v1546 = vpop.f32.mrb[0].mxu0
    %1547 = vdwg.mxu0
    %1548 = vmatprep.subr.mxu0 0.0
    %v1549 = vand.u32 %v1283, 4294901760
    %v1550 = vsub.f32 %v1283, %v1549
    %1551 = vmatpush1.msra.mxu0 %v1550
    %1552 = vmatprep.subr.mxu0 0.0
    %v1553 = vand.u32 %v1284, 4294901760
    %v1554 = vsub.f32 %v1284, %v1553
    %1555 = vmatpush1.msra.mxu0 %v1554
    %1556 = vmatprep.subr.mxu0 0.0
    %v1557 = vand.u32 %v1285, 4294901760
    %v1558 = vsub.f32 %v1285, %v1557
    %1559 = vmatpush1.msra.mxu0 %v1558
    %1560 = vmatprep.subr.mxu0 0.0
    %v1561 = vand.u32 %v1286, 4294901760
    %v1562 = vsub.f32 %v1286, %v1561
    %1563 = vmatpush1.msra.mxu0 %v1562
    %1564 = vmatprep.subr.mxu0 0.0
    %v1565 = vand.u32 %v1287, 4294901760
    %v1566 = vsub.f32 %v1287, %v1565
    %1567 = vmatpush1.msra.mxu0 %v1566
    %1568 = vmatprep.subr.mxu0 0.0
    %v1569 = vand.u32 %v1288, 4294901760
    %v1570 = vsub.f32 %v1288, %v1569
    %1571 = vmatpush1.msra.mxu0 %v1570
    %1572 = vmatprep.subr.mxu0 0.0
    %v1573 = vand.u32 %v1289, 4294901760
    %v1574 = vsub.f32 %v1289, %v1573
    %1575 = vmatpush1.msra.mxu0 %v1574
    %1576 = vmatprep.subr.mxu0 0.0
    %v1577 = vand.u32 %v1290, 4294901760
    %v1578 = vsub.f32 %v1290, %v1577
    %1579 = vmatpush1.msra.mxu0 %v1578
    %1580 = vmatprep.subr.mxu0 0.0
    %v1581 = vand.u32 %v1291, 4294901760
    %v1582 = vsub.f32 %v1291, %v1581
    %1583 = vmatpush1.msra.mxu0 %v1582
    %1584 = vmatprep.subr.mxu0 0.0
    %v1585 = vand.u32 %v1292, 4294901760
    %v1586 = vsub.f32 %v1292, %v1585
    %1587 = vmatpush1.msra.mxu0 %v1586
    %1588 = vmatprep.subr.mxu0 0.0
    %v1589 = vand.u32 %v1293, 4294901760
    %v1590 = vsub.f32 %v1293, %v1589
    %1591 = vmatpush1.msra.mxu0 %v1590
    %1592 = vmatprep.subr.mxu0 0.0
    %v1593 = vand.u32 %v1294, 4294901760
    %v1594 = vsub.f32 %v1294, %v1593
    %1595 = vmatpush1.msra.mxu0 %v1594
    %1596 = vmatprep.subr.mxu0 0.0
    %v1597 = vand.u32 %v1295, 4294901760
    %v1598 = vsub.f32 %v1295, %v1597
    %1599 = vmatpush1.msra.mxu0 %v1598
    %1600 = vmatprep.subr.mxu0 0.0
    %v1601 = vand.u32 %v1296, 4294901760
    %v1602 = vsub.f32 %v1296, %v1601
    %1603 = vmatpush1.msra.mxu0 %v1602
    %1604 = vmatprep.subr.mxu0 0.0
    %v1605 = vand.u32 %v1297, 4294901760
    %v1606 = vsub.f32 %v1297, %v1605
    %1607 = vmatpush1.msra.mxu0 %v1606
    %1608 = vmatprep.subr.mxu0 0.0
    %v1609 = vand.u32 %v1298, 4294901760
    %v1610 = vsub.f32 %v1298, %v1609
    %1611 = vmatpush1.msra.mxu0 %v1610
    %1612 = vmatprep.subr.mxu0 0.0
    %1613 = vmatpush1.msra.mxu0 0.0
    %1614 = vmatprep.subr.mxu0 0.0
    %1615 = vmatpush1.msra.mxu0 0.0
    %1616 = vmatprep.subr.mxu0 0.0
    %1617 = vmatpush1.msra.mxu0 0.0
    %1618 = vmatprep.subr.mxu0 0.0
    %1619 = vmatpush1.msra.mxu0 0.0
    %1620 = vmatprep.subr.mxu0 0.0
    %1621 = vmatpush1.msra.mxu0 0.0
    %1622 = vmatprep.subr.mxu0 0.0
    %1623 = vmatpush1.msra.mxu0 0.0
    %1624 = vmatprep.subr.mxu0 0.0
    %1625 = vmatpush1.msra.mxu0 0.0
    %1626 = vmatprep.subr.mxu0 0.0
    %1627 = vmatpush1.msra.mxu0 0.0
    %1628 = vmatprep.subr.mxu0 0.0
    %1629 = vmatpush1.msra.mxu0 0.0
    %1630 = vmatprep.subr.mxu0 0.0
    %1631 = vmatpush1.msra.mxu0 0.0
    %1632 = vmatprep.subr.mxu0 0.0
    %1633 = vmatpush1.msra.mxu0 0.0
    %1634 = vmatprep.subr.mxu0 0.0
    %1635 = vmatpush1.msra.mxu0 0.0
    %1636 = vmatprep.subr.mxu0 0.0
    %1637 = vmatpush1.msra.mxu0 0.0
    %1638 = vmatprep.subr.mxu0 0.0
    %1639 = vmatpush1.msra.mxu0 0.0
    %1640 = vmatprep.subr.mxu0 0.0
    %1641 = vmatpush1.msra.mxu0 0.0
    %1642 = vmatprep.subr.mxu0 0.0
    %1643 = vmatpush1.msra.mxu0 0.0
    %1644 = vmatprep.mubr.f32.mxu0 0.0
    %v1645 = vand.u32 %v373, 4294901760
    %v1646 = vsub.f32 %v373, %v1645
    %1647 = vmatmul.mubr.f32.gmra.mrb[0].mxu0 %v1646
    %v1648 = vpop.f32.mrb[0].mxu0
    %v1649 = vadd.f32 %v1545, %v1648
    %v1650 = vpop.f32.mrb[0].mxu0
    %1651 = vdwg.mxu0
    %1652 = vmatprep.subr.mxu0 0.0
    %v1653 = vand.u32 %v1283, 4294901760
    %1654 = vmatpush1.msra.mxu0 %v1653
    %1655 = vmatprep.subr.mxu0 0.0
    %v1656 = vand.u32 %v1284, 4294901760
    %1657 = vmatpush1.msra.mxu0 %v1656
    %1658 = vmatprep.subr.mxu0 0.0
    %v1659 = vand.u32 %v1285, 4294901760
    %1660 = vmatpush1.msra.mxu0 %v1659
    %1661 = vmatprep.subr.mxu0 0.0
    %v1662 = vand.u32 %v1286, 4294901760
    %1663 = vmatpush1.msra.mxu0 %v1662
    %1664 = vmatprep.subr.mxu0 0.0
    %v1665 = vand.u32 %v1287, 4294901760
    %1666 = vmatpush1.msra.mxu0 %v1665
    %1667 = vmatprep.subr.mxu0 0.0
    %v1668 = vand.u32 %v1288, 4294901760
    %1669 = vmatpush1.msra.mxu0 %v1668
    %1670 = vmatprep.subr.mxu0 0.0
    %v1671 = vand.u32 %v1289, 4294901760
    %1672 = vmatpush1.msra.mxu0 %v1671
    %1673 = vmatprep.subr.mxu0 0.0
    %v1674 = vand.u32 %v1290, 4294901760
    %1675 = vmatpush1.msra.mxu0 %v1674
    %1676 = vmatprep.subr.mxu0 0.0
    %v1677 = vand.u32 %v1291, 4294901760
    %1678 = vmatpush1.msra.mxu0 %v1677
    %1679 = vmatprep.subr.mxu0 0.0
    %v1680 = vand.u32 %v1292, 4294901760
    %1681 = vmatpush1.msra.mxu0 %v1680
    %1682 = vmatprep.subr.mxu0 0.0
    %v1683 = vand.u32 %v1293, 4294901760
    %1684 = vmatpush1.msra.mxu0 %v1683
    %1685 = vmatprep.subr.mxu0 0.0
    %v1686 = vand.u32 %v1294, 4294901760
    %1687 = vmatpush1.msra.mxu0 %v1686
    %1688 = vmatprep.subr.mxu0 0.0
    %v1689 = vand.u32 %v1295, 4294901760
    %1690 = vmatpush1.msra.mxu0 %v1689
    %1691 = vmatprep.subr.mxu0 0.0
    %v1692 = vand.u32 %v1296, 4294901760
    %1693 = vmatpush1.msra.mxu0 %v1692
    %1694 = vmatprep.subr.mxu0 0.0
    %v1695 = vand.u32 %v1297, 4294901760
    %1696 = vmatpush1.msra.mxu0 %v1695
    %1697 = vmatprep.subr.mxu0 0.0
    %v1698 = vand.u32 %v1298, 4294901760
    %1699 = vmatpush1.msra.mxu0 %v1698
    %1700 = vmatprep.subr.mxu0 0.0
    %1701 = vmatpush1.msra.mxu0 0.0
    %1702 = vmatprep.subr.mxu0 0.0
    %1703 = vmatpush1.msra.mxu0 0.0
    %1704 = vmatprep.subr.mxu0 0.0
    %1705 = vmatpush1.msra.mxu0 0.0
    %1706 = vmatprep.subr.mxu0 0.0
    %1707 = vmatpush1.msra.mxu0 0.0
    %1708 = vmatprep.subr.mxu0 0.0
    %1709 = vmatpush1.msra.mxu0 0.0
    %1710 = vmatprep.subr.mxu0 0.0
    %1711 = vmatpush1.msra.mxu0 0.0
    %1712 = vmatprep.subr.mxu0 0.0
    %1713 = vmatpush1.msra.mxu0 0.0
    %1714 = vmatprep.subr.mxu0 0.0
    %1715 = vmatpush1.msra.mxu0 0.0
    %1716 = vmatprep.subr.mxu0 0.0
    %1717 = vmatpush1.msra.mxu0 0.0
    %1718 = vmatprep.subr.mxu0 0.0
    %1719 = vmatpush1.msra.mxu0 0.0
    %1720 = vmatprep.subr.mxu0 0.0
    %1721 = vmatpush1.msra.mxu0 0.0
    %1722 = vmatprep.subr.mxu0 0.0
    %1723 = vmatpush1.msra.mxu0 0.0
    %1724 = vmatprep.subr.mxu0 0.0
    %1725 = vmatpush1.msra.mxu0 0.0
    %1726 = vmatprep.subr.mxu0 0.0
    %1727 = vmatpush1.msra.mxu0 0.0
    %1728 = vmatprep.subr.mxu0 0.0
    %1729 = vmatpush1.msra.mxu0 0.0
    %1730 = vmatprep.subr.mxu0 0.0
    %1731 = vmatpush1.msra.mxu0 0.0
    %1732 = vmatprep.mubr.f32.mxu0 0.0
    %v1733 = vand.u32 %v373, 4294901760
    %v1734 = vsub.f32 %v373, %v1733
    %v1735 = vand.u32 %v1734, 4294901760
    %1736 = vmatmul.mubr.f32.gmra.mrb[0].mxu0 %v1735
    %v1737 = vpop.f32.mrb[0].mxu0
    %v1738 = vadd.f32 %v1649, %v1737
    %v1739 = vpop.f32.mrb[0].mxu0
    %1740 = vdwg.mxu0
    %1741 = vmatprep.subr.mxu0 0.0
    %v1742 = vand.u32 %v1283, 4294901760
    %v1743 = vsub.f32 %v1283, %v1742
    %v1744 = vand.u32 %v1743, 4294901760
    %1745 = vmatpush1.msra.mxu0 %v1744
    %1746 = vmatprep.subr.mxu0 0.0
    %v1747 = vand.u32 %v1284, 4294901760
    %v1748 = vsub.f32 %v1284, %v1747
    %v1749 = vand.u32 %v1748, 4294901760
    %1750 = vmatpush1.msra.mxu0 %v1749
    %1751 = vmatprep.subr.mxu0 0.0
    %v1752 = vand.u32 %v1285, 4294901760
    %v1753 = vsub.f32 %v1285, %v1752
    %v1754 = vand.u32 %v1753, 4294901760
    %1755 = vmatpush1.msra.mxu0 %v1754
    %1756 = vmatprep.subr.mxu0 0.0
    %v1757 = vand.u32 %v1286, 4294901760
    %v1758 = vsub.f32 %v1286, %v1757
    %v1759 = vand.u32 %v1758, 4294901760
    %1760 = vmatpush1.msra.mxu0 %v1759
    %1761 = vmatprep.subr.mxu0 0.0
    %v1762 = vand.u32 %v1287, 4294901760
    %v1763 = vsub.f32 %v1287, %v1762
    %v1764 = vand.u32 %v1763, 4294901760
    %1765 = vmatpush1.msra.mxu0 %v1764
    %1766 = vmatprep.subr.mxu0 0.0
    %v1767 = vand.u32 %v1288, 4294901760
    %v1768 = vsub.f32 %v1288, %v1767
    %v1769 = vand.u32 %v1768, 4294901760
    %1770 = vmatpush1.msra.mxu0 %v1769
    %1771 = vmatprep.subr.mxu0 0.0
    %v1772 = vand.u32 %v1289, 4294901760
    %v1773 = vsub.f32 %v1289, %v1772
    %v1774 = vand.u32 %v1773, 4294901760
    %1775 = vmatpush1.msra.mxu0 %v1774
    %1776 = vmatprep.subr.mxu0 0.0
    %v1777 = vand.u32 %v1290, 4294901760
    %v1778 = vsub.f32 %v1290, %v1777
    %v1779 = vand.u32 %v1778, 4294901760
    %1780 = vmatpush1.msra.mxu0 %v1779
    %1781 = vmatprep.subr.mxu0 0.0
    %v1782 = vand.u32 %v1291, 4294901760
    %v1783 = vsub.f32 %v1291, %v1782
    %v1784 = vand.u32 %v1783, 4294901760
    %1785 = vmatpush1.msra.mxu0 %v1784
    %1786 = vmatprep.subr.mxu0 0.0
    %v1787 = vand.u32 %v1292, 4294901760
    %v1788 = vsub.f32 %v1292, %v1787
    %v1789 = vand.u32 %v1788, 4294901760
    %1790 = vmatpush1.msra.mxu0 %v1789
    %1791 = vmatprep.subr.mxu0 0.0
    %v1792 = vand.u32 %v1293, 4294901760
    %v1793 = vsub.f32 %v1293, %v1792
    %v1794 = vand.u32 %v1793, 4294901760
    %1795 = vmatpush1.msra.mxu0 %v1794
    %1796 = vmatprep.subr.mxu0 0.0
    %v1797 = vand.u32 %v1294, 4294901760
    %v1798 = vsub.f32 %v1294, %v1797
    %v1799 = vand.u32 %v1798, 4294901760
    %1800 = vmatpush1.msra.mxu0 %v1799
    %1801 = vmatprep.subr.mxu0 0.0
    %v1802 = vand.u32 %v1295, 4294901760
    %v1803 = vsub.f32 %v1295, %v1802
    %v1804 = vand.u32 %v1803, 4294901760
    %1805 = vmatpush1.msra.mxu0 %v1804
    %1806 = vmatprep.subr.mxu0 0.0
    %v1807 = vand.u32 %v1296, 4294901760
    %v1808 = vsub.f32 %v1296, %v1807
    %v1809 = vand.u32 %v1808, 4294901760
    %1810 = vmatpush1.msra.mxu0 %v1809
    %1811 = vmatprep.subr.mxu0 0.0
    %v1812 = vand.u32 %v1297, 4294901760
    %v1813 = vsub.f32 %v1297, %v1812
    %v1814 = vand.u32 %v1813, 4294901760
    %1815 = vmatpush1.msra.mxu0 %v1814
    %1816 = vmatprep.subr.mxu0 0.0
    %v1817 = vand.u32 %v1298, 4294901760
    %v1818 = vsub.f32 %v1298, %v1817
    %v1819 = vand.u32 %v1818, 4294901760
    %1820 = vmatpush1.msra.mxu0 %v1819
    %1821 = vmatprep.subr.mxu0 0.0
    %1822 = vmatpush1.msra.mxu0 0.0
    %1823 = vmatprep.subr.mxu0 0.0
    %1824 = vmatpush1.msra.mxu0 0.0
    %1825 = vmatprep.subr.mxu0 0.0
    %1826 = vmatpush1.msra.mxu0 0.0
    %1827 = vmatprep.subr.mxu0 0.0
    %1828 = vmatpush1.msra.mxu0 0.0
    %1829 = vmatprep.subr.mxu0 0.0
    %1830 = vmatpush1.msra.mxu0 0.0
    %1831 = vmatprep.subr.mxu0 0.0
    %1832 = vmatpush1.msra.mxu0 0.0
    %1833 = vmatprep.subr.mxu0 0.0
    %1834 = vmatpush1.msra.mxu0 0.0
    %1835 = vmatprep.subr.mxu0 0.0
    %1836 = vmatpush1.msra.mxu0 0.0
    %1837 = vmatprep.subr.mxu0 0.0
    %1838 = vmatpush1.msra.mxu0 0.0
    %1839 = vmatprep.subr.mxu0 0.0
    %1840 = vmatpush1.msra.mxu0 0.0
    %1841 = vmatprep.subr.mxu0 0.0
    %1842 = vmatpush1.msra.mxu0 0.0
    %1843 = vmatprep.subr.mxu0 0.0
    %1844 = vmatpush1.msra.mxu0 0.0
    %1845 = vmatprep.subr.mxu0 0.0
    %1846 = vmatpush1.msra.mxu0 0.0
    %1847 = vmatprep.subr.mxu0 0.0
    %1848 = vmatpush1.msra.mxu0 0.0
    %1849 = vmatprep.subr.mxu0 0.0
    %1850 = vmatpush1.msra.mxu0 0.0
    %1851 = vmatprep.subr.mxu0 0.0
    %1852 = vmatpush1.msra.mxu0 0.0
    %1853 = vmatprep.mubr.f32.mxu0 0.0
    %v1854 = vand.u32 %v373, 4294901760
    %1855 = vmatmul.mubr.f32.gmra.mrb[0].mxu0 %v1854
    %v1856 = vpop.f32.mrb[0].mxu0
    %v1857 = vadd.f32 %v1738, %v1856
    %v1858 = vpop.f32.mrb[0].mxu0
    %1859 = vdwg.mxu0
    %1860 = vmatprep.subr.mxu0 0.0
    %v1861 = vand.u32 %v1283, 4294901760
    %1862 = vmatpush1.msra.mxu0 %v1861
    %1863 = vmatprep.subr.mxu0 0.0
    %v1864 = vand.u32 %v1284, 4294901760
    %1865 = vmatpush1.msra.mxu0 %v1864
    %1866 = vmatprep.subr.mxu0 0.0
    %v1867 = vand.u32 %v1285, 4294901760
    %1868 = vmatpush1.msra.mxu0 %v1867
    %1869 = vmatprep.subr.mxu0 0.0
    %v1870 = vand.u32 %v1286, 4294901760
    %1871 = vmatpush1.msra.mxu0 %v1870
    %1872 = vmatprep.subr.mxu0 0.0
    %v1873 = vand.u32 %v1287, 4294901760
    %1874 = vmatpush1.msra.mxu0 %v1873
    %1875 = vmatprep.subr.mxu0 0.0
    %v1876 = vand.u32 %v1288, 4294901760
    %1877 = vmatpush1.msra.mxu0 %v1876
    %1878 = vmatprep.subr.mxu0 0.0
    %v1879 = vand.u32 %v1289, 4294901760
    %1880 = vmatpush1.msra.mxu0 %v1879
    %1881 = vmatprep.subr.mxu0 0.0
    %v1882 = vand.u32 %v1290, 4294901760
    %1883 = vmatpush1.msra.mxu0 %v1882
    %1884 = vmatprep.subr.mxu0 0.0
    %v1885 = vand.u32 %v1291, 4294901760
    %1886 = vmatpush1.msra.mxu0 %v1885
    %1887 = vmatprep.subr.mxu0 0.0
    %v1888 = vand.u32 %v1292, 4294901760
    %1889 = vmatpush1.msra.mxu0 %v1888
    %1890 = vmatprep.subr.mxu0 0.0
    %v1891 = vand.u32 %v1293, 4294901760
    %1892 = vmatpush1.msra.mxu0 %v1891
    %1893 = vmatprep.subr.mxu0 0.0
    %v1894 = vand.u32 %v1294, 4294901760
    %1895 = vmatpush1.msra.mxu0 %v1894
    %1896 = vmatprep.subr.mxu0 0.0
    %v1897 = vand.u32 %v1295, 4294901760
    %1898 = vmatpush1.msra.mxu0 %v1897
    %1899 = vmatprep.subr.mxu0 0.0
    %v1900 = vand.u32 %v1296, 4294901760
    %1901 = vmatpush1.msra.mxu0 %v1900
    %1902 = vmatprep.subr.mxu0 0.0
    %v1903 = vand.u32 %v1297, 4294901760
    %1904 = vmatpush1.msra.mxu0 %v1903
    %1905 = vmatprep.subr.mxu0 0.0
    %v1906 = vand.u32 %v1298, 4294901760
    %1907 = vmatpush1.msra.mxu0 %v1906
    %1908 = vmatprep.subr.mxu0 0.0
    %1909 = vmatpush1.msra.mxu0 0.0
    %1910 = vmatprep.subr.mxu0 0.0
    %1911 = vmatpush1.msra.mxu0 0.0
    %1912 = vmatprep.subr.mxu0 0.0
    %1913 = vmatpush1.msra.mxu0 0.0
    %1914 = vmatprep.subr.mxu0 0.0
    %1915 = vmatpush1.msra.mxu0 0.0
    %1916 = vmatprep.subr.mxu0 0.0
    %1917 = vmatpush1.msra.mxu0 0.0
    %1918 = vmatprep.subr.mxu0 0.0
    %1919 = vmatpush1.msra.mxu0 0.0
    %1920 = vmatprep.subr.mxu0 0.0
    %1921 = vmatpush1.msra.mxu0 0.0
    %1922 = vmatprep.subr.mxu0 0.0
    %1923 = vmatpush1.msra.mxu0 0.0
    %1924 = vmatprep.subr.mxu0 0.0
    %1925 = vmatpush1.msra.mxu0 0.0
    %1926 = vmatprep.subr.mxu0 0.0
    %1927 = vmatpush1.msra.mxu0 0.0
    %1928 = vmatprep.subr.mxu0 0.0
    %1929 = vmatpush1.msra.mxu0 0.0
    %1930 = vmatprep.subr.mxu0 0.0
    %1931 = vmatpush1.msra.mxu0 0.0
    %1932 = vmatprep.subr.mxu0 0.0
    %1933 = vmatpush1.msra.mxu0 0.0
    %1934 = vmatprep.subr.mxu0 0.0
    %1935 = vmatpush1.msra.mxu0 0.0
    %1936 = vmatprep.subr.mxu0 0.0
    %1937 = vmatpush1.msra.mxu0 0.0
    %1938 = vmatprep.subr.mxu0 0.0
    %1939 = vmatpush1.msra.mxu0 0.0
    %1940 = vmatprep.mubr.f32.mxu0 0.0
    %v1941 = vand.u32 %v373, 4294901760
    %1942 = vmatmul.mubr.f32.gmra.mrb[0].mxu0 %v1941
    %v1943 = vpop.f32.mrb[0].mxu0
    %v1944 = vadd.f32 %v1857, %v1943
    %v1945 = vpop.f32.mrb[0].mxu0
    %1946 = vdwg.mxu0
    %v1947 = vadd.f32 %v1944, %v1282
    %v1948 = vmul.f32 %v1947, 0.5
    %v1949 = vmul.f32 %v1947, 0.70710677
    %v1950 = verf.f32.pop %v1949
    %v1951 = vadd.f32 %v1950, 1.0
    %v1952 = vmul.f32 %v1948, %v1951
    %v1953 = vld [vmem:[%s6] sm:$0xff]
    %1954 = vmatprep.subr.mxu0 0.0
    %v1955 = vand.u32 %v1953, 4294901760
    %1956 = vmatpush1.msra.mxu0 %v1955
    %1957 = vmatprep.subr.mxu0 0.0
    %1958 = vmatpush1.msra.mxu0 0.0
    %1959 = vmatprep.subr.mxu0 0.0
    %1960 = vmatpush1.msra.mxu0 0.0
    %1961 = vmatprep.subr.mxu0 0.0
    %1962 = vmatpush1.msra.mxu0 0.0
    %1963 = vmatprep.subr.mxu0 0.0
    %1964 = vmatpush1.msra.mxu0 0.0
    %1965 = vmatprep.subr.mxu0 0.0
    %1966 = vmatpush1.msra.mxu0 0.0
    %1967 = vmatprep.subr.mxu0 0.0
    %1968 = vmatpush1.msra.mxu0 0.0
    %1969 = vmatprep.subr.mxu0 0.0
    %1970 = vmatpush1.msra.mxu0 0.0
    %1971 = vmatprep.subr.mxu0 0.0
    %1972 = vmatpush1.msra.mxu0 0.0
    %1973 = vmatprep.subr.mxu0 0.0
    %1974 = vmatpush1.msra.mxu0 0.0
    %1975 = vmatprep.subr.mxu0 0.0
    %1976 = vmatpush1.msra.mxu0 0.0
    %1977 = vmatprep.subr.mxu0 0.0
    %1978 = vmatpush1.msra.mxu0 0.0
    %1979 = vmatprep.subr.mxu0 0.0
    %1980 = vmatpush1.msra.mxu0 0.0
    %1981 = vmatprep.subr.mxu0 0.0
    %1982 = vmatpush1.msra.mxu0 0.0
    %1983 = vmatprep.subr.mxu0 0.0
    %1984 = vmatpush1.msra.mxu0 0.0
    %1985 = vmatprep.subr.mxu0 0.0
    %1986 = vmatpush1.msra.mxu0 0.0
    %1987 = vmatprep.subr.mxu0 0.0
    %1988 = vmatpush1.msra.mxu0 0.0
    %1989 = vmatprep.subr.mxu0 0.0
    %1990 = vmatpush1.msra.mxu0 0.0
    %1991 = vmatprep.subr.mxu0 0.0
    %1992 = vmatpush1.msra.mxu0 0.0
    %1993 = vmatprep.subr.mxu0 0.0
    %1994 = vmatpush1.msra.mxu0 0.0
    %1995 = vmatprep.subr.mxu0 0.0
    %1996 = vmatpush1.msra.mxu0 0.0
    %1997 = vmatprep.subr.mxu0 0.0
    %1998 = vmatpush1.msra.mxu0 0.0
    %1999 = vmatprep.subr.mxu0 0.0
    %2000 = vmatpush1.msra.mxu0 0.0
    %2001 = vmatprep.subr.mxu0 0.0
    %2002 = vmatpush1.msra.mxu0 0.0
    %2003 = vmatprep.subr.mxu0 0.0
    %2004 = vmatpush1.msra.mxu0 0.0
    %2005 = vmatprep.subr.mxu0 0.0
    %2006 = vmatpush1.msra.mxu0 0.0
    %2007 = vmatprep.subr.mxu0 0.0
    %2008 = vmatpush1.msra.mxu0 0.0
    %2009 = vmatprep.subr.mxu0 0.0
    %2010 = vmatpush1.msra.mxu0 0.0
    %2011 = vmatprep.subr.mxu0 0.0
    %2012 = vmatpush1.msra.mxu0 0.0
    %2013 = vmatprep.subr.mxu0 0.0
    %2014 = vmatpush1.msra.mxu0 0.0
    %2015 = vmatprep.subr.mxu0 0.0
    %2016 = vmatpush1.msra.mxu0 0.0
    %2017 = vmatprep.subr.mxu0 0.0
    %2018 = vmatpush1.msra.mxu0 0.0
    %2019 = vmatprep.mubr.f32.mxu0 0.0
    %v2020 = vand.u32 %v383, 4294901760
    %v2021 = vsub.f32 %v383, %v2020
    %v2022 = vand.u32 %v2021, 4294901760
    %v2023 = vsub.f32 %v2021, %v2022
    %v2024 = vand.u32 %v2023, 4294901760
    %2025 = vmatmul.mubr.f32.gmra.mrb[0].mxu0 %v2024
    %v2026 = vpop.f32.mrb[0].mxu0
    %v2027 = vadd.f32 0.0, %v2026
    %v2028 = vpop.f32.mrb[0].mxu0
    %2029 = vdwg.mxu0
    %2030 = vmatprep.subr.mxu0 0.0
    %v2031 = vand.u32 %v1953, 4294901760
    %v2032 = vsub.f32 %v1953, %v2031
    %v2033 = vand.u32 %v2032, 4294901760
    %v2034 = vsub.f32 %v2032, %v2033
    %v2035 = vand.u32 %v2034, 4294901760
    %2036 = vmatpush1.msra.mxu0 %v2035
    %2037 = vmatprep.subr.mxu0 0.0
    %2038 = vmatpush1.msra.mxu0 0.0
    %2039 = vmatprep.subr.mxu0 0.0
    %2040 = vmatpush1.msra.mxu0 0.0
    %2041 = vmatprep.subr.mxu0 0.0
    %2042 = vmatpush1.msra.mxu0 0.0
    %2043 = vmatprep.subr.mxu0 0.0
    %2044 = vmatpush1.msra.mxu0 0.0
    %2045 = vmatprep.subr.mxu0 0.0
    %2046 = vmatpush1.msra.mxu0 0.0
    %2047 = vmatprep.subr.mxu0 0.0
    %2048 = vmatpush1.msra.mxu0 0.0
    %2049 = vmatprep.subr.mxu0 0.0
    %2050 = vmatpush1.msra.mxu0 0.0
    %2051 = vmatprep.subr.mxu0 0.0
    %2052 = vmatpush1.msra.mxu0 0.0
    %2053 = vmatprep.subr.mxu0 0.0
    %2054 = vmatpush1.msra.mxu0 0.0
    %2055 = vmatprep.subr.mxu0 0.0
    %2056 = vmatpush1.msra.mxu0 0.0
    %2057 = vmatprep.subr.mxu0 0.0
    %2058 = vmatpush1.msra.mxu0 0.0
    %2059 = vmatprep.subr.mxu0 0.0
    %2060 = vmatpush1.msra.mxu0 0.0
    %2061 = vmatprep.subr.mxu0 0.0
    %2062 = vmatpush1.msra.mxu0 0.0
    %2063 = vmatprep.subr.mxu0 0.0
    %2064 = vmatpush1.msra.mxu0 0.0
    %2065 = vmatprep.subr.mxu0 0.0
    %2066 = vmatpush1.msra.mxu0 0.0
    %2067 = vmatprep.subr.mxu0 0.0
    %2068 = vmatpush1.msra.mxu0 0.0
    %2069 = vmatprep.subr.mxu0 0.0
    %2070 = vmatpush1.msra.mxu0 0.0
    %2071 = vmatprep.subr.mxu0 0.0
    %2072 = vmatpush1.msra.mxu0 0.0
    %2073 = vmatprep.subr.mxu0 0.0
    %2074 = vmatpush1.msra.mxu0 0.0
    %2075 = vmatprep.subr.mxu0 0.0
    %2076 = vmatpush1.msra.mxu0 0.0
    %2077 = vmatprep.subr.mxu0 0.0
    %2078 = vmatpush1.msra.mxu0 0.0
    %2079 = vmatprep.subr.mxu0 0.0
    %2080 = vmatpush1.msra.mxu0 0.0
    %2081 = vmatprep.subr.mxu0 0.0
    %2082 = vmatpush1.msra.mxu0 0.0
    %2083 = vmatprep.subr.mxu0 0.0
    %2084 = vmatpush1.msra.mxu0 0.0
    %2085 = vmatprep.subr.mxu0 0.0
    %2086 = vmatpush1.msra.mxu0 0.0
    %2087 = vmatprep.subr.mxu0 0.0
    %2088 = vmatpush1.msra.mxu0 0.0
    %2089 = vmatprep.subr.mxu0 0.0
    %2090 = vmatpush1.msra.mxu0 0.0
    %2091 = vmatprep.subr.mxu0 0.0
    %2092 = vmatpush1.msra.mxu0 0.0
    %2093 = vmatprep.subr.mxu0 0.0
    %2094 = vmatpush1.msra.mxu0 0.0
    %2095 = vmatprep.subr.mxu0 0.0
    %2096 = vmatpush1.msra.mxu0 0.0
    %2097 = vmatprep.subr.mxu0 0.0
    %2098 = vmatpush1.msra.mxu0 0.0
    %2099 = vmatprep.mubr.f32.mxu0 0.0
    %v2100 = vand.u32 %v383, 4294901760
    %2101 = vmatmul.mubr.f32.gmra.mrb[0].mxu0 %v2100
    %v2102 = vpop.f32.mrb[0].mxu0
    %v2103 = vadd.f32 %v2027, %v2102
    %v2104 = vpop.f32.mrb[0].mxu0
    %2105 = vdwg.mxu0
    %2106 = vmatprep.subr.mxu0 0.0
    %v2107 = vand.u32 %v1953, 4294901760
    %v2108 = vsub.f32 %v1953, %v2107
    %2109 = vmatpush1.msra.mxu0 %v2108
    %2110 = vmatprep.subr.mxu0 0.0
    %2111 = vmatpush1.msra.mxu0 0.0
    %2112 = vmatprep.subr.mxu0 0.0
    %2113 = vmatpush1.msra.mxu0 0.0
    %2114 = vmatprep.subr.mxu0 0.0
    %2115 = vmatpush1.msra.mxu0 0.0
    %2116 = vmatprep.subr.mxu0 0.0
    %2117 = vmatpush1.msra.mxu0 0.0
    %2118 = vmatprep.subr.mxu0 0.0
    %2119 = vmatpush1.msra.mxu0 0.0
    %2120 = vmatprep.subr.mxu0 0.0
    %2121 = vmatpush1.msra.mxu0 0.0
    %2122 = vmatprep.subr.mxu0 0.0
    %2123 = vmatpush1.msra.mxu0 0.0
    %2124 = vmatprep.subr.mxu0 0.0
    %2125 = vmatpush1.msra.mxu0 0.0
    %2126 = vmatprep.subr.mxu0 0.0
    %2127 = vmatpush1.msra.mxu0 0.0
    %2128 = vmatprep.subr.mxu0 0.0
    %2129 = vmatpush1.msra.mxu0 0.0
    %2130 = vmatprep.subr.mxu0 0.0
    %2131 = vmatpush1.msra.mxu0 0.0
    %2132 = vmatprep.subr.mxu0 0.0
    %2133 = vmatpush1.msra.mxu0 0.0
    %2134 = vmatprep.subr.mxu0 0.0
    %2135 = vmatpush1.msra.mxu0 0.0
    %2136 = vmatprep.subr.mxu0 0.0
    %2137 = vmatpush1.msra.mxu0 0.0
    %2138 = vmatprep.subr.mxu0 0.0
    %2139 = vmatpush1.msra.mxu0 0.0
    %2140 = vmatprep.subr.mxu0 0.0
    %2141 = vmatpush1.msra.mxu0 0.0
    %2142 = vmatprep.subr.mxu0 0.0
    %2143 = vmatpush1.msra.mxu0 0.0
    %2144 = vmatprep.subr.mxu0 0.0
    %2145 = vmatpush1.msra.mxu0 0.0
    %2146 = vmatprep.subr.mxu0 0.0
    %2147 = vmatpush1.msra.mxu0 0.0
    %2148 = vmatprep.subr.mxu0 0.0
    %2149 = vmatpush1.msra.mxu0 0.0
    %2150 = vmatprep.subr.mxu0 0.0
    %2151 = vmatpush1.msra.mxu0 0.0
    %2152 = vmatprep.subr.mxu0 0.0
    %2153 = vmatpush1.msra.mxu0 0.0
    %2154 = vmatprep.subr.mxu0 0.0
    %2155 = vmatpush1.msra.mxu0 0.0
    %2156 = vmatprep.subr.mxu0 0.0
    %2157 = vmatpush1.msra.mxu0 0.0
    %2158 = vmatprep.subr.mxu0 0.0
    %2159 = vmatpush1.msra.mxu0 0.0
    %2160 = vmatprep.subr.mxu0 0.0
    %2161 = vmatpush1.msra.mxu0 0.0
    %2162 = vmatprep.subr.mxu0 0.0
    %2163 = vmatpush1.msra.mxu0 0.0
    %2164 = vmatprep.subr.mxu0 0.0
    %2165 = vmatpush1.msra.mxu0 0.0
    %2166 = vmatprep.subr.mxu0 0.0
    %2167 = vmatpush1.msra.mxu0 0.0
    %2168 = vmatprep.subr.mxu0 0.0
    %2169 = vmatpush1.msra.mxu0 0.0
    %2170 = vmatprep.subr.mxu0 0.0
    %2171 = vmatpush1.msra.mxu0 0.0
    %2172 = vmatprep.mubr.f32.mxu0 0.0
    %v2173 = vand.u32 %v383, 4294901760
    %v2174 = vsub.f32 %v383, %v2173
    %2175 = vmatmul.mubr.f32.gmra.mrb[0].mxu0 %v2174
    %v2176 = vpop.f32.mrb[0].mxu0
    %v2177 = vadd.f32 %v2103, %v2176
    %v2178 = vpop.f32.mrb[0].mxu0
    %2179 = vdwg.mxu0
    %2180 = vmatprep.subr.mxu0 0.0
    %v2181 = vand.u32 %v1953, 4294901760
    %2182 = vmatpush1.msra.mxu0 %v2181
    %2183 = vmatprep.subr.mxu0 0.0
    %2184 = vmatpush1.msra.mxu0 0.0
    %2185 = vmatprep.subr.mxu0 0.0
    %2186 = vmatpush1.msra.mxu0 0.0
    %2187 = vmatprep.subr.mxu0 0.0
    %2188 = vmatpush1.msra.mxu0 0.0
    %2189 = vmatprep.subr.mxu0 0.0
    %2190 = vmatpush1.msra.mxu0 0.0
    %2191 = vmatprep.subr.mxu0 0.0
    %2192 = vmatpush1.msra.mxu0 0.0
    %2193 = vmatprep.subr.mxu0 0.0
    %2194 = vmatpush1.msra.mxu0 0.0
    %2195 = vmatprep.subr.mxu0 0.0
    %2196 = vmatpush1.msra.mxu0 0.0
    %2197 = vmatprep.subr.mxu0 0.0
    %2198 = vmatpush1.msra.mxu0 0.0
    %2199 = vmatprep.subr.mxu0 0.0
    %2200 = vmatpush1.msra.mxu0 0.0
    %2201 = vmatprep.subr.mxu0 0.0
    %2202 = vmatpush1.msra.mxu0 0.0
    %2203 = vmatprep.subr.mxu0 0.0
    %2204 = vmatpush1.msra.mxu0 0.0
    %2205 = vmatprep.subr.mxu0 0.0
    %2206 = vmatpush1.msra.mxu0 0.0
    %2207 = vmatprep.subr.mxu0 0.0
    %2208 = vmatpush1.msra.mxu0 0.0
    %2209 = vmatprep.subr.mxu0 0.0
    %2210 = vmatpush1.msra.mxu0 0.0
    %2211 = vmatprep.subr.mxu0 0.0
    %2212 = vmatpush1.msra.mxu0 0.0
    %2213 = vmatprep.subr.mxu0 0.0
    %2214 = vmatpush1.msra.mxu0 0.0
    %2215 = vmatprep.subr.mxu0 0.0
    %2216 = vmatpush1.msra.mxu0 0.0
    %2217 = vmatprep.subr.mxu0 0.0
    %2218 = vmatpush1.msra.mxu0 0.0
    %2219 = vmatprep.subr.mxu0 0.0
    %2220 = vmatpush1.msra.mxu0 0.0
    %2221 = vmatprep.subr.mxu0 0.0
    %2222 = vmatpush1.msra.mxu0 0.0
    %2223 = vmatprep.subr.mxu0 0.0
    %2224 = vmatpush1.msra.mxu0 0.0
    %2225 = vmatprep.subr.mxu0 0.0
    %2226 = vmatpush1.msra.mxu0 0.0
    %2227 = vmatprep.subr.mxu0 0.0
    %2228 = vmatpush1.msra.mxu0 0.0
    %2229 = vmatprep.subr.mxu0 0.0
    %2230 = vmatpush1.msra.mxu0 0.0
    %2231 = vmatprep.subr.mxu0 0.0
    %2232 = vmatpush1.msra.mxu0 0.0
    %2233 = vmatprep.subr.mxu0 0.0
    %2234 = vmatpush1.msra.mxu0 0.0
    %2235 = vmatprep.subr.mxu0 0.0
    %2236 = vmatpush1.msra.mxu0 0.0
    %2237 = vmatprep.subr.mxu0 0.0
    %2238 = vmatpush1.msra.mxu0 0.0
    %2239 = vmatprep.subr.mxu0 0.0
    %2240 = vmatpush1.msra.mxu0 0.0
    %2241 = vmatprep.subr.mxu0 0.0
    %2242 = vmatpush1.msra.mxu0 0.0
    %2243 = vmatprep.subr.mxu0 0.0
    %2244 = vmatpush1.msra.mxu0 0.0
    %2245 = vmatprep.mubr.f32.mxu0 0.0
    %v2246 = vand.u32 %v383, 4294901760
    %v2247 = vsub.f32 %v383, %v2246
    %v2248 = vand.u32 %v2247, 4294901760
    %2249 = vmatmul.mubr.f32.gmra.mrb[0].mxu0 %v2248
    %v2250 = vpop.f32.mrb[0].mxu0
    %v2251 = vadd.f32 %v2177, %v2250
    %v2252 = vpop.f32.mrb[0].mxu0
    %2253 = vdwg.mxu0
    %2254 = vmatprep.subr.mxu0 0.0
    %v2255 = vand.u32 %v1953, 4294901760
    %v2256 = vsub.f32 %v1953, %v2255
    %v2257 = vand.u32 %v2256, 4294901760
    %2258 = vmatpush1.msra.mxu0 %v2257
    %2259 = vmatprep.subr.mxu0 0.0
    %2260 = vmatpush1.msra.mxu0 0.0
    %2261 = vmatprep.subr.mxu0 0.0
    %2262 = vmatpush1.msra.mxu0 0.0
    %2263 = vmatprep.subr.mxu0 0.0
    %2264 = vmatpush1.msra.mxu0 0.0
    %2265 = vmatprep.subr.mxu0 0.0
    %2266 = vmatpush1.msra.mxu0 0.0
    %2267 = vmatprep.subr.mxu0 0.0
    %2268 = vmatpush1.msra.mxu0 0.0
    %2269 = vmatprep.subr.mxu0 0.0
    %2270 = vmatpush1.msra.mxu0 0.0
    %2271 = vmatprep.subr.mxu0 0.0
    %2272 = vmatpush1.msra.mxu0 0.0
    %2273 = vmatprep.subr.mxu0 0.0
    %2274 = vmatpush1.msra.mxu0 0.0
    %2275 = vmatprep.subr.mxu0 0.0
    %2276 = vmatpush1.msra.mxu0 0.0
    %2277 = vmatprep.subr.mxu0 0.0
    %2278 = vmatpush1.msra.mxu0 0.0
    %2279 = vmatprep.subr.mxu0 0.0
    %2280 = vmatpush1.msra.mxu0 0.0
    %2281 = vmatprep.subr.mxu0 0.0
    %2282 = vmatpush1.msra.mxu0 0.0
    %2283 = vmatprep.subr.mxu0 0.0
    %2284 = vmatpush1.msra.mxu0 0.0
    %2285 = vmatprep.subr.mxu0 0.0
    %2286 = vmatpush1.msra.mxu0 0.0
    %2287 = vmatprep.subr.mxu0 0.0
    %2288 = vmatpush1.msra.mxu0 0.0
    %2289 = vmatprep.subr.mxu0 0.0
    %2290 = vmatpush1.msra.mxu0 0.0
    %2291 = vmatprep.subr.mxu0 0.0
    %2292 = vmatpush1.msra.mxu0 0.0
    %2293 = vmatprep.subr.mxu0 0.0
    %2294 = vmatpush1.msra.mxu0 0.0
    %2295 = vmatprep.subr.mxu0 0.0
    %2296 = vmatpush1.msra.mxu0 0.0
    %2297 = vmatprep.subr.mxu0 0.0
    %2298 = vmatpush1.msra.mxu0 0.0
    %2299 = vmatprep.subr.mxu0 0.0
    %2300 = vmatpush1.msra.mxu0 0.0
    %2301 = vmatprep.subr.mxu0 0.0
    %2302 = vmatpush1.msra.mxu0 0.0
    %2303 = vmatprep.subr.mxu0 0.0
    %2304 = vmatpush1.msra.mxu0 0.0
    %2305 = vmatprep.subr.mxu0 0.0
    %2306 = vmatpush1.msra.mxu0 0.0
    %2307 = vmatprep.subr.mxu0 0.0
    %2308 = vmatpush1.msra.mxu0 0.0
    %2309 = vmatprep.subr.mxu0 0.0
    %2310 = vmatpush1.msra.mxu0 0.0
    %2311 = vmatprep.subr.mxu0 0.0
    %2312 = vmatpush1.msra.mxu0 0.0
    %2313 = vmatprep.subr.mxu0 0.0
    %2314 = vmatpush1.msra.mxu0 0.0
    %2315 = vmatprep.subr.mxu0 0.0
    %2316 = vmatpush1.msra.mxu0 0.0
    %2317 = vmatprep.subr.mxu0 0.0
    %2318 = vmatpush1.msra.mxu0 0.0
    %2319 = vmatprep.subr.mxu0 0.0
    %2320 = vmatpush1.msra.mxu0 0.0
    %2321 = vmatprep.mubr.f32.mxu0 0.0
    %v2322 = vand.u32 %v383, 4294901760
    %2323 = vmatmul.mubr.f32.gmra.mrb[0].mxu0 %v2322
    %v2324 = vpop.f32.mrb[0].mxu0
    %v2325 = vadd.f32 %v2251, %v2324
    %v2326 = vpop.f32.mrb[0].mxu0
    %2327 = vdwg.mxu0
    %2328 = vmatprep.subr.mxu0 0.0
    %v2329 = vand.u32 %v1953, 4294901760
    %2330 = vmatpush1.msra.mxu0 %v2329
    %2331 = vmatprep.subr.mxu0 0.0
    %2332 = vmatpush1.msra.mxu0 0.0
    %2333 = vmatprep.subr.mxu0 0.0
    %2334 = vmatpush1.msra.mxu0 0.0
    %2335 = vmatprep.subr.mxu0 0.0
    %2336 = vmatpush1.msra.mxu0 0.0
    %2337 = vmatprep.subr.mxu0 0.0
    %2338 = vmatpush1.msra.mxu0 0.0
    %2339 = vmatprep.subr.mxu0 0.0
    %2340 = vmatpush1.msra.mxu0 0.0
    %2341 = vmatprep.subr.mxu0 0.0
    %2342 = vmatpush1.msra.mxu0 0.0
    %2343 = vmatprep.subr.mxu0 0.0
    %2344 = vmatpush1.msra.mxu0 0.0
    %2345 = vmatprep.subr.mxu0 0.0
    %2346 = vmatpush1.msra.mxu0 0.0
    %2347 = vmatprep.subr.mxu0 0.0
    %2348 = vmatpush1.msra.mxu0 0.0
    %2349 = vmatprep.subr.mxu0 0.0
    %2350 = vmatpush1.msra.mxu0 0.0
    %2351 = vmatprep.subr.mxu0 0.0
    %2352 = vmatpush1.msra.mxu0 0.0
    %2353 = vmatprep.subr.mxu0 0.0
    %2354 = vmatpush1.msra.mxu0 0.0
    %2355 = vmatprep.subr.mxu0 0.0
    %2356 = vmatpush1.msra.mxu0 0.0
    %2357 = vmatprep.subr.mxu0 0.0
    %2358 = vmatpush1.msra.mxu0 0.0
    %2359 = vmatprep.subr.mxu0 0.0
    %2360 = vmatpush1.msra.mxu0 0.0
    %2361 = vmatprep.subr.mxu0 0.0
    %2362 = vmatpush1.msra.mxu0 0.0
    %2363 = vmatprep.subr.mxu0 0.0
    %2364 = vmatpush1.msra.mxu0 0.0
    %2365 = vmatprep.subr.mxu0 0.0
    %2366 = vmatpush1.msra.mxu0 0.0
    %2367 = vmatprep.subr.mxu0 0.0
    %2368 = vmatpush1.msra.mxu0 0.0
    %2369 = vmatprep.subr.mxu0 0.0
    %2370 = vmatpush1.msra.mxu0 0.0
    %2371 = vmatprep.subr.mxu0 0.0
    %2372 = vmatpush1.msra.mxu0 0.0
    %2373 = vmatprep.subr.mxu0 0.0
    %2374 = vmatpush1.msra.mxu0 0.0
    %2375 = vmatprep.subr.mxu0 0.0
    %2376 = vmatpush1.msra.mxu0 0.0
    %2377 = vmatprep.subr.mxu0 0.0
    %2378 = vmatpush1.msra.mxu0 0.0
    %2379 = vmatprep.subr.mxu0 0.0
    %2380 = vmatpush1.msra.mxu0 0.0
    %2381 = vmatprep.subr.mxu0 0.0
    %2382 = vmatpush1.msra.mxu0 0.0
    %2383 = vmatprep.subr.mxu0 0.0
    %2384 = vmatpush1.msra.mxu0 0.0
    %2385 = vmatprep.subr.mxu0 0.0
    %2386 = vmatpush1.msra.mxu0 0.0
    %2387 = vmatprep.subr.mxu0 0.0
    %2388 = vmatpush1.msra.mxu0 0.0
    %2389 = vmatprep.subr.mxu0 0.0
    %2390 = vmatpush1.msra.mxu0 0.0
    %2391 = vmatprep.subr.mxu0 0.0
    %2392 = vmatpush1.msra.mxu0 0.0
    %2393 = vmatprep.mubr.f32.mxu0 0.0
    %v2394 = vand.u32 %v383, 4294901760
    %2395 = vmatmul.mubr.f32.gmra.mrb[0].mxu0 %v2394
    %v2396 = vpop.f32.mrb[0].mxu0
    %v2397 = vadd.f32 %v2325, %v2396
    %v2398 = vpop.f32.mrb[0].mxu0
    %2399 = vdwg.mxu0
    %v2400 = vld [vmem:[%s7] sm:$0xff]
    %2401 = vmatprep.subr.mxu0 0.0
    %v2402 = vand.u32 %v2400, 4294901760
    %2403 = vmatpush1.msra.mxu0 %v2402
    %2404 = vmatprep.subr.mxu0 0.0
    %2405 = vmatpush1.msra.mxu0 0.0
    %2406 = vmatprep.subr.mxu0 0.0
    %2407 = vmatpush1.msra.mxu0 0.0
    %2408 = vmatprep.subr.mxu0 0.0
    %2409 = vmatpush1.msra.mxu0 0.0
    %2410 = vmatprep.subr.mxu0 0.0
    %2411 = vmatpush1.msra.mxu0 0.0
    %2412 = vmatprep.subr.mxu0 0.0
    %2413 = vmatpush1.msra.mxu0 0.0
    %2414 = vmatprep.subr.mxu0 0.0
    %2415 = vmatpush1.msra.mxu0 0.0
    %2416 = vmatprep.subr.mxu0 0.0
    %2417 = vmatpush1.msra.mxu0 0.0
    %2418 = vmatprep.subr.mxu0 0.0
    %2419 = vmatpush1.msra.mxu0 0.0
    %2420 = vmatprep.subr.mxu0 0.0
    %2421 = vmatpush1.msra.mxu0 0.0
    %2422 = vmatprep.subr.mxu0 0.0
    %2423 = vmatpush1.msra.mxu0 0.0
    %2424 = vmatprep.subr.mxu0 0.0
    %2425 = vmatpush1.msra.mxu0 0.0
    %2426 = vmatprep.subr.mxu0 0.0
    %2427 = vmatpush1.msra.mxu0 0.0
    %2428 = vmatprep.subr.mxu0 0.0
    %2429 = vmatpush1.msra.mxu0 0.0
    %2430 = vmatprep.subr.mxu0 0.0
    %2431 = vmatpush1.msra.mxu0 0.0
    %2432 = vmatprep.subr.mxu0 0.0
    %2433 = vmatpush1.msra.mxu0 0.0
    %2434 = vmatprep.subr.mxu0 0.0
    %2435 = vmatpush1.msra.mxu0 0.0
    %2436 = vmatprep.subr.mxu0 0.0
    %2437 = vmatpush1.msra.mxu0 0.0
    %2438 = vmatprep.subr.mxu0 0.0
    %2439 = vmatpush1.msra.mxu0 0.0
    %2440 = vmatprep.subr.mxu0 0.0
    %2441 = vmatpush1.msra.mxu0 0.0
    %2442 = vmatprep.subr.mxu0 0.0
    %2443 = vmatpush1.msra.mxu0 0.0
    %2444 = vmatprep.subr.mxu0 0.0
    %2445 = vmatpush1.msra.mxu0 0.0
    %2446 = vmatprep.subr.mxu0 0.0
    %2447 = vmatpush1.msra.mxu0 0.0
    %2448 = vmatprep.subr.mxu0 0.0
    %2449 = vmatpush1.msra.mxu0 0.0
    %2450 = vmatprep.subr.mxu0 0.0
    %2451 = vmatpush1.msra.mxu0 0.0
    %2452 = vmatprep.subr.mxu0 0.0
    %2453 = vmatpush1.msra.mxu0 0.0
    %2454 = vmatprep.subr.mxu0 0.0
    %2455 = vmatpush1.msra.mxu0 0.0
    %2456 = vmatprep.subr.mxu0 0.0
    %2457 = vmatpush1.msra.mxu0 0.0
    %2458 = vmatprep.subr.mxu0 0.0
    %2459 = vmatpush1.msra.mxu0 0.0
    %2460 = vmatprep.subr.mxu0 0.0
    %2461 = vmatpush1.msra.mxu0 0.0
    %2462 = vmatprep.subr.mxu0 0.0
    %2463 = vmatpush1.msra.mxu0 0.0
    %2464 = vmatprep.subr.mxu0 0.0
    %2465 = vmatpush1.msra.mxu0 0.0
    %2466 = vmatprep.mubr.f32.mxu0 0.0
    %v2467 = vand.u32 %v383, 4294901760
    %v2468 = vsub.f32 %v383, %v2467
    %v2469 = vand.u32 %v2468, 4294901760
    %v2470 = vsub.f32 %v2468, %v2469
    %v2471 = vand.u32 %v2470, 4294901760
    %2472 = vmatmul.mubr.f32.gmra.mrb[0].mxu0 %v2471
    %v2473 = vpop.f32.mrb[0].mxu0
    %v2474 = vadd.f32 0.0, %v2473
    %v2475 = vpop.f32.mrb[0].mxu0
    %2476 = vdwg.mxu0
    %2477 = vmatprep.subr.mxu0 0.0
    %v2478 = vand.u32 %v2400, 4294901760
    %v2479 = vsub.f32 %v2400, %v2478
    %v2480 = vand.u32 %v2479, 4294901760
    %v2481 = vsub.f32 %v2479, %v2480
    %v2482 = vand.u32 %v2481, 4294901760
    %2483 = vmatpush1.msra.mxu0 %v2482
    %2484 = vmatprep.subr.mxu0 0.0
    %2485 = vmatpush1.msra.mxu0 0.0
    %2486 = vmatprep.subr.mxu0 0.0
    %2487 = vmatpush1.msra.mxu0 0.0
    %2488 = vmatprep.subr.mxu0 0.0
    %2489 = vmatpush1.msra.mxu0 0.0
    %2490 = vmatprep.subr.mxu0 0.0
    %2491 = vmatpush1.msra.mxu0 0.0
    %2492 = vmatprep.subr.mxu0 0.0
    %2493 = vmatpush1.msra.mxu0 0.0
    %2494 = vmatprep.subr.mxu0 0.0
    %2495 = vmatpush1.msra.mxu0 0.0
    %2496 = vmatprep.subr.mxu0 0.0
    %2497 = vmatpush1.msra.mxu0 0.0
    %2498 = vmatprep.subr.mxu0 0.0
    %2499 = vmatpush1.msra.mxu0 0.0
    %2500 = vmatprep.subr.mxu0 0.0
    %2501 = vmatpush1.msra.mxu0 0.0
    %2502 = vmatprep.subr.mxu0 0.0
    %2503 = vmatpush1.msra.mxu0 0.0
    %2504 = vmatprep.subr.mxu0 0.0
    %2505 = vmatpush1.msra.mxu0 0.0
    %2506 = vmatprep.subr.mxu0 0.0
    %2507 = vmatpush1.msra.mxu0 0.0
    %2508 = vmatprep.subr.mxu0 0.0
    %2509 = vmatpush1.msra.mxu0 0.0
    %2510 = vmatprep.subr.mxu0 0.0
    %2511 = vmatpush1.msra.mxu0 0.0
    %2512 = vmatprep.subr.mxu0 0.0
    %2513 = vmatpush1.msra.mxu0 0.0
    %2514 = vmatprep.subr.mxu0 0.0
    %2515 = vmatpush1.msra.mxu0 0.0
    %2516 = vmatprep.subr.mxu0 0.0
    %2517 = vmatpush1.msra.mxu0 0.0
    %2518 = vmatprep.subr.mxu0 0.0
    %2519 = vmatpush1.msra.mxu0 0.0
    %2520 = vmatprep.subr.mxu0 0.0
    %2521 = vmatpush1.msra.mxu0 0.0
    %2522 = vmatprep.subr.mxu0 0.0
    %2523 = vmatpush1.msra.mxu0 0.0
    %2524 = vmatprep.subr.mxu0 0.0
    %2525 = vmatpush1.msra.mxu0 0.0
    %2526 = vmatprep.subr.mxu0 0.0
    %2527 = vmatpush1.msra.mxu0 0.0
    %2528 = vmatprep.subr.mxu0 0.0
    %2529 = vmatpush1.msra.mxu0 0.0
    %2530 = vmatprep.subr.mxu0 0.0
    %2531 = vmatpush1.msra.mxu0 0.0
    %2532 = vmatprep.subr.mxu0 0.0
    %2533 = vmatpush1.msra.mxu0 0.0
    %2534 = vmatprep.subr.mxu0 0.0
    %2535 = vmatpush1.msra.mxu0 0.0
    %2536 = vmatprep.subr.mxu0 0.0
    %2537 = vmatpush1.msra.mxu0 0.0
    %2538 = vmatprep.subr.mxu0 0.0
    %2539 = vmatpush1.msra.mxu0 0.0
    %2540 = vmatprep.subr.mxu0 0.0
    %2541 = vmatpush1.msra.mxu0 0.0
    %2542 = vmatprep.subr.mxu0 0.0
    %2543 = vmatpush1.msra.mxu0 0.0
    %2544 = vmatprep.subr.mxu0 0.0
    %2545 = vmatpush1.msra.mxu0 0.0
    %2546 = vmatprep.mubr.f32.mxu0 0.0
    %v2547 = vand.u32 %v383, 4294901760
    %2548 = vmatmul.mubr.f32.gmra.mrb[0].mxu0 %v2547
    %v2549 = vpop.f32.mrb[0].mxu0
    %v2550 = vadd.f32 %v2474, %v2549
    %v2551 = vpop.f32.mrb[0].mxu0
    %2552 = vdwg.mxu0
    %2553 = vmatprep.subr.mxu0 0.0
    %v2554 = vand.u32 %v2400, 4294901760
    %v2555 = vsub.f32 %v2400, %v2554
    %2556 = vmatpush1.msra.mxu0 %v2555
    %2557 = vmatprep.subr.mxu0 0.0
    %2558 = vmatpush1.msra.mxu0 0.0
    %2559 = vmatprep.subr.mxu0 0.0
    %2560 = vmatpush1.msra.mxu0 0.0
    %2561 = vmatprep.subr.mxu0 0.0
    %2562 = vmatpush1.msra.mxu0 0.0
    %2563 = vmatprep.subr.mxu0 0.0
    %2564 = vmatpush1.msra.mxu0 0.0
    %2565 = vmatprep.subr.mxu0 0.0
    %2566 = vmatpush1.msra.mxu0 0.0
    %2567 = vmatprep.subr.mxu0 0.0
    %2568 = vmatpush1.msra.mxu0 0.0
    %2569 = vmatprep.subr.mxu0 0.0
    %2570 = vmatpush1.msra.mxu0 0.0
    %2571 = vmatprep.subr.mxu0 0.0
    %2572 = vmatpush1.msra.mxu0 0.0
    %2573 = vmatprep.subr.mxu0 0.0
    %2574 = vmatpush1.msra.mxu0 0.0
    %2575 = vmatprep.subr.mxu0 0.0
    %2576 = vmatpush1.msra.mxu0 0.0
    %2577 = vmatprep.subr.mxu0 0.0
    %2578 = vmatpush1.msra.mxu0 0.0
    %2579 = vmatprep.subr.mxu0 0.0
    %2580 = vmatpush1.msra.mxu0 0.0
    %2581 = vmatprep.subr.mxu0 0.0
    %2582 = vmatpush1.msra.mxu0 0.0
    %2583 = vmatprep.subr.mxu0 0.0
    %2584 = vmatpush1.msra.mxu0 0.0
    %2585 = vmatprep.subr.mxu0 0.0
    %2586 = vmatpush1.msra.mxu0 0.0
    %2587 = vmatprep.subr.mxu0 0.0
    %2588 = vmatpush1.msra.mxu0 0.0
    %2589 = vmatprep.subr.mxu0 0.0
    %2590 = vmatpush1.msra.mxu0 0.0
    %2591 = vmatprep.subr.mxu0 0.0
    %2592 = vmatpush1.msra.mxu0 0.0
    %2593 = vmatprep.subr.mxu0 0.0
    %2594 = vmatpush1.msra.mxu0 0.0
    %2595 = vmatprep.subr.mxu0 0.0
    %2596 = vmatpush1.msra.mxu0 0.0
    %2597 = vmatprep.subr.mxu0 0.0
    %2598 = vmatpush1.msra.mxu0 0.0
    %2599 = vmatprep.subr.mxu0 0.0
    %2600 = vmatpush1.msra.mxu0 0.0
    %2601 = vmatprep.subr.mxu0 0.0
    %2602 = vmatpush1.msra.mxu0 0.0
    %2603 = vmatprep.subr.mxu0 0.0
    %2604 = vmatpush1.msra.mxu0 0.0
    %2605 = vmatprep.subr.mxu0 0.0
    %2606 = vmatpush1.msra.mxu0 0.0
    %2607 = vmatprep.subr.mxu0 0.0
    %2608 = vmatpush1.msra.mxu0 0.0
    %2609 = vmatprep.subr.mxu0 0.0
    %2610 = vmatpush1.msra.mxu0 0.0
    %2611 = vmatprep.subr.mxu0 0.0
    %2612 = vmatpush1.msra.mxu0 0.0
    %2613 = vmatprep.subr.mxu0 0.0
    %2614 = vmatpush1.msra.mxu0 0.0
    %2615 = vmatprep.subr.mxu0 0.0
    %2616 = vmatpush1.msra.mxu0 0.0
    %2617 = vmatprep.subr.mxu0 0.0
    %2618 = vmatpush1.msra.mxu0 0.0
    %2619 = vmatprep.mubr.f32.mxu0 0.0
    %v2620 = vand.u32 %v383, 4294901760
    %v2621 = vsub.f32 %v383, %v2620
    %2622 = vmatmul.mubr.f32.gmra.mrb[0].mxu0 %v2621
    %v2623 = vpop.f32.mrb[0].mxu0
    %v2624 = vadd.f32 %v2550, %v2623
    %v2625 = vpop.f32.mrb[0].mxu0
    %2626 = vdwg.mxu0
    %2627 = vmatprep.subr.mxu0 0.0
    %v2628 = vand.u32 %v2400, 4294901760
    %2629 = vmatpush1.msra.mxu0 %v2628
    %2630 = vmatprep.subr.mxu0 0.0
    %2631 = vmatpush1.msra.mxu0 0.0
    %2632 = vmatprep.subr.mxu0 0.0
    %2633 = vmatpush1.msra.mxu0 0.0
    %2634 = vmatprep.subr.mxu0 0.0
    %2635 = vmatpush1.msra.mxu0 0.0
    %2636 = vmatprep.subr.mxu0 0.0
    %2637 = vmatpush1.msra.mxu0 0.0
    %2638 = vmatprep.subr.mxu0 0.0
    %2639 = vmatpush1.msra.mxu0 0.0
    %2640 = vmatprep.subr.mxu0 0.0
    %2641 = vmatpush1.msra.mxu0 0.0
    %2642 = vmatprep.subr.mxu0 0.0
    %2643 = vmatpush1.msra.mxu0 0.0
    %2644 = vmatprep.subr.mxu0 0.0
    %2645 = vmatpush1.msra.mxu0 0.0
    %2646 = vmatprep.subr.mxu0 0.0
    %2647 = vmatpush1.msra.mxu0 0.0
    %2648 = vmatprep.subr.mxu0 0.0
    %2649 = vmatpush1.msra.mxu0 0.0
    %2650 = vmatprep.subr.mxu0 0.0
    %2651 = vmatpush1.msra.mxu0 0.0
    %2652 = vmatprep.subr.mxu0 0.0
    %2653 = vmatpush1.msra.mxu0 0.0
    %2654 = vmatprep.subr.mxu0 0.0
    %2655 = vmatpush1.msra.mxu0 0.0
    %2656 = vmatprep.subr.mxu0 0.0
    %2657 = vmatpush1.msra.mxu0 0.0
    %2658 = vmatprep.subr.mxu0 0.0
    %2659 = vmatpush1.msra.mxu0 0.0
    %2660 = vmatprep.subr.mxu0 0.0
    %2661 = vmatpush1.msra.mxu0 0.0
    %2662 = vmatprep.subr.mxu0 0.0
    %2663 = vmatpush1.msra.mxu0 0.0
    %2664 = vmatprep.subr.mxu0 0.0
    %2665 = vmatpush1.msra.mxu0 0.0
    %2666 = vmatprep.subr.mxu0 0.0
    %2667 = vmatpush1.msra.mxu0 0.0
    %2668 = vmatprep.subr.mxu0 0.0
    %2669 = vmatpush1.msra.mxu0 0.0
    %2670 = vmatprep.subr.mxu0 0.0
    %2671 = vmatpush1.msra.mxu0 0.0
    %2672 = vmatprep.subr.mxu0 0.0
    %2673 = vmatpush1.msra.mxu0 0.0
    %2674 = vmatprep.subr.mxu0 0.0
    %2675 = vmatpush1.msra.mxu0 0.0
    %2676 = vmatprep.subr.mxu0 0.0
    %2677 = vmatpush1.msra.mxu0 0.0
    %2678 = vmatprep.subr.mxu0 0.0
    %2679 = vmatpush1.msra.mxu0 0.0
    %2680 = vmatprep.subr.mxu0 0.0
    %2681 = vmatpush1.msra.mxu0 0.0
    %2682 = vmatprep.subr.mxu0 0.0
    %2683 = vmatpush1.msra.mxu0 0.0
    %2684 = vmatprep.subr.mxu0 0.0
    %2685 = vmatpush1.msra.mxu0 0.0
    %2686 = vmatprep.subr.mxu0 0.0
    %2687 = vmatpush1.msra.mxu0 0.0
    %2688 = vmatprep.subr.mxu0 0.0
    %2689 = vmatpush1.msra.mxu0 0.0
    %2690 = vmatprep.subr.mxu0 0.0
    %2691 = vmatpush1.msra.mxu0 0.0
    %2692 = vmatprep.mubr.f32.mxu0 0.0
    %v2693 = vand.u32 %v383, 4294901760
    %v2694 = vsub.f32 %v383, %v2693
    %v2695 = vand.u32 %v2694, 4294901760
    %2696 = vmatmul.mubr.f32.gmra.mrb[0].mxu0 %v2695
    %v2697 = vpop.f32.mrb[0].mxu0
    %v2698 = vadd.f32 %v2624, %v2697
    %v2699 = vpop.f32.mrb[0].mxu0
    %2700 = vdwg.mxu0
    %2701 = vmatprep.subr.mxu0 0.0
    %v2702 = vand.u32 %v2400, 4294901760
    %v2703 = vsub.f32 %v2400, %v2702
    %v2704 = vand.u32 %v2703, 4294901760
    %2705 = vmatpush1.msra.mxu0 %v2704
    %2706 = vmatprep.subr.mxu0 0.0
    %2707 = vmatpush1.msra.mxu0 0.0
    %2708 = vmatprep.subr.mxu0 0.0
    %2709 = vmatpush1.msra.mxu0 0.0
    %2710 = vmatprep.subr.mxu0 0.0
    %2711 = vmatpush1.msra.mxu0 0.0
    %2712 = vmatprep.subr.mxu0 0.0
    %2713 = vmatpush1.msra.mxu0 0.0
    %2714 = vmatprep.subr.mxu0 0.0
    %2715 = vmatpush1.msra.mxu0 0.0
    %2716 = vmatprep.subr.mxu0 0.0
    %2717 = vmatpush1.msra.mxu0 0.0
    %2718 = vmatprep.subr.mxu0 0.0
    %2719 = vmatpush1.msra.mxu0 0.0
    %2720 = vmatprep.subr.mxu0 0.0
    %2721 = vmatpush1.msra.mxu0 0.0
    %2722 = vmatprep.subr.mxu0 0.0
    %2723 = vmatpush1.msra.mxu0 0.0
    %2724 = vmatprep.subr.mxu0 0.0
    %2725 = vmatpush1.msra.mxu0 0.0
    %2726 = vmatprep.subr.mxu0 0.0
    %2727 = vmatpush1.msra.mxu0 0.0
    %2728 = vmatprep.subr.mxu0 0.0
    %2729 = vmatpush1.msra.mxu0 0.0
    %2730 = vmatprep.subr.mxu0 0.0
    %2731 = vmatpush1.msra.mxu0 0.0
    %2732 = vmatprep.subr.mxu0 0.0
    %2733 = vmatpush1.msra.mxu0 0.0
    %2734 = vmatprep.subr.mxu0 0.0
    %2735 = vmatpush1.msra.mxu0 0.0
    %2736 = vmatprep.subr.mxu0 0.0
    %2737 = vmatpush1.msra.mxu0 0.0
    %2738 = vmatprep.subr.mxu0 0.0
    %2739 = vmatpush1.msra.mxu0 0.0
    %2740 = vmatprep.subr.mxu0 0.0
    %2741 = vmatpush1.msra.mxu0 0.0
    %2742 = vmatprep.subr.mxu0 0.0
    %2743 = vmatpush1.msra.mxu0 0.0
    %2744 = vmatprep.subr.mxu0 0.0
    %2745 = vmatpush1.msra.mxu0 0.0
    %2746 = vmatprep.subr.mxu0 0.0
    %2747 = vmatpush1.msra.mxu0 0.0
    %2748 = vmatprep.subr.mxu0 0.0
    %2749 = vmatpush1.msra.mxu0 0.0
    %2750 = vmatprep.subr.mxu0 0.0
    %2751 = vmatpush1.msra.mxu0 0.0
    %2752 = vmatprep.subr.mxu0 0.0
    %2753 = vmatpush1.msra.mxu0 0.0
    %2754 = vmatprep.subr.mxu0 0.0
    %2755 = vmatpush1.msra.mxu0 0.0
    %2756 = vmatprep.subr.mxu0 0.0
    %2757 = vmatpush1.msra.mxu0 0.0
    %2758 = vmatprep.subr.mxu0 0.0
    %2759 = vmatpush1.msra.mxu0 0.0
    %2760 = vmatprep.subr.mxu0 0.0
    %2761 = vmatpush1.msra.mxu0 0.0
    %2762 = vmatprep.subr.mxu0 0.0
    %2763 = vmatpush1.msra.mxu0 0.0
    %2764 = vmatprep.subr.mxu0 0.0
    %2765 = vmatpush1.msra.mxu0 0.0
    %2766 = vmatprep.subr.mxu0 0.0
    %2767 = vmatpush1.msra.mxu0 0.0
    %2768 = vmatprep.mubr.f32.mxu0 0.0
    %v2769 = vand.u32 %v383, 4294901760
    %2770 = vmatmul.mubr.f32.gmra.mrb[0].mxu0 %v2769
    %v2771 = vpop.f32.mrb[0].mxu0
    %v2772 = vadd.f32 %v2698, %v2771
    %v2773 = vpop.f32.mrb[0].mxu0
    %2774 = vdwg.mxu0
    %2775 = vmatprep.subr.mxu0 0.0
    %v2776 = vand.u32 %v2400, 4294901760
    %2777 = vmatpush1.msra.mxu0 %v2776
    %2778 = vmatprep.subr.mxu0 0.0
    %2779 = vmatpush1.msra.mxu0 0.0
    %2780 = vmatprep.subr.mxu0 0.0
    %2781 = vmatpush1.msra.mxu0 0.0
    %2782 = vmatprep.subr.mxu0 0.0
    %2783 = vmatpush1.msra.mxu0 0.0
    %2784 = vmatprep.subr.mxu0 0.0
    %2785 = vmatpush1.msra.mxu0 0.0
    %2786 = vmatprep.subr.mxu0 0.0
    %2787 = vmatpush1.msra.mxu0 0.0
    %2788 = vmatprep.subr.mxu0 0.0
    %2789 = vmatpush1.msra.mxu0 0.0
    %2790 = vmatprep.subr.mxu0 0.0
    %2791 = vmatpush1.msra.mxu0 0.0
    %2792 = vmatprep.subr.mxu0 0.0
    %2793 = vmatpush1.msra.mxu0 0.0
    %2794 = vmatprep.subr.mxu0 0.0
    %2795 = vmatpush1.msra.mxu0 0.0
    %2796 = vmatprep.subr.mxu0 0.0
    %2797 = vmatpush1.msra.mxu0 0.0
    %2798 = vmatprep.subr.mxu0 0.0
    %2799 = vmatpush1.msra.mxu0 0.0
    %2800 = vmatprep.subr.mxu0 0.0
    %2801 = vmatpush1.msra.mxu0 0.0
    %2802 = vmatprep.subr.mxu0 0.0
    %2803 = vmatpush1.msra.mxu0 0.0
    %2804 = vmatprep.subr.mxu0 0.0
    %2805 = vmatpush1.msra.mxu0 0.0
    %2806 = vmatprep.subr.mxu0 0.0
    %2807 = vmatpush1.msra.mxu0 0.0
    %2808 = vmatprep.subr.mxu0 0.0
    %2809 = vmatpush1.msra.mxu0 0.0
    %2810 = vmatprep.subr.mxu0 0.0
    %2811 = vmatpush1.msra.mxu0 0.0
    %2812 = vmatprep.subr.mxu0 0.0
    %2813 = vmatpush1.msra.mxu0 0.0
    %2814 = vmatprep.subr.mxu0 0.0
    %2815 = vmatpush1.msra.mxu0 0.0
    %2816 = vmatprep.subr.mxu0 0.0
    %2817 = vmatpush1.msra.mxu0 0.0
    %2818 = vmatprep.subr.mxu0 0.0
    %2819 = vmatpush1.msra.mxu0 0.0
    %2820 = vmatprep.subr.mxu0 0.0
    %2821 = vmatpush1.msra.mxu0 0.0
    %2822 = vmatprep.subr.mxu0 0.0
    %2823 = vmatpush1.msra.mxu0 0.0
    %2824 = vmatprep.subr.mxu0 0.0
    %2825 = vmatpush1.msra.mxu0 0.0
    %2826 = vmatprep.subr.mxu0 0.0
    %2827 = vmatpush1.msra.mxu0 0.0
    %2828 = vmatprep.subr.mxu0 0.0
    %2829 = vmatpush1.msra.mxu0 0.0
    %2830 = vmatprep.subr.mxu0 0.0
    %2831 = vmatpush1.msra.mxu0 0.0
    %2832 = vmatprep.subr.mxu0 0.0
    %2833 = vmatpush1.msra.mxu0 0.0
    %2834 = vmatprep.subr.mxu0 0.0
    %2835 = vmatpush1.msra.mxu0 0.0
    %2836 = vmatprep.subr.mxu0 0.0
    %2837 = vmatpush1.msra.mxu0 0.0
    %2838 = vmatprep.subr.mxu0 0.0
    %2839 = vmatpush1.msra.mxu0 0.0
    %2840 = vmatprep.mubr.f32.mxu0 0.0
    %v2841 = vand.u32 %v383, 4294901760
    %2842 = vmatmul.mubr.f32.gmra.mrb[0].mxu0 %v2841
    %v2843 = vpop.f32.mrb[0].mxu0
    %v2844 = vadd.f32 %v2772, %v2843
    %v2845 = vpop.f32.mrb[0].mxu0
    %2846 = vdwg.mxu0
    %v2847 = vmul.f32 %v2844, %v1952
    %2848 = vadd.xlane.f32.xlu0 %v2847
    %v2849 = vpop.xlane.xlu0 %2848
    %v2850 = vmul.f32 %v2849, 0.03125
    %v2851 = vmul.f32 %v2397, %v2850
    %v2852 = vld [vmem:[#allocation12] sm:$0xff]
    %v2853 = vld [vmem:[#allocation12 + $0x8] sm:$0xff]
    %v2854 = vld [vmem:[#allocation12 + $0x10] sm:$0xff]
    %v2855 = vld [vmem:[#allocation12 + $0x18] sm:$0xff]
    %v2856 = vld [vmem:[#allocation12 + $0x20] sm:$0xff]
    %v2857 = vld [vmem:[#allocation12 + $0x28] sm:$0xff]
    %v2858 = vld [vmem:[#allocation12 + $0x30] sm:$0xff]
    %v2859 = vld [vmem:[#allocation12 + $0x38] sm:$0xff]
    %v2860 = vld [vmem:[#allocation12 + $0x40] sm:$0xff]
    %v2861 = vld [vmem:[#allocation12 + $0x48] sm:$0xff]
    %v2862 = vld [vmem:[#allocation12 + $0x50] sm:$0xff]
    %v2863 = vld [vmem:[#allocation12 + $0x58] sm:$0xff]
    %v2864 = vld [vmem:[#allocation12 + $0x60] sm:$0xff]
    %v2865 = vld [vmem:[#allocation12 + $0x68] sm:$0xff]
    %v2866 = vld [vmem:[#allocation12 + $0x70] sm:$0xff]
    %v2867 = vld [vmem:[#allocation12 + $0x78] sm:$0xff]
    %v2868 = vld [vmem:[#allocation12 + $0x80] sm:$0xff]
    %v2869 = vld [vmem:[#allocation12 + $0x88] sm:$0xff]
    %v2870 = vld [vmem:[#allocation12 + $0x90] sm:$0xff]
    %v2871 = vld [vmem:[#allocation12 + $0x98] sm:$0xff]
    %v2872 = vld [vmem:[#allocation12 + $0xa0] sm:$0xff]
    %v2873 = vld [vmem:[#allocation12 + $0xa8] sm:$0xff]
    %v2874 = vld [vmem:[#allocation12 + $0xb0] sm:$0xff]
    %v2875 = vld [vmem:[#allocation12 + $0xb8] sm:$0xff]
    %v2876 = vld [vmem:[#allocation12 + $0xc0] sm:$0xff]
    %v2877 = vld [vmem:[#allocation12 + $0xc8] sm:$0xff]
    %v2878 = vld [vmem:[#allocation12 + $0xd0] sm:$0xff]
    %v2879 = vld [vmem:[#allocation12 + $0xd8] sm:$0xff]
    %v2880 = vld [vmem:[#allocation12 + $0xe0] sm:$0xff]
    %v2881 = vld [vmem:[#allocation12 + $0xe8] sm:$0xff]
    %v2882 = vld [vmem:[#allocation12 + $0xf0] sm:$0xff]
    %v2883 = vld [vmem:[#allocation12 + $0xf8] sm:$0xff]
    %v2884 = vld [vmem:[%s9] sm:$0x3]
    %v2886 = vlaneseq
    %v2887 = vshrl.u32 %v2886, 7
    %v2888 = vsub.s32 0, %v2887
    %v2889 = vrot.slane %v2884, %v2888
    %v2890 = vlaneseq
    %v2891 = vshrl.u32 %v2890, 7
    %v2892 = vsub.s32 1, %v2891
    %v2893 = vrot.slane %v2884, %v2892
    %v2896 = vand.u32 %v2853, 4294901760
    %2897 = vmatprep.subr.mxu0 %v2896
    %v2898 = vand.u32 %v2852, 4294901760
    %2899 = vmatpush1.msra.mxu0 %v2898
    %v2900 = vand.u32 %v2855, 4294901760
    %2901 = vmatprep.subr.mxu0 %v2900
    %v2902 = vand.u32 %v2854, 4294901760
    %2903 = vmatpush1.msra.mxu0 %v2902
    %v2904 = vand.u32 %v2857, 4294901760
    %2905 = vmatprep.subr.mxu0 %v2904
    %v2906 = vand.u32 %v2856, 4294901760
    %2907 = vmatpush1.msra.mxu0 %v2906
    %v2908 = vand.u32 %v2859, 4294901760
    %2909 = vmatprep.subr.mxu0 %v2908
    %v2910 = vand.u32 %v2858, 4294901760
    %2911 = vmatpush1.msra.mxu0 %v2910
    %v2912 = vand.u32 %v2861, 4294901760
    %2913 = vmatprep.subr.mxu0 %v2912
    %v2914 = vand.u32 %v2860, 4294901760
    %2915 = vmatpush1.msra.mxu0 %v2914
    %v2916 = vand.u32 %v2863, 4294901760
    %2917 = vmatprep.subr.mxu0 %v2916
    %v2918 = vand.u32 %v2862, 4294901760
    %2919 = vmatpush1.msra.mxu0 %v2918
    %v2920 = vand.u32 %v2865, 4294901760
    %2921 = vmatprep.subr.mxu0 %v2920
    %v2922 = vand.u32 %v2864, 4294901760
    %2923 = vmatpush1.msra.mxu0 %v2922
    %v2924 = vand.u32 %v2867, 4294901760
    %2925 = vmatprep.subr.mxu0 %v2924
    %v2926 = vand.u32 %v2866, 4294901760
    %2927 = vmatpush1.msra.mxu0 %v2926
    %v2928 = vand.u32 %v2869, 4294901760
    %2929 = vmatprep.subr.mxu0 %v2928
    %v2930 = vand.u32 %v2868, 4294901760
    %2931 = vmatpush1.msra.mxu0 %v2930
    %v2932 = vand.u32 %v2871, 4294901760
    %2933 = vmatprep.subr.mxu0 %v2932
    %v2934 = vand.u32 %v2870, 4294901760
    %2935 = vmatpush1.msra.mxu0 %v2934
    %v2936 = vand.u32 %v2873, 4294901760
    %2937 = vmatprep.subr.mxu0 %v2936
    %v2938 = vand.u32 %v2872, 4294901760
    %2939 = vmatpush1.msra.mxu0 %v2938
    %v2940 = vand.u32 %v2875, 4294901760
    %2941 = vmatprep.subr.mxu0 %v2940
    %v2942 = vand.u32 %v2874, 4294901760
    %2943 = vmatpush1.msra.mxu0 %v2942
    %v2944 = vand.u32 %v2877, 4294901760
    %2945 = vmatprep.subr.mxu0 %v2944
    %v2946 = vand.u32 %v2876, 4294901760
    %2947 = vmatpush1.msra.mxu0 %v2946
    %v2948 = vand.u32 %v2879, 4294901760
    %2949 = vmatprep.subr.mxu0 %v2948
    %v2950 = vand.u32 %v2878, 4294901760
    %2951 = vmatpush1.msra.mxu0 %v2950
    %v2952 = vand.u32 %v2881, 4294901760
    %2953 = vmatprep.subr.mxu0 %v2952
    %v2954 = vand.u32 %v2880, 4294901760
    %2955 = vmatpush1.msra.mxu0 %v2954
    %v2956 = vand.u32 %v2883, 4294901760
    %2957 = vmatprep.subr.mxu0 %v2956
    %v2958 = vand.u32 %v2882, 4294901760
    %2959 = vmatpush1.msra.mxu0 %v2958
    %2960 = vmatprep.subr.mxu0 0.0
    %2961 = vmatpush1.msra.mxu0 0.0
    %2962 = vmatprep.subr.mxu0 0.0
    %2963 = vmatpush1.msra.mxu0 0.0
    %2964 = vmatprep.subr.mxu0 0.0
    %2965 = vmatpush1.msra.mxu0 0.0
    %2966 = vmatprep.subr.mxu0 0.0
    %2967 = vmatpush1.msra.mxu0 0.0
    %2968 = vmatprep.subr.mxu0 0.0
    %2969 = vmatpush1.msra.mxu0 0.0
    %2970 = vmatprep.subr.mxu0 0.0
    %2971 = vmatpush1.msra.mxu0 0.0
    %2972 = vmatprep.subr.mxu0 0.0
    %2973 = vmatpush1.msra.mxu0 0.0
    %2974 = vmatprep.subr.mxu0 0.0
    %2975 = vmatpush1.msra.mxu0 0.0
    %2976 = vmatprep.subr.mxu0 0.0
    %2977 = vmatpush1.msra.mxu0 0.0
    %2978 = vmatprep.subr.mxu0 0.0
    %2979 = vmatpush1.msra.mxu0 0.0
    %2980 = vmatprep.subr.mxu0 0.0
    %2981 = vmatpush1.msra.mxu0 0.0
    %2982 = vmatprep.subr.mxu0 0.0
    %2983 = vmatpush1.msra.mxu0 0.0
    %2984 = vmatprep.subr.mxu0 0.0
    %2985 = vmatpush1.msra.mxu0 0.0
    %2986 = vmatprep.subr.mxu0 0.0
    %2987 = vmatpush1.msra.mxu0 0.0
    %2988 = vmatprep.subr.mxu0 0.0
    %2989 = vmatpush1.msra.mxu0 0.0
    %2990 = vmatprep.subr.mxu0 0.0
    %2991 = vmatpush1.msra.mxu0 0.0
    %2992 = vmatprep.mubr.f32.mxu0 0.0
    %v2993 = vand.u32 %v1952, 4294901760
    %v2994 = vsub.f32 %v1952, %v2993
    %v2995 = vand.u32 %v2994, 4294901760
    %v2996 = vsub.f32 %v2994, %v2995
    %v2997 = vand.u32 %v2996, 4294901760
    %2998 = vmatmul.mubr.f32.gmra.mrb[0].mxu0 %v2997
    %v2999 = vpop.f32.mrb[0].mxu0
    %v3000 = vadd.f32 %v2889, %v2999
    %v3001 = vpop.f32.mrb[0].mxu0
    %v3002 = vadd.f32 %v2893, %v3001
    %3003 = vdwg.mxu0
    %v3004 = vand.u32 %v2853, 4294901760
    %v3005 = vsub.f32 %v2853, %v3004
    %v3006 = vand.u32 %v3005, 4294901760
    %v3007 = vsub.f32 %v3005, %v3006
    %v3008 = vand.u32 %v3007, 4294901760
    %3009 = vmatprep.subr.mxu0 %v3008
    %v3010 = vand.u32 %v2852, 4294901760
    %v3011 = vsub.f32 %v2852, %v3010
    %v3012 = vand.u32 %v3011, 4294901760
    %v3013 = vsub.f32 %v3011, %v3012
    %v3014 = vand.u32 %v3013, 4294901760
    %3015 = vmatpush1.msra.mxu0 %v3014
    %v3016 = vand.u32 %v2855, 4294901760
    %v3017 = vsub.f32 %v2855, %v3016
    %v3018 = vand.u32 %v3017, 4294901760
    %v3019 = vsub.f32 %v3017, %v3018
    %v3020 = vand.u32 %v3019, 4294901760
    %3021 = vmatprep.subr.mxu0 %v3020
    %v3022 = vand.u32 %v2854, 4294901760
    %v3023 = vsub.f32 %v2854, %v3022
    %v3024 = vand.u32 %v3023, 4294901760
    %v3025 = vsub.f32 %v3023, %v3024
    %v3026 = vand.u32 %v3025, 4294901760
    %3027 = vmatpush1.msra.mxu0 %v3026
    %v3028 = vand.u32 %v2857, 4294901760
    %v3029 = vsub.f32 %v2857, %v3028
    %v3030 = vand.u32 %v3029, 4294901760
    %v3031 = vsub.f32 %v3029, %v3030
    %v3032 = vand.u32 %v3031, 4294901760
    %3033 = vmatprep.subr.mxu0 %v3032
    %v3034 = vand.u32 %v2856, 4294901760
    %v3035 = vsub.f32 %v2856, %v3034
    %v3036 = vand.u32 %v3035, 4294901760
    %v3037 = vsub.f32 %v3035, %v3036
    %v3038 = vand.u32 %v3037, 4294901760
    %3039 = vmatpush1.msra.mxu0 %v3038
    %v3040 = vand.u32 %v2859, 4294901760
    %v3041 = vsub.f32 %v2859, %v3040
    %v3042 = vand.u32 %v3041, 4294901760
    %v3043 = vsub.f32 %v3041, %v3042
    %v3044 = vand.u32 %v3043, 4294901760
    %3045 = vmatprep.subr.mxu0 %v3044
    %v3046 = vand.u32 %v2858, 4294901760
    %v3047 = vsub.f32 %v2858, %v3046
    %v3048 = vand.u32 %v3047, 4294901760
    %v3049 = vsub.f32 %v3047, %v3048
    %v3050 = vand.u32 %v3049, 4294901760
    %3051 = vmatpush1.msra.mxu0 %v3050
    %v3052 = vand.u32 %v2861, 4294901760
    %v3053 = vsub.f32 %v2861, %v3052
    %v3054 = vand.u32 %v3053, 4294901760
    %v3055 = vsub.f32 %v3053, %v3054
    %v3056 = vand.u32 %v3055, 4294901760
    %3057 = vmatprep.subr.mxu0 %v3056
    %v3058 = vand.u32 %v2860, 4294901760
    %v3059 = vsub.f32 %v2860, %v3058
    %v3060 = vand.u32 %v3059, 4294901760
    %v3061 = vsub.f32 %v3059, %v3060
    %v3062 = vand.u32 %v3061, 4294901760
    %3063 = vmatpush1.msra.mxu0 %v3062
    %v3064 = vand.u32 %v2863, 4294901760
    %v3065 = vsub.f32 %v2863, %v3064
    %v3066 = vand.u32 %v3065, 4294901760
    %v3067 = vsub.f32 %v3065, %v3066
    %v3068 = vand.u32 %v3067, 4294901760
    %3069 = vmatprep.subr.mxu0 %v3068
    %v3070 = vand.u32 %v2862, 4294901760
    %v3071 = vsub.f32 %v2862, %v3070
    %v3072 = vand.u32 %v3071, 4294901760
    %v3073 = vsub.f32 %v3071, %v3072
    %v3074 = vand.u32 %v3073, 4294901760
    %3075 = vmatpush1.msra.mxu0 %v3074
    %v3076 = vand.u32 %v2865, 4294901760
    %v3077 = vsub.f32 %v2865, %v3076
    %v3078 = vand.u32 %v3077, 4294901760
    %v3079 = vsub.f32 %v3077, %v3078
    %v3080 = vand.u32 %v3079, 4294901760
    %3081 = vmatprep.subr.mxu0 %v3080
    %v3082 = vand.u32 %v2864, 4294901760
    %v3083 = vsub.f32 %v2864, %v3082
    %v3084 = vand.u32 %v3083, 4294901760
    %v3085 = vsub.f32 %v3083, %v3084
    %v3086 = vand.u32 %v3085, 4294901760
    %3087 = vmatpush1.msra.mxu0 %v3086
    %v3088 = vand.u32 %v2867, 4294901760
    %v3089 = vsub.f32 %v2867, %v3088
    %v3090 = vand.u32 %v3089, 4294901760
    %v3091 = vsub.f32 %v3089, %v3090
    %v3092 = vand.u32 %v3091, 4294901760
    %3093 = vmatprep.subr.mxu0 %v3092
    %v3094 = vand.u32 %v2866, 4294901760
    %v3095 = vsub.f32 %v2866, %v3094
    %v3096 = vand.u32 %v3095, 4294901760
    %v3097 = vsub.f32 %v3095, %v3096
    %v3098 = vand.u32 %v3097, 4294901760
    %3099 = vmatpush1.msra.mxu0 %v3098
    %v3100 = vand.u32 %v2869, 4294901760
    %v3101 = vsub.f32 %v2869, %v3100
    %v3102 = vand.u32 %v3101, 4294901760
    %v3103 = vsub.f32 %v3101, %v3102
    %v3104 = vand.u32 %v3103, 4294901760
    %3105 = vmatprep.subr.mxu0 %v3104
    %v3106 = vand.u32 %v2868, 4294901760
    %v3107 = vsub.f32 %v2868, %v3106
    %v3108 = vand.u32 %v3107, 4294901760
    %v3109 = vsub.f32 %v3107, %v3108
    %v3110 = vand.u32 %v3109, 4294901760
    %3111 = vmatpush1.msra.mxu0 %v3110
    %v3112 = vand.u32 %v2871, 4294901760
    %v3113 = vsub.f32 %v2871, %v3112
    %v3114 = vand.u32 %v3113, 4294901760
    %v3115 = vsub.f32 %v3113, %v3114
    %v3116 = vand.u32 %v3115, 4294901760
    %3117 = vmatprep.subr.mxu0 %v3116
    %v3118 = vand.u32 %v2870, 4294901760
    %v3119 = vsub.f32 %v2870, %v3118
    %v3120 = vand.u32 %v3119, 4294901760
    %v3121 = vsub.f32 %v3119, %v3120
    %v3122 = vand.u32 %v3121, 4294901760
    %3123 = vmatpush1.msra.mxu0 %v3122
    %v3124 = vand.u32 %v2873, 4294901760
    %v3125 = vsub.f32 %v2873, %v3124
    %v3126 = vand.u32 %v3125, 4294901760
    %v3127 = vsub.f32 %v3125, %v3126
    %v3128 = vand.u32 %v3127, 4294901760
    %3129 = vmatprep.subr.mxu0 %v3128
    %v3130 = vand.u32 %v2872, 4294901760
    %v3131 = vsub.f32 %v2872, %v3130
    %v3132 = vand.u32 %v3131, 4294901760
    %v3133 = vsub.f32 %v3131, %v3132
    %v3134 = vand.u32 %v3133, 4294901760
    %3135 = vmatpush1.msra.mxu0 %v3134
    %v3136 = vand.u32 %v2875, 4294901760
    %v3137 = vsub.f32 %v2875, %v3136
    %v3138 = vand.u32 %v3137, 4294901760
    %v3139 = vsub.f32 %v3137, %v3138
    %v3140 = vand.u32 %v3139, 4294901760
    %3141 = vmatprep.subr.mxu0 %v3140
    %v3142 = vand.u32 %v2874, 4294901760
    %v3143 = vsub.f32 %v2874, %v3142
    %v3144 = vand.u32 %v3143, 4294901760
    %v3145 = vsub.f32 %v3143, %v3144
    %v3146 = vand.u32 %v3145, 4294901760
    %3147 = vmatpush1.msra.mxu0 %v3146
    %v3148 = vand.u32 %v2877, 4294901760
    %v3149 = vsub.f32 %v2877, %v3148
    %v3150 = vand.u32 %v3149, 4294901760
    %v3151 = vsub.f32 %v3149, %v3150
    %v3152 = vand.u32 %v3151, 4294901760
    %3153 = vmatprep.subr.mxu0 %v3152
    %v3154 = vand.u32 %v2876, 4294901760
    %v3155 = vsub.f32 %v2876, %v3154
    %v3156 = vand.u32 %v3155, 4294901760
    %v3157 = vsub.f32 %v3155, %v3156
    %v3158 = vand.u32 %v3157, 4294901760
    %3159 = vmatpush1.msra.mxu0 %v3158
    %v3160 = vand.u32 %v2879, 4294901760
    %v3161 = vsub.f32 %v2879, %v3160
    %v3162 = vand.u32 %v3161, 4294901760
    %v3163 = vsub.f32 %v3161, %v3162
    %v3164 = vand.u32 %v3163, 4294901760
    %3165 = vmatprep.subr.mxu0 %v3164
    %v3166 = vand.u32 %v2878, 4294901760
    %v3167 = vsub.f32 %v2878, %v3166
    %v3168 = vand.u32 %v3167, 4294901760
    %v3169 = vsub.f32 %v3167, %v3168
    %v3170 = vand.u32 %v3169, 4294901760
    %3171 = vmatpush1.msra.mxu0 %v3170
    %v3172 = vand.u32 %v2881, 4294901760
    %v3173 = vsub.f32 %v2881, %v3172
    %v3174 = vand.u32 %v3173, 4294901760
    %v3175 = vsub.f32 %v3173, %v3174
    %v3176 = vand.u32 %v3175, 4294901760
    %3177 = vmatprep.subr.mxu0 %v3176
    %v3178 = vand.u32 %v2880, 4294901760
    %v3179 = vsub.f32 %v2880, %v3178
    %v3180 = vand.u32 %v3179, 4294901760
    %v3181 = vsub.f32 %v3179, %v3180
    %v3182 = vand.u32 %v3181, 4294901760
    %3183 = vmatpush1.msra.mxu0 %v3182
    %v3184 = vand.u32 %v2883, 4294901760
    %v3185 = vsub.f32 %v2883, %v3184
    %v3186 = vand.u32 %v3185, 4294901760
    %v3187 = vsub.f32 %v3185, %v3186
    %v3188 = vand.u32 %v3187, 4294901760
    %3189 = vmatprep.subr.mxu0 %v3188
    %v3190 = vand.u32 %v2882, 4294901760
    %v3191 = vsub.f32 %v2882, %v3190
    %v3192 = vand.u32 %v3191, 4294901760
    %v3193 = vsub.f32 %v3191, %v3192
    %v3194 = vand.u32 %v3193, 4294901760
    %3195 = vmatpush1.msra.mxu0 %v3194
    %3196 = vmatprep.subr.mxu0 0.0
    %3197 = vmatpush1.msra.mxu0 0.0
    %3198 = vmatprep.subr.mxu0 0.0
    %3199 = vmatpush1.msra.mxu0 0.0
    %3200 = vmatprep.subr.mxu0 0.0
    %3201 = vmatpush1.msra.mxu0 0.0
    %3202 = vmatprep.subr.mxu0 0.0
    %3203 = vmatpush1.msra.mxu0 0.0
    %3204 = vmatprep.subr.mxu0 0.0
    %3205 = vmatpush1.msra.mxu0 0.0
    %3206 = vmatprep.subr.mxu0 0.0
    %3207 = vmatpush1.msra.mxu0 0.0
    %3208 = vmatprep.subr.mxu0 0.0
    %3209 = vmatpush1.msra.mxu0 0.0
    %3210 = vmatprep.subr.mxu0 0.0
    %3211 = vmatpush1.msra.mxu0 0.0
    %3212 = vmatprep.subr.mxu0 0.0
    %3213 = vmatpush1.msra.mxu0 0.0
    %3214 = vmatprep.subr.mxu0 0.0
    %3215 = vmatpush1.msra.mxu0 0.0
    %3216 = vmatprep.subr.mxu0 0.0
    %3217 = vmatpush1.msra.mxu0 0.0
    %3218 = vmatprep.subr.mxu0 0.0
    %3219 = vmatpush1.msra.mxu0 0.0
    %3220 = vmatprep.subr.mxu0 0.0
    %3221 = vmatpush1.msra.mxu0 0.0
    %3222 = vmatprep.subr.mxu0 0.0
    %3223 = vmatpush1.msra.mxu0 0.0
    %3224 = vmatprep.subr.mxu0 0.0
    %3225 = vmatpush1.msra.mxu0 0.0
    %3226 = vmatprep.subr.mxu0 0.0
    %3227 = vmatpush1.msra.mxu0 0.0
    %3228 = vmatprep.mubr.f32.mxu0 0.0
    %v3229 = vand.u32 %v1952, 4294901760
    %3230 = vmatmul.mubr.f32.gmra.mrb[0].mxu0 %v3229
    %v3231 = vpop.f32.mrb[0].mxu0
    %v3232 = vadd.f32 %v3000, %v3231
    %v3233 = vpop.f32.mrb[0].mxu0
    %v3234 = vadd.f32 %v3002, %v3233
    %3235 = vdwg.mxu0
    %v3236 = vand.u32 %v2853, 4294901760
    %v3237 = vsub.f32 %v2853, %v3236
    %3238 = vmatprep.subr.mxu0 %v3237
    %v3239 = vand.u32 %v2852, 4294901760
    %v3240 = vsub.f32 %v2852, %v3239
    %3241 = vmatpush1.msra.mxu0 %v3240
    %v3242 = vand.u32 %v2855, 4294901760
    %v3243 = vsub.f32 %v2855, %v3242
    %3244 = vmatprep.subr.mxu0 %v3243
    %v3245 = vand.u32 %v2854, 4294901760
    %v3246 = vsub.f32 %v2854, %v3245
    %3247 = vmatpush1.msra.mxu0 %v3246
    %v3248 = vand.u32 %v2857, 4294901760
    %v3249 = vsub.f32 %v2857, %v3248
    %3250 = vmatprep.subr.mxu0 %v3249
    %v3251 = vand.u32 %v2856, 4294901760
    %v3252 = vsub.f32 %v2856, %v3251
    %3253 = vmatpush1.msra.mxu0 %v3252
    %v3254 = vand.u32 %v2859, 4294901760
    %v3255 = vsub.f32 %v2859, %v3254
    %3256 = vmatprep.subr.mxu0 %v3255
    %v3257 = vand.u32 %v2858, 4294901760
    %v3258 = vsub.f32 %v2858, %v3257
    %3259 = vmatpush1.msra.mxu0 %v3258
    %v3260 = vand.u32 %v2861, 4294901760
    %v3261 = vsub.f32 %v2861, %v3260
    %3262 = vmatprep.subr.mxu0 %v3261
    %v3263 = vand.u32 %v2860, 4294901760
    %v3264 = vsub.f32 %v2860, %v3263
    %3265 = vmatpush1.msra.mxu0 %v3264
    %v3266 = vand.u32 %v2863, 4294901760
    %v3267 = vsub.f32 %v2863, %v3266
    %3268 = vmatprep.subr.mxu0 %v3267
    %v3269 = vand.u32 %v2862, 4294901760
    %v3270 = vsub.f32 %v2862, %v3269
    %3271 = vmatpush1.msra.mxu0 %v3270
    %v3272 = vand.u32 %v2865, 4294901760
    %v3273 = vsub.f32 %v2865, %v3272
    %3274 = vmatprep.subr.mxu0 %v3273
    %v3275 = vand.u32 %v2864, 4294901760
    %v3276 = vsub.f32 %v2864, %v3275
    %3277 = vmatpush1.msra.mxu0 %v3276
    %v3278 = vand.u32 %v2867, 4294901760
    %v3279 = vsub.f32 %v2867, %v3278
    %3280 = vmatprep.subr.mxu0 %v3279
    %v3281 = vand.u32 %v2866, 4294901760
    %v3282 = vsub.f32 %v2866, %v3281
    %3283 = vmatpush1.msra.mxu0 %v3282
    %v3284 = vand.u32 %v2869, 4294901760
    %v3285 = vsub.f32 %v2869, %v3284
    %3286 = vmatprep.subr.mxu0 %v3285
    %v3287 = vand.u32 %v2868, 4294901760
    %v3288 = vsub.f32 %v2868, %v3287
    %3289 = vmatpush1.msra.mxu0 %v3288
    %v3290 = vand.u32 %v2871, 4294901760
    %v3291 = vsub.f32 %v2871, %v3290
    %3292 = vmatprep.subr.mxu0 %v3291
    %v3293 = vand.u32 %v2870, 4294901760
    %v3294 = vsub.f32 %v2870, %v3293
    %3295 = vmatpush1.msra.mxu0 %v3294
    %v3296 = vand.u32 %v2873, 4294901760
    %v3297 = vsub.f32 %v2873, %v3296
    %3298 = vmatprep.subr.mxu0 %v3297
    %v3299 = vand.u32 %v2872, 4294901760
    %v3300 = vsub.f32 %v2872, %v3299
    %3301 = vmatpush1.msra.mxu0 %v3300
    %v3302 = vand.u32 %v2875, 4294901760
    %v3303 = vsub.f32 %v2875, %v3302
    %3304 = vmatprep.subr.mxu0 %v3303
    %v3305 = vand.u32 %v2874, 4294901760
    %v3306 = vsub.f32 %v2874, %v3305
    %3307 = vmatpush1.msra.mxu0 %v3306
    %v3308 = vand.u32 %v2877, 4294901760
    %v3309 = vsub.f32 %v2877, %v3308
    %3310 = vmatprep.subr.mxu0 %v3309
    %v3311 = vand.u32 %v2876, 4294901760
    %v3312 = vsub.f32 %v2876, %v3311
    %3313 = vmatpush1.msra.mxu0 %v3312
    %v3314 = vand.u32 %v2879, 4294901760
    %v3315 = vsub.f32 %v2879, %v3314
    %3316 = vmatprep.subr.mxu0 %v3315
    %v3317 = vand.u32 %v2878, 4294901760
    %v3318 = vsub.f32 %v2878, %v3317
    %3319 = vmatpush1.msra.mxu0 %v3318
    %v3320 = vand.u32 %v2881, 4294901760
    %v3321 = vsub.f32 %v2881, %v3320
    %3322 = vmatprep.subr.mxu0 %v3321
    %v3323 = vand.u32 %v2880, 4294901760
    %v3324 = vsub.f32 %v2880, %v3323
    %3325 = vmatpush1.msra.mxu0 %v3324
    %v3326 = vand.u32 %v2883, 4294901760
    %v3327 = vsub.f32 %v2883, %v3326
    %3328 = vmatprep.subr.mxu0 %v3327
    %v3329 = vand.u32 %v2882, 4294901760
    %v3330 = vsub.f32 %v2882, %v3329
    %3331 = vmatpush1.msra.mxu0 %v3330
    %3332 = vmatprep.subr.mxu0 0.0
    %3333 = vmatpush1.msra.mxu0 0.0
    %3334 = vmatprep.subr.mxu0 0.0
    %3335 = vmatpush1.msra.mxu0 0.0
    %3336 = vmatprep.subr.mxu0 0.0
    %3337 = vmatpush1.msra.mxu0 0.0
    %3338 = vmatprep.subr.mxu0 0.0
    %3339 = vmatpush1.msra.mxu0 0.0
    %3340 = vmatprep.subr.mxu0 0.0
    %3341 = vmatpush1.msra.mxu0 0.0
    %3342 = vmatprep.subr.mxu0 0.0
    %3343 = vmatpush1.msra.mxu0 0.0
    %3344 = vmatprep.subr.mxu0 0.0
    %3345 = vmatpush1.msra.mxu0 0.0
    %3346 = vmatprep.subr.mxu0 0.0
    %3347 = vmatpush1.msra.mxu0 0.0
    %3348 = vmatprep.subr.mxu0 0.0
    %3349 = vmatpush1.msra.mxu0 0.0
    %3350 = vmatprep.subr.mxu0 0.0
    %3351 = vmatpush1.msra.mxu0 0.0
    %3352 = vmatprep.subr.mxu0 0.0
    %3353 = vmatpush1.msra.mxu0 0.0
    %3354 = vmatprep.subr.mxu0 0.0
    %3355 = vmatpush1.msra.mxu0 0.0
    %3356 = vmatprep.subr.mxu0 0.0
    %3357 = vmatpush1.msra.mxu0 0.0
    %3358 = vmatprep.subr.mxu0 0.0
    %3359 = vmatpush1.msra.mxu0 0.0
    %3360 = vmatprep.subr.mxu0 0.0
    %3361 = vmatpush1.msra.mxu0 0.0
    %3362 = vmatprep.subr.mxu0 0.0
    %3363 = vmatpush1.msra.mxu0 0.0
    %3364 = vmatprep.mubr.f32.mxu0 0.0
    %v3365 = vand.u32 %v1952, 4294901760
    %v3366 = vsub.f32 %v1952, %v3365
    %3367 = vmatmul.mubr.f32.gmra.mrb[0].mxu0 %v3366
    %v3368 = vpop.f32.mrb[0].mxu0
    %v3369 = vadd.f32 %v3232, %v3368
    %v3370 = vpop.f32.mrb[0].mxu0
    %v3371 = vadd.f32 %v3234, %v3370
    %3372 = vdwg.mxu0
    %v3373 = vand.u32 %v2853, 4294901760
    %3374 = vmatprep.subr.mxu0 %v3373
    %v3375 = vand.u32 %v2852, 4294901760
    %3376 = vmatpush1.msra.mxu0 %v3375
    %v3377 = vand.u32 %v2855, 4294901760
    %3378 = vmatprep.subr.mxu0 %v3377
    %v3379 = vand.u32 %v2854, 4294901760
    %3380 = vmatpush1.msra.mxu0 %v3379
    %v3381 = vand.u32 %v2857, 4294901760
    %3382 = vmatprep.subr.mxu0 %v3381
    %v3383 = vand.u32 %v2856, 4294901760
    %3384 = vmatpush1.msra.mxu0 %v3383
    %v3385 = vand.u32 %v2859, 4294901760
    %3386 = vmatprep.subr.mxu0 %v3385
    %v3387 = vand.u32 %v2858, 4294901760
    %3388 = vmatpush1.msra.mxu0 %v3387
    %v3389 = vand.u32 %v2861, 4294901760
    %3390 = vmatprep.subr.mxu0 %v3389
    %v3391 = vand.u32 %v2860, 4294901760
    %3392 = vmatpush1.msra.mxu0 %v3391
    %v3393 = vand.u32 %v2863, 4294901760
    %3394 = vmatprep.subr.mxu0 %v3393
    %v3395 = vand.u32 %v2862, 4294901760
    %3396 = vmatpush1.msra.mxu0 %v3395
    %v3397 = vand.u32 %v2865, 4294901760
    %3398 = vmatprep.subr.mxu0 %v3397
    %v3399 = vand.u32 %v2864, 4294901760
    %3400 = vmatpush1.msra.mxu0 %v3399
    %v3401 = vand.u32 %v2867, 4294901760
    %3402 = vmatprep.subr.mxu0 %v3401
    %v3403 = vand.u32 %v2866, 4294901760
    %3404 = vmatpush1.msra.mxu0 %v3403
    %v3405 = vand.u32 %v2869, 4294901760
    %3406 = vmatprep.subr.mxu0 %v3405
    %v3407 = vand.u32 %v2868, 4294901760
    %3408 = vmatpush1.msra.mxu0 %v3407
    %v3409 = vand.u32 %v2871, 4294901760
    %3410 = vmatprep.subr.mxu0 %v3409
    %v3411 = vand.u32 %v2870, 4294901760
    %3412 = vmatpush1.msra.mxu0 %v3411
    %v3413 = vand.u32 %v2873, 4294901760
    %3414 = vmatprep.subr.mxu0 %v3413
    %v3415 = vand.u32 %v2872, 4294901760
    %3416 = vmatpush1.msra.mxu0 %v3415
    %v3417 = vand.u32 %v2875, 4294901760
    %3418 = vmatprep.subr.mxu0 %v3417
    %v3419 = vand.u32 %v2874, 4294901760
    %3420 = vmatpush1.msra.mxu0 %v3419
    %v3421 = vand.u32 %v2877, 4294901760
    %3422 = vmatprep.subr.mxu0 %v3421
    %v3423 = vand.u32 %v2876, 4294901760
    %3424 = vmatpush1.msra.mxu0 %v3423
    %v3425 = vand.u32 %v2879, 4294901760
    %3426 = vmatprep.subr.mxu0 %v3425
    %v3427 = vand.u32 %v2878, 4294901760
    %3428 = vmatpush1.msra.mxu0 %v3427
    %v3429 = vand.u32 %v2881, 4294901760
    %3430 = vmatprep.subr.mxu0 %v3429
    %v3431 = vand.u32 %v2880, 4294901760
    %3432 = vmatpush1.msra.mxu0 %v3431
    %v3433 = vand.u32 %v2883, 4294901760
    %3434 = vmatprep.subr.mxu0 %v3433
    %v3435 = vand.u32 %v2882, 4294901760
    %3436 = vmatpush1.msra.mxu0 %v3435
    %3437 = vmatprep.subr.mxu0 0.0
    %3438 = vmatpush1.msra.mxu0 0.0
    %3439 = vmatprep.subr.mxu0 0.0
    %3440 = vmatpush1.msra.mxu0 0.0
    %3441 = vmatprep.subr.mxu0 0.0
    %3442 = vmatpush1.msra.mxu0 0.0
    %3443 = vmatprep.subr.mxu0 0.0
    %3444 = vmatpush1.msra.mxu0 0.0
    %3445 = vmatprep.subr.mxu0 0.0
    %3446 = vmatpush1.msra.mxu0 0.0
    %3447 = vmatprep.subr.mxu0 0.0
    %3448 = vmatpush1.msra.mxu0 0.0
    %3449 = vmatprep.subr.mxu0 0.0
    %3450 = vmatpush1.msra.mxu0 0.0
    %3451 = vmatprep.subr.mxu0 0.0
    %3452 = vmatpush1.msra.mxu0 0.0
    %3453 = vmatprep.subr.mxu0 0.0
    %3454 = vmatpush1.msra.mxu0 0.0
    %3455 = vmatprep.subr.mxu0 0.0
    %3456 = vmatpush1.msra.mxu0 0.0
    %3457 = vmatprep.subr.mxu0 0.0
    %3458 = vmatpush1.msra.mxu0 0.0
    %3459 = vmatprep.subr.mxu0 0.0
    %3460 = vmatpush1.msra.mxu0 0.0
    %3461 = vmatprep.subr.mxu0 0.0
    %3462 = vmatpush1.msra.mxu0 0.0
    %3463 = vmatprep.subr.mxu0 0.0
    %3464 = vmatpush1.msra.mxu0 0.0
    %3465 = vmatprep.subr.mxu0 0.0
    %3466 = vmatpush1.msra.mxu0 0.0
    %3467 = vmatprep.subr.mxu0 0.0
    %3468 = vmatpush1.msra.mxu0 0.0
    %3469 = vmatprep.mubr.f32.mxu0 0.0
    %v3470 = vand.u32 %v1952, 4294901760
    %v3471 = vsub.f32 %v1952, %v3470
    %v3472 = vand.u32 %v3471, 4294901760
    %3473 = vmatmul.mubr.f32.gmra.mrb[0].mxu0 %v3472
    %v3474 = vpop.f32.mrb[0].mxu0
    %v3475 = vadd.f32 %v3369, %v3474
    %v3476 = vpop.f32.mrb[0].mxu0
    %v3477 = vadd.f32 %v3371, %v3476
    %3478 = vdwg.mxu0
    %v3479 = vand.u32 %v2853, 4294901760
    %v3480 = vsub.f32 %v2853, %v3479
    %v3481 = vand.u32 %v3480, 4294901760
    %3482 = vmatprep.subr.mxu0 %v3481
    %v3483 = vand.u32 %v2852, 4294901760
    %v3484 = vsub.f32 %v2852, %v3483
    %v3485 = vand.u32 %v3484, 4294901760
    %3486 = vmatpush1.msra.mxu0 %v3485
    %v3487 = vand.u32 %v2855, 4294901760
    %v3488 = vsub.f32 %v2855, %v3487
    %v3489 = vand.u32 %v3488, 4294901760
    %3490 = vmatprep.subr.mxu0 %v3489
    %v3491 = vand.u32 %v2854, 4294901760
    %v3492 = vsub.f32 %v2854, %v3491
    %v3493 = vand.u32 %v3492, 4294901760
    %3494 = vmatpush1.msra.mxu0 %v3493
    %v3495 = vand.u32 %v2857, 4294901760
    %v3496 = vsub.f32 %v2857, %v3495
    %v3497 = vand.u32 %v3496, 4294901760
    %3498 = vmatprep.subr.mxu0 %v3497
    %v3499 = vand.u32 %v2856, 4294901760
    %v3500 = vsub.f32 %v2856, %v3499
    %v3501 = vand.u32 %v3500, 4294901760
    %3502 = vmatpush1.msra.mxu0 %v3501
    %v3503 = vand.u32 %v2859, 4294901760
    %v3504 = vsub.f32 %v2859, %v3503
    %v3505 = vand.u32 %v3504, 4294901760
    %3506 = vmatprep.subr.mxu0 %v3505
    %v3507 = vand.u32 %v2858, 4294901760
    %v3508 = vsub.f32 %v2858, %v3507
    %v3509 = vand.u32 %v3508, 4294901760
    %3510 = vmatpush1.msra.mxu0 %v3509
    %v3511 = vand.u32 %v2861, 4294901760
    %v3512 = vsub.f32 %v2861, %v3511
    %v3513 = vand.u32 %v3512, 4294901760
    %3514 = vmatprep.subr.mxu0 %v3513
    %v3515 = vand.u32 %v2860, 4294901760
    %v3516 = vsub.f32 %v2860, %v3515
    %v3517 = vand.u32 %v3516, 4294901760
    %3518 = vmatpush1.msra.mxu0 %v3517
    %v3519 = vand.u32 %v2863, 4294901760
    %v3520 = vsub.f32 %v2863, %v3519
    %v3521 = vand.u32 %v3520, 4294901760
    %3522 = vmatprep.subr.mxu0 %v3521
    %v3523 = vand.u32 %v2862, 4294901760
    %v3524 = vsub.f32 %v2862, %v3523
    %v3525 = vand.u32 %v3524, 4294901760
    %3526 = vmatpush1.msra.mxu0 %v3525
    %v3527 = vand.u32 %v2865, 4294901760
    %v3528 = vsub.f32 %v2865, %v3527
    %v3529 = vand.u32 %v3528, 4294901760
    %3530 = vmatprep.subr.mxu0 %v3529
    %v3531 = vand.u32 %v2864, 4294901760
    %v3532 = vsub.f32 %v2864, %v3531
    %v3533 = vand.u32 %v3532, 4294901760
    %3534 = vmatpush1.msra.mxu0 %v3533
    %v3535 = vand.u32 %v2867, 4294901760
    %v3536 = vsub.f32 %v2867, %v3535
    %v3537 = vand.u32 %v3536, 4294901760
    %3538 = vmatprep.subr.mxu0 %v3537
    %v3539 = vand.u32 %v2866, 4294901760
    %v3540 = vsub.f32 %v2866, %v3539
    %v3541 = vand.u32 %v3540, 4294901760
    %3542 = vmatpush1.msra.mxu0 %v3541
    %v3543 = vand.u32 %v2869, 4294901760
    %v3544 = vsub.f32 %v2869, %v3543
    %v3545 = vand.u32 %v3544, 4294901760
    %3546 = vmatprep.subr.mxu0 %v3545
    %v3547 = vand.u32 %v2868, 4294901760
    %v3548 = vsub.f32 %v2868, %v3547
    %v3549 = vand.u32 %v3548, 4294901760
    %3550 = vmatpush1.msra.mxu0 %v3549
    %v3551 = vand.u32 %v2871, 4294901760
    %v3552 = vsub.f32 %v2871, %v3551
    %v3553 = vand.u32 %v3552, 4294901760
    %3554 = vmatprep.subr.mxu0 %v3553
    %v3555 = vand.u32 %v2870, 4294901760
    %v3556 = vsub.f32 %v2870, %v3555
    %v3557 = vand.u32 %v3556, 4294901760
    %3558 = vmatpush1.msra.mxu0 %v3557
    %v3559 = vand.u32 %v2873, 4294901760
    %v3560 = vsub.f32 %v2873, %v3559
    %v3561 = vand.u32 %v3560, 4294901760
    %3562 = vmatprep.subr.mxu0 %v3561
    %v3563 = vand.u32 %v2872, 4294901760
    %v3564 = vsub.f32 %v2872, %v3563
    %v3565 = vand.u32 %v3564, 4294901760
    %3566 = vmatpush1.msra.mxu0 %v3565
    %v3567 = vand.u32 %v2875, 4294901760
    %v3568 = vsub.f32 %v2875, %v3567
    %v3569 = vand.u32 %v3568, 4294901760
    %3570 = vmatprep.subr.mxu0 %v3569
    %v3571 = vand.u32 %v2874, 4294901760
    %v3572 = vsub.f32 %v2874, %v3571
    %v3573 = vand.u32 %v3572, 4294901760
    %3574 = vmatpush1.msra.mxu0 %v3573
    %v3575 = vand.u32 %v2877, 4294901760
    %v3576 = vsub.f32 %v2877, %v3575
    %v3577 = vand.u32 %v3576, 4294901760
    %3578 = vmatprep.subr.mxu0 %v3577
    %v3579 = vand.u32 %v2876, 4294901760
    %v3580 = vsub.f32 %v2876, %v3579
    %v3581 = vand.u32 %v3580, 4294901760
    %3582 = vmatpush1.msra.mxu0 %v3581
    %v3583 = vand.u32 %v2879, 4294901760
    %v3584 = vsub.f32 %v2879, %v3583
    %v3585 = vand.u32 %v3584, 4294901760
    %3586 = vmatprep.subr.mxu0 %v3585
    %v3587 = vand.u32 %v2878, 4294901760
    %v3588 = vsub.f32 %v2878, %v3587
    %v3589 = vand.u32 %v3588, 4294901760
    %3590 = vmatpush1.msra.mxu0 %v3589
    %v3591 = vand.u32 %v2881, 4294901760
    %v3592 = vsub.f32 %v2881, %v3591
    %v3593 = vand.u32 %v3592, 4294901760
    %3594 = vmatprep.subr.mxu0 %v3593
    %v3595 = vand.u32 %v2880, 4294901760
    %v3596 = vsub.f32 %v2880, %v3595
    %v3597 = vand.u32 %v3596, 4294901760
    %3598 = vmatpush1.msra.mxu0 %v3597
    %v3599 = vand.u32 %v2883, 4294901760
    %v3600 = vsub.f32 %v2883, %v3599
    %v3601 = vand.u32 %v3600, 4294901760
    %3602 = vmatprep.subr.mxu0 %v3601
    %v3603 = vand.u32 %v2882, 4294901760
    %v3604 = vsub.f32 %v2882, %v3603
    %v3605 = vand.u32 %v3604, 4294901760
    %3606 = vmatpush1.msra.mxu0 %v3605
    %3607 = vmatprep.subr.mxu0 0.0
    %3608 = vmatpush1.msra.mxu0 0.0
    %3609 = vmatprep.subr.mxu0 0.0
    %3610 = vmatpush1.msra.mxu0 0.0
    %3611 = vmatprep.subr.mxu0 0.0
    %3612 = vmatpush1.msra.mxu0 0.0
    %3613 = vmatprep.subr.mxu0 0.0
    %3614 = vmatpush1.msra.mxu0 0.0
    %3615 = vmatprep.subr.mxu0 0.0
    %3616 = vmatpush1.msra.mxu0 0.0
    %3617 = vmatprep.subr.mxu0 0.0
    %3618 = vmatpush1.msra.mxu0 0.0
    %3619 = vmatprep.subr.mxu0 0.0
    %3620 = vmatpush1.msra.mxu0 0.0
    %3621 = vmatprep.subr.mxu0 0.0
    %3622 = vmatpush1.msra.mxu0 0.0
    %3623 = vmatprep.subr.mxu0 0.0
    %3624 = vmatpush1.msra.mxu0 0.0
    %3625 = vmatprep.subr.mxu0 0.0
    %3626 = vmatpush1.msra.mxu0 0.0
    %3627 = vmatprep.subr.mxu0 0.0
    %3628 = vmatpush1.msra.mxu0 0.0
    %3629 = vmatprep.subr.mxu0 0.0
    %3630 = vmatpush1.msra.mxu0 0.0
    %3631 = vmatprep.subr.mxu0 0.0
    %3632 = vmatpush1.msra.mxu0 0.0
    %3633 = vmatprep.subr.mxu0 0.0
    %3634 = vmatpush1.msra.mxu0 0.0
    %3635 = vmatprep.subr.mxu0 0.0
    %3636 = vmatpush1.msra.mxu0 0.0
    %3637 = vmatprep.subr.mxu0 0.0
    %3638 = vmatpush1.msra.mxu0 0.0
    %3639 = vmatprep.mubr.f32.mxu0 0.0
    %v3640 = vand.u32 %v1952, 4294901760
    %3641 = vmatmul.mubr.f32.gmra.mrb[0].mxu0 %v3640
    %v3642 = vpop.f32.mrb[0].mxu0
    %v3643 = vadd.f32 %v3475, %v3642
    %v3644 = vpop.f32.mrb[0].mxu0
    %v3645 = vadd.f32 %v3477, %v3644
    %3646 = vdwg.mxu0
    %v3647 = vand.u32 %v2853, 4294901760
    %3648 = vmatprep.subr.mxu0 %v3647
    %v3649 = vand.u32 %v2852, 4294901760
    %3650 = vmatpush1.msra.mxu0 %v3649
    %v3651 = vand.u32 %v2855, 4294901760
    %3652 = vmatprep.subr.mxu0 %v3651
    %v3653 = vand.u32 %v2854, 4294901760
    %3654 = vmatpush1.msra.mxu0 %v3653
    %v3655 = vand.u32 %v2857, 4294901760
    %3656 = vmatprep.subr.mxu0 %v3655
    %v3657 = vand.u32 %v2856, 4294901760
    %3658 = vmatpush1.msra.mxu0 %v3657
    %v3659 = vand.u32 %v2859, 4294901760
    %3660 = vmatprep.subr.mxu0 %v3659
    %v3661 = vand.u32 %v2858, 4294901760
    %3662 = vmatpush1.msra.mxu0 %v3661
    %v3663 = vand.u32 %v2861, 4294901760
    %3664 = vmatprep.subr.mxu0 %v3663
    %v3665 = vand.u32 %v2860, 4294901760
    %3666 = vmatpush1.msra.mxu0 %v3665
    %v3667 = vand.u32 %v2863, 4294901760
    %3668 = vmatprep.subr.mxu0 %v3667
    %v3669 = vand.u32 %v2862, 4294901760
    %3670 = vmatpush1.msra.mxu0 %v3669
    %v3671 = vand.u32 %v2865, 4294901760
    %3672 = vmatprep.subr.mxu0 %v3671
    %v3673 = vand.u32 %v2864, 4294901760
    %3674 = vmatpush1.msra.mxu0 %v3673
    %v3675 = vand.u32 %v2867, 4294901760
    %3676 = vmatprep.subr.mxu0 %v3675
    %v3677 = vand.u32 %v2866, 4294901760
    %3678 = vmatpush1.msra.mxu0 %v3677
    %v3679 = vand.u32 %v2869, 4294901760
    %3680 = vmatprep.subr.mxu0 %v3679
    %v3681 = vand.u32 %v2868, 4294901760
    %3682 = vmatpush1.msra.mxu0 %v3681
    %v3683 = vand.u32 %v2871, 4294901760
    %3684 = vmatprep.subr.mxu0 %v3683
    %v3685 = vand.u32 %v2870, 4294901760
    %3686 = vmatpush1.msra.mxu0 %v3685
    %v3687 = vand.u32 %v2873, 4294901760
    %3688 = vmatprep.subr.mxu0 %v3687
    %v3689 = vand.u32 %v2872, 4294901760
    %3690 = vmatpush1.msra.mxu0 %v3689
    %v3691 = vand.u32 %v2875, 4294901760
    %3692 = vmatprep.subr.mxu0 %v3691
    %v3693 = vand.u32 %v2874, 4294901760
    %3694 = vmatpush1.msra.mxu0 %v3693
    %v3695 = vand.u32 %v2877, 4294901760
    %3696 = vmatprep.subr.mxu0 %v3695
    %v3697 = vand.u32 %v2876, 4294901760
    %3698 = vmatpush1.msra.mxu0 %v3697
    %v3699 = vand.u32 %v2879, 4294901760
    %3700 = vmatprep.subr.mxu0 %v3699
    %v3701 = vand.u32 %v2878, 4294901760
    %3702 = vmatpush1.msra.mxu0 %v3701
    %v3703 = vand.u32 %v2881, 4294901760
    %3704 = vmatprep.subr.mxu0 %v3703
    %v3705 = vand.u32 %v2880, 4294901760
    %3706 = vmatpush1.msra.mxu0 %v3705
    %v3707 = vand.u32 %v2883, 4294901760
    %3708 = vmatprep.subr.mxu0 %v3707
    %v3709 = vand.u32 %v2882, 4294901760
    %3710 = vmatpush1.msra.mxu0 %v3709
    %3711 = vmatprep.subr.mxu0 0.0
    %3712 = vmatpush1.msra.mxu0 0.0
    %3713 = vmatprep.subr.mxu0 0.0
    %3714 = vmatpush1.msra.mxu0 0.0
    %3715 = vmatprep.subr.mxu0 0.0
    %3716 = vmatpush1.msra.mxu0 0.0
    %3717 = vmatprep.subr.mxu0 0.0
    %3718 = vmatpush1.msra.mxu0 0.0
    %3719 = vmatprep.subr.mxu0 0.0
    %3720 = vmatpush1.msra.mxu0 0.0
    %3721 = vmatprep.subr.mxu0 0.0
    %3722 = vmatpush1.msra.mxu0 0.0
    %3723 = vmatprep.subr.mxu0 0.0
    %3724 = vmatpush1.msra.mxu0 0.0
    %3725 = vmatprep.subr.mxu0 0.0
    %3726 = vmatpush1.msra.mxu0 0.0
    %3727 = vmatprep.subr.mxu0 0.0
    %3728 = vmatpush1.msra.mxu0 0.0
    %3729 = vmatprep.subr.mxu0 0.0
    %3730 = vmatpush1.msra.mxu0 0.0
    %3731 = vmatprep.subr.mxu0 0.0
    %3732 = vmatpush1.msra.mxu0 0.0
    %3733 = vmatprep.subr.mxu0 0.0
    %3734 = vmatpush1.msra.mxu0 0.0
    %3735 = vmatprep.subr.mxu0 0.0
    %3736 = vmatpush1.msra.mxu0 0.0
    %3737 = vmatprep.subr.mxu0 0.0
    %3738 = vmatpush1.msra.mxu0 0.0
    %3739 = vmatprep.subr.mxu0 0.0
    %3740 = vmatpush1.msra.mxu0 0.0
    %3741 = vmatprep.subr.mxu0 0.0
    %3742 = vmatpush1.msra.mxu0 0.0
    %3743 = vmatprep.mubr.f32.mxu0 0.0
    %v3744 = vand.u32 %v1952, 4294901760
    %3745 = vmatmul.mubr.f32.gmra.mrb[0].mxu0 %v3744
    %v3746 = vpop.f32.mrb[0].mxu0
    %v3747 = vadd.f32 %v3643, %v3746
    %v3748 = vpop.f32.mrb[0].mxu0
    %v3749 = vadd.f32 %v3645, %v3748
    %3750 = vdwg.mxu0
    %v3751 = vadd.f32 %v3747, %v2851
    %v3752 = vmul.f32 %v3749, 0.5
    %v3753 = vmul.f32 %v3749, 0.70710677
    %v3754 = verf.f32.pop %v3753
    %v3755 = vadd.f32 %v3754, 1.0
    %v3756 = vmul.f32 %v3752, %v3755
    %v3757 = vld [vmem:[%s10] sm:$0x1]
    %v3759 = vlaneseq
    %v3760 = vshrl.u32 %v3759, 7
    %v3761 = vsub.s32 0, %v3760
    %v3762 = vrot.slane %v3757, %v3761
    %v3764 = vmul.f32 %v3756, %v3762
    %3765 = vadd.xlane.f32.xlu0 %v3764
    %v3766 = vpop.xlane.xlu0 %3765
    %v3767 = vld [vmem:[#allocation2] sm:$0x1]
    %v3769 = vlaneseq
    %v3770 = vshrl.u32 %v3769, 7
    %v3771 = vsub.s32 0, %v3770
    %v3772 = vrot.slane %v3767, %v3771
    %v3774 = vadd.f32 %v3766, %v3772
    %vm3775 = vcmp.eq.s32.totalorder %v162, 16
    %3777 = vset.pattern.permute.xlu0 0
    %3778 = vperm.xlu0 %3777, %v3774
    %v3779 = vpop.permute.xlu0 %3778
    %v3781 = vsel %vm3775, %v3779, %v3751
    %3782 = vst [vmem:[#allocation14] sm:$0xff] %v3781
    // Predicated region
    $region74: #{tpu_custom_call.1} parent=1 // pred_check
      _
    $region75: #{tpu_custom_call.1} parent=1 // pred_check_branch
      %3784 = sbr.rel (0) target = $region77
    $region76: #{tpu_custom_call.1} parent=1 // pred_region
      %s3786 = ssub.s32 128, 128
      %3787 = vsyncadd [#allocation5], %s3786
      %s3789 = sshll.u32 [#allocation14], 4
      %s3790 = int_to_ptr.vmem [resolvable:$true] %s3789
      %3792 = dma.vmem_to_hbm [thread:$0]  %s3790, 128, %s12, [#allocation5]
    $region77: #{tpu_custom_call.1} parent=1 // pred_fallthru
      _
    // Predicated region
    $region78: #{tpu_custom_call.1} parent=1 // pred_check
      _
    $region79: #{tpu_custom_call.1} parent=1 // pred_check_branch
      %3794 = sbr.rel (0) target = $region81
    $region80: #{tpu_custom_call.1} parent=1 // pred_region
      %3795 = dma.done [#allocation5], 128
    $region81: #{tpu_custom_call.1} parent=1 // pred_fallthru
      _
    %3796 = vsyncpa [#allocation4], 1
    %3797 = vsyncpa [#allocation7], 1
    %3798 = vsyncpa [#allocation10], 1
    %3799 = vsyncpa [#allocation13], 1
    %3800 = vsyncpa [#allocation5], 1

</llo_original>
